<compile_context>
chip_gen: v7x
topology: tpu7x:2x2x1
jax: 0.10.0
libtpu: 0.0.40
codegen_flags: <defaults>
</compile_context>

<pallas_src>
import math
import numpy as np
import jax
import jax.numpy as jnp
from jax.experimental import pallas as pl
from jax.experimental.pallas import tpu as pltpu

# ------------------------- model hyper-parameters (small) -------------------------
N_FEATURES = 32          # FourierFeatures n_features  -> encoded dim per object = 64
GAUSS_SCALE = 10.0
HIDDEN = 32              # MLP hidden_dim
N_LAYERS = 4             # MLP n_layers (last layer -> sigmoid)
OUT_DIM = 4              # colors (3) + mask (1)
N_HID = N_LAYERS - 2     # number of hidden (H->H) layers

ENC_ROWS = 4 * N_FEATURES    # 128: [sin1; cos1; sin2; cos2] fused encoding rows
H2 = 2 * HIDDEN              # 64 : fused hidden width (both objects)
OUT2 = 2 * OUT_DIM           # 8  : fused last-layer output rows
OUT_ROWS = 8                 # packed output rows: r,g,b,mask1,mask2,mask_comb,0,0
MAX_TILE_N = 8192            # points per grid step (upper bound)
TWO_PI = 2.0 * math.pi

# ---- aux slab (ENC_ROWS, AUX_COLS): one small parameter vector per lane column ----
COL_B0 = 0                    # layer-0 bias (H2 rows used)
COL_BH = 1                    # hidden bias i at column COL_BH + i
COL_BL = COL_BH + N_HID       # last-layer bias (OUT2 rows used)
COL_BXW = COL_BL + 1          # 2*pi*B[:,0], stacked [B1,B1,B2,B2]
COL_BYW = COL_BXW + 1         # 2*pi*B[:,1]
COL_CPH = COL_BYW + 1         # per-row phase constant: quad_offset - 2*pi*(B@p)
AUX_COLS = ((COL_CPH + 1 + 7) // 8) * 8


# --------------------------------- Pallas kernel ----------------------------------
def _sigmoid(y):
    # exact identity, single EUP transcendental (tanh) instead of exp + divide
    return 0.5 * (jnp.tanh(0.5 * y) + 1.0)


def scene_kernel(x_ref, w0_ref, wh_ref, wl_ref, aux_ref, out_ref):
    x = x_ref[...]                                            # (2, T) global pixel coords

    # fused Fourier encoding for both objects: one broadcast-MAC + one sin pass
    bxw = aux_ref[:, COL_BXW:COL_BXW + 1]                     # (128, 1)
    byw = aux_ref[:, COL_BYW:COL_BYW + 1]                     # (128, 1)
    cph = aux_ref[:, COL_CPH:COL_CPH + 1]                     # (128, 1)
    phase = bxw * x[0:1, :] + byw * x[1:2, :] + cph           # (128, T)
    enc = jnp.sin(phase)                                      # [sin1; cos1; sin2; cos2]

    # layer 0: block-diagonal (64, 128) @ (128, T)
    b0 = aux_ref[0:H2, COL_B0:COL_B0 + 1]                     # (64, 1)
    h = jnp.dot(w0_ref[...], enc, preferred_element_type=jnp.float32)
    h = jnp.maximum(h + b0, 0.0)                              # (64, T)

    # hidden layers: block-diagonal (64, 64) @ (64, T)
    for i in range(N_HID):
        w = wh_ref[i]                                         # (64, 64)
        b = aux_ref[0:H2, COL_BH + i:COL_BH + i + 1]          # (64, 1)
        h = jnp.maximum(jnp.dot(w, h, preferred_element_type=jnp.float32) + b, 0.0)

    # last layer (sigmoid): block-diagonal (8, 64) @ (64, T)
    bl = aux_ref[0:OUT2, COL_BL:COL_BL + 1]                   # (8, 1)
    y = jnp.dot(wl_ref[...], h, preferred_element_type=jnp.float32) + bl
    o = _sigmoid(y)                                           # (8, T) = [r1,g1,b1,m1,r2,g2,b2,m2]

    c1, m1 = o[0:3, :], o[3:4, :]
    c2, m2 = o[4:7, :], o[7:8, :]
    colors = jnp.clip(c1 * m1 + c2 * m2, 0.0, 1.0)            # (3, T)
    z = jnp.zeros_like(m1)
    # assemble the full (8, T) block in registers -> single unmasked full-block store
    out_ref[...] = jnp.concatenate(
        [colors, m1, m2, jnp.maximum(m1, m2), z, z], axis=0)


# ------------------------------ parameter packing -----------------------------------
def _pack_fused_params(params):
    """Fuse both representations into block-diagonal weights + one aux slab."""
    B1, B2 = params["B1"], params["B2"]
    w1, b1 = params["w1"], params["b1"]
    w2, b2 = params["w2"], params["b2"]
    p1, p2 = params["p1"], params["p2"]
    F = N_FEATURES

    # Fourier per-row params for the fused (128, T) phase slab (rows: sin1,cos1,sin2,cos2)
    bx = jnp.concatenate([B1[:, 0]] * 2 + [B2[:, 0]] * 2)                 # (128,)
    by = jnp.concatenate([B1[:, 1]] * 2 + [B2[:, 1]] * 2)                 # (128,)
    px = jnp.concatenate([jnp.full((2 * F,), p1[0]), jnp.full((2 * F,), p2[0])])
    py = jnp.concatenate([jnp.full((2 * F,), p1[1]), jnp.full((2 * F,), p2[1])])
    quad = jnp.concatenate([jnp.zeros((F,)), jnp.full((F,), 0.5 * math.pi)] * 2)
    bxw = TWO_PI * bx
    byw = TWO_PI * by
    cph = quad - (bxw * px + byw * py)        # folds trafo_to_local and cos = sin(.+pi/2)

    # block-diagonal weights
    W0 = jnp.zeros((H2, ENC_ROWS), jnp.float32)
    W0 = W0.at[:HIDDEN, :2 * F].set(w1[0]).at[HIDDEN:, 2 * F:].set(w2[0])          # (64,128)
    WH = []
    for i in range(1, N_LAYERS - 1):
        W = jnp.zeros((H2, H2), jnp.float32)
        WH.append(W.at[:HIDDEN, :HIDDEN].set(w1[i]).at[HIDDEN:, HIDDEN:].set(w2[i]))
    WH = jnp.stack(WH, axis=0)                                                      # (N_HID,64,64)
    WL = jnp.zeros((OUT2, H2), jnp.float32)
    WL = WL.at[:OUT_DIM, :HIDDEN].set(w1[-1]).at[OUT_DIM:, HIDDEN:].set(w2[-1])     # (8,64)

    # aux slab: one small parameter vector per lane column
    aux = jnp.zeros((ENC_ROWS, AUX_COLS), jnp.float32)
    aux = aux.at[:H2, COL_B0].set(jnp.concatenate([b1[0], b2[0]]))
    for i in range(N_HID):
        aux = aux.at[:H2, COL_BH + i].set(jnp.concatenate([b1[i + 1], b2[i + 1]]))
    aux = aux.at[:OUT2, COL_BL].set(jnp.concatenate([b1[-1], b2[-1]]))
    aux = aux.at[:, COL_BXW].set(bxw)
    aux = aux.at[:, COL_BYW].set(byw)
    aux = aux.at[:, COL_CPH].set(cph)
    return W0, WH, WL, aux


# ----------------------------------- wrapper ---------------------------------------
def _choose_grid(n, max_tile=MAX_TILE_N):
    """Even grid length >= 2 (v7x 2-TC balance); tile multiple of 128, <= max_tile.
    N is padded up to grid*tile, so awkward N never collapses to tiny tiles."""
    g = -(-n // max_tile)          # ceil(n / max_tile)
    if g % 2:
        g += 1
    g = max(g, 2)
    tile = -(-n // (g * 128)) * 128
    return g, tile


def local_representation_forward(x, params):
    N = x.shape[0]
    g, tile_n = _choose_grid(N)
    n_pad = g * tile_n
    xt = jnp.zeros((2, n_pad), jnp.float32).at[:, :N].set(x.T)   # points on the lane axis

    W0, WH, WL, aux = _pack_fused_params(params)

    out_packed = pl.pallas_call(
        scene_kernel,
        grid=(g,),
        in_specs=[
            pl.BlockSpec((2, tile_n), lambda i: (0, i)),          # x (2, n_pad)
            pl.BlockSpec(W0.shape, lambda i: (0, 0)),
            pl.BlockSpec(WH.shape, lambda i: (0, 0, 0)),
            pl.BlockSpec(WL.shape, lambda i: (0, 0)),
            pl.BlockSpec(aux.shape, lambda i: (0, 0)),
        ],
        out_specs=pl.BlockSpec((OUT_ROWS, tile_n), lambda i: (0, i)),
        out_shape=jax.ShapeDtypeStruct((OUT_ROWS, n_pad), jnp.float32),
        compiler_params=pltpu.CompilerParams(
            dimension_semantics=("parallel",),
            vmem_limit_bytes=48 * 1024 * 1024),
    )(xt, W0, WH, WL, aux)

    colors = out_packed[0:3, :N].T                               # (N, 3)
    masks = {"mask1": out_packed[3, :N],
             "mask2": out_packed[4, :N],
             "mask_combined": out_packed[5, :N]}
    return colors, masks


# -------------------------- parameters & pure-JAX reference -------------------------
def make_params(key):
    """Deterministic synthetic parameters (same shapes/init as the PyTorch module)."""
    def mlp_params(k):
        dims = [2 * N_FEATURES] + [HIDDEN] * (N_LAYERS - 1) + [OUT_DIM]
        ws, bs = [], []
        for i in range(N_LAYERS):
            k, kw, kb = jax.random.split(k, 3)
            fan_in, fan_out = dims[i], dims[i + 1]
            limit = math.sqrt(6.0 / (fan_in + fan_out))            # xavier_uniform
            ws.append(jax.random.uniform(kw, (fan_out, fan_in), jnp.float32, -limit, limit))
            blim = 1.0 / math.sqrt(fan_in)                         # torch Linear bias init
            bs.append(jax.random.uniform(kb, (fan_out,), jnp.float32, -blim, blim))
        return ws, bs

    k1, k2, k3, k4 = jax.random.split(key, 4)
    B1 = GAUSS_SCALE * jax.random.normal(k1, (N_FEATURES, 2), jnp.float32)
    B2 = GAUSS_SCALE * jax.random.normal(k2, (N_FEATURES, 2), jnp.float32)
    w1, b1 = mlp_params(k3)
    w2, b2 = mlp_params(k4)
    return dict(p1=0.25 * jnp.ones(2, jnp.float32),   # p1_0
                p2=0.75 * jnp.ones(2, jnp.float32),   # p2_0
                B1=B1, w1=w1, b1=b1, B2=B2, w2=w2, b2=b2)


def reference_forward(x, params):
    def rep(xl, B, ws, bs):
        proj = TWO_PI * (xl[:, 0:1] * B[:, 0][None, :] + xl[:, 1:2] * B[:, 1][None, :])
        h = jnp.concatenate([jnp.sin(proj), jnp.cos(proj)], axis=-1)
        for i in range(N_LAYERS):
            y = jnp.dot(h, ws[i].T, precision=jax.lax.Precision.HIGHEST) + bs[i]
            h = jax.nn.sigmoid(y) if i == N_LAYERS - 1 else jnp.maximum(y, 0.0)
        return h

    out1 = rep(x - params["p1"], params["B1"], params["w1"], params["b1"])
    out2 = rep(x - params["p2"], params["B2"], params["w2"], params["b2"])
    c1, m1 = out1[:, :3], out1[:, 3]
    c2, m2 = out2[:, :3], out2[:, 3]
    colors = jnp.clip(c1 * m1[:, None] + c2 * m2[:, None], 0.0, 1.0)
    return colors, {"mask_combined": jnp.maximum(m1, m2), "mask1": m1, "mask2": m2}


if __name__ == "__main__":
    key = jax.random.PRNGKey(0)
    kx, kp = jax.random.split(key)
    N = 1000                                                     # non-multiple of 128: exercises padding
    x = jax.random.uniform(kx, (N, 2), jnp.float32, -1.0, 1.0)   # pixel coords in [-1, 1]
    params = make_params(kp)

    colors, masks = local_representation_forward(x, params)
    jax.block_until_ready(colors)
    jax.block_until_ready(masks["mask_combined"])

    ref_colors, ref_masks = reference_forward(x, params)
    np.testing.assert_allclose(np.asarray(colors), np.asarray(ref_colors), atol=2e-3, rtol=2e-3)
    for name in ("mask_combined", "mask1", "mask2"):
        np.testing.assert_allclose(np.asarray(masks[name]), np.asarray(ref_masks[name]),
                                   atol=2e-3, rtol=2e-3)

    print("KERNEL_OK")
</pallas_src>

<mosaic_0001>
module attributes {stable_mosaic.version = 11 : i64} {
  func.func @scene_kernel(%arg0: i32, %arg1: memref<2x512xf32, #tpu.memory_space<vmem>>, %arg2: memref<64x128xf32, #tpu.memory_space<vmem>>, %arg3: memref<2x64x64xf32, #tpu.memory_space<vmem>>, %arg4: memref<8x64xf32, #tpu.memory_space<vmem>>, %arg5: memref<128x8xf32, #tpu.memory_space<vmem>>, %arg6: memref<8x512xf32, #tpu.memory_space<vmem>>) attributes {dimension_semantics = [#tpu.dimension_semantics<parallel>], iteration_bounds = array<i64: 2>, scalar_prefetch = 0 : i64, scratch_operands = 0 : i64, tpu.core_type = #tpu.core_type<tc>, window_params = [{transform_indices = @transform_0, window_bounds = array<i64: 2, 512>}, {pipeline_mode = #tpu.pipeline_mode<synchronous>, transform_indices = @transform_1, window_bounds = array<i64: 64, 128>}, {pipeline_mode = #tpu.pipeline_mode<synchronous>, transform_indices = @transform_2, window_bounds = array<i64: 2, 64, 64>}, {pipeline_mode = #tpu.pipeline_mode<synchronous>, transform_indices = @transform_3, window_bounds = array<i64: 8, 64>}, {pipeline_mode = #tpu.pipeline_mode<synchronous>, transform_indices = @transform_4, window_bounds = array<i64: 128, 8>}, {transform_indices = @transform_5, window_bounds = array<i64: 8, 512>}]} {
    %c0 = arith.constant 0 : index
    %c0_0 = arith.constant 0 : index
    %0 = vector.load %arg1[%c0, %c0_0] : memref<2x512xf32, #tpu.memory_space<vmem>>, vector<2x512xf32>
    %c0_1 = arith.constant 0 : index
    %c4 = arith.constant 4 : index
    %1 = vector.load %arg5[%c0_1, %c4] : memref<128x8xf32, #tpu.memory_space<vmem>>, vector<128x1xf32>
    %c0_2 = arith.constant 0 : index
    %c5 = arith.constant 5 : index
    %2 = vector.load %arg5[%c0_2, %c5] : memref<128x8xf32, #tpu.memory_space<vmem>>, vector<128x1xf32>
    %c0_3 = arith.constant 0 : index
    %c6 = arith.constant 6 : index
    %3 = vector.load %arg5[%c0_3, %c6] : memref<128x8xf32, #tpu.memory_space<vmem>>, vector<128x1xf32>
    %4 = vector.extract_strided_slice %0 {offsets = [0, 0], sizes = [1, 512], strides = [1, 1]} : vector<2x512xf32> to vector<1x512xf32>
    %5 = vector.broadcast %1 : vector<128x1xf32> to vector<128x512xf32>
    %6 = vector.broadcast %4 : vector<1x512xf32> to vector<128x512xf32>
    %7 = arith.mulf %5, %6 : vector<128x512xf32>
    %8 = vector.extract_strided_slice %0 {offsets = [1, 0], sizes = [1, 512], strides = [1, 1]} : vector<2x512xf32> to vector<1x512xf32>
    %9 = vector.broadcast %2 : vector<128x1xf32> to vector<128x512xf32>
    %10 = vector.broadcast %8 : vector<1x512xf32> to vector<128x512xf32>
    %11 = arith.mulf %9, %10 : vector<128x512xf32>
    %12 = arith.addf %7, %11 : vector<128x512xf32>
    %13 = vector.broadcast %3 : vector<128x1xf32> to vector<128x512xf32>
    %14 = arith.addf %12, %13 : vector<128x512xf32>
    %15 = math.sin %14 : vector<128x512xf32>
    %c0_4 = arith.constant 0 : index
    %c0_5 = arith.constant 0 : index
    %16 = vector.load %arg5[%c0_4, %c0_5] : memref<128x8xf32, #tpu.memory_space<vmem>>, vector<64x1xf32>
    %c0_6 = arith.constant 0 : index
    %c0_7 = arith.constant 0 : index
    %17 = vector.load %arg2[%c0_6, %c0_7] : memref<64x128xf32, #tpu.memory_space<vmem>>, vector<64x128xf32>
    %cst = arith.constant dense<0.000000e+00> : vector<64x512xf32>
    %18 = tpu.matmul %17, %15, %cst {dimension_numbers = #tpu.dot_dimension_numbers<[1], [0], [0], [1], [0, 0, 1, 1], [], []>} : vector<64x128xf32>, vector<128x512xf32>, vector<64x512xf32> -> vector<64x512xf32>
    %19 = vector.broadcast %16 : vector<64x1xf32> to vector<64x512xf32>
    %20 = arith.addf %18, %19 : vector<64x512xf32>
    %cst_8 = arith.constant 0.000000e+00 : f32
    %21 = vector.broadcast %cst_8 : f32 to vector<64x512xf32>
    %22 = arith.maximumf %20, %21 : vector<64x512xf32>
    %c0_9 = arith.constant 0 : index
    %c0_10 = arith.constant 0 : index
    %c0_11 = arith.constant 0 : index
    %23 = vector.load %arg3[%c0_9, %c0_10, %c0_11] : memref<2x64x64xf32, #tpu.memory_space<vmem>>, vector<1x64x64xf32>
    %24 = vector.shape_cast %23 : vector<1x64x64xf32> to vector<64x64xf32>
    %c0_12 = arith.constant 0 : index
    %c1 = arith.constant 1 : index
    %25 = vector.load %arg5[%c0_12, %c1] : memref<128x8xf32, #tpu.memory_space<vmem>>, vector<64x1xf32>
    %cst_13 = arith.constant dense<0.000000e+00> : vector<64x512xf32>
    %26 = tpu.matmul %24, %22, %cst_13 {dimension_numbers = #tpu.dot_dimension_numbers<[1], [0], [0], [1], [0, 0, 1, 1], [], []>} : vector<64x64xf32>, vector<64x512xf32>, vector<64x512xf32> -> vector<64x512xf32>
    %27 = vector.broadcast %25 : vector<64x1xf32> to vector<64x512xf32>
    %28 = arith.addf %26, %27 : vector<64x512xf32>
    %cst_14 = arith.constant 0.000000e+00 : f32
    %29 = vector.broadcast %cst_14 : f32 to vector<64x512xf32>
    %30 = arith.maximumf %28, %29 : vector<64x512xf32>
    %c1_15 = arith.constant 1 : index
    %c0_16 = arith.constant 0 : index
    %c0_17 = arith.constant 0 : index
    %31 = vector.load %arg3[%c1_15, %c0_16, %c0_17] : memref<2x64x64xf32, #tpu.memory_space<vmem>>, vector<1x64x64xf32>
    %32 = vector.shape_cast %31 : vector<1x64x64xf32> to vector<64x64xf32>
    %c0_18 = arith.constant 0 : index
    %c2 = arith.constant 2 : index
    %33 = vector.load %arg5[%c0_18, %c2] : memref<128x8xf32, #tpu.memory_space<vmem>>, vector<64x1xf32>
    %cst_19 = arith.constant dense<0.000000e+00> : vector<64x512xf32>
    %34 = tpu.matmul %32, %30, %cst_19 {dimension_numbers = #tpu.dot_dimension_numbers<[1], [0], [0], [1], [0, 0, 1, 1], [], []>} : vector<64x64xf32>, vector<64x512xf32>, vector<64x512xf32> -> vector<64x512xf32>
    %35 = vector.broadcast %33 : vector<64x1xf32> to vector<64x512xf32>
    %36 = arith.addf %34, %35 : vector<64x512xf32>
    %cst_20 = arith.constant 0.000000e+00 : f32
    %37 = vector.broadcast %cst_20 : f32 to vector<64x512xf32>
    %38 = arith.maximumf %36, %37 : vector<64x512xf32>
    %c0_21 = arith.constant 0 : index
    %c3 = arith.constant 3 : index
    %39 = vector.load %arg5[%c0_21, %c3] : memref<128x8xf32, #tpu.memory_space<vmem>>, vector<8x1xf32>
    %c0_22 = arith.constant 0 : index
    %c0_23 = arith.constant 0 : index
    %40 = vector.load %arg4[%c0_22, %c0_23] : memref<8x64xf32, #tpu.memory_space<vmem>>, vector<8x64xf32>
    %cst_24 = arith.constant dense<0.000000e+00> : vector<8x512xf32>
    %41 = tpu.matmul %40, %38, %cst_24 {dimension_numbers = #tpu.dot_dimension_numbers<[1], [0], [0], [1], [0, 0, 1, 1], [], []>} : vector<8x64xf32>, vector<64x512xf32>, vector<8x512xf32> -> vector<8x512xf32>
    %42 = vector.broadcast %39 : vector<8x1xf32> to vector<8x512xf32>
    %43 = arith.addf %41, %42 : vector<8x512xf32>
    %cst_25 = arith.constant 5.000000e-01 : f32
    %44 = vector.broadcast %cst_25 : f32 to vector<8x512xf32>
    %45 = arith.mulf %44, %43 : vector<8x512xf32>
    %46 = math.tanh %45 : vector<8x512xf32>
    %cst_26 = arith.constant 1.000000e+00 : f32
    %47 = vector.broadcast %cst_26 : f32 to vector<8x512xf32>
    %48 = arith.addf %46, %47 : vector<8x512xf32>
    %cst_27 = arith.constant 5.000000e-01 : f32
    %49 = vector.broadcast %cst_27 : f32 to vector<8x512xf32>
    %50 = arith.mulf %49, %48 : vector<8x512xf32>
    %51 = vector.extract_strided_slice %50 {offsets = [0, 0], sizes = [3, 512], strides = [1, 1]} : vector<8x512xf32> to vector<3x512xf32>
    %52 = vector.extract_strided_slice %50 {offsets = [3, 0], sizes = [1, 512], strides = [1, 1]} : vector<8x512xf32> to vector<1x512xf32>
    %53 = vector.extract_strided_slice %50 {offsets = [4, 0], sizes = [3, 512], strides = [1, 1]} : vector<8x512xf32> to vector<3x512xf32>
    %54 = vector.extract_strided_slice %50 {offsets = [7, 0], sizes = [1, 512], strides = [1, 1]} : vector<8x512xf32> to vector<1x512xf32>
    %55 = vector.broadcast %52 : vector<1x512xf32> to vector<3x512xf32>
    %56 = arith.mulf %51, %55 : vector<3x512xf32>
    %57 = vector.broadcast %54 : vector<1x512xf32> to vector<3x512xf32>
    %58 = arith.mulf %53, %57 : vector<3x512xf32>
    %59 = arith.addf %56, %58 : vector<3x512xf32>
    %cst_28 = arith.constant 0.000000e+00 : f32
    %cst_29 = arith.constant 1.000000e+00 : f32
    %60 = vector.broadcast %cst_28 : f32 to vector<3x512xf32>
    %61 = arith.maximumf %60, %59 : vector<3x512xf32>
    %62 = vector.broadcast %cst_29 : f32 to vector<3x512xf32>
    %63 = arith.minimumf %62, %61 : vector<3x512xf32>
    %cst_30 = arith.constant 0.000000e+00 : f32
    %64 = vector.broadcast %cst_30 : f32 to vector<1x512xf32>
    %65 = arith.maximumf %52, %54 : vector<1x512xf32>
    %66 = tpu.concatenate %63, %52, %54, %65, %64, %64 in 0 : vector<3x512xf32>, vector<1x512xf32>, vector<1x512xf32>, vector<1x512xf32>, vector<1x512xf32>, vector<1x512xf32> -> vector<8x512xf32>
    %c0_31 = arith.constant 0 : index
    %c0_32 = arith.constant 0 : index
    %67 = vector.load %arg6[%c0_31, %c0_32] : memref<8x512xf32, #tpu.memory_space<vmem>>, vector<8x512xf32>
    tpu.vector_store %arg6[%c0_31, %c0_32], %66 {strides = array<i32>} : memref<8x512xf32, #tpu.memory_space<vmem>>, vector<8x512xf32>,
    return
  }
  func.func @transform_0(%arg0: i32) -> (i32, i32) {
    %c0_i32 = arith.constant 0 : i32
    %c0_i32_0 = arith.constant 0 : i32
    return %c0_i32, %arg0 : i32, i32
  }
  func.func @transform_1(%arg0: i32) -> (i32, i32) {
    %c0_i32 = arith.constant 0 : i32
    %c0_i32_0 = arith.constant 0 : i32
    %c0_i32_1 = arith.constant 0 : i32
    return %c0_i32, %c0_i32_0 : i32, i32
  }
  func.func @transform_2(%arg0: i32) -> (i32, i32, i32) {
    %c0_i32 = arith.constant 0 : i32
    %c0_i32_0 = arith.constant 0 : i32
    %c0_i32_1 = arith.constant 0 : i32
    %c0_i32_2 = arith.constant 0 : i32
    return %c0_i32, %c0_i32_0, %c0_i32_1 : i32, i32, i32
  }
  func.func @transform_3(%arg0: i32) -> (i32, i32) {
    %c0_i32 = arith.constant 0 : i32
    %c0_i32_0 = arith.constant 0 : i32
    %c0_i32_1 = arith.constant 0 : i32
    return %c0_i32, %c0_i32_0 : i32, i32
  }
  func.func @transform_4(%arg0: i32) -> (i32, i32) {
    %c0_i32 = arith.constant 0 : i32
    %c0_i32_0 = arith.constant 0 : i32
    %c0_i32_1 = arith.constant 0 : i32
    return %c0_i32, %c0_i32_0 : i32, i32
  }
  func.func @transform_5(%arg0: i32) -> (i32, i32) {
    %c0_i32 = arith.constant 0 : i32
    %c0_i32_0 = arith.constant 0 : i32
    return %c0_i32, %arg0 : i32, i32
  }
}

</mosaic_0001>

<llo_original>
// kernel: tpu_custom_call.1
$region0: #{tpu_custom_call.1}
  #allocation0 [shape = 'u32[]', space=smem, size = 0x4, offset = 0x4, fixed_abs, tag = 'smem constant byte address 0x4 - core index']
  #allocation1 [shape = 'u32[144,128]{1,0:T(1,128)}', space=vmem, size = 0x12000, scoped, tag = 'internal scratch']
  %s0 = inlined_call_operand.hbm [shape: f32[2,1024], index: 0, kind: input, shape index: {}]
  %s1 = inlined_call_operand.hbm [shape: f32[64,128], index: 1, kind: input, shape index: {}]
  %s2 = inlined_call_operand.vmem [shape: f32[2,64,64], index: 2, kind: input, shape index: {}]
  %s3 = inlined_call_operand.vmem [shape: f32[8,64], index: 3, kind: input, shape index: {}]
  %s4 = inlined_call_operand.vmem [shape: f32[128,8], index: 4, kind: input, shape index: {}]
  %s5 = inlined_call_operand.hbm [shape: f32[8,1024], index: 5, kind: output, shape index: {}]
  %s6 = sld [smem:[#allocation0]]
  $region61: #{tpu_custom_call.1} parent=0
    _
  %s8 = ssub.s32 1, %s6
  %s9 = scalar_select 0, %s8, %s6
  $region1: #{tpu_custom_call.1} parent=0
    #allocation2 [shape = 'u8[8192]{0}', space=vmem, size = 0x2000, scoped, tag = 'input window, operand 0']
    #allocation3 [shape = 's32[2]{0}', space=sflag, size = 0x8, scoped, tag = 'scoped memory for tpu_custom_call.1']
    #allocation4 [shape = 's32[2]{0}', space=sflag, size = 0x8, scoped, tag = 'scoped memory for tpu_custom_call.1']
    #allocation5 [shape = 'u8[32768]{0}', space=vmem, size = 0x8000, scoped, tag = 'input window, operand 1, single buffered']
    #allocation6 [shape = 's32[1]{0}', space=sflag, size = 0x4, scoped, tag = 'scoped memory for tpu_custom_call.1']
    #allocation7 [shape = 'u8[32768]{0}', space=vmem, size = 0x8000, scoped, tag = 'output window, operand 0']
    %10 = vsyncpa [#allocation3], 0
    %s11 = scalar_lea.sflag [#allocation3], 1
    %12 = vsyncpa %s11, 0
    %13 = vsyncpa [#allocation6], 0
    %14 = vsyncpa [#allocation4], 0
    %s15 = scalar_lea.sflag [#allocation4], 1
    %16 = vsyncpa %s15, 0
    loop: start=0, step=1, limit=4
    $region2: #{tpu_custom_call.1} parent=1 // loop_pre_header
      _
    $region3: #{tpu_custom_call.1} parent=1 // loop_header
      %s18 = sphi 0, %s22
      %p19 = scmp.ge.s32.totalorder %s18, 4
      %s28 = sphi 0, %s30
      %s31 = sphi 0, %s28
      %s32 = sphi 0, %s31
      %s48 = sphi 0, %s32
      %s52 = sphi 0, %s52
      %s54 = sphi 0, %s52
      %s55 = sphi 0, %s54
      %s69 = sphi 0, %s55
      %s73 = sphi 0, %s73
      %s75 = sphi 0, %s73
      %s76 = sphi 0, %s75
      %s90 = sphi 0, %s76
      %s94 = sphi 0, %s94
      %s96 = sphi 0, %s94
      %s97 = sphi 0, %s96
      %s111 = sphi 0, %s97
      %s115 = sphi 0, %s115
      %s117 = sphi 0, %s115
      %s118 = sphi 0, %s117
      %s132 = sphi 0, %s118
      %s138 = sphi 0, %s140
      %s141 = sphi 0, %s138
      %s142 = sphi 0, %s141
      %s158 = sphi 0, %s142
    $region4: #{tpu_custom_call.1} parent=1 // loop_header_branch
      %21 = sbr.rel (%p19) target = $region8
    $region5: #{tpu_custom_call.1} parent=1 // loop_body
      %s23 = ssub.s32 %s18, 1
      %s24 = ssub.s32 %s18, 2
      %s25 = sadd.s32 %s18, 1
      %s26 = ssub.s32 %s18, %s25
      %p27 = scmp.eq.s32.totalorder %s26, 0
      %s29 = sadd.s32 %s28, 1
      %s30 = scalar_select %p27, %s28, %s29
      %p33 = pneg %p27
      %p34 = scmp.eq.s32.totalorder %s18, 1
      %p35 = por %p33, %p34
      %p36 = scmp.ne.s32.totalorder %s28, %s31
      %p37 = scmp.eq.s32.totalorder %s18, 0
      %p38 = por %p36, %p37
      %p39 = scmp.ne.s32.totalorder %s28, %s31
      %p40 = scmp.eq.s32.totalorder %s23, 1
      %p41 = por %p39, %p40
      %p42 = scmp.ne.s32.totalorder %s31, %s32
      %p43 = scmp.eq.s32.totalorder %s23, 0
      %p44 = por %p42, %p43
      %p45 = scmp.ne.s32.totalorder %s31, %s32
      %p46 = scmp.eq.s32.totalorder %s24, 1
      %p47 = por %p45, %p46
      %p49 = scmp.ne.s32.totalorder %s32, %s48
      %p50 = scmp.eq.s32.totalorder %s24, 0
      %p51 = por %p49, %p50
      %s53 = sadd.s32 %s52, 1
      %p56 = scmp.eq.s32.totalorder %s18, 1
      %p57 = scmp.ne.s32.totalorder %s52, %s54
      %p58 = scmp.eq.s32.totalorder %s18, 0
      %p59 = por %p57, %p58
      %p60 = scmp.ne.s32.totalorder %s52, %s54
      %p61 = scmp.eq.s32.totalorder %s23, 1
      %p62 = por %p60, %p61
      %p63 = scmp.ne.s32.totalorder %s54, %s55
      %p64 = scmp.eq.s32.totalorder %s23, 0
      %p65 = por %p63, %p64
      %p66 = scmp.ne.s32.totalorder %s54, %s55
      %p67 = scmp.eq.s32.totalorder %s24, 1
      %p68 = por %p66, %p67
      %p70 = scmp.ne.s32.totalorder %s55, %s69
      %p71 = scmp.eq.s32.totalorder %s24, 0
      %p72 = por %p70, %p71
      %s74 = sadd.s32 %s73, 1
      %p77 = scmp.eq.s32.totalorder %s18, 1
      %p78 = scmp.ne.s32.totalorder %s73, %s75
      %p79 = scmp.eq.s32.totalorder %s18, 0
      %p80 = por %p78, %p79
      %p81 = scmp.ne.s32.totalorder %s73, %s75
      %p82 = scmp.eq.s32.totalorder %s23, 1
      %p83 = por %p81, %p82
      %p84 = scmp.ne.s32.totalorder %s75, %s76
      %p85 = scmp.eq.s32.totalorder %s23, 0
      %p86 = por %p84, %p85
      %p87 = scmp.ne.s32.totalorder %s75, %s76
      %p88 = scmp.eq.s32.totalorder %s24, 1
      %p89 = por %p87, %p88
      %p91 = scmp.ne.s32.totalorder %s76, %s90
      %p92 = scmp.eq.s32.totalorder %s24, 0
      %p93 = por %p91, %p92
      %s95 = sadd.s32 %s94, 1
      %p98 = scmp.eq.s32.totalorder %s18, 1
      %p99 = scmp.ne.s32.totalorder %s94, %s96
      %p100 = scmp.eq.s32.totalorder %s18, 0
      %p101 = por %p99, %p100
      %p102 = scmp.ne.s32.totalorder %s94, %s96
      %p103 = scmp.eq.s32.totalorder %s23, 1
      %p104 = por %p102, %p103
      %p105 = scmp.ne.s32.totalorder %s96, %s97
      %p106 = scmp.eq.s32.totalorder %s23, 0
      %p107 = por %p105, %p106
      %p108 = scmp.ne.s32.totalorder %s96, %s97
      %p109 = scmp.eq.s32.totalorder %s24, 1
      %p110 = por %p108, %p109
      %p112 = scmp.ne.s32.totalorder %s97, %s111
      %p113 = scmp.eq.s32.totalorder %s24, 0
      %p114 = por %p112, %p113
      %s116 = sadd.s32 %s115, 1
      %p119 = scmp.eq.s32.totalorder %s18, 1
      %p120 = scmp.ne.s32.totalorder %s115, %s117
      %p121 = scmp.eq.s32.totalorder %s18, 0
      %p122 = por %p120, %p121
      %p123 = scmp.ne.s32.totalorder %s115, %s117
      %p124 = scmp.eq.s32.totalorder %s23, 1
      %p125 = por %p123, %p124
      %p126 = scmp.ne.s32.totalorder %s117, %s118
      %p127 = scmp.eq.s32.totalorder %s23, 0
      %p128 = por %p126, %p127
      %p129 = scmp.ne.s32.totalorder %s117, %s118
      %p130 = scmp.eq.s32.totalorder %s24, 1
      %p131 = por %p129, %p130
      %p133 = scmp.ne.s32.totalorder %s118, %s132
      %p134 = scmp.eq.s32.totalorder %s24, 0
      %p135 = por %p133, %p134
      %s136 = ssub.s32 %s18, %s25
      %p137 = scmp.eq.s32.totalorder %s136, 0
      %s139 = sadd.s32 %s138, 1
      %s140 = scalar_select %p137, %s138, %s139
      %p143 = pneg %p137
      %p144 = scmp.eq.s32.totalorder %s18, 1
      %p145 = por %p143, %p144
      %p146 = scmp.ne.s32.totalorder %s138, %s141
      %p147 = scmp.eq.s32.totalorder %s18, 0
      %p148 = por %p146, %p147
      %p149 = scmp.ne.s32.totalorder %s138, %s141
      %p150 = scmp.eq.s32.totalorder %s23, 1
      %p151 = por %p149, %p150
      %p152 = scmp.ne.s32.totalorder %s141, %s142
      %p153 = scmp.eq.s32.totalorder %s23, 0
      %p154 = por %p152, %p153
      %p155 = scmp.ne.s32.totalorder %s141, %s142
      %p156 = scmp.eq.s32.totalorder %s24, 1
      %p157 = por %p155, %p156
      %p159 = scmp.ne.s32.totalorder %s142, %s158
      %p160 = scmp.eq.s32.totalorder %s24, 0
      %p161 = por %p159, %p160
      %p162 = scmp.le.s32.totalorder 1, %s18
      %p163 = scmp.lt.s32.totalorder %s18, 3
      %p164 = pnand %p162, %p163
      %p165 = pneg %p164
      // Predicated region
      $region9: #{tpu_custom_call.1} parent=5 // pred_check
        _
      $region10: #{tpu_custom_call.1} parent=5 // pred_check_branch
        %167 = sbr.rel (%p164) target = $region12
      $region11: #{tpu_custom_call.1} parent=5 // pred_region
        %s168 = ssub.s32 %s18, 1
        // Predicated region
        $region13: #{tpu_custom_call.1} parent=11 // pred_check
          %p169 = pneg %p65
        $region14: #{tpu_custom_call.1} parent=11 // pred_check_branch
          %171 = sbr.rel (%p169) target = $region16
        $region15: #{tpu_custom_call.1} parent=11 // pred_region
          %s173 = ssub.s32 1024, 1024
          %174 = vsyncadd [#allocation6], %s173
          %s175 = sshll.u32 [#allocation5], 4
          %s176 = int_to_ptr.vmem [resolvable:$true] %s175
          %181 = dma.hbm_to_vmem [thread:$0]  %s1, 1024, %s176, [#allocation6], 128, 128, 8
        $region16: #{tpu_custom_call.1} parent=11 // pred_fallthru
          _
        // Predicated region
        $region17: #{tpu_custom_call.1} parent=11 // pred_check
          %p182 = pneg %p86
        $region18: #{tpu_custom_call.1} parent=11 // pred_check_branch
          %184 = sbr.rel (%p182) target = $region20
        $region19: #{tpu_custom_call.1} parent=11 // pred_region
          _
        $region20: #{tpu_custom_call.1} parent=11 // pred_fallthru
          _
        // Predicated region
        $region21: #{tpu_custom_call.1} parent=11 // pred_check
          %p185 = pneg %p107
        $region22: #{tpu_custom_call.1} parent=11 // pred_check_branch
          %187 = sbr.rel (%p185) target = $region24
        $region23: #{tpu_custom_call.1} parent=11 // pred_region
          _
        $region24: #{tpu_custom_call.1} parent=11 // pred_fallthru
          _
        // Predicated region
        $region25: #{tpu_custom_call.1} parent=11 // pred_check
          %p188 = pneg %p128
        $region26: #{tpu_custom_call.1} parent=11 // pred_check_branch
          %190 = sbr.rel (%p188) target = $region28
        $region27: #{tpu_custom_call.1} parent=11 // pred_region
          _
        $region28: #{tpu_custom_call.1} parent=11 // pred_fallthru
          _
      $region12: #{tpu_custom_call.1} parent=5 // pred_fallthru
        _
      %p191 = scmp.lt.s32.totalorder %s18, 2
      // Predicated region
      $region29: #{tpu_custom_call.1} parent=5 // pred_check
        %p192 = pneg %p191
      $region30: #{tpu_custom_call.1} parent=5 // pred_check_branch
        %194 = sbr.rel (%p192) target = $region32
      $region31: #{tpu_custom_call.1} parent=5 // pred_region
        // Predicated region
        $region33: #{tpu_custom_call.1} parent=31 // pred_check
          %p195 = pneg %p38
        $region34: #{tpu_custom_call.1} parent=31 // pred_check_branch
          %197 = sbr.rel (%p195) target = $region36
        $region35: #{tpu_custom_call.1} parent=31 // pred_region
          %s198 = sand.u32 %s28, 1
          %s199 = scalar_lea.sflag [#allocation3], %s198
          %s200 = sand.u32 %s28, 1
          %s201 = smul.addr %s200, 8
          %s202 = scalar_lea.vmem [#allocation2], %s201
          %s203 = smul.u32 4, %s18
          %s205 = ssub.s32 128, 128
          %206 = vsyncadd %s199, %s205
          %s207 = smul.addr %s203, 32
          %s208 = scalar_lea.hbm %s0, %s207
          %s210 = sshll.u32 %s202, 4
          %s211 = int_to_ptr.vmem [resolvable:$true] %s210
          %213 = dma.hbm_to_vmem [thread:$0]  %s208, 128, %s211, %s199
        $region36: #{tpu_custom_call.1} parent=31 // pred_fallthru
          _
      $region32: #{tpu_custom_call.1} parent=5 // pred_fallthru
        _
      %p214 = scmp.le.s32.totalorder 1, %s18
      %p215 = scmp.lt.s32.totalorder %s18, 3
      %p216 = pnand %p214, %p215
      %p217 = pneg %p216
      // Predicated region
      $region37: #{tpu_custom_call.1} parent=5 // pred_check
        _
      $region38: #{tpu_custom_call.1} parent=5 // pred_check_branch
        %219 = sbr.rel (%p216) target = $region40
      $region39: #{tpu_custom_call.1} parent=5 // pred_region
        %s220 = ssub.s32 %s18, 1
        %s221 = sand.u32 %s31, 1
        %s222 = scalar_lea.sflag [#allocation3], %s221
        %s223 = sand.u32 %s31, 1
        %s224 = smul.addr %s223, 8
        %s225 = scalar_lea.vmem [#allocation2], %s224
        // Predicated region
        $region41: #{tpu_custom_call.1} parent=39 // pred_check
          %p226 = pneg %p44
        $region42: #{tpu_custom_call.1} parent=39 // pred_check_branch
          %228 = sbr.rel (%p226) target = $region44
        $region43: #{tpu_custom_call.1} parent=39 // pred_region
          %229 = dma.done %s222, 128
        $region44: #{tpu_custom_call.1} parent=39 // pred_fallthru
          _
        // Predicated region
        $region45: #{tpu_custom_call.1} parent=39 // pred_check
          %p230 = pneg %p65
        $region46: #{tpu_custom_call.1} parent=39 // pred_check_branch
          %232 = sbr.rel (%p230) target = $region48
        $region47: #{tpu_custom_call.1} parent=39 // pred_region
          %233 = dma.done [#allocation6], 1024
        $region48: #{tpu_custom_call.1} parent=39 // pred_fallthru
          _
        %s234 = sand.u32 %s31, 1
        %s235 = scalar_lea.sflag [#allocation3], %s234
        %s236 = sand.u32 %s31, 1
        %s237 = smul.addr %s236, 8
        %s238 = scalar_lea.vmem [#allocation2], %s237
        %p239 = pneg %p44
        %p240 = pneg %p41
        %p241 = pneg %p65
        %p242 = pneg %p62
        %p243 = pneg %p86
        %p244 = pneg %p83
        %p245 = pneg %p107
        %p246 = pneg %p104
        %p247 = pneg %p128
        %p248 = pneg %p125
        %p249 = pneg %p154
        %p250 = pneg %p151
        %s251 = sand.u32 %s141, 1
        %s252 = scalar_lea.sflag [#allocation4], %s251
        %s253 = sand.u32 %s141, 1
        %s254 = smul.addr %s253, 32
        %s255 = scalar_lea.vmem [#allocation7], %s254
        %s256 = smul.u32 4, %s23
        %s257 = smul.u32 4, %s23
        %v258 = vld [vmem:[%s225] sm:$0xff]
        %v259 = vld [vmem:[%s4] sm:$0xff]
        %v260 = vld [vmem:[%s4 + $0x8] sm:$0xff]
        %v261 = vld [vmem:[%s4 + $0x10] sm:$0xff]
        %v262 = vld [vmem:[%s4 + $0x18] sm:$0xff]
        %v263 = vld [vmem:[%s4 + $0x20] sm:$0xff]
        %v264 = vld [vmem:[%s4 + $0x28] sm:$0xff]
        %v265 = vld [vmem:[%s4 + $0x30] sm:$0xff]
        %v266 = vld [vmem:[%s4 + $0x38] sm:$0xff]
        %v267 = vld [vmem:[%s4 + $0x40] sm:$0xff]
        %v268 = vld [vmem:[%s4 + $0x48] sm:$0xff]
        %v269 = vld [vmem:[%s4 + $0x50] sm:$0xff]
        %v270 = vld [vmem:[%s4 + $0x58] sm:$0xff]
        %v271 = vld [vmem:[%s4 + $0x60] sm:$0xff]
        %v272 = vld [vmem:[%s4 + $0x68] sm:$0xff]
        %v273 = vld [vmem:[%s4 + $0x70] sm:$0xff]
        %v274 = vld [vmem:[%s4 + $0x78] sm:$0xff]
        %276 = vset.pattern.permute.xlu0 4
        %277 = vperm.xlu0 %276, %v259
        %v278 = vpop.permute.xlu0 %277
        %281 = vset.pattern.permute.xlu0 4
        %282 = vperm.xlu0 %281, %v260
        %v283 = vpop.permute.xlu0 %282
        %286 = vset.pattern.permute.xlu0 4
        %287 = vperm.xlu0 %286, %v261
        %v288 = vpop.permute.xlu0 %287
        %291 = vset.pattern.permute.xlu0 4
        %292 = vperm.xlu0 %291, %v262
        %v293 = vpop.permute.xlu0 %292
        %296 = vset.pattern.permute.xlu0 4
        %297 = vperm.xlu0 %296, %v263
        %v298 = vpop.permute.xlu0 %297
        %301 = vset.pattern.permute.xlu0 4
        %302 = vperm.xlu0 %301, %v264
        %v303 = vpop.permute.xlu0 %302
        %306 = vset.pattern.permute.xlu0 4
        %307 = vperm.xlu0 %306, %v265
        %v308 = vpop.permute.xlu0 %307
        %311 = vset.pattern.permute.xlu0 4
        %312 = vperm.xlu0 %311, %v266
        %v313 = vpop.permute.xlu0 %312
        %316 = vset.pattern.permute.xlu0 4
        %317 = vperm.xlu0 %316, %v267
        %v318 = vpop.permute.xlu0 %317
        %321 = vset.pattern.permute.xlu0 4
        %322 = vperm.xlu0 %321, %v268
        %v323 = vpop.permute.xlu0 %322
        %326 = vset.pattern.permute.xlu0 4
        %327 = vperm.xlu0 %326, %v269
        %v328 = vpop.permute.xlu0 %327
        %331 = vset.pattern.permute.xlu0 4
        %332 = vperm.xlu0 %331, %v270
        %v333 = vpop.permute.xlu0 %332
        %336 = vset.pattern.permute.xlu0 4
        %337 = vperm.xlu0 %336, %v271
        %v338 = vpop.permute.xlu0 %337
        %341 = vset.pattern.permute.xlu0 4
        %342 = vperm.xlu0 %341, %v272
        %v343 = vpop.permute.xlu0 %342
        %346 = vset.pattern.permute.xlu0 4
        %347 = vperm.xlu0 %346, %v273
        %v348 = vpop.permute.xlu0 %347
        %351 = vset.pattern.permute.xlu0 4
        %352 = vperm.xlu0 %351, %v274
        %v353 = vpop.permute.xlu0 %352
        %v356 = vlaneseq
        %v357 = vshrl.u32 %v356, 7
        %v358 = vsub.s32 0, %v357
        %v359 = vrot.slane %v258, %v358
        %v360 = vlaneseq
        %v361 = vshrl.u32 %v360, 7
        %v362 = vsub.s32 2, %v361
        %v363 = vrot.slane %v258, %v362
        %v364 = vlaneseq
        %v365 = vshrl.u32 %v364, 7
        %v366 = vsub.s32 4, %v365
        %v367 = vrot.slane %v258, %v366
        %v368 = vlaneseq
        %v369 = vshrl.u32 %v368, 7
        %v370 = vsub.s32 6, %v369
        %v371 = vrot.slane %v258, %v370
        %v376 = vlaneseq
        %v377 = vshrl.u32 %v376, 7
        %v378 = vsub.s32 0, %v377
        %v379 = vrot.slane %v359, %v378
        %v380 = vlaneseq
        %v381 = vshrl.u32 %v380, 7
        %v382 = vsub.s32 0, %v381
        %v383 = vrot.slane %v363, %v382
        %v384 = vlaneseq
        %v385 = vshrl.u32 %v384, 7
        %v386 = vsub.s32 0, %v385
        %v387 = vrot.slane %v367, %v386
        %v388 = vlaneseq
        %v389 = vshrl.u32 %v388, 7
        %v390 = vsub.s32 0, %v389
        %v391 = vrot.slane %v371, %v390
        %v392 = vmul.f32 %v278, %v379
        %v393 = vmul.f32 %v278, %v383
        %v394 = vmul.f32 %v278, %v387
        %v395 = vmul.f32 %v278, %v391
        %v396 = vmul.f32 %v283, %v379
        %v397 = vmul.f32 %v283, %v383
        %v398 = vmul.f32 %v283, %v387
        %v399 = vmul.f32 %v283, %v391
        %v400 = vmul.f32 %v288, %v379
        %v401 = vmul.f32 %v288, %v383
        %v402 = vmul.f32 %v288, %v387
        %v403 = vmul.f32 %v288, %v391
        %v404 = vmul.f32 %v293, %v379
        %v405 = vmul.f32 %v293, %v383
        %v406 = vmul.f32 %v293, %v387
        %v407 = vmul.f32 %v293, %v391
        %v408 = vmul.f32 %v298, %v379
        %v409 = vmul.f32 %v298, %v383
        %v410 = vmul.f32 %v298, %v387
        %v411 = vmul.f32 %v298, %v391
        %v412 = vmul.f32 %v303, %v379
        %v413 = vmul.f32 %v303, %v383
        %v414 = vmul.f32 %v303, %v387
        %v415 = vmul.f32 %v303, %v391
        %v416 = vmul.f32 %v308, %v379
        %v417 = vmul.f32 %v308, %v383
        %v418 = vmul.f32 %v308, %v387
        %v419 = vmul.f32 %v308, %v391
        %v420 = vmul.f32 %v313, %v379
        %v421 = vmul.f32 %v313, %v383
        %v422 = vmul.f32 %v313, %v387
        %v423 = vmul.f32 %v313, %v391
        %v424 = vmul.f32 %v318, %v379
        %v425 = vmul.f32 %v318, %v383
        %v426 = vmul.f32 %v318, %v387
        %v427 = vmul.f32 %v318, %v391
        %v428 = vmul.f32 %v323, %v379
        %v429 = vmul.f32 %v323, %v383
        %v430 = vmul.f32 %v323, %v387
        %v431 = vmul.f32 %v323, %v391
        %v432 = vmul.f32 %v328, %v379
        %v433 = vmul.f32 %v328, %v383
        %v434 = vmul.f32 %v328, %v387
        %v435 = vmul.f32 %v328, %v391
        %v436 = vmul.f32 %v333, %v379
        %v437 = vmul.f32 %v333, %v383
        %v438 = vmul.f32 %v333, %v387
        %v439 = vmul.f32 %v333, %v391
        %v440 = vmul.f32 %v338, %v379
        %v441 = vmul.f32 %v338, %v383
        %v442 = vmul.f32 %v338, %v387
        %v443 = vmul.f32 %v338, %v391
        %v444 = vmul.f32 %v343, %v379
        %v445 = vmul.f32 %v343, %v383
        %v446 = vmul.f32 %v343, %v387
        %v447 = vmul.f32 %v343, %v391
        %v448 = vmul.f32 %v348, %v379
        %v449 = vmul.f32 %v348, %v383
        %v450 = vmul.f32 %v348, %v387
        %v451 = vmul.f32 %v348, %v391
        %v452 = vmul.f32 %v353, %v379
        %v453 = vmul.f32 %v353, %v383
        %v454 = vmul.f32 %v353, %v387
        %v455 = vmul.f32 %v353, %v391
        %456 = vset.pattern.permute.xlu0 5
        %457 = vperm.xlu0 %456, %v259
        %v458 = vpop.permute.xlu0 %457
        %460 = vset.pattern.permute.xlu0 5
        %461 = vperm.xlu0 %460, %v260
        %v462 = vpop.permute.xlu0 %461
        %464 = vset.pattern.permute.xlu0 5
        %465 = vperm.xlu0 %464, %v261
        %v466 = vpop.permute.xlu0 %465
        %468 = vset.pattern.permute.xlu0 5
        %469 = vperm.xlu0 %468, %v262
        %v470 = vpop.permute.xlu0 %469
        %472 = vset.pattern.permute.xlu0 5
        %473 = vperm.xlu0 %472, %v263
        %v474 = vpop.permute.xlu0 %473
        %476 = vset.pattern.permute.xlu0 5
        %477 = vperm.xlu0 %476, %v264
        %v478 = vpop.permute.xlu0 %477
        %480 = vset.pattern.permute.xlu0 5
        %481 = vperm.xlu0 %480, %v265
        %v482 = vpop.permute.xlu0 %481
        %484 = vset.pattern.permute.xlu0 5
        %485 = vperm.xlu0 %484, %v266
        %v486 = vpop.permute.xlu0 %485
        %488 = vset.pattern.permute.xlu0 5
        %489 = vperm.xlu0 %488, %v267
        %v490 = vpop.permute.xlu0 %489
        %492 = vset.pattern.permute.xlu0 5
        %493 = vperm.xlu0 %492, %v268
        %v494 = vpop.permute.xlu0 %493
        %496 = vset.pattern.permute.xlu0 5
        %497 = vperm.xlu0 %496, %v269
        %v498 = vpop.permute.xlu0 %497
        %500 = vset.pattern.permute.xlu0 5
        %501 = vperm.xlu0 %500, %v270
        %v502 = vpop.permute.xlu0 %501
        %504 = vset.pattern.permute.xlu0 5
        %505 = vperm.xlu0 %504, %v271
        %v506 = vpop.permute.xlu0 %505
        %508 = vset.pattern.permute.xlu0 5
        %509 = vperm.xlu0 %508, %v272
        %v510 = vpop.permute.xlu0 %509
        %512 = vset.pattern.permute.xlu0 5
        %513 = vperm.xlu0 %512, %v273
        %v514 = vpop.permute.xlu0 %513
        %516 = vset.pattern.permute.xlu0 5
        %517 = vperm.xlu0 %516, %v274
        %v518 = vpop.permute.xlu0 %517
        %v520 = vlaneseq
        %v521 = vshrl.u32 %v520, 7
        %v522 = vsub.s32 1, %v521
        %v523 = vrot.slane %v258, %v522
        %v524 = vlaneseq
        %v525 = vshrl.u32 %v524, 7
        %v526 = vsub.s32 3, %v525
        %v527 = vrot.slane %v258, %v526
        %v528 = vlaneseq
        %v529 = vshrl.u32 %v528, 7
        %v530 = vsub.s32 5, %v529
        %v531 = vrot.slane %v258, %v530
        %v532 = vlaneseq
        %v533 = vshrl.u32 %v532, 7
        %v534 = vsub.s32 7, %v533
        %v535 = vrot.slane %v258, %v534
        %v540 = vlaneseq
        %v541 = vshrl.u32 %v540, 7
        %v542 = vsub.s32 1, %v541
        %v543 = vrot.slane %v523, %v542
        %v544 = vlaneseq
        %v545 = vshrl.u32 %v544, 7
        %v546 = vsub.s32 1, %v545
        %v547 = vrot.slane %v527, %v546
        %v548 = vlaneseq
        %v549 = vshrl.u32 %v548, 7
        %v550 = vsub.s32 1, %v549
        %v551 = vrot.slane %v531, %v550
        %v552 = vlaneseq
        %v553 = vshrl.u32 %v552, 7
        %v554 = vsub.s32 1, %v553
        %v555 = vrot.slane %v535, %v554
        %v556 = vmul.f32 %v458, %v543
        %v557 = vmul.f32 %v458, %v547
        %v558 = vmul.f32 %v458, %v551
        %v559 = vmul.f32 %v458, %v555
        %v560 = vmul.f32 %v462, %v543
        %v561 = vmul.f32 %v462, %v547
        %v562 = vmul.f32 %v462, %v551
        %v563 = vmul.f32 %v462, %v555
        %v564 = vmul.f32 %v466, %v543
        %v565 = vmul.f32 %v466, %v547
        %v566 = vmul.f32 %v466, %v551
        %v567 = vmul.f32 %v466, %v555
        %v568 = vmul.f32 %v470, %v543
        %v569 = vmul.f32 %v470, %v547
        %v570 = vmul.f32 %v470, %v551
        %v571 = vmul.f32 %v470, %v555
        %v572 = vmul.f32 %v474, %v543
        %v573 = vmul.f32 %v474, %v547
        %v574 = vmul.f32 %v474, %v551
        %v575 = vmul.f32 %v474, %v555
        %v576 = vmul.f32 %v478, %v543
        %v577 = vmul.f32 %v478, %v547
        %v578 = vmul.f32 %v478, %v551
        %v579 = vmul.f32 %v478, %v555
        %v580 = vmul.f32 %v482, %v543
        %v581 = vmul.f32 %v482, %v547
        %v582 = vmul.f32 %v482, %v551
        %v583 = vmul.f32 %v482, %v555
        %v584 = vmul.f32 %v486, %v543
        %v585 = vmul.f32 %v486, %v547
        %v586 = vmul.f32 %v486, %v551
        %v587 = vmul.f32 %v486, %v555
        %v588 = vmul.f32 %v490, %v543
        %v589 = vmul.f32 %v490, %v547
        %v590 = vmul.f32 %v490, %v551
        %v591 = vmul.f32 %v490, %v555
        %v592 = vmul.f32 %v494, %v543
        %v593 = vmul.f32 %v494, %v547
        %v594 = vmul.f32 %v494, %v551
        %v595 = vmul.f32 %v494, %v555
        %v596 = vmul.f32 %v498, %v543
        %v597 = vmul.f32 %v498, %v547
        %v598 = vmul.f32 %v498, %v551
        %v599 = vmul.f32 %v498, %v555
        %v600 = vmul.f32 %v502, %v543
        %v601 = vmul.f32 %v502, %v547
        %v602 = vmul.f32 %v502, %v551
        %v603 = vmul.f32 %v502, %v555
        %v604 = vmul.f32 %v506, %v543
        %v605 = vmul.f32 %v506, %v547
        %v606 = vmul.f32 %v506, %v551
        %v607 = vmul.f32 %v506, %v555
        %v608 = vmul.f32 %v510, %v543
        %v609 = vmul.f32 %v510, %v547
        %v610 = vmul.f32 %v510, %v551
        %v611 = vmul.f32 %v510, %v555
        %v612 = vmul.f32 %v514, %v543
        %v613 = vmul.f32 %v514, %v547
        %v614 = vmul.f32 %v514, %v551
        %v615 = vmul.f32 %v514, %v555
        %v616 = vmul.f32 %v518, %v543
        %v617 = vmul.f32 %v518, %v547
        %v618 = vmul.f32 %v518, %v551
        %v619 = vmul.f32 %v518, %v555
        %v620 = vadd.f32 %v392, %v556
        %v621 = vadd.f32 %v393, %v557
        %v622 = vadd.f32 %v394, %v558
        %v623 = vadd.f32 %v395, %v559
        %v624 = vadd.f32 %v396, %v560
        %v625 = vadd.f32 %v397, %v561
        %v626 = vadd.f32 %v398, %v562
        %v627 = vadd.f32 %v399, %v563
        %v628 = vadd.f32 %v400, %v564
        %v629 = vadd.f32 %v401, %v565
        %v630 = vadd.f32 %v402, %v566
        %v631 = vadd.f32 %v403, %v567
        %v632 = vadd.f32 %v404, %v568
        %v633 = vadd.f32 %v405, %v569
        %v634 = vadd.f32 %v406, %v570
        %v635 = vadd.f32 %v407, %v571
        %v636 = vadd.f32 %v408, %v572
        %v637 = vadd.f32 %v409, %v573
        %v638 = vadd.f32 %v410, %v574
        %v639 = vadd.f32 %v411, %v575
        %v640 = vadd.f32 %v412, %v576
        %v641 = vadd.f32 %v413, %v577
        %v642 = vadd.f32 %v414, %v578
        %v643 = vadd.f32 %v415, %v579
        %v644 = vadd.f32 %v416, %v580
        %v645 = vadd.f32 %v417, %v581
        %v646 = vadd.f32 %v418, %v582
        %v647 = vadd.f32 %v419, %v583
        %v648 = vadd.f32 %v420, %v584
        %v649 = vadd.f32 %v421, %v585
        %v650 = vadd.f32 %v422, %v586
        %v651 = vadd.f32 %v423, %v587
        %v652 = vadd.f32 %v424, %v588
        %v653 = vadd.f32 %v425, %v589
        %v654 = vadd.f32 %v426, %v590
        %v655 = vadd.f32 %v427, %v591
        %v656 = vadd.f32 %v428, %v592
        %v657 = vadd.f32 %v429, %v593
        %v658 = vadd.f32 %v430, %v594
        %v659 = vadd.f32 %v431, %v595
        %v660 = vadd.f32 %v432, %v596
        %v661 = vadd.f32 %v433, %v597
        %v662 = vadd.f32 %v434, %v598
        %v663 = vadd.f32 %v435, %v599
        %v664 = vadd.f32 %v436, %v600
        %v665 = vadd.f32 %v437, %v601
        %v666 = vadd.f32 %v438, %v602
        %v667 = vadd.f32 %v439, %v603
        %v668 = vadd.f32 %v440, %v604
        %v669 = vadd.f32 %v441, %v605
        %v670 = vadd.f32 %v442, %v606
        %v671 = vadd.f32 %v443, %v607
        %v672 = vadd.f32 %v444, %v608
        %v673 = vadd.f32 %v445, %v609
        %v674 = vadd.f32 %v446, %v610
        %v675 = vadd.f32 %v447, %v611
        %v676 = vadd.f32 %v448, %v612
        %v677 = vadd.f32 %v449, %v613
        %v678 = vadd.f32 %v450, %v614
        %v679 = vadd.f32 %v451, %v615
        %v680 = vadd.f32 %v452, %v616
        %v681 = vadd.f32 %v453, %v617
        %v682 = vadd.f32 %v454, %v618
        %v683 = vadd.f32 %v455, %v619
        %684 = vset.pattern.permute.xlu0 6
        %685 = vperm.xlu0 %684, %v259
        %v686 = vpop.permute.xlu0 %685
        %688 = vset.pattern.permute.xlu0 6
        %689 = vperm.xlu0 %688, %v260
        %v690 = vpop.permute.xlu0 %689
        %692 = vset.pattern.permute.xlu0 6
        %693 = vperm.xlu0 %692, %v261
        %v694 = vpop.permute.xlu0 %693
        %696 = vset.pattern.permute.xlu0 6
        %697 = vperm.xlu0 %696, %v262
        %v698 = vpop.permute.xlu0 %697
        %700 = vset.pattern.permute.xlu0 6
        %701 = vperm.xlu0 %700, %v263
        %v702 = vpop.permute.xlu0 %701
        %704 = vset.pattern.permute.xlu0 6
        %705 = vperm.xlu0 %704, %v264
        %v706 = vpop.permute.xlu0 %705
        %708 = vset.pattern.permute.xlu0 6
        %709 = vperm.xlu0 %708, %v265
        %v710 = vpop.permute.xlu0 %709
        %712 = vset.pattern.permute.xlu0 6
        %713 = vperm.xlu0 %712, %v266
        %v714 = vpop.permute.xlu0 %713
        %716 = vset.pattern.permute.xlu0 6
        %717 = vperm.xlu0 %716, %v267
        %v718 = vpop.permute.xlu0 %717
        %720 = vset.pattern.permute.xlu0 6
        %721 = vperm.xlu0 %720, %v268
        %v722 = vpop.permute.xlu0 %721
        %724 = vset.pattern.permute.xlu0 6
        %725 = vperm.xlu0 %724, %v269
        %v726 = vpop.permute.xlu0 %725
        %728 = vset.pattern.permute.xlu0 6
        %729 = vperm.xlu0 %728, %v270
        %v730 = vpop.permute.xlu0 %729
        %732 = vset.pattern.permute.xlu0 6
        %733 = vperm.xlu0 %732, %v271
        %v734 = vpop.permute.xlu0 %733
        %736 = vset.pattern.permute.xlu0 6
        %737 = vperm.xlu0 %736, %v272
        %v738 = vpop.permute.xlu0 %737
        %740 = vset.pattern.permute.xlu0 6
        %741 = vperm.xlu0 %740, %v273
        %v742 = vpop.permute.xlu0 %741
        %744 = vset.pattern.permute.xlu0 6
        %745 = vperm.xlu0 %744, %v274
        %v746 = vpop.permute.xlu0 %745
        %v748 = vadd.f32 %v620, %v686
        %v749 = vadd.f32 %v621, %v686
        %v750 = vadd.f32 %v622, %v686
        %v751 = vadd.f32 %v623, %v686
        %v752 = vadd.f32 %v624, %v690
        %v753 = vadd.f32 %v625, %v690
        %v754 = vadd.f32 %v626, %v690
        %v755 = vadd.f32 %v627, %v690
        %v756 = vadd.f32 %v628, %v694
        %v757 = vadd.f32 %v629, %v694
        %v758 = vadd.f32 %v630, %v694
        %v759 = vadd.f32 %v631, %v694
        %v760 = vadd.f32 %v632, %v698
        %v761 = vadd.f32 %v633, %v698
        %v762 = vadd.f32 %v634, %v698
        %v763 = vadd.f32 %v635, %v698
        %v764 = vadd.f32 %v636, %v702
        %v765 = vadd.f32 %v637, %v702
        %v766 = vadd.f32 %v638, %v702
        %v767 = vadd.f32 %v639, %v702
        %v768 = vadd.f32 %v640, %v706
        %v769 = vadd.f32 %v641, %v706
        %v770 = vadd.f32 %v642, %v706
        %v771 = vadd.f32 %v643, %v706
        %v772 = vadd.f32 %v644, %v710
        %v773 = vadd.f32 %v645, %v710
        %v774 = vadd.f32 %v646, %v710
        %v775 = vadd.f32 %v647, %v710
        %v776 = vadd.f32 %v648, %v714
        %v777 = vadd.f32 %v649, %v714
        %v778 = vadd.f32 %v650, %v714
        %v779 = vadd.f32 %v651, %v714
        %v780 = vadd.f32 %v652, %v718
        %v781 = vadd.f32 %v653, %v718
        %v782 = vadd.f32 %v654, %v718
        %v783 = vadd.f32 %v655, %v718
        %v784 = vadd.f32 %v656, %v722
        %v785 = vadd.f32 %v657, %v722
        %v786 = vadd.f32 %v658, %v722
        %v787 = vadd.f32 %v659, %v722
        %v788 = vadd.f32 %v660, %v726
        %v789 = vadd.f32 %v661, %v726
        %v790 = vadd.f32 %v662, %v726
        %v791 = vadd.f32 %v663, %v726
        %v792 = vadd.f32 %v664, %v730
        %v793 = vadd.f32 %v665, %v730
        %v794 = vadd.f32 %v666, %v730
        %v795 = vadd.f32 %v667, %v730
        %v796 = vadd.f32 %v668, %v734
        %v797 = vadd.f32 %v669, %v734
        %v798 = vadd.f32 %v670, %v734
        %v799 = vadd.f32 %v671, %v734
        %v800 = vadd.f32 %v672, %v738
        %v801 = vadd.f32 %v673, %v738
        %v802 = vadd.f32 %v674, %v738
        %v803 = vadd.f32 %v675, %v738
        %v804 = vadd.f32 %v676, %v742
        %v805 = vadd.f32 %v677, %v742
        %v806 = vadd.f32 %v678, %v742
        %v807 = vadd.f32 %v679, %v742
        %v808 = vadd.f32 %v680, %v746
        %v809 = vadd.f32 %v681, %v746
        %v810 = vadd.f32 %v682, %v746
        %v811 = vadd.f32 %v683, %v746
        %v812 = vand.u32 2147483647, %v748
        %vm813 = vcmp.le.f32.partialorder %v812, 0.7853982
        %vm814 = vcmp.lt.s32.totalorder %v748, 0
        %v815 = vand.u32 %v748, 2139095040
        %v816 = vshrl.u32 %v815, 23
        %v817 = vsub.s32 %v816, 127
        %v818 = vand.u32 2147483647, %v748
        %v819 = vand.u32 %v818, 8388607
        %v820 = vor.u32 %v819, 8388608
        %v821 = vsub.s32 0, %v820
        %v822 = vadd.s32 %v817, 1
        %vm823 = vcmp.gt.s32.totalorder %v822, 0
        %v824 = vsel %vm823, %v822, 0
        %v825 = vshrl.u32 %v824, 5
        %v826 = vand.u32 %v824, 31
        %v827 = vsub.s32 32, %v826
        %v828 = vshrl.u32 683565275, %v827
        %v829 = vshll.u32 683565275, %v826
        %v830 = vshrl.u32 2475754826, %v827
        %v831 = vor.u32 %v829, %v830
        %v832 = vshll.u32 2475754826, %v826
        %v833 = vshrl.u32 2131351028, %v827
        %v834 = vor.u32 %v832, %v833
        %v835 = vshll.u32 2131351028, %v826
        %v836 = vshrl.u32 2102212464, %v827
        %v837 = vor.u32 %v835, %v836
        %v838 = vshll.u32 2102212464, %v826
        %v839 = vshrl.u32 920167782, %v827
        %v840 = vor.u32 %v838, %v839
        %v841 = vshll.u32 920167782, %v826
        %v842 = vshrl.u32 1326507024, %v827
        %v843 = vor.u32 %v841, %v842
        %vm844 = vcmp.lt.s32.totalorder %v825, 1
        %vm845 = vcmp.lt.s32.totalorder %v825, 2
        %vm846 = vcmp.lt.s32.totalorder %v825, 3
        %vm847 = vcmp.lt.s32.totalorder %v825, 4
        %v848 = vsel %vm844, %v828, %v831
        %v849 = vsel %vm847, %v837, 2102212464
        %v850 = vsel %vm846, %v834, %v849
        %v851 = vsel %vm845, %v848, %v850
        %v852 = vsel %vm844, %v831, %v834
        %v853 = vsel %vm847, %v840, 920167782
        %v854 = vsel %vm846, %v837, %v853
        %v855 = vsel %vm845, %v852, %v854
        %v856 = vsel %vm844, %v834, %v837
        %v857 = vsel %vm847, %v843, 1326507024
        %v858 = vsel %vm846, %v840, %v857
        %v859 = vsel %vm845, %v856, %v858
        %v860 = vshll.u32 %v820, 8
        %v861 = vmul.u32.u64.compose %v860, %v859
        %v862 = vextract.low.u32 %v861
        %v863 = vextract.high.u32 %v861
        %v864 = vmul.u32.u64.compose %v860, %v855
        %v865 = vextract.low.u32 %v864
        %v866 = vextract.high.u32 %v864
        %v867 = vmul.u32 %v860, %v851
        %v868 = vadd.s32 %v863, %v865
        %vm869 = vc.u32 %v863, %v865
        %v870 = vadd.s32 %v866, 1
        %v871 = vsel %vm869, %v870, %v866
        %v872 = vadd.s32 %v867, %v871
        %v873 = vadd.s32 %v872, 536870912
        %v874 = vshrl.u32 %v873, 30
        %v875 = vshll.u32 %v874, 30
        %v876 = vsub.s32 %v872, %v875
        %vm877 = vcmp.lt.s32.totalorder %v876, 0
        %v878 = vsub.s32 0, %v876
        %v879 = vsel %vm877, %v878, %v876
        %v880 = vclz %v879
        %v881 = vsub.s32 %v880, 2
        %vm882 = vcmp.gt.s32.totalorder 0, %v881
        %v883 = vsel %vm882, 0, %v881
        %v884 = vsub.s32 32, %v883
        %v885 = vshll.u32 %v876, %v883
        %v886 = vshrl.u32 %v868, %v884
        %v887 = vor.u32 %v885, %v886
        %v888 = vsub.s32 4294967266, %v883
        %v889 = vadd.s32 %v888, 127
        %v890 = vshll.u32 %v889, 23
        %v891 = vor.u32 4788187, %v890
        %v892 = vand.u32 2147483647, %v891
        %v894 = vcvt.s32.f32 %v887
        %v895 = vmul.f32 %v894, %v892
        %v896 = vxor.u32 %v895, 2147483648
        %v897 = vsel %vm814, %v896, %v895
        %v898 = vsub.s32 4, %v874
        %v899 = vsel %vm814, %v898, %v874
        %v900 = vsel %vm813, %v748, %v897
        %v901 = vsel %vm813, 0, %v899
        %v902 = vcosq.f32.pop %v900
        %v903 = vsinq.f32.pop %v900
        %vm904 = vweird.f32 %v748
        %v905 = vadd.s32 %v901, 3
        %v906 = vand.u32 %v905, 3
        %vm907 = vcmp.lt.s32.totalorder %v906, 2
        %vm908 = vcmp.eq.s32.totalorder %v906, 0
        %v909 = vxor.u32 %v903, 2147483648
        %v910 = vsel %vm908, %v902, %v909
        %vm911 = vcmp.eq.s32.totalorder %v906, 2
        %v912 = vxor.u32 %v902, 2147483648
        %v913 = vsel %vm911, %v912, %v903
        %v914 = vsel %vm907, %v910, %v913
        %v915 = vsel %vm904, nan, %v914
        %v916 = vand.u32 2147483647, %v749
        %vm917 = vcmp.le.f32.partialorder %v916, 0.7853982
        %vm918 = vcmp.lt.s32.totalorder %v749, 0
        %v919 = vand.u32 %v749, 2139095040
        %v920 = vshrl.u32 %v919, 23
        %v921 = vsub.s32 %v920, 127
        %v922 = vand.u32 2147483647, %v749
        %v923 = vand.u32 %v922, 8388607
        %v924 = vor.u32 %v923, 8388608
        %v925 = vsub.s32 0, %v924
        %v926 = vadd.s32 %v921, 1
        %vm927 = vcmp.gt.s32.totalorder %v926, 0
        %v928 = vsel %vm927, %v926, 0
        %v929 = vshrl.u32 %v928, 5
        %v930 = vand.u32 %v928, 31
        %v931 = vsub.s32 32, %v930
        %v932 = vshrl.u32 683565275, %v931
        %v933 = vshll.u32 683565275, %v930
        %v934 = vshrl.u32 2475754826, %v931
        %v935 = vor.u32 %v933, %v934
        %v936 = vshll.u32 2475754826, %v930
        %v937 = vshrl.u32 2131351028, %v931
        %v938 = vor.u32 %v936, %v937
        %v939 = vshll.u32 2131351028, %v930
        %v940 = vshrl.u32 2102212464, %v931
        %v941 = vor.u32 %v939, %v940
        %v942 = vshll.u32 2102212464, %v930
        %v943 = vshrl.u32 920167782, %v931
        %v944 = vor.u32 %v942, %v943
        %v945 = vshll.u32 920167782, %v930
        %v946 = vshrl.u32 1326507024, %v931
        %v947 = vor.u32 %v945, %v946
        %vm948 = vcmp.lt.s32.totalorder %v929, 1
        %vm949 = vcmp.lt.s32.totalorder %v929, 2
        %vm950 = vcmp.lt.s32.totalorder %v929, 3
        %vm951 = vcmp.lt.s32.totalorder %v929, 4
        %v952 = vsel %vm948, %v932, %v935
        %v953 = vsel %vm951, %v941, 2102212464
        %v954 = vsel %vm950, %v938, %v953
        %v955 = vsel %vm949, %v952, %v954
        %v956 = vsel %vm948, %v935, %v938
        %v957 = vsel %vm951, %v944, 920167782
        %v958 = vsel %vm950, %v941, %v957
        %v959 = vsel %vm949, %v956, %v958
        %v960 = vsel %vm948, %v938, %v941
        %v961 = vsel %vm951, %v947, 1326507024
        %v962 = vsel %vm950, %v944, %v961
        %v963 = vsel %vm949, %v960, %v962
        %v964 = vshll.u32 %v924, 8
        %v965 = vmul.u32.u64.compose %v964, %v963
        %v966 = vextract.low.u32 %v965
        %v967 = vextract.high.u32 %v965
        %v968 = vmul.u32.u64.compose %v964, %v959
        %v969 = vextract.low.u32 %v968
        %v970 = vextract.high.u32 %v968
        %v971 = vmul.u32 %v964, %v955
        %v972 = vadd.s32 %v967, %v969
        %vm973 = vc.u32 %v967, %v969
        %v974 = vadd.s32 %v970, 1
        %v975 = vsel %vm973, %v974, %v970
        %v976 = vadd.s32 %v971, %v975
        %v977 = vadd.s32 %v976, 536870912
        %v978 = vshrl.u32 %v977, 30
        %v979 = vshll.u32 %v978, 30
        %v980 = vsub.s32 %v976, %v979
        %vm981 = vcmp.lt.s32.totalorder %v980, 0
        %v982 = vsub.s32 0, %v980
        %v983 = vsel %vm981, %v982, %v980
        %v984 = vclz %v983
        %v985 = vsub.s32 %v984, 2
        %vm986 = vcmp.gt.s32.totalorder 0, %v985
        %v987 = vsel %vm986, 0, %v985
        %v988 = vsub.s32 32, %v987
        %v989 = vshll.u32 %v980, %v987
        %v990 = vshrl.u32 %v972, %v988
        %v991 = vor.u32 %v989, %v990
        %v992 = vsub.s32 4294967266, %v987
        %v993 = vadd.s32 %v992, 127
        %v994 = vshll.u32 %v993, 23
        %v995 = vor.u32 4788187, %v994
        %v996 = vand.u32 2147483647, %v995
        %v998 = vcvt.s32.f32 %v991
        %v999 = vmul.f32 %v998, %v996
        %v1000 = vxor.u32 %v999, 2147483648
        %v1001 = vsel %vm918, %v1000, %v999
        %v1002 = vsub.s32 4, %v978
        %v1003 = vsel %vm918, %v1002, %v978
        %v1004 = vsel %vm917, %v749, %v1001
        %v1005 = vsel %vm917, 0, %v1003
        %v1006 = vcosq.f32.pop %v1004
        %v1007 = vsinq.f32.pop %v1004
        %vm1008 = vweird.f32 %v749
        %v1009 = vadd.s32 %v1005, 3
        %v1010 = vand.u32 %v1009, 3
        %vm1011 = vcmp.lt.s32.totalorder %v1010, 2
        %vm1012 = vcmp.eq.s32.totalorder %v1010, 0
        %v1013 = vxor.u32 %v1007, 2147483648
        %v1014 = vsel %vm1012, %v1006, %v1013
        %vm1015 = vcmp.eq.s32.totalorder %v1010, 2
        %v1016 = vxor.u32 %v1006, 2147483648
        %v1017 = vsel %vm1015, %v1016, %v1007
        %v1018 = vsel %vm1011, %v1014, %v1017
        %v1019 = vsel %vm1008, nan, %v1018
        %v1020 = vand.u32 2147483647, %v750
        %vm1021 = vcmp.le.f32.partialorder %v1020, 0.7853982
        %vm1022 = vcmp.lt.s32.totalorder %v750, 0
        %v1023 = vand.u32 %v750, 2139095040
        %v1024 = vshrl.u32 %v1023, 23
        %v1025 = vsub.s32 %v1024, 127
        %v1026 = vand.u32 2147483647, %v750
        %v1027 = vand.u32 %v1026, 8388607
        %v1028 = vor.u32 %v1027, 8388608
        %v1029 = vsub.s32 0, %v1028
        %v1030 = vadd.s32 %v1025, 1
        %vm1031 = vcmp.gt.s32.totalorder %v1030, 0
        %v1032 = vsel %vm1031, %v1030, 0
        %v1033 = vshrl.u32 %v1032, 5
        %v1034 = vand.u32 %v1032, 31
        %v1035 = vsub.s32 32, %v1034
        %v1036 = vshrl.u32 683565275, %v1035
        %v1037 = vshll.u32 683565275, %v1034
        %v1038 = vshrl.u32 2475754826, %v1035
        %v1039 = vor.u32 %v1037, %v1038
        %v1040 = vshll.u32 2475754826, %v1034
        %v1041 = vshrl.u32 2131351028, %v1035
        %v1042 = vor.u32 %v1040, %v1041
        %v1043 = vshll.u32 2131351028, %v1034
        %v1044 = vshrl.u32 2102212464, %v1035
        %v1045 = vor.u32 %v1043, %v1044
        %v1046 = vshll.u32 2102212464, %v1034
        %v1047 = vshrl.u32 920167782, %v1035
        %v1048 = vor.u32 %v1046, %v1047
        %v1049 = vshll.u32 920167782, %v1034
        %v1050 = vshrl.u32 1326507024, %v1035
        %v1051 = vor.u32 %v1049, %v1050
        %vm1052 = vcmp.lt.s32.totalorder %v1033, 1
        %vm1053 = vcmp.lt.s32.totalorder %v1033, 2
        %vm1054 = vcmp.lt.s32.totalorder %v1033, 3
        %vm1055 = vcmp.lt.s32.totalorder %v1033, 4
        %v1056 = vsel %vm1052, %v1036, %v1039
        %v1057 = vsel %vm1055, %v1045, 2102212464
        %v1058 = vsel %vm1054, %v1042, %v1057
        %v1059 = vsel %vm1053, %v1056, %v1058
        %v1060 = vsel %vm1052, %v1039, %v1042
        %v1061 = vsel %vm1055, %v1048, 920167782
        %v1062 = vsel %vm1054, %v1045, %v1061
        %v1063 = vsel %vm1053, %v1060, %v1062
        %v1064 = vsel %vm1052, %v1042, %v1045
        %v1065 = vsel %vm1055, %v1051, 1326507024
        %v1066 = vsel %vm1054, %v1048, %v1065
        %v1067 = vsel %vm1053, %v1064, %v1066
        %v1068 = vshll.u32 %v1028, 8
        %v1069 = vmul.u32.u64.compose %v1068, %v1067
        %v1070 = vextract.low.u32 %v1069
        %v1071 = vextract.high.u32 %v1069
        %v1072 = vmul.u32.u64.compose %v1068, %v1063
        %v1073 = vextract.low.u32 %v1072
        %v1074 = vextract.high.u32 %v1072
        %v1075 = vmul.u32 %v1068, %v1059
        %v1076 = vadd.s32 %v1071, %v1073
        %vm1077 = vc.u32 %v1071, %v1073
        %v1078 = vadd.s32 %v1074, 1
        %v1079 = vsel %vm1077, %v1078, %v1074
        %v1080 = vadd.s32 %v1075, %v1079
        %v1081 = vadd.s32 %v1080, 536870912
        %v1082 = vshrl.u32 %v1081, 30
        %v1083 = vshll.u32 %v1082, 30
        %v1084 = vsub.s32 %v1080, %v1083
        %vm1085 = vcmp.lt.s32.totalorder %v1084, 0
        %v1086 = vsub.s32 0, %v1084
        %v1087 = vsel %vm1085, %v1086, %v1084
        %v1088 = vclz %v1087
        %v1089 = vsub.s32 %v1088, 2
        %vm1090 = vcmp.gt.s32.totalorder 0, %v1089
        %v1091 = vsel %vm1090, 0, %v1089
        %v1092 = vsub.s32 32, %v1091
        %v1093 = vshll.u32 %v1084, %v1091
        %v1094 = vshrl.u32 %v1076, %v1092
        %v1095 = vor.u32 %v1093, %v1094
        %v1096 = vsub.s32 4294967266, %v1091
        %v1097 = vadd.s32 %v1096, 127
        %v1098 = vshll.u32 %v1097, 23
        %v1099 = vor.u32 4788187, %v1098
        %v1100 = vand.u32 2147483647, %v1099
        %v1102 = vcvt.s32.f32 %v1095
        %v1103 = vmul.f32 %v1102, %v1100
        %v1104 = vxor.u32 %v1103, 2147483648
        %v1105 = vsel %vm1022, %v1104, %v1103
        %v1106 = vsub.s32 4, %v1082
        %v1107 = vsel %vm1022, %v1106, %v1082
        %v1108 = vsel %vm1021, %v750, %v1105
        %v1109 = vsel %vm1021, 0, %v1107
        %v1110 = vcosq.f32.pop %v1108
        %v1111 = vsinq.f32.pop %v1108
        %vm1112 = vweird.f32 %v750
        %v1113 = vadd.s32 %v1109, 3
        %v1114 = vand.u32 %v1113, 3
        %vm1115 = vcmp.lt.s32.totalorder %v1114, 2
        %vm1116 = vcmp.eq.s32.totalorder %v1114, 0
        %v1117 = vxor.u32 %v1111, 2147483648
        %v1118 = vsel %vm1116, %v1110, %v1117
        %vm1119 = vcmp.eq.s32.totalorder %v1114, 2
        %v1120 = vxor.u32 %v1110, 2147483648
        %v1121 = vsel %vm1119, %v1120, %v1111
        %v1122 = vsel %vm1115, %v1118, %v1121
        %v1123 = vsel %vm1112, nan, %v1122
        %v1124 = vand.u32 2147483647, %v751
        %vm1125 = vcmp.le.f32.partialorder %v1124, 0.7853982
        %vm1126 = vcmp.lt.s32.totalorder %v751, 0
        %v1127 = vand.u32 %v751, 2139095040
        %v1128 = vshrl.u32 %v1127, 23
        %v1129 = vsub.s32 %v1128, 127
        %v1130 = vand.u32 2147483647, %v751
        %v1131 = vand.u32 %v1130, 8388607
        %v1132 = vor.u32 %v1131, 8388608
        %v1133 = vsub.s32 0, %v1132
        %v1134 = vadd.s32 %v1129, 1
        %vm1135 = vcmp.gt.s32.totalorder %v1134, 0
        %v1136 = vsel %vm1135, %v1134, 0
        %v1137 = vshrl.u32 %v1136, 5
        %v1138 = vand.u32 %v1136, 31
        %v1139 = vsub.s32 32, %v1138
        %v1140 = vshrl.u32 683565275, %v1139
        %v1141 = vshll.u32 683565275, %v1138
        %v1142 = vshrl.u32 2475754826, %v1139
        %v1143 = vor.u32 %v1141, %v1142
        %v1144 = vshll.u32 2475754826, %v1138
        %v1145 = vshrl.u32 2131351028, %v1139
        %v1146 = vor.u32 %v1144, %v1145
        %v1147 = vshll.u32 2131351028, %v1138
        %v1148 = vshrl.u32 2102212464, %v1139
        %v1149 = vor.u32 %v1147, %v1148
        %v1150 = vshll.u32 2102212464, %v1138
        %v1151 = vshrl.u32 920167782, %v1139
        %v1152 = vor.u32 %v1150, %v1151
        %v1153 = vshll.u32 920167782, %v1138
        %v1154 = vshrl.u32 1326507024, %v1139
        %v1155 = vor.u32 %v1153, %v1154
        %vm1156 = vcmp.lt.s32.totalorder %v1137, 1
        %vm1157 = vcmp.lt.s32.totalorder %v1137, 2
        %vm1158 = vcmp.lt.s32.totalorder %v1137, 3
        %vm1159 = vcmp.lt.s32.totalorder %v1137, 4
        %v1160 = vsel %vm1156, %v1140, %v1143
        %v1161 = vsel %vm1159, %v1149, 2102212464
        %v1162 = vsel %vm1158, %v1146, %v1161
        %v1163 = vsel %vm1157, %v1160, %v1162
        %v1164 = vsel %vm1156, %v1143, %v1146
        %v1165 = vsel %vm1159, %v1152, 920167782
        %v1166 = vsel %vm1158, %v1149, %v1165
        %v1167 = vsel %vm1157, %v1164, %v1166
        %v1168 = vsel %vm1156, %v1146, %v1149
        %v1169 = vsel %vm1159, %v1155, 1326507024
        %v1170 = vsel %vm1158, %v1152, %v1169
        %v1171 = vsel %vm1157, %v1168, %v1170
        %v1172 = vshll.u32 %v1132, 8
        %v1173 = vmul.u32.u64.compose %v1172, %v1171
        %v1174 = vextract.low.u32 %v1173
        %v1175 = vextract.high.u32 %v1173
        %v1176 = vmul.u32.u64.compose %v1172, %v1167
        %v1177 = vextract.low.u32 %v1176
        %v1178 = vextract.high.u32 %v1176
        %v1179 = vmul.u32 %v1172, %v1163
        %v1180 = vadd.s32 %v1175, %v1177
        %vm1181 = vc.u32 %v1175, %v1177
        %v1182 = vadd.s32 %v1178, 1
        %v1183 = vsel %vm1181, %v1182, %v1178
        %v1184 = vadd.s32 %v1179, %v1183
        %v1185 = vadd.s32 %v1184, 536870912
        %v1186 = vshrl.u32 %v1185, 30
        %v1187 = vshll.u32 %v1186, 30
        %v1188 = vsub.s32 %v1184, %v1187
        %vm1189 = vcmp.lt.s32.totalorder %v1188, 0
        %v1190 = vsub.s32 0, %v1188
        %v1191 = vsel %vm1189, %v1190, %v1188
        %v1192 = vclz %v1191
        %v1193 = vsub.s32 %v1192, 2
        %vm1194 = vcmp.gt.s32.totalorder 0, %v1193
        %v1195 = vsel %vm1194, 0, %v1193
        %v1196 = vsub.s32 32, %v1195
        %v1197 = vshll.u32 %v1188, %v1195
        %v1198 = vshrl.u32 %v1180, %v1196
        %v1199 = vor.u32 %v1197, %v1198
        %v1200 = vsub.s32 4294967266, %v1195
        %v1201 = vadd.s32 %v1200, 127
        %v1202 = vshll.u32 %v1201, 23
        %v1203 = vor.u32 4788187, %v1202
        %v1204 = vand.u32 2147483647, %v1203
        %v1206 = vcvt.s32.f32 %v1199
        %v1207 = vmul.f32 %v1206, %v1204
        %v1208 = vxor.u32 %v1207, 2147483648
        %v1209 = vsel %vm1126, %v1208, %v1207
        %v1210 = vsub.s32 4, %v1186
        %v1211 = vsel %vm1126, %v1210, %v1186
        %v1212 = vsel %vm1125, %v751, %v1209
        %v1213 = vsel %vm1125, 0, %v1211
        %v1214 = vcosq.f32.pop %v1212
        %v1215 = vsinq.f32.pop %v1212
        %vm1216 = vweird.f32 %v751
        %v1217 = vadd.s32 %v1213, 3
        %v1218 = vand.u32 %v1217, 3
        %vm1219 = vcmp.lt.s32.totalorder %v1218, 2
        %vm1220 = vcmp.eq.s32.totalorder %v1218, 0
        %v1221 = vxor.u32 %v1215, 2147483648
        %v1222 = vsel %vm1220, %v1214, %v1221
        %vm1223 = vcmp.eq.s32.totalorder %v1218, 2
        %v1224 = vxor.u32 %v1214, 2147483648
        %v1225 = vsel %vm1223, %v1224, %v1215
        %v1226 = vsel %vm1219, %v1222, %v1225
        %v1227 = vsel %vm1216, nan, %v1226
        %v1228 = vand.u32 2147483647, %v752
        %vm1229 = vcmp.le.f32.partialorder %v1228, 0.7853982
        %vm1230 = vcmp.lt.s32.totalorder %v752, 0
        %v1231 = vand.u32 %v752, 2139095040
        %v1232 = vshrl.u32 %v1231, 23
        %v1233 = vsub.s32 %v1232, 127
        %v1234 = vand.u32 2147483647, %v752
        %v1235 = vand.u32 %v1234, 8388607
        %v1236 = vor.u32 %v1235, 8388608
        %v1237 = vsub.s32 0, %v1236
        %v1238 = vadd.s32 %v1233, 1
        %vm1239 = vcmp.gt.s32.totalorder %v1238, 0
        %v1240 = vsel %vm1239, %v1238, 0
        %v1241 = vshrl.u32 %v1240, 5
        %v1242 = vand.u32 %v1240, 31
        %v1243 = vsub.s32 32, %v1242
        %v1244 = vshrl.u32 683565275, %v1243
        %v1245 = vshll.u32 683565275, %v1242
        %v1246 = vshrl.u32 2475754826, %v1243
        %v1247 = vor.u32 %v1245, %v1246
        %v1248 = vshll.u32 2475754826, %v1242
        %v1249 = vshrl.u32 2131351028, %v1243
        %v1250 = vor.u32 %v1248, %v1249
        %v1251 = vshll.u32 2131351028, %v1242
        %v1252 = vshrl.u32 2102212464, %v1243
        %v1253 = vor.u32 %v1251, %v1252
        %v1254 = vshll.u32 2102212464, %v1242
        %v1255 = vshrl.u32 920167782, %v1243
        %v1256 = vor.u32 %v1254, %v1255
        %v1257 = vshll.u32 920167782, %v1242
        %v1258 = vshrl.u32 1326507024, %v1243
        %v1259 = vor.u32 %v1257, %v1258
        %vm1260 = vcmp.lt.s32.totalorder %v1241, 1
        %vm1261 = vcmp.lt.s32.totalorder %v1241, 2
        %vm1262 = vcmp.lt.s32.totalorder %v1241, 3
        %vm1263 = vcmp.lt.s32.totalorder %v1241, 4
        %v1264 = vsel %vm1260, %v1244, %v1247
        %v1265 = vsel %vm1263, %v1253, 2102212464
        %v1266 = vsel %vm1262, %v1250, %v1265
        %v1267 = vsel %vm1261, %v1264, %v1266
        %v1268 = vsel %vm1260, %v1247, %v1250
        %v1269 = vsel %vm1263, %v1256, 920167782
        %v1270 = vsel %vm1262, %v1253, %v1269
        %v1271 = vsel %vm1261, %v1268, %v1270
        %v1272 = vsel %vm1260, %v1250, %v1253
        %v1273 = vsel %vm1263, %v1259, 1326507024
        %v1274 = vsel %vm1262, %v1256, %v1273
        %v1275 = vsel %vm1261, %v1272, %v1274
        %v1276 = vshll.u32 %v1236, 8
        %v1277 = vmul.u32.u64.compose %v1276, %v1275
        %v1278 = vextract.low.u32 %v1277
        %v1279 = vextract.high.u32 %v1277
        %v1280 = vmul.u32.u64.compose %v1276, %v1271
        %v1281 = vextract.low.u32 %v1280
        %v1282 = vextract.high.u32 %v1280
        %v1283 = vmul.u32 %v1276, %v1267
        %v1284 = vadd.s32 %v1279, %v1281
        %vm1285 = vc.u32 %v1279, %v1281
        %v1286 = vadd.s32 %v1282, 1
        %v1287 = vsel %vm1285, %v1286, %v1282
        %v1288 = vadd.s32 %v1283, %v1287
        %v1289 = vadd.s32 %v1288, 536870912
        %v1290 = vshrl.u32 %v1289, 30
        %v1291 = vshll.u32 %v1290, 30
        %v1292 = vsub.s32 %v1288, %v1291
        %vm1293 = vcmp.lt.s32.totalorder %v1292, 0
        %v1294 = vsub.s32 0, %v1292
        %v1295 = vsel %vm1293, %v1294, %v1292
        %v1296 = vclz %v1295
        %v1297 = vsub.s32 %v1296, 2
        %vm1298 = vcmp.gt.s32.totalorder 0, %v1297
        %v1299 = vsel %vm1298, 0, %v1297
        %v1300 = vsub.s32 32, %v1299
        %v1301 = vshll.u32 %v1292, %v1299
        %v1302 = vshrl.u32 %v1284, %v1300
        %v1303 = vor.u32 %v1301, %v1302
        %v1304 = vsub.s32 4294967266, %v1299
        %v1305 = vadd.s32 %v1304, 127
        %v1306 = vshll.u32 %v1305, 23
        %v1307 = vor.u32 4788187, %v1306
        %v1308 = vand.u32 2147483647, %v1307
        %v1310 = vcvt.s32.f32 %v1303
        %v1311 = vmul.f32 %v1310, %v1308
        %v1312 = vxor.u32 %v1311, 2147483648
        %v1313 = vsel %vm1230, %v1312, %v1311
        %v1314 = vsub.s32 4, %v1290
        %v1315 = vsel %vm1230, %v1314, %v1290
        %v1316 = vsel %vm1229, %v752, %v1313
        %v1317 = vsel %vm1229, 0, %v1315
        %v1318 = vcosq.f32.pop %v1316
        %v1319 = vsinq.f32.pop %v1316
        %vm1320 = vweird.f32 %v752
        %v1321 = vadd.s32 %v1317, 3
        %v1322 = vand.u32 %v1321, 3
        %vm1323 = vcmp.lt.s32.totalorder %v1322, 2
        %vm1324 = vcmp.eq.s32.totalorder %v1322, 0
        %v1325 = vxor.u32 %v1319, 2147483648
        %v1326 = vsel %vm1324, %v1318, %v1325
        %vm1327 = vcmp.eq.s32.totalorder %v1322, 2
        %v1328 = vxor.u32 %v1318, 2147483648
        %v1329 = vsel %vm1327, %v1328, %v1319
        %v1330 = vsel %vm1323, %v1326, %v1329
        %v1331 = vsel %vm1320, nan, %v1330
        %v1332 = vand.u32 2147483647, %v753
        %vm1333 = vcmp.le.f32.partialorder %v1332, 0.7853982
        %vm1334 = vcmp.lt.s32.totalorder %v753, 0
        %v1335 = vand.u32 %v753, 2139095040
        %v1336 = vshrl.u32 %v1335, 23
        %v1337 = vsub.s32 %v1336, 127
        %v1338 = vand.u32 2147483647, %v753
        %v1339 = vand.u32 %v1338, 8388607
        %v1340 = vor.u32 %v1339, 8388608
        %v1341 = vsub.s32 0, %v1340
        %v1342 = vadd.s32 %v1337, 1
        %vm1343 = vcmp.gt.s32.totalorder %v1342, 0
        %v1344 = vsel %vm1343, %v1342, 0
        %v1345 = vshrl.u32 %v1344, 5
        %v1346 = vand.u32 %v1344, 31
        %v1347 = vsub.s32 32, %v1346
        %v1348 = vshrl.u32 683565275, %v1347
        %v1349 = vshll.u32 683565275, %v1346
        %v1350 = vshrl.u32 2475754826, %v1347
        %v1351 = vor.u32 %v1349, %v1350
        %v1352 = vshll.u32 2475754826, %v1346
        %v1353 = vshrl.u32 2131351028, %v1347
        %v1354 = vor.u32 %v1352, %v1353
        %v1355 = vshll.u32 2131351028, %v1346
        %v1356 = vshrl.u32 2102212464, %v1347
        %v1357 = vor.u32 %v1355, %v1356
        %v1358 = vshll.u32 2102212464, %v1346
        %v1359 = vshrl.u32 920167782, %v1347
        %v1360 = vor.u32 %v1358, %v1359
        %v1361 = vshll.u32 920167782, %v1346
        %v1362 = vshrl.u32 1326507024, %v1347
        %v1363 = vor.u32 %v1361, %v1362
        %vm1364 = vcmp.lt.s32.totalorder %v1345, 1
        %vm1365 = vcmp.lt.s32.totalorder %v1345, 2
        %vm1366 = vcmp.lt.s32.totalorder %v1345, 3
        %vm1367 = vcmp.lt.s32.totalorder %v1345, 4
        %v1368 = vsel %vm1364, %v1348, %v1351
        %v1369 = vsel %vm1367, %v1357, 2102212464
        %v1370 = vsel %vm1366, %v1354, %v1369
        %v1371 = vsel %vm1365, %v1368, %v1370
        %v1372 = vsel %vm1364, %v1351, %v1354
        %v1373 = vsel %vm1367, %v1360, 920167782
        %v1374 = vsel %vm1366, %v1357, %v1373
        %v1375 = vsel %vm1365, %v1372, %v1374
        %v1376 = vsel %vm1364, %v1354, %v1357
        %v1377 = vsel %vm1367, %v1363, 1326507024
        %v1378 = vsel %vm1366, %v1360, %v1377
        %v1379 = vsel %vm1365, %v1376, %v1378
        %v1380 = vshll.u32 %v1340, 8
        %v1381 = vmul.u32.u64.compose %v1380, %v1379
        %v1382 = vextract.low.u32 %v1381
        %v1383 = vextract.high.u32 %v1381
        %v1384 = vmul.u32.u64.compose %v1380, %v1375
        %v1385 = vextract.low.u32 %v1384
        %v1386 = vextract.high.u32 %v1384
        %v1387 = vmul.u32 %v1380, %v1371
        %v1388 = vadd.s32 %v1383, %v1385
        %vm1389 = vc.u32 %v1383, %v1385
        %v1390 = vadd.s32 %v1386, 1
        %v1391 = vsel %vm1389, %v1390, %v1386
        %v1392 = vadd.s32 %v1387, %v1391
        %v1393 = vadd.s32 %v1392, 536870912
        %v1394 = vshrl.u32 %v1393, 30
        %v1395 = vshll.u32 %v1394, 30
        %v1396 = vsub.s32 %v1392, %v1395
        %vm1397 = vcmp.lt.s32.totalorder %v1396, 0
        %v1398 = vsub.s32 0, %v1396
        %v1399 = vsel %vm1397, %v1398, %v1396
        %v1400 = vclz %v1399
        %v1401 = vsub.s32 %v1400, 2
        %vm1402 = vcmp.gt.s32.totalorder 0, %v1401
        %v1403 = vsel %vm1402, 0, %v1401
        %v1404 = vsub.s32 32, %v1403
        %v1405 = vshll.u32 %v1396, %v1403
        %v1406 = vshrl.u32 %v1388, %v1404
        %v1407 = vor.u32 %v1405, %v1406
        %v1408 = vsub.s32 4294967266, %v1403
        %v1409 = vadd.s32 %v1408, 127
        %v1410 = vshll.u32 %v1409, 23
        %v1411 = vor.u32 4788187, %v1410
        %v1412 = vand.u32 2147483647, %v1411
        %v1414 = vcvt.s32.f32 %v1407
        %v1415 = vmul.f32 %v1414, %v1412
        %v1416 = vxor.u32 %v1415, 2147483648
        %v1417 = vsel %vm1334, %v1416, %v1415
        %v1418 = vsub.s32 4, %v1394
        %v1419 = vsel %vm1334, %v1418, %v1394
        %v1420 = vsel %vm1333, %v753, %v1417
        %v1421 = vsel %vm1333, 0, %v1419
        %v1422 = vcosq.f32.pop %v1420
        %v1423 = vsinq.f32.pop %v1420
        %vm1424 = vweird.f32 %v753
        %v1425 = vadd.s32 %v1421, 3
        %v1426 = vand.u32 %v1425, 3
        %vm1427 = vcmp.lt.s32.totalorder %v1426, 2
        %vm1428 = vcmp.eq.s32.totalorder %v1426, 0
        %v1429 = vxor.u32 %v1423, 2147483648
        %v1430 = vsel %vm1428, %v1422, %v1429
        %vm1431 = vcmp.eq.s32.totalorder %v1426, 2
        %v1432 = vxor.u32 %v1422, 2147483648
        %v1433 = vsel %vm1431, %v1432, %v1423
        %v1434 = vsel %vm1427, %v1430, %v1433
        %v1435 = vsel %vm1424, nan, %v1434
        %v1436 = vand.u32 2147483647, %v754
        %vm1437 = vcmp.le.f32.partialorder %v1436, 0.7853982
        %vm1438 = vcmp.lt.s32.totalorder %v754, 0
        %v1439 = vand.u32 %v754, 2139095040
        %v1440 = vshrl.u32 %v1439, 23
        %v1441 = vsub.s32 %v1440, 127
        %v1442 = vand.u32 2147483647, %v754
        %v1443 = vand.u32 %v1442, 8388607
        %v1444 = vor.u32 %v1443, 8388608
        %v1445 = vsub.s32 0, %v1444
        %v1446 = vadd.s32 %v1441, 1
        %vm1447 = vcmp.gt.s32.totalorder %v1446, 0
        %v1448 = vsel %vm1447, %v1446, 0
        %v1449 = vshrl.u32 %v1448, 5
        %v1450 = vand.u32 %v1448, 31
        %v1451 = vsub.s32 32, %v1450
        %v1452 = vshrl.u32 683565275, %v1451
        %v1453 = vshll.u32 683565275, %v1450
        %v1454 = vshrl.u32 2475754826, %v1451
        %v1455 = vor.u32 %v1453, %v1454
        %v1456 = vshll.u32 2475754826, %v1450
        %v1457 = vshrl.u32 2131351028, %v1451
        %v1458 = vor.u32 %v1456, %v1457
        %v1459 = vshll.u32 2131351028, %v1450
        %v1460 = vshrl.u32 2102212464, %v1451
        %v1461 = vor.u32 %v1459, %v1460
        %v1462 = vshll.u32 2102212464, %v1450
        %v1463 = vshrl.u32 920167782, %v1451
        %v1464 = vor.u32 %v1462, %v1463
        %v1465 = vshll.u32 920167782, %v1450
        %v1466 = vshrl.u32 1326507024, %v1451
        %v1467 = vor.u32 %v1465, %v1466
        %vm1468 = vcmp.lt.s32.totalorder %v1449, 1
        %vm1469 = vcmp.lt.s32.totalorder %v1449, 2
        %vm1470 = vcmp.lt.s32.totalorder %v1449, 3
        %vm1471 = vcmp.lt.s32.totalorder %v1449, 4
        %v1472 = vsel %vm1468, %v1452, %v1455
        %v1473 = vsel %vm1471, %v1461, 2102212464
        %v1474 = vsel %vm1470, %v1458, %v1473
        %v1475 = vsel %vm1469, %v1472, %v1474
        %v1476 = vsel %vm1468, %v1455, %v1458
        %v1477 = vsel %vm1471, %v1464, 920167782
        %v1478 = vsel %vm1470, %v1461, %v1477
        %v1479 = vsel %vm1469, %v1476, %v1478
        %v1480 = vsel %vm1468, %v1458, %v1461
        %v1481 = vsel %vm1471, %v1467, 1326507024
        %v1482 = vsel %vm1470, %v1464, %v1481
        %v1483 = vsel %vm1469, %v1480, %v1482
        %v1484 = vshll.u32 %v1444, 8
        %v1485 = vmul.u32.u64.compose %v1484, %v1483
        %v1486 = vextract.low.u32 %v1485
        %v1487 = vextract.high.u32 %v1485
        %v1488 = vmul.u32.u64.compose %v1484, %v1479
        %v1489 = vextract.low.u32 %v1488
        %v1490 = vextract.high.u32 %v1488
        %v1491 = vmul.u32 %v1484, %v1475
        %v1492 = vadd.s32 %v1487, %v1489
        %vm1493 = vc.u32 %v1487, %v1489
        %v1494 = vadd.s32 %v1490, 1
        %v1495 = vsel %vm1493, %v1494, %v1490
        %v1496 = vadd.s32 %v1491, %v1495
        %v1497 = vadd.s32 %v1496, 536870912
        %v1498 = vshrl.u32 %v1497, 30
        %v1499 = vshll.u32 %v1498, 30
        %v1500 = vsub.s32 %v1496, %v1499
        %vm1501 = vcmp.lt.s32.totalorder %v1500, 0
        %v1502 = vsub.s32 0, %v1500
        %v1503 = vsel %vm1501, %v1502, %v1500
        %v1504 = vclz %v1503
        %v1505 = vsub.s32 %v1504, 2
        %vm1506 = vcmp.gt.s32.totalorder 0, %v1505
        %v1507 = vsel %vm1506, 0, %v1505
        %v1508 = vsub.s32 32, %v1507
        %v1509 = vshll.u32 %v1500, %v1507
        %v1510 = vshrl.u32 %v1492, %v1508
        %v1511 = vor.u32 %v1509, %v1510
        %v1512 = vsub.s32 4294967266, %v1507
        %v1513 = vadd.s32 %v1512, 127
        %v1514 = vshll.u32 %v1513, 23
        %v1515 = vor.u32 4788187, %v1514
        %v1516 = vand.u32 2147483647, %v1515
        %v1518 = vcvt.s32.f32 %v1511
        %v1519 = vmul.f32 %v1518, %v1516
        %v1520 = vxor.u32 %v1519, 2147483648
        %v1521 = vsel %vm1438, %v1520, %v1519
        %v1522 = vsub.s32 4, %v1498
        %v1523 = vsel %vm1438, %v1522, %v1498
        %v1524 = vsel %vm1437, %v754, %v1521
        %v1525 = vsel %vm1437, 0, %v1523
        %v1526 = vcosq.f32.pop %v1524
        %v1527 = vsinq.f32.pop %v1524
        %vm1528 = vweird.f32 %v754
        %v1529 = vadd.s32 %v1525, 3
        %v1530 = vand.u32 %v1529, 3
        %vm1531 = vcmp.lt.s32.totalorder %v1530, 2
        %vm1532 = vcmp.eq.s32.totalorder %v1530, 0
        %v1533 = vxor.u32 %v1527, 2147483648
        %v1534 = vsel %vm1532, %v1526, %v1533
        %vm1535 = vcmp.eq.s32.totalorder %v1530, 2
        %v1536 = vxor.u32 %v1526, 2147483648
        %v1537 = vsel %vm1535, %v1536, %v1527
        %v1538 = vsel %vm1531, %v1534, %v1537
        %v1539 = vsel %vm1528, nan, %v1538
        %v1540 = vand.u32 2147483647, %v755
        %vm1541 = vcmp.le.f32.partialorder %v1540, 0.7853982
        %vm1542 = vcmp.lt.s32.totalorder %v755, 0
        %v1543 = vand.u32 %v755, 2139095040
        %v1544 = vshrl.u32 %v1543, 23
        %v1545 = vsub.s32 %v1544, 127
        %v1546 = vand.u32 2147483647, %v755
        %v1547 = vand.u32 %v1546, 8388607
        %v1548 = vor.u32 %v1547, 8388608
        %v1549 = vsub.s32 0, %v1548
        %v1550 = vadd.s32 %v1545, 1
        %vm1551 = vcmp.gt.s32.totalorder %v1550, 0
        %v1552 = vsel %vm1551, %v1550, 0
        %v1553 = vshrl.u32 %v1552, 5
        %v1554 = vand.u32 %v1552, 31
        %v1555 = vsub.s32 32, %v1554
        %v1556 = vshrl.u32 683565275, %v1555
        %v1557 = vshll.u32 683565275, %v1554
        %v1558 = vshrl.u32 2475754826, %v1555
        %v1559 = vor.u32 %v1557, %v1558
        %v1560 = vshll.u32 2475754826, %v1554
        %v1561 = vshrl.u32 2131351028, %v1555
        %v1562 = vor.u32 %v1560, %v1561
        %v1563 = vshll.u32 2131351028, %v1554
        %v1564 = vshrl.u32 2102212464, %v1555
        %v1565 = vor.u32 %v1563, %v1564
        %v1566 = vshll.u32 2102212464, %v1554
        %v1567 = vshrl.u32 920167782, %v1555
        %v1568 = vor.u32 %v1566, %v1567
        %v1569 = vshll.u32 920167782, %v1554
        %v1570 = vshrl.u32 1326507024, %v1555
        %v1571 = vor.u32 %v1569, %v1570
        %vm1572 = vcmp.lt.s32.totalorder %v1553, 1
        %vm1573 = vcmp.lt.s32.totalorder %v1553, 2
        %vm1574 = vcmp.lt.s32.totalorder %v1553, 3
        %vm1575 = vcmp.lt.s32.totalorder %v1553, 4
        %v1576 = vsel %vm1572, %v1556, %v1559
        %v1577 = vsel %vm1575, %v1565, 2102212464
        %v1578 = vsel %vm1574, %v1562, %v1577
        %v1579 = vsel %vm1573, %v1576, %v1578
        %v1580 = vsel %vm1572, %v1559, %v1562
        %v1581 = vsel %vm1575, %v1568, 920167782
        %v1582 = vsel %vm1574, %v1565, %v1581
        %v1583 = vsel %vm1573, %v1580, %v1582
        %v1584 = vsel %vm1572, %v1562, %v1565
        %v1585 = vsel %vm1575, %v1571, 1326507024
        %v1586 = vsel %vm1574, %v1568, %v1585
        %v1587 = vsel %vm1573, %v1584, %v1586
        %v1588 = vshll.u32 %v1548, 8
        %v1589 = vmul.u32.u64.compose %v1588, %v1587
        %v1590 = vextract.low.u32 %v1589
        %v1591 = vextract.high.u32 %v1589
        %v1592 = vmul.u32.u64.compose %v1588, %v1583
        %v1593 = vextract.low.u32 %v1592
        %v1594 = vextract.high.u32 %v1592
        %v1595 = vmul.u32 %v1588, %v1579
        %v1596 = vadd.s32 %v1591, %v1593
        %vm1597 = vc.u32 %v1591, %v1593
        %v1598 = vadd.s32 %v1594, 1
        %v1599 = vsel %vm1597, %v1598, %v1594
        %v1600 = vadd.s32 %v1595, %v1599
        %v1601 = vadd.s32 %v1600, 536870912
        %v1602 = vshrl.u32 %v1601, 30
        %v1603 = vshll.u32 %v1602, 30
        %v1604 = vsub.s32 %v1600, %v1603
        %vm1605 = vcmp.lt.s32.totalorder %v1604, 0
        %v1606 = vsub.s32 0, %v1604
        %v1607 = vsel %vm1605, %v1606, %v1604
        %v1608 = vclz %v1607
        %v1609 = vsub.s32 %v1608, 2
        %vm1610 = vcmp.gt.s32.totalorder 0, %v1609
        %v1611 = vsel %vm1610, 0, %v1609
        %v1612 = vsub.s32 32, %v1611
        %v1613 = vshll.u32 %v1604, %v1611
        %v1614 = vshrl.u32 %v1596, %v1612
        %v1615 = vor.u32 %v1613, %v1614
        %v1616 = vsub.s32 4294967266, %v1611
        %v1617 = vadd.s32 %v1616, 127
        %v1618 = vshll.u32 %v1617, 23
        %v1619 = vor.u32 4788187, %v1618
        %v1620 = vand.u32 2147483647, %v1619
        %v1622 = vcvt.s32.f32 %v1615
        %v1623 = vmul.f32 %v1622, %v1620
        %v1624 = vxor.u32 %v1623, 2147483648
        %v1625 = vsel %vm1542, %v1624, %v1623
        %v1626 = vsub.s32 4, %v1602
        %v1627 = vsel %vm1542, %v1626, %v1602
        %v1628 = vsel %vm1541, %v755, %v1625
        %v1629 = vsel %vm1541, 0, %v1627
        %v1630 = vcosq.f32.pop %v1628
        %v1631 = vsinq.f32.pop %v1628
        %vm1632 = vweird.f32 %v755
        %v1633 = vadd.s32 %v1629, 3
        %v1634 = vand.u32 %v1633, 3
        %vm1635 = vcmp.lt.s32.totalorder %v1634, 2
        %vm1636 = vcmp.eq.s32.totalorder %v1634, 0
        %v1637 = vxor.u32 %v1631, 2147483648
        %v1638 = vsel %vm1636, %v1630, %v1637
        %vm1639 = vcmp.eq.s32.totalorder %v1634, 2
        %v1640 = vxor.u32 %v1630, 2147483648
        %v1641 = vsel %vm1639, %v1640, %v1631
        %v1642 = vsel %vm1635, %v1638, %v1641
        %v1643 = vsel %vm1632, nan, %v1642
        %v1644 = vand.u32 2147483647, %v756
        %vm1645 = vcmp.le.f32.partialorder %v1644, 0.7853982
        %vm1646 = vcmp.lt.s32.totalorder %v756, 0
        %v1647 = vand.u32 %v756, 2139095040
        %v1648 = vshrl.u32 %v1647, 23
        %v1649 = vsub.s32 %v1648, 127
        %v1650 = vand.u32 2147483647, %v756
        %v1651 = vand.u32 %v1650, 8388607
        %v1652 = vor.u32 %v1651, 8388608
        %v1653 = vsub.s32 0, %v1652
        %v1654 = vadd.s32 %v1649, 1
        %vm1655 = vcmp.gt.s32.totalorder %v1654, 0
        %v1656 = vsel %vm1655, %v1654, 0
        %v1657 = vshrl.u32 %v1656, 5
        %v1658 = vand.u32 %v1656, 31
        %v1659 = vsub.s32 32, %v1658
        %v1660 = vshrl.u32 683565275, %v1659
        %v1661 = vshll.u32 683565275, %v1658
        %v1662 = vshrl.u32 2475754826, %v1659
        %v1663 = vor.u32 %v1661, %v1662
        %v1664 = vshll.u32 2475754826, %v1658
        %v1665 = vshrl.u32 2131351028, %v1659
        %v1666 = vor.u32 %v1664, %v1665
        %v1667 = vshll.u32 2131351028, %v1658
        %v1668 = vshrl.u32 2102212464, %v1659
        %v1669 = vor.u32 %v1667, %v1668
        %v1670 = vshll.u32 2102212464, %v1658
        %v1671 = vshrl.u32 920167782, %v1659
        %v1672 = vor.u32 %v1670, %v1671
        %v1673 = vshll.u32 920167782, %v1658
        %v1674 = vshrl.u32 1326507024, %v1659
        %v1675 = vor.u32 %v1673, %v1674
        %vm1676 = vcmp.lt.s32.totalorder %v1657, 1
        %vm1677 = vcmp.lt.s32.totalorder %v1657, 2
        %vm1678 = vcmp.lt.s32.totalorder %v1657, 3
        %vm1679 = vcmp.lt.s32.totalorder %v1657, 4
        %v1680 = vsel %vm1676, %v1660, %v1663
        %v1681 = vsel %vm1679, %v1669, 2102212464
        %v1682 = vsel %vm1678, %v1666, %v1681
        %v1683 = vsel %vm1677, %v1680, %v1682
        %v1684 = vsel %vm1676, %v1663, %v1666
        %v1685 = vsel %vm1679, %v1672, 920167782
        %v1686 = vsel %vm1678, %v1669, %v1685
        %v1687 = vsel %vm1677, %v1684, %v1686
        %v1688 = vsel %vm1676, %v1666, %v1669
        %v1689 = vsel %vm1679, %v1675, 1326507024
        %v1690 = vsel %vm1678, %v1672, %v1689
        %v1691 = vsel %vm1677, %v1688, %v1690
        %v1692 = vshll.u32 %v1652, 8
        %v1693 = vmul.u32.u64.compose %v1692, %v1691
        %v1694 = vextract.low.u32 %v1693
        %v1695 = vextract.high.u32 %v1693
        %v1696 = vmul.u32.u64.compose %v1692, %v1687
        %v1697 = vextract.low.u32 %v1696
        %v1698 = vextract.high.u32 %v1696
        %v1699 = vmul.u32 %v1692, %v1683
        %v1700 = vadd.s32 %v1695, %v1697
        %vm1701 = vc.u32 %v1695, %v1697
        %v1702 = vadd.s32 %v1698, 1
        %v1703 = vsel %vm1701, %v1702, %v1698
        %v1704 = vadd.s32 %v1699, %v1703
        %v1705 = vadd.s32 %v1704, 536870912
        %v1706 = vshrl.u32 %v1705, 30
        %v1707 = vshll.u32 %v1706, 30
        %v1708 = vsub.s32 %v1704, %v1707
        %vm1709 = vcmp.lt.s32.totalorder %v1708, 0
        %v1710 = vsub.s32 0, %v1708
        %v1711 = vsel %vm1709, %v1710, %v1708
        %v1712 = vclz %v1711
        %v1713 = vsub.s32 %v1712, 2
        %vm1714 = vcmp.gt.s32.totalorder 0, %v1713
        %v1715 = vsel %vm1714, 0, %v1713
        %v1716 = vsub.s32 32, %v1715
        %v1717 = vshll.u32 %v1708, %v1715
        %v1718 = vshrl.u32 %v1700, %v1716
        %v1719 = vor.u32 %v1717, %v1718
        %v1720 = vsub.s32 4294967266, %v1715
        %v1721 = vadd.s32 %v1720, 127
        %v1722 = vshll.u32 %v1721, 23
        %v1723 = vor.u32 4788187, %v1722
        %v1724 = vand.u32 2147483647, %v1723
        %v1726 = vcvt.s32.f32 %v1719
        %v1727 = vmul.f32 %v1726, %v1724
        %v1728 = vxor.u32 %v1727, 2147483648
        %v1729 = vsel %vm1646, %v1728, %v1727
        %v1730 = vsub.s32 4, %v1706
        %v1731 = vsel %vm1646, %v1730, %v1706
        %v1732 = vsel %vm1645, %v756, %v1729
        %v1733 = vsel %vm1645, 0, %v1731
        %v1734 = vcosq.f32.pop %v1732
        %v1735 = vsinq.f32.pop %v1732
        %vm1736 = vweird.f32 %v756
        %v1737 = vadd.s32 %v1733, 3
        %v1738 = vand.u32 %v1737, 3
        %vm1739 = vcmp.lt.s32.totalorder %v1738, 2
        %vm1740 = vcmp.eq.s32.totalorder %v1738, 0
        %v1741 = vxor.u32 %v1735, 2147483648
        %v1742 = vsel %vm1740, %v1734, %v1741
        %vm1743 = vcmp.eq.s32.totalorder %v1738, 2
        %v1744 = vxor.u32 %v1734, 2147483648
        %v1745 = vsel %vm1743, %v1744, %v1735
        %v1746 = vsel %vm1739, %v1742, %v1745
        %v1747 = vsel %vm1736, nan, %v1746
        %v1748 = vand.u32 2147483647, %v757
        %vm1749 = vcmp.le.f32.partialorder %v1748, 0.7853982
        %vm1750 = vcmp.lt.s32.totalorder %v757, 0
        %v1751 = vand.u32 %v757, 2139095040
        %v1752 = vshrl.u32 %v1751, 23
        %v1753 = vsub.s32 %v1752, 127
        %v1754 = vand.u32 2147483647, %v757
        %v1755 = vand.u32 %v1754, 8388607
        %v1756 = vor.u32 %v1755, 8388608
        %v1757 = vsub.s32 0, %v1756
        %v1758 = vadd.s32 %v1753, 1
        %vm1759 = vcmp.gt.s32.totalorder %v1758, 0
        %v1760 = vsel %vm1759, %v1758, 0
        %v1761 = vshrl.u32 %v1760, 5
        %v1762 = vand.u32 %v1760, 31
        %v1763 = vsub.s32 32, %v1762
        %v1764 = vshrl.u32 683565275, %v1763
        %v1765 = vshll.u32 683565275, %v1762
        %v1766 = vshrl.u32 2475754826, %v1763
        %v1767 = vor.u32 %v1765, %v1766
        %v1768 = vshll.u32 2475754826, %v1762
        %v1769 = vshrl.u32 2131351028, %v1763
        %v1770 = vor.u32 %v1768, %v1769
        %v1771 = vshll.u32 2131351028, %v1762
        %v1772 = vshrl.u32 2102212464, %v1763
        %v1773 = vor.u32 %v1771, %v1772
        %v1774 = vshll.u32 2102212464, %v1762
        %v1775 = vshrl.u32 920167782, %v1763
        %v1776 = vor.u32 %v1774, %v1775
        %v1777 = vshll.u32 920167782, %v1762
        %v1778 = vshrl.u32 1326507024, %v1763
        %v1779 = vor.u32 %v1777, %v1778
        %vm1780 = vcmp.lt.s32.totalorder %v1761, 1
        %vm1781 = vcmp.lt.s32.totalorder %v1761, 2
        %vm1782 = vcmp.lt.s32.totalorder %v1761, 3
        %vm1783 = vcmp.lt.s32.totalorder %v1761, 4
        %v1784 = vsel %vm1780, %v1764, %v1767
        %v1785 = vsel %vm1783, %v1773, 2102212464
        %v1786 = vsel %vm1782, %v1770, %v1785
        %v1787 = vsel %vm1781, %v1784, %v1786
        %v1788 = vsel %vm1780, %v1767, %v1770
        %v1789 = vsel %vm1783, %v1776, 920167782
        %v1790 = vsel %vm1782, %v1773, %v1789
        %v1791 = vsel %vm1781, %v1788, %v1790
        %v1792 = vsel %vm1780, %v1770, %v1773
        %v1793 = vsel %vm1783, %v1779, 1326507024
        %v1794 = vsel %vm1782, %v1776, %v1793
        %v1795 = vsel %vm1781, %v1792, %v1794
        %v1796 = vshll.u32 %v1756, 8
        %v1797 = vmul.u32.u64.compose %v1796, %v1795
        %v1798 = vextract.low.u32 %v1797
        %v1799 = vextract.high.u32 %v1797
        %v1800 = vmul.u32.u64.compose %v1796, %v1791
        %v1801 = vextract.low.u32 %v1800
        %v1802 = vextract.high.u32 %v1800
        %v1803 = vmul.u32 %v1796, %v1787
        %v1804 = vadd.s32 %v1799, %v1801
        %vm1805 = vc.u32 %v1799, %v1801
        %v1806 = vadd.s32 %v1802, 1
        %v1807 = vsel %vm1805, %v1806, %v1802
        %v1808 = vadd.s32 %v1803, %v1807
        %v1809 = vadd.s32 %v1808, 536870912
        %v1810 = vshrl.u32 %v1809, 30
        %v1811 = vshll.u32 %v1810, 30
        %v1812 = vsub.s32 %v1808, %v1811
        %vm1813 = vcmp.lt.s32.totalorder %v1812, 0
        %v1814 = vsub.s32 0, %v1812
        %v1815 = vsel %vm1813, %v1814, %v1812
        %v1816 = vclz %v1815
        %v1817 = vsub.s32 %v1816, 2
        %vm1818 = vcmp.gt.s32.totalorder 0, %v1817
        %v1819 = vsel %vm1818, 0, %v1817
        %v1820 = vsub.s32 32, %v1819
        %v1821 = vshll.u32 %v1812, %v1819
        %v1822 = vshrl.u32 %v1804, %v1820
        %v1823 = vor.u32 %v1821, %v1822
        %v1824 = vsub.s32 4294967266, %v1819
        %v1825 = vadd.s32 %v1824, 127
        %v1826 = vshll.u32 %v1825, 23
        %v1827 = vor.u32 4788187, %v1826
        %v1828 = vand.u32 2147483647, %v1827
        %v1830 = vcvt.s32.f32 %v1823
        %v1831 = vmul.f32 %v1830, %v1828
        %v1832 = vxor.u32 %v1831, 2147483648
        %v1833 = vsel %vm1750, %v1832, %v1831
        %v1834 = vsub.s32 4, %v1810
        %v1835 = vsel %vm1750, %v1834, %v1810
        %v1836 = vsel %vm1749, %v757, %v1833
        %v1837 = vsel %vm1749, 0, %v1835
        %v1838 = vcosq.f32.pop %v1836
        %v1839 = vsinq.f32.pop %v1836
        %vm1840 = vweird.f32 %v757
        %v1841 = vadd.s32 %v1837, 3
        %v1842 = vand.u32 %v1841, 3
        %vm1843 = vcmp.lt.s32.totalorder %v1842, 2
        %vm1844 = vcmp.eq.s32.totalorder %v1842, 0
        %v1845 = vxor.u32 %v1839, 2147483648
        %v1846 = vsel %vm1844, %v1838, %v1845
        %vm1847 = vcmp.eq.s32.totalorder %v1842, 2
        %v1848 = vxor.u32 %v1838, 2147483648
        %v1849 = vsel %vm1847, %v1848, %v1839
        %v1850 = vsel %vm1843, %v1846, %v1849
        %v1851 = vsel %vm1840, nan, %v1850
        %v1852 = vand.u32 2147483647, %v758
        %vm1853 = vcmp.le.f32.partialorder %v1852, 0.7853982
        %vm1854 = vcmp.lt.s32.totalorder %v758, 0
        %v1855 = vand.u32 %v758, 2139095040
        %v1856 = vshrl.u32 %v1855, 23
        %v1857 = vsub.s32 %v1856, 127
        %v1858 = vand.u32 2147483647, %v758
        %v1859 = vand.u32 %v1858, 8388607
        %v1860 = vor.u32 %v1859, 8388608
        %v1861 = vsub.s32 0, %v1860
        %v1862 = vadd.s32 %v1857, 1
        %vm1863 = vcmp.gt.s32.totalorder %v1862, 0
        %v1864 = vsel %vm1863, %v1862, 0
        %v1865 = vshrl.u32 %v1864, 5
        %v1866 = vand.u32 %v1864, 31
        %v1867 = vsub.s32 32, %v1866
        %v1868 = vshrl.u32 683565275, %v1867
        %v1869 = vshll.u32 683565275, %v1866
        %v1870 = vshrl.u32 2475754826, %v1867
        %v1871 = vor.u32 %v1869, %v1870
        %v1872 = vshll.u32 2475754826, %v1866
        %v1873 = vshrl.u32 2131351028, %v1867
        %v1874 = vor.u32 %v1872, %v1873
        %v1875 = vshll.u32 2131351028, %v1866
        %v1876 = vshrl.u32 2102212464, %v1867
        %v1877 = vor.u32 %v1875, %v1876
        %v1878 = vshll.u32 2102212464, %v1866
        %v1879 = vshrl.u32 920167782, %v1867
        %v1880 = vor.u32 %v1878, %v1879
        %v1881 = vshll.u32 920167782, %v1866
        %v1882 = vshrl.u32 1326507024, %v1867
        %v1883 = vor.u32 %v1881, %v1882
        %vm1884 = vcmp.lt.s32.totalorder %v1865, 1
        %vm1885 = vcmp.lt.s32.totalorder %v1865, 2
        %vm1886 = vcmp.lt.s32.totalorder %v1865, 3
        %vm1887 = vcmp.lt.s32.totalorder %v1865, 4
        %v1888 = vsel %vm1884, %v1868, %v1871
        %v1889 = vsel %vm1887, %v1877, 2102212464
        %v1890 = vsel %vm1886, %v1874, %v1889
        %v1891 = vsel %vm1885, %v1888, %v1890
        %v1892 = vsel %vm1884, %v1871, %v1874
        %v1893 = vsel %vm1887, %v1880, 920167782
        %v1894 = vsel %vm1886, %v1877, %v1893
        %v1895 = vsel %vm1885, %v1892, %v1894
        %v1896 = vsel %vm1884, %v1874, %v1877
        %v1897 = vsel %vm1887, %v1883, 1326507024
        %v1898 = vsel %vm1886, %v1880, %v1897
        %v1899 = vsel %vm1885, %v1896, %v1898
        %v1900 = vshll.u32 %v1860, 8
        %v1901 = vmul.u32.u64.compose %v1900, %v1899
        %v1902 = vextract.low.u32 %v1901
        %v1903 = vextract.high.u32 %v1901
        %v1904 = vmul.u32.u64.compose %v1900, %v1895
        %v1905 = vextract.low.u32 %v1904
        %v1906 = vextract.high.u32 %v1904
        %v1907 = vmul.u32 %v1900, %v1891
        %v1908 = vadd.s32 %v1903, %v1905
        %vm1909 = vc.u32 %v1903, %v1905
        %v1910 = vadd.s32 %v1906, 1
        %v1911 = vsel %vm1909, %v1910, %v1906
        %v1912 = vadd.s32 %v1907, %v1911
        %v1913 = vadd.s32 %v1912, 536870912
        %v1914 = vshrl.u32 %v1913, 30
        %v1915 = vshll.u32 %v1914, 30
        %v1916 = vsub.s32 %v1912, %v1915
        %vm1917 = vcmp.lt.s32.totalorder %v1916, 0
        %v1918 = vsub.s32 0, %v1916
        %v1919 = vsel %vm1917, %v1918, %v1916
        %v1920 = vclz %v1919
        %v1921 = vsub.s32 %v1920, 2
        %vm1922 = vcmp.gt.s32.totalorder 0, %v1921
        %v1923 = vsel %vm1922, 0, %v1921
        %v1924 = vsub.s32 32, %v1923
        %v1925 = vshll.u32 %v1916, %v1923
        %v1926 = vshrl.u32 %v1908, %v1924
        %v1927 = vor.u32 %v1925, %v1926
        %v1928 = vsub.s32 4294967266, %v1923
        %v1929 = vadd.s32 %v1928, 127
        %v1930 = vshll.u32 %v1929, 23
        %v1931 = vor.u32 4788187, %v1930
        %v1932 = vand.u32 2147483647, %v1931
        %v1934 = vcvt.s32.f32 %v1927
        %v1935 = vmul.f32 %v1934, %v1932
        %v1936 = vxor.u32 %v1935, 2147483648
        %v1937 = vsel %vm1854, %v1936, %v1935
        %v1938 = vsub.s32 4, %v1914
        %v1939 = vsel %vm1854, %v1938, %v1914
        %v1940 = vsel %vm1853, %v758, %v1937
        %v1941 = vsel %vm1853, 0, %v1939
        %v1942 = vcosq.f32.pop %v1940
        %v1943 = vsinq.f32.pop %v1940
        %vm1944 = vweird.f32 %v758
        %v1945 = vadd.s32 %v1941, 3
        %v1946 = vand.u32 %v1945, 3
        %vm1947 = vcmp.lt.s32.totalorder %v1946, 2
        %vm1948 = vcmp.eq.s32.totalorder %v1946, 0
        %v1949 = vxor.u32 %v1943, 2147483648
        %v1950 = vsel %vm1948, %v1942, %v1949
        %vm1951 = vcmp.eq.s32.totalorder %v1946, 2
        %v1952 = vxor.u32 %v1942, 2147483648
        %v1953 = vsel %vm1951, %v1952, %v1943
        %v1954 = vsel %vm1947, %v1950, %v1953
        %v1955 = vsel %vm1944, nan, %v1954
        %v1956 = vand.u32 2147483647, %v759
        %vm1957 = vcmp.le.f32.partialorder %v1956, 0.7853982
        %vm1958 = vcmp.lt.s32.totalorder %v759, 0
        %v1959 = vand.u32 %v759, 2139095040
        %v1960 = vshrl.u32 %v1959, 23
        %v1961 = vsub.s32 %v1960, 127
        %v1962 = vand.u32 2147483647, %v759
        %v1963 = vand.u32 %v1962, 8388607
        %v1964 = vor.u32 %v1963, 8388608
        %v1965 = vsub.s32 0, %v1964
        %v1966 = vadd.s32 %v1961, 1
        %vm1967 = vcmp.gt.s32.totalorder %v1966, 0
        %v1968 = vsel %vm1967, %v1966, 0
        %v1969 = vshrl.u32 %v1968, 5
        %v1970 = vand.u32 %v1968, 31
        %v1971 = vsub.s32 32, %v1970
        %v1972 = vshrl.u32 683565275, %v1971
        %v1973 = vshll.u32 683565275, %v1970
        %v1974 = vshrl.u32 2475754826, %v1971
        %v1975 = vor.u32 %v1973, %v1974
        %v1976 = vshll.u32 2475754826, %v1970
        %v1977 = vshrl.u32 2131351028, %v1971
        %v1978 = vor.u32 %v1976, %v1977
        %v1979 = vshll.u32 2131351028, %v1970
        %v1980 = vshrl.u32 2102212464, %v1971
        %v1981 = vor.u32 %v1979, %v1980
        %v1982 = vshll.u32 2102212464, %v1970
        %v1983 = vshrl.u32 920167782, %v1971
        %v1984 = vor.u32 %v1982, %v1983
        %v1985 = vshll.u32 920167782, %v1970
        %v1986 = vshrl.u32 1326507024, %v1971
        %v1987 = vor.u32 %v1985, %v1986
        %vm1988 = vcmp.lt.s32.totalorder %v1969, 1
        %vm1989 = vcmp.lt.s32.totalorder %v1969, 2
        %vm1990 = vcmp.lt.s32.totalorder %v1969, 3
        %vm1991 = vcmp.lt.s32.totalorder %v1969, 4
        %v1992 = vsel %vm1988, %v1972, %v1975
        %v1993 = vsel %vm1991, %v1981, 2102212464
        %v1994 = vsel %vm1990, %v1978, %v1993
        %v1995 = vsel %vm1989, %v1992, %v1994
        %v1996 = vsel %vm1988, %v1975, %v1978
        %v1997 = vsel %vm1991, %v1984, 920167782
        %v1998 = vsel %vm1990, %v1981, %v1997
        %v1999 = vsel %vm1989, %v1996, %v1998
        %v2000 = vsel %vm1988, %v1978, %v1981
        %v2001 = vsel %vm1991, %v1987, 1326507024
        %v2002 = vsel %vm1990, %v1984, %v2001
        %v2003 = vsel %vm1989, %v2000, %v2002
        %v2004 = vshll.u32 %v1964, 8
        %v2005 = vmul.u32.u64.compose %v2004, %v2003
        %v2006 = vextract.low.u32 %v2005
        %v2007 = vextract.high.u32 %v2005
        %v2008 = vmul.u32.u64.compose %v2004, %v1999
        %v2009 = vextract.low.u32 %v2008
        %v2010 = vextract.high.u32 %v2008
        %v2011 = vmul.u32 %v2004, %v1995
        %v2012 = vadd.s32 %v2007, %v2009
        %vm2013 = vc.u32 %v2007, %v2009
        %v2014 = vadd.s32 %v2010, 1
        %v2015 = vsel %vm2013, %v2014, %v2010
        %v2016 = vadd.s32 %v2011, %v2015
        %v2017 = vadd.s32 %v2016, 536870912
        %v2018 = vshrl.u32 %v2017, 30
        %v2019 = vshll.u32 %v2018, 30
        %v2020 = vsub.s32 %v2016, %v2019
        %vm2021 = vcmp.lt.s32.totalorder %v2020, 0
        %v2022 = vsub.s32 0, %v2020
        %v2023 = vsel %vm2021, %v2022, %v2020
        %v2024 = vclz %v2023
        %v2025 = vsub.s32 %v2024, 2
        %vm2026 = vcmp.gt.s32.totalorder 0, %v2025
        %v2027 = vsel %vm2026, 0, %v2025
        %v2028 = vsub.s32 32, %v2027
        %v2029 = vshll.u32 %v2020, %v2027
        %v2030 = vshrl.u32 %v2012, %v2028
        %v2031 = vor.u32 %v2029, %v2030
        %v2032 = vsub.s32 4294967266, %v2027
        %v2033 = vadd.s32 %v2032, 127
        %v2034 = vshll.u32 %v2033, 23
        %v2035 = vor.u32 4788187, %v2034
        %v2036 = vand.u32 2147483647, %v2035
        %v2038 = vcvt.s32.f32 %v2031
        %v2039 = vmul.f32 %v2038, %v2036
        %v2040 = vxor.u32 %v2039, 2147483648
        %v2041 = vsel %vm1958, %v2040, %v2039
        %v2042 = vsub.s32 4, %v2018
        %v2043 = vsel %vm1958, %v2042, %v2018
        %v2044 = vsel %vm1957, %v759, %v2041
        %v2045 = vsel %vm1957, 0, %v2043
        %v2046 = vcosq.f32.pop %v2044
        %v2047 = vsinq.f32.pop %v2044
        %vm2048 = vweird.f32 %v759
        %v2049 = vadd.s32 %v2045, 3
        %v2050 = vand.u32 %v2049, 3
        %vm2051 = vcmp.lt.s32.totalorder %v2050, 2
        %vm2052 = vcmp.eq.s32.totalorder %v2050, 0
        %v2053 = vxor.u32 %v2047, 2147483648
        %v2054 = vsel %vm2052, %v2046, %v2053
        %vm2055 = vcmp.eq.s32.totalorder %v2050, 2
        %v2056 = vxor.u32 %v2046, 2147483648
        %v2057 = vsel %vm2055, %v2056, %v2047
        %v2058 = vsel %vm2051, %v2054, %v2057
        %v2059 = vsel %vm2048, nan, %v2058
        %v2060 = vand.u32 2147483647, %v760
        %vm2061 = vcmp.le.f32.partialorder %v2060, 0.7853982
        %vm2062 = vcmp.lt.s32.totalorder %v760, 0
        %v2063 = vand.u32 %v760, 2139095040
        %v2064 = vshrl.u32 %v2063, 23
        %v2065 = vsub.s32 %v2064, 127
        %v2066 = vand.u32 2147483647, %v760
        %v2067 = vand.u32 %v2066, 8388607
        %v2068 = vor.u32 %v2067, 8388608
        %v2069 = vsub.s32 0, %v2068
        %v2070 = vadd.s32 %v2065, 1
        %vm2071 = vcmp.gt.s32.totalorder %v2070, 0
        %v2072 = vsel %vm2071, %v2070, 0
        %v2073 = vshrl.u32 %v2072, 5
        %v2074 = vand.u32 %v2072, 31
        %v2075 = vsub.s32 32, %v2074
        %v2076 = vshrl.u32 683565275, %v2075
        %v2077 = vshll.u32 683565275, %v2074
        %v2078 = vshrl.u32 2475754826, %v2075
        %v2079 = vor.u32 %v2077, %v2078
        %v2080 = vshll.u32 2475754826, %v2074
        %v2081 = vshrl.u32 2131351028, %v2075
        %v2082 = vor.u32 %v2080, %v2081
        %v2083 = vshll.u32 2131351028, %v2074
        %v2084 = vshrl.u32 2102212464, %v2075
        %v2085 = vor.u32 %v2083, %v2084
        %v2086 = vshll.u32 2102212464, %v2074
        %v2087 = vshrl.u32 920167782, %v2075
        %v2088 = vor.u32 %v2086, %v2087
        %v2089 = vshll.u32 920167782, %v2074
        %v2090 = vshrl.u32 1326507024, %v2075
        %v2091 = vor.u32 %v2089, %v2090
        %vm2092 = vcmp.lt.s32.totalorder %v2073, 1
        %vm2093 = vcmp.lt.s32.totalorder %v2073, 2
        %vm2094 = vcmp.lt.s32.totalorder %v2073, 3
        %vm2095 = vcmp.lt.s32.totalorder %v2073, 4
        %v2096 = vsel %vm2092, %v2076, %v2079
        %v2097 = vsel %vm2095, %v2085, 2102212464
        %v2098 = vsel %vm2094, %v2082, %v2097
        %v2099 = vsel %vm2093, %v2096, %v2098
        %v2100 = vsel %vm2092, %v2079, %v2082
        %v2101 = vsel %vm2095, %v2088, 920167782
        %v2102 = vsel %vm2094, %v2085, %v2101
        %v2103 = vsel %vm2093, %v2100, %v2102
        %v2104 = vsel %vm2092, %v2082, %v2085
        %v2105 = vsel %vm2095, %v2091, 1326507024
        %v2106 = vsel %vm2094, %v2088, %v2105
        %v2107 = vsel %vm2093, %v2104, %v2106
        %v2108 = vshll.u32 %v2068, 8
        %v2109 = vmul.u32.u64.compose %v2108, %v2107
        %v2110 = vextract.low.u32 %v2109
        %v2111 = vextract.high.u32 %v2109
        %v2112 = vmul.u32.u64.compose %v2108, %v2103
        %v2113 = vextract.low.u32 %v2112
        %v2114 = vextract.high.u32 %v2112
        %v2115 = vmul.u32 %v2108, %v2099
        %v2116 = vadd.s32 %v2111, %v2113
        %vm2117 = vc.u32 %v2111, %v2113
        %v2118 = vadd.s32 %v2114, 1
        %v2119 = vsel %vm2117, %v2118, %v2114
        %v2120 = vadd.s32 %v2115, %v2119
        %v2121 = vadd.s32 %v2120, 536870912
        %v2122 = vshrl.u32 %v2121, 30
        %v2123 = vshll.u32 %v2122, 30
        %v2124 = vsub.s32 %v2120, %v2123
        %vm2125 = vcmp.lt.s32.totalorder %v2124, 0
        %v2126 = vsub.s32 0, %v2124
        %v2127 = vsel %vm2125, %v2126, %v2124
        %v2128 = vclz %v2127
        %v2129 = vsub.s32 %v2128, 2
        %vm2130 = vcmp.gt.s32.totalorder 0, %v2129
        %v2131 = vsel %vm2130, 0, %v2129
        %v2132 = vsub.s32 32, %v2131
        %v2133 = vshll.u32 %v2124, %v2131
        %v2134 = vshrl.u32 %v2116, %v2132
        %v2135 = vor.u32 %v2133, %v2134
        %v2136 = vsub.s32 4294967266, %v2131
        %v2137 = vadd.s32 %v2136, 127
        %v2138 = vshll.u32 %v2137, 23
        %v2139 = vor.u32 4788187, %v2138
        %v2140 = vand.u32 2147483647, %v2139
        %v2142 = vcvt.s32.f32 %v2135
        %v2143 = vmul.f32 %v2142, %v2140
        %v2144 = vxor.u32 %v2143, 2147483648
        %v2145 = vsel %vm2062, %v2144, %v2143
        %v2146 = vsub.s32 4, %v2122
        %v2147 = vsel %vm2062, %v2146, %v2122
        %v2148 = vsel %vm2061, %v760, %v2145
        %v2149 = vsel %vm2061, 0, %v2147
        %v2150 = vcosq.f32.pop %v2148
        %v2151 = vsinq.f32.pop %v2148
        %vm2152 = vweird.f32 %v760
        %v2153 = vadd.s32 %v2149, 3
        %v2154 = vand.u32 %v2153, 3
        %vm2155 = vcmp.lt.s32.totalorder %v2154, 2
        %vm2156 = vcmp.eq.s32.totalorder %v2154, 0
        %v2157 = vxor.u32 %v2151, 2147483648
        %v2158 = vsel %vm2156, %v2150, %v2157
        %vm2159 = vcmp.eq.s32.totalorder %v2154, 2
        %v2160 = vxor.u32 %v2150, 2147483648
        %v2161 = vsel %vm2159, %v2160, %v2151
        %v2162 = vsel %vm2155, %v2158, %v2161
        %v2163 = vsel %vm2152, nan, %v2162
        %v2164 = vand.u32 2147483647, %v761
        %vm2165 = vcmp.le.f32.partialorder %v2164, 0.7853982
        %vm2166 = vcmp.lt.s32.totalorder %v761, 0
        %v2167 = vand.u32 %v761, 2139095040
        %v2168 = vshrl.u32 %v2167, 23
        %v2169 = vsub.s32 %v2168, 127
        %v2170 = vand.u32 2147483647, %v761
        %v2171 = vand.u32 %v2170, 8388607
        %v2172 = vor.u32 %v2171, 8388608
        %v2173 = vsub.s32 0, %v2172
        %v2174 = vadd.s32 %v2169, 1
        %vm2175 = vcmp.gt.s32.totalorder %v2174, 0
        %v2176 = vsel %vm2175, %v2174, 0
        %v2177 = vshrl.u32 %v2176, 5
        %v2178 = vand.u32 %v2176, 31
        %v2179 = vsub.s32 32, %v2178
        %v2180 = vshrl.u32 683565275, %v2179
        %v2181 = vshll.u32 683565275, %v2178
        %v2182 = vshrl.u32 2475754826, %v2179
        %v2183 = vor.u32 %v2181, %v2182
        %v2184 = vshll.u32 2475754826, %v2178
        %v2185 = vshrl.u32 2131351028, %v2179
        %v2186 = vor.u32 %v2184, %v2185
        %v2187 = vshll.u32 2131351028, %v2178
        %v2188 = vshrl.u32 2102212464, %v2179
        %v2189 = vor.u32 %v2187, %v2188
        %v2190 = vshll.u32 2102212464, %v2178
        %v2191 = vshrl.u32 920167782, %v2179
        %v2192 = vor.u32 %v2190, %v2191
        %v2193 = vshll.u32 920167782, %v2178
        %v2194 = vshrl.u32 1326507024, %v2179
        %v2195 = vor.u32 %v2193, %v2194
        %vm2196 = vcmp.lt.s32.totalorder %v2177, 1
        %vm2197 = vcmp.lt.s32.totalorder %v2177, 2
        %vm2198 = vcmp.lt.s32.totalorder %v2177, 3
        %vm2199 = vcmp.lt.s32.totalorder %v2177, 4
        %v2200 = vsel %vm2196, %v2180, %v2183
        %v2201 = vsel %vm2199, %v2189, 2102212464
        %v2202 = vsel %vm2198, %v2186, %v2201
        %v2203 = vsel %vm2197, %v2200, %v2202
        %v2204 = vsel %vm2196, %v2183, %v2186
        %v2205 = vsel %vm2199, %v2192, 920167782
        %v2206 = vsel %vm2198, %v2189, %v2205
        %v2207 = vsel %vm2197, %v2204, %v2206
        %v2208 = vsel %vm2196, %v2186, %v2189
        %v2209 = vsel %vm2199, %v2195, 1326507024
        %v2210 = vsel %vm2198, %v2192, %v2209
        %v2211 = vsel %vm2197, %v2208, %v2210
        %v2212 = vshll.u32 %v2172, 8
        %v2213 = vmul.u32.u64.compose %v2212, %v2211
        %v2214 = vextract.low.u32 %v2213
        %v2215 = vextract.high.u32 %v2213
        %v2216 = vmul.u32.u64.compose %v2212, %v2207
        %v2217 = vextract.low.u32 %v2216
        %v2218 = vextract.high.u32 %v2216
        %v2219 = vmul.u32 %v2212, %v2203
        %v2220 = vadd.s32 %v2215, %v2217
        %vm2221 = vc.u32 %v2215, %v2217
        %v2222 = vadd.s32 %v2218, 1
        %v2223 = vsel %vm2221, %v2222, %v2218
        %v2224 = vadd.s32 %v2219, %v2223
        %v2225 = vadd.s32 %v2224, 536870912
        %v2226 = vshrl.u32 %v2225, 30
        %v2227 = vshll.u32 %v2226, 30
        %v2228 = vsub.s32 %v2224, %v2227
        %vm2229 = vcmp.lt.s32.totalorder %v2228, 0
        %v2230 = vsub.s32 0, %v2228
        %v2231 = vsel %vm2229, %v2230, %v2228
        %v2232 = vclz %v2231
        %v2233 = vsub.s32 %v2232, 2
        %vm2234 = vcmp.gt.s32.totalorder 0, %v2233
        %v2235 = vsel %vm2234, 0, %v2233
        %v2236 = vsub.s32 32, %v2235
        %v2237 = vshll.u32 %v2228, %v2235
        %v2238 = vshrl.u32 %v2220, %v2236
        %v2239 = vor.u32 %v2237, %v2238
        %v2240 = vsub.s32 4294967266, %v2235
        %v2241 = vadd.s32 %v2240, 127
        %v2242 = vshll.u32 %v2241, 23
        %v2243 = vor.u32 4788187, %v2242
        %v2244 = vand.u32 2147483647, %v2243
        %v2246 = vcvt.s32.f32 %v2239
        %v2247 = vmul.f32 %v2246, %v2244
        %v2248 = vxor.u32 %v2247, 2147483648
        %v2249 = vsel %vm2166, %v2248, %v2247
        %v2250 = vsub.s32 4, %v2226
        %v2251 = vsel %vm2166, %v2250, %v2226
        %v2252 = vsel %vm2165, %v761, %v2249
        %v2253 = vsel %vm2165, 0, %v2251
        %v2254 = vcosq.f32.pop %v2252
        %v2255 = vsinq.f32.pop %v2252
        %vm2256 = vweird.f32 %v761
        %v2257 = vadd.s32 %v2253, 3
        %v2258 = vand.u32 %v2257, 3
        %vm2259 = vcmp.lt.s32.totalorder %v2258, 2
        %vm2260 = vcmp.eq.s32.totalorder %v2258, 0
        %v2261 = vxor.u32 %v2255, 2147483648
        %v2262 = vsel %vm2260, %v2254, %v2261
        %vm2263 = vcmp.eq.s32.totalorder %v2258, 2
        %v2264 = vxor.u32 %v2254, 2147483648
        %v2265 = vsel %vm2263, %v2264, %v2255
        %v2266 = vsel %vm2259, %v2262, %v2265
        %v2267 = vsel %vm2256, nan, %v2266
        %v2268 = vand.u32 2147483647, %v762
        %vm2269 = vcmp.le.f32.partialorder %v2268, 0.7853982
        %vm2270 = vcmp.lt.s32.totalorder %v762, 0
        %v2271 = vand.u32 %v762, 2139095040
        %v2272 = vshrl.u32 %v2271, 23
        %v2273 = vsub.s32 %v2272, 127
        %v2274 = vand.u32 2147483647, %v762
        %v2275 = vand.u32 %v2274, 8388607
        %v2276 = vor.u32 %v2275, 8388608
        %v2277 = vsub.s32 0, %v2276
        %v2278 = vadd.s32 %v2273, 1
        %vm2279 = vcmp.gt.s32.totalorder %v2278, 0
        %v2280 = vsel %vm2279, %v2278, 0
        %v2281 = vshrl.u32 %v2280, 5
        %v2282 = vand.u32 %v2280, 31
        %v2283 = vsub.s32 32, %v2282
        %v2284 = vshrl.u32 683565275, %v2283
        %v2285 = vshll.u32 683565275, %v2282
        %v2286 = vshrl.u32 2475754826, %v2283
        %v2287 = vor.u32 %v2285, %v2286
        %v2288 = vshll.u32 2475754826, %v2282
        %v2289 = vshrl.u32 2131351028, %v2283
        %v2290 = vor.u32 %v2288, %v2289
        %v2291 = vshll.u32 2131351028, %v2282
        %v2292 = vshrl.u32 2102212464, %v2283
        %v2293 = vor.u32 %v2291, %v2292
        %v2294 = vshll.u32 2102212464, %v2282
        %v2295 = vshrl.u32 920167782, %v2283
        %v2296 = vor.u32 %v2294, %v2295
        %v2297 = vshll.u32 920167782, %v2282
        %v2298 = vshrl.u32 1326507024, %v2283
        %v2299 = vor.u32 %v2297, %v2298
        %vm2300 = vcmp.lt.s32.totalorder %v2281, 1
        %vm2301 = vcmp.lt.s32.totalorder %v2281, 2
        %vm2302 = vcmp.lt.s32.totalorder %v2281, 3
        %vm2303 = vcmp.lt.s32.totalorder %v2281, 4
        %v2304 = vsel %vm2300, %v2284, %v2287
        %v2305 = vsel %vm2303, %v2293, 2102212464
        %v2306 = vsel %vm2302, %v2290, %v2305
        %v2307 = vsel %vm2301, %v2304, %v2306
        %v2308 = vsel %vm2300, %v2287, %v2290
        %v2309 = vsel %vm2303, %v2296, 920167782
        %v2310 = vsel %vm2302, %v2293, %v2309
        %v2311 = vsel %vm2301, %v2308, %v2310
        %v2312 = vsel %vm2300, %v2290, %v2293
        %v2313 = vsel %vm2303, %v2299, 1326507024
        %v2314 = vsel %vm2302, %v2296, %v2313
        %v2315 = vsel %vm2301, %v2312, %v2314
        %v2316 = vshll.u32 %v2276, 8
        %v2317 = vmul.u32.u64.compose %v2316, %v2315
        %v2318 = vextract.low.u32 %v2317
        %v2319 = vextract.high.u32 %v2317
        %v2320 = vmul.u32.u64.compose %v2316, %v2311
        %v2321 = vextract.low.u32 %v2320
        %v2322 = vextract.high.u32 %v2320
        %v2323 = vmul.u32 %v2316, %v2307
        %v2324 = vadd.s32 %v2319, %v2321
        %vm2325 = vc.u32 %v2319, %v2321
        %v2326 = vadd.s32 %v2322, 1
        %v2327 = vsel %vm2325, %v2326, %v2322
        %v2328 = vadd.s32 %v2323, %v2327
        %v2329 = vadd.s32 %v2328, 536870912
        %v2330 = vshrl.u32 %v2329, 30
        %v2331 = vshll.u32 %v2330, 30
        %v2332 = vsub.s32 %v2328, %v2331
        %vm2333 = vcmp.lt.s32.totalorder %v2332, 0
        %v2334 = vsub.s32 0, %v2332
        %v2335 = vsel %vm2333, %v2334, %v2332
        %v2336 = vclz %v2335
        %v2337 = vsub.s32 %v2336, 2
        %vm2338 = vcmp.gt.s32.totalorder 0, %v2337
        %v2339 = vsel %vm2338, 0, %v2337
        %v2340 = vsub.s32 32, %v2339
        %v2341 = vshll.u32 %v2332, %v2339
        %v2342 = vshrl.u32 %v2324, %v2340
        %v2343 = vor.u32 %v2341, %v2342
        %v2344 = vsub.s32 4294967266, %v2339
        %v2345 = vadd.s32 %v2344, 127
        %v2346 = vshll.u32 %v2345, 23
        %v2347 = vor.u32 4788187, %v2346
        %v2348 = vand.u32 2147483647, %v2347
        %v2350 = vcvt.s32.f32 %v2343
        %v2351 = vmul.f32 %v2350, %v2348
        %v2352 = vxor.u32 %v2351, 2147483648
        %v2353 = vsel %vm2270, %v2352, %v2351
        %v2354 = vsub.s32 4, %v2330
        %v2355 = vsel %vm2270, %v2354, %v2330
        %v2356 = vsel %vm2269, %v762, %v2353
        %v2357 = vsel %vm2269, 0, %v2355
        %v2358 = vcosq.f32.pop %v2356
        %v2359 = vsinq.f32.pop %v2356
        %vm2360 = vweird.f32 %v762
        %v2361 = vadd.s32 %v2357, 3
        %v2362 = vand.u32 %v2361, 3
        %vm2363 = vcmp.lt.s32.totalorder %v2362, 2
        %vm2364 = vcmp.eq.s32.totalorder %v2362, 0
        %v2365 = vxor.u32 %v2359, 2147483648
        %v2366 = vsel %vm2364, %v2358, %v2365
        %vm2367 = vcmp.eq.s32.totalorder %v2362, 2
        %v2368 = vxor.u32 %v2358, 2147483648
        %v2369 = vsel %vm2367, %v2368, %v2359
        %v2370 = vsel %vm2363, %v2366, %v2369
        %v2371 = vsel %vm2360, nan, %v2370
        %v2372 = vand.u32 2147483647, %v763
        %vm2373 = vcmp.le.f32.partialorder %v2372, 0.7853982
        %vm2374 = vcmp.lt.s32.totalorder %v763, 0
        %v2375 = vand.u32 %v763, 2139095040
        %v2376 = vshrl.u32 %v2375, 23
        %v2377 = vsub.s32 %v2376, 127
        %v2378 = vand.u32 2147483647, %v763
        %v2379 = vand.u32 %v2378, 8388607
        %v2380 = vor.u32 %v2379, 8388608
        %v2381 = vsub.s32 0, %v2380
        %v2382 = vadd.s32 %v2377, 1
        %vm2383 = vcmp.gt.s32.totalorder %v2382, 0
        %v2384 = vsel %vm2383, %v2382, 0
        %v2385 = vshrl.u32 %v2384, 5
        %v2386 = vand.u32 %v2384, 31
        %v2387 = vsub.s32 32, %v2386
        %v2388 = vshrl.u32 683565275, %v2387
        %v2389 = vshll.u32 683565275, %v2386
        %v2390 = vshrl.u32 2475754826, %v2387
        %v2391 = vor.u32 %v2389, %v2390
        %v2392 = vshll.u32 2475754826, %v2386
        %v2393 = vshrl.u32 2131351028, %v2387
        %v2394 = vor.u32 %v2392, %v2393
        %v2395 = vshll.u32 2131351028, %v2386
        %v2396 = vshrl.u32 2102212464, %v2387
        %v2397 = vor.u32 %v2395, %v2396
        %v2398 = vshll.u32 2102212464, %v2386
        %v2399 = vshrl.u32 920167782, %v2387
        %v2400 = vor.u32 %v2398, %v2399
        %v2401 = vshll.u32 920167782, %v2386
        %v2402 = vshrl.u32 1326507024, %v2387
        %v2403 = vor.u32 %v2401, %v2402
        %vm2404 = vcmp.lt.s32.totalorder %v2385, 1
        %vm2405 = vcmp.lt.s32.totalorder %v2385, 2
        %vm2406 = vcmp.lt.s32.totalorder %v2385, 3
        %vm2407 = vcmp.lt.s32.totalorder %v2385, 4
        %v2408 = vsel %vm2404, %v2388, %v2391
        %v2409 = vsel %vm2407, %v2397, 2102212464
        %v2410 = vsel %vm2406, %v2394, %v2409
        %v2411 = vsel %vm2405, %v2408, %v2410
        %v2412 = vsel %vm2404, %v2391, %v2394
        %v2413 = vsel %vm2407, %v2400, 920167782
        %v2414 = vsel %vm2406, %v2397, %v2413
        %v2415 = vsel %vm2405, %v2412, %v2414
        %v2416 = vsel %vm2404, %v2394, %v2397
        %v2417 = vsel %vm2407, %v2403, 1326507024
        %v2418 = vsel %vm2406, %v2400, %v2417
        %v2419 = vsel %vm2405, %v2416, %v2418
        %v2420 = vshll.u32 %v2380, 8
        %v2421 = vmul.u32.u64.compose %v2420, %v2419
        %v2422 = vextract.low.u32 %v2421
        %v2423 = vextract.high.u32 %v2421
        %v2424 = vmul.u32.u64.compose %v2420, %v2415
        %v2425 = vextract.low.u32 %v2424
        %v2426 = vextract.high.u32 %v2424
        %v2427 = vmul.u32 %v2420, %v2411
        %v2428 = vadd.s32 %v2423, %v2425
        %vm2429 = vc.u32 %v2423, %v2425
        %v2430 = vadd.s32 %v2426, 1
        %v2431 = vsel %vm2429, %v2430, %v2426
        %v2432 = vadd.s32 %v2427, %v2431
        %v2433 = vadd.s32 %v2432, 536870912
        %v2434 = vshrl.u32 %v2433, 30
        %v2435 = vshll.u32 %v2434, 30
        %v2436 = vsub.s32 %v2432, %v2435
        %vm2437 = vcmp.lt.s32.totalorder %v2436, 0
        %v2438 = vsub.s32 0, %v2436
        %v2439 = vsel %vm2437, %v2438, %v2436
        %v2440 = vclz %v2439
        %v2441 = vsub.s32 %v2440, 2
        %vm2442 = vcmp.gt.s32.totalorder 0, %v2441
        %v2443 = vsel %vm2442, 0, %v2441
        %v2444 = vsub.s32 32, %v2443
        %v2445 = vshll.u32 %v2436, %v2443
        %v2446 = vshrl.u32 %v2428, %v2444
        %v2447 = vor.u32 %v2445, %v2446
        %v2448 = vsub.s32 4294967266, %v2443
        %v2449 = vadd.s32 %v2448, 127
        %v2450 = vshll.u32 %v2449, 23
        %v2451 = vor.u32 4788187, %v2450
        %v2452 = vand.u32 2147483647, %v2451
        %v2454 = vcvt.s32.f32 %v2447
        %v2455 = vmul.f32 %v2454, %v2452
        %v2456 = vxor.u32 %v2455, 2147483648
        %v2457 = vsel %vm2374, %v2456, %v2455
        %v2458 = vsub.s32 4, %v2434
        %v2459 = vsel %vm2374, %v2458, %v2434
        %v2460 = vsel %vm2373, %v763, %v2457
        %v2461 = vsel %vm2373, 0, %v2459
        %v2462 = vcosq.f32.pop %v2460
        %v2463 = vsinq.f32.pop %v2460
        %vm2464 = vweird.f32 %v763
        %v2465 = vadd.s32 %v2461, 3
        %v2466 = vand.u32 %v2465, 3
        %vm2467 = vcmp.lt.s32.totalorder %v2466, 2
        %vm2468 = vcmp.eq.s32.totalorder %v2466, 0
        %v2469 = vxor.u32 %v2463, 2147483648
        %v2470 = vsel %vm2468, %v2462, %v2469
        %vm2471 = vcmp.eq.s32.totalorder %v2466, 2
        %v2472 = vxor.u32 %v2462, 2147483648
        %v2473 = vsel %vm2471, %v2472, %v2463
        %v2474 = vsel %vm2467, %v2470, %v2473
        %v2475 = vsel %vm2464, nan, %v2474
        %v2476 = vand.u32 2147483647, %v764
        %vm2477 = vcmp.le.f32.partialorder %v2476, 0.7853982
        %vm2478 = vcmp.lt.s32.totalorder %v764, 0
        %v2479 = vand.u32 %v764, 2139095040
        %v2480 = vshrl.u32 %v2479, 23
        %v2481 = vsub.s32 %v2480, 127
        %v2482 = vand.u32 2147483647, %v764
        %v2483 = vand.u32 %v2482, 8388607
        %v2484 = vor.u32 %v2483, 8388608
        %v2485 = vsub.s32 0, %v2484
        %v2486 = vadd.s32 %v2481, 1
        %vm2487 = vcmp.gt.s32.totalorder %v2486, 0
        %v2488 = vsel %vm2487, %v2486, 0
        %v2489 = vshrl.u32 %v2488, 5
        %v2490 = vand.u32 %v2488, 31
        %v2491 = vsub.s32 32, %v2490
        %v2492 = vshrl.u32 683565275, %v2491
        %v2493 = vshll.u32 683565275, %v2490
        %v2494 = vshrl.u32 2475754826, %v2491
        %v2495 = vor.u32 %v2493, %v2494
        %v2496 = vshll.u32 2475754826, %v2490
        %v2497 = vshrl.u32 2131351028, %v2491
        %v2498 = vor.u32 %v2496, %v2497
        %v2499 = vshll.u32 2131351028, %v2490
        %v2500 = vshrl.u32 2102212464, %v2491
        %v2501 = vor.u32 %v2499, %v2500
        %v2502 = vshll.u32 2102212464, %v2490
        %v2503 = vshrl.u32 920167782, %v2491
        %v2504 = vor.u32 %v2502, %v2503
        %v2505 = vshll.u32 920167782, %v2490
        %v2506 = vshrl.u32 1326507024, %v2491
        %v2507 = vor.u32 %v2505, %v2506
        %vm2508 = vcmp.lt.s32.totalorder %v2489, 1
        %vm2509 = vcmp.lt.s32.totalorder %v2489, 2
        %vm2510 = vcmp.lt.s32.totalorder %v2489, 3
        %vm2511 = vcmp.lt.s32.totalorder %v2489, 4
        %v2512 = vsel %vm2508, %v2492, %v2495
        %v2513 = vsel %vm2511, %v2501, 2102212464
        %v2514 = vsel %vm2510, %v2498, %v2513
        %v2515 = vsel %vm2509, %v2512, %v2514
        %v2516 = vsel %vm2508, %v2495, %v2498
        %v2517 = vsel %vm2511, %v2504, 920167782
        %v2518 = vsel %vm2510, %v2501, %v2517
        %v2519 = vsel %vm2509, %v2516, %v2518
        %v2520 = vsel %vm2508, %v2498, %v2501
        %v2521 = vsel %vm2511, %v2507, 1326507024
        %v2522 = vsel %vm2510, %v2504, %v2521
        %v2523 = vsel %vm2509, %v2520, %v2522
        %v2524 = vshll.u32 %v2484, 8
        %v2525 = vmul.u32.u64.compose %v2524, %v2523
        %v2526 = vextract.low.u32 %v2525
        %v2527 = vextract.high.u32 %v2525
        %v2528 = vmul.u32.u64.compose %v2524, %v2519
        %v2529 = vextract.low.u32 %v2528
        %v2530 = vextract.high.u32 %v2528
        %v2531 = vmul.u32 %v2524, %v2515
        %v2532 = vadd.s32 %v2527, %v2529
        %vm2533 = vc.u32 %v2527, %v2529
        %v2534 = vadd.s32 %v2530, 1
        %v2535 = vsel %vm2533, %v2534, %v2530
        %v2536 = vadd.s32 %v2531, %v2535
        %v2537 = vadd.s32 %v2536, 536870912
        %v2538 = vshrl.u32 %v2537, 30
        %v2539 = vshll.u32 %v2538, 30
        %v2540 = vsub.s32 %v2536, %v2539
        %vm2541 = vcmp.lt.s32.totalorder %v2540, 0
        %v2542 = vsub.s32 0, %v2540
        %v2543 = vsel %vm2541, %v2542, %v2540
        %v2544 = vclz %v2543
        %v2545 = vsub.s32 %v2544, 2
        %vm2546 = vcmp.gt.s32.totalorder 0, %v2545
        %v2547 = vsel %vm2546, 0, %v2545
        %v2548 = vsub.s32 32, %v2547
        %v2549 = vshll.u32 %v2540, %v2547
        %v2550 = vshrl.u32 %v2532, %v2548
        %v2551 = vor.u32 %v2549, %v2550
        %v2552 = vsub.s32 4294967266, %v2547
        %v2553 = vadd.s32 %v2552, 127
        %v2554 = vshll.u32 %v2553, 23
        %v2555 = vor.u32 4788187, %v2554
        %v2556 = vand.u32 2147483647, %v2555
        %v2558 = vcvt.s32.f32 %v2551
        %v2559 = vmul.f32 %v2558, %v2556
        %v2560 = vxor.u32 %v2559, 2147483648
        %v2561 = vsel %vm2478, %v2560, %v2559
        %v2562 = vsub.s32 4, %v2538
        %v2563 = vsel %vm2478, %v2562, %v2538
        %v2564 = vsel %vm2477, %v764, %v2561
        %v2565 = vsel %vm2477, 0, %v2563
        %v2566 = vcosq.f32.pop %v2564
        %v2567 = vsinq.f32.pop %v2564
        %vm2568 = vweird.f32 %v764
        %v2569 = vadd.s32 %v2565, 3
        %v2570 = vand.u32 %v2569, 3
        %vm2571 = vcmp.lt.s32.totalorder %v2570, 2
        %vm2572 = vcmp.eq.s32.totalorder %v2570, 0
        %v2573 = vxor.u32 %v2567, 2147483648
        %v2574 = vsel %vm2572, %v2566, %v2573
        %vm2575 = vcmp.eq.s32.totalorder %v2570, 2
        %v2576 = vxor.u32 %v2566, 2147483648
        %v2577 = vsel %vm2575, %v2576, %v2567
        %v2578 = vsel %vm2571, %v2574, %v2577
        %v2579 = vsel %vm2568, nan, %v2578
        %v2580 = vand.u32 2147483647, %v765
        %vm2581 = vcmp.le.f32.partialorder %v2580, 0.7853982
        %vm2582 = vcmp.lt.s32.totalorder %v765, 0
        %v2583 = vand.u32 %v765, 2139095040
        %v2584 = vshrl.u32 %v2583, 23
        %v2585 = vsub.s32 %v2584, 127
        %v2586 = vand.u32 2147483647, %v765
        %v2587 = vand.u32 %v2586, 8388607
        %v2588 = vor.u32 %v2587, 8388608
        %v2589 = vsub.s32 0, %v2588
        %v2590 = vadd.s32 %v2585, 1
        %vm2591 = vcmp.gt.s32.totalorder %v2590, 0
        %v2592 = vsel %vm2591, %v2590, 0
        %v2593 = vshrl.u32 %v2592, 5
        %v2594 = vand.u32 %v2592, 31
        %v2595 = vsub.s32 32, %v2594
        %v2596 = vshrl.u32 683565275, %v2595
        %v2597 = vshll.u32 683565275, %v2594
        %v2598 = vshrl.u32 2475754826, %v2595
        %v2599 = vor.u32 %v2597, %v2598
        %v2600 = vshll.u32 2475754826, %v2594
        %v2601 = vshrl.u32 2131351028, %v2595
        %v2602 = vor.u32 %v2600, %v2601
        %v2603 = vshll.u32 2131351028, %v2594
        %v2604 = vshrl.u32 2102212464, %v2595
        %v2605 = vor.u32 %v2603, %v2604
        %v2606 = vshll.u32 2102212464, %v2594
        %v2607 = vshrl.u32 920167782, %v2595
        %v2608 = vor.u32 %v2606, %v2607
        %v2609 = vshll.u32 920167782, %v2594
        %v2610 = vshrl.u32 1326507024, %v2595
        %v2611 = vor.u32 %v2609, %v2610
        %vm2612 = vcmp.lt.s32.totalorder %v2593, 1
        %vm2613 = vcmp.lt.s32.totalorder %v2593, 2
        %vm2614 = vcmp.lt.s32.totalorder %v2593, 3
        %vm2615 = vcmp.lt.s32.totalorder %v2593, 4
        %v2616 = vsel %vm2612, %v2596, %v2599
        %v2617 = vsel %vm2615, %v2605, 2102212464
        %v2618 = vsel %vm2614, %v2602, %v2617
        %v2619 = vsel %vm2613, %v2616, %v2618
        %v2620 = vsel %vm2612, %v2599, %v2602
        %v2621 = vsel %vm2615, %v2608, 920167782
        %v2622 = vsel %vm2614, %v2605, %v2621
        %v2623 = vsel %vm2613, %v2620, %v2622
        %v2624 = vsel %vm2612, %v2602, %v2605
        %v2625 = vsel %vm2615, %v2611, 1326507024
        %v2626 = vsel %vm2614, %v2608, %v2625
        %v2627 = vsel %vm2613, %v2624, %v2626
        %v2628 = vshll.u32 %v2588, 8
        %v2629 = vmul.u32.u64.compose %v2628, %v2627
        %v2630 = vextract.low.u32 %v2629
        %v2631 = vextract.high.u32 %v2629
        %v2632 = vmul.u32.u64.compose %v2628, %v2623
        %v2633 = vextract.low.u32 %v2632
        %v2634 = vextract.high.u32 %v2632
        %v2635 = vmul.u32 %v2628, %v2619
        %v2636 = vadd.s32 %v2631, %v2633
        %vm2637 = vc.u32 %v2631, %v2633
        %v2638 = vadd.s32 %v2634, 1
        %v2639 = vsel %vm2637, %v2638, %v2634
        %v2640 = vadd.s32 %v2635, %v2639
        %v2641 = vadd.s32 %v2640, 536870912
        %v2642 = vshrl.u32 %v2641, 30
        %v2643 = vshll.u32 %v2642, 30
        %v2644 = vsub.s32 %v2640, %v2643
        %vm2645 = vcmp.lt.s32.totalorder %v2644, 0
        %v2646 = vsub.s32 0, %v2644
        %v2647 = vsel %vm2645, %v2646, %v2644
        %v2648 = vclz %v2647
        %v2649 = vsub.s32 %v2648, 2
        %vm2650 = vcmp.gt.s32.totalorder 0, %v2649
        %v2651 = vsel %vm2650, 0, %v2649
        %v2652 = vsub.s32 32, %v2651
        %v2653 = vshll.u32 %v2644, %v2651
        %v2654 = vshrl.u32 %v2636, %v2652
        %v2655 = vor.u32 %v2653, %v2654
        %v2656 = vsub.s32 4294967266, %v2651
        %v2657 = vadd.s32 %v2656, 127
        %v2658 = vshll.u32 %v2657, 23
        %v2659 = vor.u32 4788187, %v2658
        %v2660 = vand.u32 2147483647, %v2659
        %v2662 = vcvt.s32.f32 %v2655
        %v2663 = vmul.f32 %v2662, %v2660
        %v2664 = vxor.u32 %v2663, 2147483648
        %v2665 = vsel %vm2582, %v2664, %v2663
        %v2666 = vsub.s32 4, %v2642
        %v2667 = vsel %vm2582, %v2666, %v2642
        %v2668 = vsel %vm2581, %v765, %v2665
        %v2669 = vsel %vm2581, 0, %v2667
        %v2670 = vcosq.f32.pop %v2668
        %v2671 = vsinq.f32.pop %v2668
        %vm2672 = vweird.f32 %v765
        %v2673 = vadd.s32 %v2669, 3
        %v2674 = vand.u32 %v2673, 3
        %vm2675 = vcmp.lt.s32.totalorder %v2674, 2
        %vm2676 = vcmp.eq.s32.totalorder %v2674, 0
        %v2677 = vxor.u32 %v2671, 2147483648
        %v2678 = vsel %vm2676, %v2670, %v2677
        %vm2679 = vcmp.eq.s32.totalorder %v2674, 2
        %v2680 = vxor.u32 %v2670, 2147483648
        %v2681 = vsel %vm2679, %v2680, %v2671
        %v2682 = vsel %vm2675, %v2678, %v2681
        %v2683 = vsel %vm2672, nan, %v2682
        %v2684 = vand.u32 2147483647, %v766
        %vm2685 = vcmp.le.f32.partialorder %v2684, 0.7853982
        %vm2686 = vcmp.lt.s32.totalorder %v766, 0
        %v2687 = vand.u32 %v766, 2139095040
        %v2688 = vshrl.u32 %v2687, 23
        %v2689 = vsub.s32 %v2688, 127
        %v2690 = vand.u32 2147483647, %v766
        %v2691 = vand.u32 %v2690, 8388607
        %v2692 = vor.u32 %v2691, 8388608
        %v2693 = vsub.s32 0, %v2692
        %v2694 = vadd.s32 %v2689, 1
        %vm2695 = vcmp.gt.s32.totalorder %v2694, 0
        %v2696 = vsel %vm2695, %v2694, 0
        %v2697 = vshrl.u32 %v2696, 5
        %v2698 = vand.u32 %v2696, 31
        %v2699 = vsub.s32 32, %v2698
        %v2700 = vshrl.u32 683565275, %v2699
        %v2701 = vshll.u32 683565275, %v2698
        %v2702 = vshrl.u32 2475754826, %v2699
        %v2703 = vor.u32 %v2701, %v2702
        %v2704 = vshll.u32 2475754826, %v2698
        %v2705 = vshrl.u32 2131351028, %v2699
        %v2706 = vor.u32 %v2704, %v2705
        %v2707 = vshll.u32 2131351028, %v2698
        %v2708 = vshrl.u32 2102212464, %v2699
        %v2709 = vor.u32 %v2707, %v2708
        %v2710 = vshll.u32 2102212464, %v2698
        %v2711 = vshrl.u32 920167782, %v2699
        %v2712 = vor.u32 %v2710, %v2711
        %v2713 = vshll.u32 920167782, %v2698
        %v2714 = vshrl.u32 1326507024, %v2699
        %v2715 = vor.u32 %v2713, %v2714
        %vm2716 = vcmp.lt.s32.totalorder %v2697, 1
        %vm2717 = vcmp.lt.s32.totalorder %v2697, 2
        %vm2718 = vcmp.lt.s32.totalorder %v2697, 3
        %vm2719 = vcmp.lt.s32.totalorder %v2697, 4
        %v2720 = vsel %vm2716, %v2700, %v2703
        %v2721 = vsel %vm2719, %v2709, 2102212464
        %v2722 = vsel %vm2718, %v2706, %v2721
        %v2723 = vsel %vm2717, %v2720, %v2722
        %v2724 = vsel %vm2716, %v2703, %v2706
        %v2725 = vsel %vm2719, %v2712, 920167782
        %v2726 = vsel %vm2718, %v2709, %v2725
        %v2727 = vsel %vm2717, %v2724, %v2726
        %v2728 = vsel %vm2716, %v2706, %v2709
        %v2729 = vsel %vm2719, %v2715, 1326507024
        %v2730 = vsel %vm2718, %v2712, %v2729
        %v2731 = vsel %vm2717, %v2728, %v2730
        %v2732 = vshll.u32 %v2692, 8
        %v2733 = vmul.u32.u64.compose %v2732, %v2731
        %v2734 = vextract.low.u32 %v2733
        %v2735 = vextract.high.u32 %v2733
        %v2736 = vmul.u32.u64.compose %v2732, %v2727
        %v2737 = vextract.low.u32 %v2736
        %v2738 = vextract.high.u32 %v2736
        %v2739 = vmul.u32 %v2732, %v2723
        %v2740 = vadd.s32 %v2735, %v2737
        %vm2741 = vc.u32 %v2735, %v2737
        %v2742 = vadd.s32 %v2738, 1
        %v2743 = vsel %vm2741, %v2742, %v2738
        %v2744 = vadd.s32 %v2739, %v2743
        %v2745 = vadd.s32 %v2744, 536870912
        %v2746 = vshrl.u32 %v2745, 30
        %v2747 = vshll.u32 %v2746, 30
        %v2748 = vsub.s32 %v2744, %v2747
        %vm2749 = vcmp.lt.s32.totalorder %v2748, 0
        %v2750 = vsub.s32 0, %v2748
        %v2751 = vsel %vm2749, %v2750, %v2748
        %v2752 = vclz %v2751
        %v2753 = vsub.s32 %v2752, 2
        %vm2754 = vcmp.gt.s32.totalorder 0, %v2753
        %v2755 = vsel %vm2754, 0, %v2753
        %v2756 = vsub.s32 32, %v2755
        %v2757 = vshll.u32 %v2748, %v2755
        %v2758 = vshrl.u32 %v2740, %v2756
        %v2759 = vor.u32 %v2757, %v2758
        %v2760 = vsub.s32 4294967266, %v2755
        %v2761 = vadd.s32 %v2760, 127
        %v2762 = vshll.u32 %v2761, 23
        %v2763 = vor.u32 4788187, %v2762
        %v2764 = vand.u32 2147483647, %v2763
        %v2766 = vcvt.s32.f32 %v2759
        %v2767 = vmul.f32 %v2766, %v2764
        %v2768 = vxor.u32 %v2767, 2147483648
        %v2769 = vsel %vm2686, %v2768, %v2767
        %v2770 = vsub.s32 4, %v2746
        %v2771 = vsel %vm2686, %v2770, %v2746
        %v2772 = vsel %vm2685, %v766, %v2769
        %v2773 = vsel %vm2685, 0, %v2771
        %v2774 = vcosq.f32.pop %v2772
        %v2775 = vsinq.f32.pop %v2772
        %vm2776 = vweird.f32 %v766
        %v2777 = vadd.s32 %v2773, 3
        %v2778 = vand.u32 %v2777, 3
        %vm2779 = vcmp.lt.s32.totalorder %v2778, 2
        %vm2780 = vcmp.eq.s32.totalorder %v2778, 0
        %v2781 = vxor.u32 %v2775, 2147483648
        %v2782 = vsel %vm2780, %v2774, %v2781
        %vm2783 = vcmp.eq.s32.totalorder %v2778, 2
        %v2784 = vxor.u32 %v2774, 2147483648
        %v2785 = vsel %vm2783, %v2784, %v2775
        %v2786 = vsel %vm2779, %v2782, %v2785
        %v2787 = vsel %vm2776, nan, %v2786
        %v2788 = vand.u32 2147483647, %v767
        %vm2789 = vcmp.le.f32.partialorder %v2788, 0.7853982
        %vm2790 = vcmp.lt.s32.totalorder %v767, 0
        %v2791 = vand.u32 %v767, 2139095040
        %v2792 = vshrl.u32 %v2791, 23
        %v2793 = vsub.s32 %v2792, 127
        %v2794 = vand.u32 2147483647, %v767
        %v2795 = vand.u32 %v2794, 8388607
        %v2796 = vor.u32 %v2795, 8388608
        %v2797 = vsub.s32 0, %v2796
        %v2798 = vadd.s32 %v2793, 1
        %vm2799 = vcmp.gt.s32.totalorder %v2798, 0
        %v2800 = vsel %vm2799, %v2798, 0
        %v2801 = vshrl.u32 %v2800, 5
        %v2802 = vand.u32 %v2800, 31
        %v2803 = vsub.s32 32, %v2802
        %v2804 = vshrl.u32 683565275, %v2803
        %v2805 = vshll.u32 683565275, %v2802
        %v2806 = vshrl.u32 2475754826, %v2803
        %v2807 = vor.u32 %v2805, %v2806
        %v2808 = vshll.u32 2475754826, %v2802
        %v2809 = vshrl.u32 2131351028, %v2803
        %v2810 = vor.u32 %v2808, %v2809
        %v2811 = vshll.u32 2131351028, %v2802
        %v2812 = vshrl.u32 2102212464, %v2803
        %v2813 = vor.u32 %v2811, %v2812
        %v2814 = vshll.u32 2102212464, %v2802
        %v2815 = vshrl.u32 920167782, %v2803
        %v2816 = vor.u32 %v2814, %v2815
        %v2817 = vshll.u32 920167782, %v2802
        %v2818 = vshrl.u32 1326507024, %v2803
        %v2819 = vor.u32 %v2817, %v2818
        %vm2820 = vcmp.lt.s32.totalorder %v2801, 1
        %vm2821 = vcmp.lt.s32.totalorder %v2801, 2
        %vm2822 = vcmp.lt.s32.totalorder %v2801, 3
        %vm2823 = vcmp.lt.s32.totalorder %v2801, 4
        %v2824 = vsel %vm2820, %v2804, %v2807
        %v2825 = vsel %vm2823, %v2813, 2102212464
        %v2826 = vsel %vm2822, %v2810, %v2825
        %v2827 = vsel %vm2821, %v2824, %v2826
        %v2828 = vsel %vm2820, %v2807, %v2810
        %v2829 = vsel %vm2823, %v2816, 920167782
        %v2830 = vsel %vm2822, %v2813, %v2829
        %v2831 = vsel %vm2821, %v2828, %v2830
        %v2832 = vsel %vm2820, %v2810, %v2813
        %v2833 = vsel %vm2823, %v2819, 1326507024
        %v2834 = vsel %vm2822, %v2816, %v2833
        %v2835 = vsel %vm2821, %v2832, %v2834
        %v2836 = vshll.u32 %v2796, 8
        %v2837 = vmul.u32.u64.compose %v2836, %v2835
        %v2838 = vextract.low.u32 %v2837
        %v2839 = vextract.high.u32 %v2837
        %v2840 = vmul.u32.u64.compose %v2836, %v2831
        %v2841 = vextract.low.u32 %v2840
        %v2842 = vextract.high.u32 %v2840
        %v2843 = vmul.u32 %v2836, %v2827
        %v2844 = vadd.s32 %v2839, %v2841
        %vm2845 = vc.u32 %v2839, %v2841
        %v2846 = vadd.s32 %v2842, 1
        %v2847 = vsel %vm2845, %v2846, %v2842
        %v2848 = vadd.s32 %v2843, %v2847
        %v2849 = vadd.s32 %v2848, 536870912
        %v2850 = vshrl.u32 %v2849, 30
        %v2851 = vshll.u32 %v2850, 30
        %v2852 = vsub.s32 %v2848, %v2851
        %vm2853 = vcmp.lt.s32.totalorder %v2852, 0
        %v2854 = vsub.s32 0, %v2852
        %v2855 = vsel %vm2853, %v2854, %v2852
        %v2856 = vclz %v2855
        %v2857 = vsub.s32 %v2856, 2
        %vm2858 = vcmp.gt.s32.totalorder 0, %v2857
        %v2859 = vsel %vm2858, 0, %v2857
        %v2860 = vsub.s32 32, %v2859
        %v2861 = vshll.u32 %v2852, %v2859
        %v2862 = vshrl.u32 %v2844, %v2860
        %v2863 = vor.u32 %v2861, %v2862
        %v2864 = vsub.s32 4294967266, %v2859
        %v2865 = vadd.s32 %v2864, 127
        %v2866 = vshll.u32 %v2865, 23
        %v2867 = vor.u32 4788187, %v2866
        %v2868 = vand.u32 2147483647, %v2867
        %v2870 = vcvt.s32.f32 %v2863
        %v2871 = vmul.f32 %v2870, %v2868
        %v2872 = vxor.u32 %v2871, 2147483648
        %v2873 = vsel %vm2790, %v2872, %v2871
        %v2874 = vsub.s32 4, %v2850
        %v2875 = vsel %vm2790, %v2874, %v2850
        %v2876 = vsel %vm2789, %v767, %v2873
        %v2877 = vsel %vm2789, 0, %v2875
        %v2878 = vcosq.f32.pop %v2876
        %v2879 = vsinq.f32.pop %v2876
        %vm2880 = vweird.f32 %v767
        %v2881 = vadd.s32 %v2877, 3
        %v2882 = vand.u32 %v2881, 3
        %vm2883 = vcmp.lt.s32.totalorder %v2882, 2
        %vm2884 = vcmp.eq.s32.totalorder %v2882, 0
        %v2885 = vxor.u32 %v2879, 2147483648
        %v2886 = vsel %vm2884, %v2878, %v2885
        %vm2887 = vcmp.eq.s32.totalorder %v2882, 2
        %v2888 = vxor.u32 %v2878, 2147483648
        %v2889 = vsel %vm2887, %v2888, %v2879
        %v2890 = vsel %vm2883, %v2886, %v2889
        %v2891 = vsel %vm2880, nan, %v2890
        %v2892 = vand.u32 2147483647, %v768
        %vm2893 = vcmp.le.f32.partialorder %v2892, 0.7853982
        %vm2894 = vcmp.lt.s32.totalorder %v768, 0
        %v2895 = vand.u32 %v768, 2139095040
        %v2896 = vshrl.u32 %v2895, 23
        %v2897 = vsub.s32 %v2896, 127
        %v2898 = vand.u32 2147483647, %v768
        %v2899 = vand.u32 %v2898, 8388607
        %v2900 = vor.u32 %v2899, 8388608
        %v2901 = vsub.s32 0, %v2900
        %v2902 = vadd.s32 %v2897, 1
        %vm2903 = vcmp.gt.s32.totalorder %v2902, 0
        %v2904 = vsel %vm2903, %v2902, 0
        %v2905 = vshrl.u32 %v2904, 5
        %v2906 = vand.u32 %v2904, 31
        %v2907 = vsub.s32 32, %v2906
        %v2908 = vshrl.u32 683565275, %v2907
        %v2909 = vshll.u32 683565275, %v2906
        %v2910 = vshrl.u32 2475754826, %v2907
        %v2911 = vor.u32 %v2909, %v2910
        %v2912 = vshll.u32 2475754826, %v2906
        %v2913 = vshrl.u32 2131351028, %v2907
        %v2914 = vor.u32 %v2912, %v2913
        %v2915 = vshll.u32 2131351028, %v2906
        %v2916 = vshrl.u32 2102212464, %v2907
        %v2917 = vor.u32 %v2915, %v2916
        %v2918 = vshll.u32 2102212464, %v2906
        %v2919 = vshrl.u32 920167782, %v2907
        %v2920 = vor.u32 %v2918, %v2919
        %v2921 = vshll.u32 920167782, %v2906
        %v2922 = vshrl.u32 1326507024, %v2907
        %v2923 = vor.u32 %v2921, %v2922
        %vm2924 = vcmp.lt.s32.totalorder %v2905, 1
        %vm2925 = vcmp.lt.s32.totalorder %v2905, 2
        %vm2926 = vcmp.lt.s32.totalorder %v2905, 3
        %vm2927 = vcmp.lt.s32.totalorder %v2905, 4
        %v2928 = vsel %vm2924, %v2908, %v2911
        %v2929 = vsel %vm2927, %v2917, 2102212464
        %v2930 = vsel %vm2926, %v2914, %v2929
        %v2931 = vsel %vm2925, %v2928, %v2930
        %v2932 = vsel %vm2924, %v2911, %v2914
        %v2933 = vsel %vm2927, %v2920, 920167782
        %v2934 = vsel %vm2926, %v2917, %v2933
        %v2935 = vsel %vm2925, %v2932, %v2934
        %v2936 = vsel %vm2924, %v2914, %v2917
        %v2937 = vsel %vm2927, %v2923, 1326507024
        %v2938 = vsel %vm2926, %v2920, %v2937
        %v2939 = vsel %vm2925, %v2936, %v2938
        %v2940 = vshll.u32 %v2900, 8
        %v2941 = vmul.u32.u64.compose %v2940, %v2939
        %v2942 = vextract.low.u32 %v2941
        %v2943 = vextract.high.u32 %v2941
        %v2944 = vmul.u32.u64.compose %v2940, %v2935
        %v2945 = vextract.low.u32 %v2944
        %v2946 = vextract.high.u32 %v2944
        %v2947 = vmul.u32 %v2940, %v2931
        %v2948 = vadd.s32 %v2943, %v2945
        %vm2949 = vc.u32 %v2943, %v2945
        %v2950 = vadd.s32 %v2946, 1
        %v2951 = vsel %vm2949, %v2950, %v2946
        %v2952 = vadd.s32 %v2947, %v2951
        %v2953 = vadd.s32 %v2952, 536870912
        %v2954 = vshrl.u32 %v2953, 30
        %v2955 = vshll.u32 %v2954, 30
        %v2956 = vsub.s32 %v2952, %v2955
        %vm2957 = vcmp.lt.s32.totalorder %v2956, 0
        %v2958 = vsub.s32 0, %v2956
        %v2959 = vsel %vm2957, %v2958, %v2956
        %v2960 = vclz %v2959
        %v2961 = vsub.s32 %v2960, 2
        %vm2962 = vcmp.gt.s32.totalorder 0, %v2961
        %v2963 = vsel %vm2962, 0, %v2961
        %v2964 = vsub.s32 32, %v2963
        %v2965 = vshll.u32 %v2956, %v2963
        %v2966 = vshrl.u32 %v2948, %v2964
        %v2967 = vor.u32 %v2965, %v2966
        %v2968 = vsub.s32 4294967266, %v2963
        %v2969 = vadd.s32 %v2968, 127
        %v2970 = vshll.u32 %v2969, 23
        %v2971 = vor.u32 4788187, %v2970
        %v2972 = vand.u32 2147483647, %v2971
        %v2974 = vcvt.s32.f32 %v2967
        %v2975 = vmul.f32 %v2974, %v2972
        %v2976 = vxor.u32 %v2975, 2147483648
        %v2977 = vsel %vm2894, %v2976, %v2975
        %v2978 = vsub.s32 4, %v2954
        %v2979 = vsel %vm2894, %v2978, %v2954
        %v2980 = vsel %vm2893, %v768, %v2977
        %v2981 = vsel %vm2893, 0, %v2979
        %v2982 = vcosq.f32.pop %v2980
        %v2983 = vsinq.f32.pop %v2980
        %vm2984 = vweird.f32 %v768
        %v2985 = vadd.s32 %v2981, 3
        %v2986 = vand.u32 %v2985, 3
        %vm2987 = vcmp.lt.s32.totalorder %v2986, 2
        %vm2988 = vcmp.eq.s32.totalorder %v2986, 0
        %v2989 = vxor.u32 %v2983, 2147483648
        %v2990 = vsel %vm2988, %v2982, %v2989
        %vm2991 = vcmp.eq.s32.totalorder %v2986, 2
        %v2992 = vxor.u32 %v2982, 2147483648
        %v2993 = vsel %vm2991, %v2992, %v2983
        %v2994 = vsel %vm2987, %v2990, %v2993
        %v2995 = vsel %vm2984, nan, %v2994
        %v2996 = vand.u32 2147483647, %v769
        %vm2997 = vcmp.le.f32.partialorder %v2996, 0.7853982
        %vm2998 = vcmp.lt.s32.totalorder %v769, 0
        %v2999 = vand.u32 %v769, 2139095040
        %v3000 = vshrl.u32 %v2999, 23
        %v3001 = vsub.s32 %v3000, 127
        %v3002 = vand.u32 2147483647, %v769
        %v3003 = vand.u32 %v3002, 8388607
        %v3004 = vor.u32 %v3003, 8388608
        %v3005 = vsub.s32 0, %v3004
        %v3006 = vadd.s32 %v3001, 1
        %vm3007 = vcmp.gt.s32.totalorder %v3006, 0
        %v3008 = vsel %vm3007, %v3006, 0
        %v3009 = vshrl.u32 %v3008, 5
        %v3010 = vand.u32 %v3008, 31
        %v3011 = vsub.s32 32, %v3010
        %v3012 = vshrl.u32 683565275, %v3011
        %v3013 = vshll.u32 683565275, %v3010
        %v3014 = vshrl.u32 2475754826, %v3011
        %v3015 = vor.u32 %v3013, %v3014
        %v3016 = vshll.u32 2475754826, %v3010
        %v3017 = vshrl.u32 2131351028, %v3011
        %v3018 = vor.u32 %v3016, %v3017
        %v3019 = vshll.u32 2131351028, %v3010
        %v3020 = vshrl.u32 2102212464, %v3011
        %v3021 = vor.u32 %v3019, %v3020
        %v3022 = vshll.u32 2102212464, %v3010
        %v3023 = vshrl.u32 920167782, %v3011
        %v3024 = vor.u32 %v3022, %v3023
        %v3025 = vshll.u32 920167782, %v3010
        %v3026 = vshrl.u32 1326507024, %v3011
        %v3027 = vor.u32 %v3025, %v3026
        %vm3028 = vcmp.lt.s32.totalorder %v3009, 1
        %vm3029 = vcmp.lt.s32.totalorder %v3009, 2
        %vm3030 = vcmp.lt.s32.totalorder %v3009, 3
        %vm3031 = vcmp.lt.s32.totalorder %v3009, 4
        %v3032 = vsel %vm3028, %v3012, %v3015
        %v3033 = vsel %vm3031, %v3021, 2102212464
        %v3034 = vsel %vm3030, %v3018, %v3033
        %v3035 = vsel %vm3029, %v3032, %v3034
        %v3036 = vsel %vm3028, %v3015, %v3018
        %v3037 = vsel %vm3031, %v3024, 920167782
        %v3038 = vsel %vm3030, %v3021, %v3037
        %v3039 = vsel %vm3029, %v3036, %v3038
        %v3040 = vsel %vm3028, %v3018, %v3021
        %v3041 = vsel %vm3031, %v3027, 1326507024
        %v3042 = vsel %vm3030, %v3024, %v3041
        %v3043 = vsel %vm3029, %v3040, %v3042
        %v3044 = vshll.u32 %v3004, 8
        %v3045 = vmul.u32.u64.compose %v3044, %v3043
        %v3046 = vextract.low.u32 %v3045
        %v3047 = vextract.high.u32 %v3045
        %v3048 = vmul.u32.u64.compose %v3044, %v3039
        %v3049 = vextract.low.u32 %v3048
        %v3050 = vextract.high.u32 %v3048
        %v3051 = vmul.u32 %v3044, %v3035
        %v3052 = vadd.s32 %v3047, %v3049
        %vm3053 = vc.u32 %v3047, %v3049
        %v3054 = vadd.s32 %v3050, 1
        %v3055 = vsel %vm3053, %v3054, %v3050
        %v3056 = vadd.s32 %v3051, %v3055
        %v3057 = vadd.s32 %v3056, 536870912
        %v3058 = vshrl.u32 %v3057, 30
        %v3059 = vshll.u32 %v3058, 30
        %v3060 = vsub.s32 %v3056, %v3059
        %vm3061 = vcmp.lt.s32.totalorder %v3060, 0
        %v3062 = vsub.s32 0, %v3060
        %v3063 = vsel %vm3061, %v3062, %v3060
        %v3064 = vclz %v3063
        %v3065 = vsub.s32 %v3064, 2
        %vm3066 = vcmp.gt.s32.totalorder 0, %v3065
        %v3067 = vsel %vm3066, 0, %v3065
        %v3068 = vsub.s32 32, %v3067
        %v3069 = vshll.u32 %v3060, %v3067
        %v3070 = vshrl.u32 %v3052, %v3068
        %v3071 = vor.u32 %v3069, %v3070
        %v3072 = vsub.s32 4294967266, %v3067
        %v3073 = vadd.s32 %v3072, 127
        %v3074 = vshll.u32 %v3073, 23
        %v3075 = vor.u32 4788187, %v3074
        %v3076 = vand.u32 2147483647, %v3075
        %v3078 = vcvt.s32.f32 %v3071
        %v3079 = vmul.f32 %v3078, %v3076
        %v3080 = vxor.u32 %v3079, 2147483648
        %v3081 = vsel %vm2998, %v3080, %v3079
        %v3082 = vsub.s32 4, %v3058
        %v3083 = vsel %vm2998, %v3082, %v3058
        %v3084 = vsel %vm2997, %v769, %v3081
        %v3085 = vsel %vm2997, 0, %v3083
        %v3086 = vcosq.f32.pop %v3084
        %v3087 = vsinq.f32.pop %v3084
        %vm3088 = vweird.f32 %v769
        %v3089 = vadd.s32 %v3085, 3
        %v3090 = vand.u32 %v3089, 3
        %vm3091 = vcmp.lt.s32.totalorder %v3090, 2
        %vm3092 = vcmp.eq.s32.totalorder %v3090, 0
        %v3093 = vxor.u32 %v3087, 2147483648
        %v3094 = vsel %vm3092, %v3086, %v3093
        %vm3095 = vcmp.eq.s32.totalorder %v3090, 2
        %v3096 = vxor.u32 %v3086, 2147483648
        %v3097 = vsel %vm3095, %v3096, %v3087
        %v3098 = vsel %vm3091, %v3094, %v3097
        %v3099 = vsel %vm3088, nan, %v3098
        %v3100 = vand.u32 2147483647, %v770
        %vm3101 = vcmp.le.f32.partialorder %v3100, 0.7853982
        %vm3102 = vcmp.lt.s32.totalorder %v770, 0
        %v3103 = vand.u32 %v770, 2139095040
        %v3104 = vshrl.u32 %v3103, 23
        %v3105 = vsub.s32 %v3104, 127
        %v3106 = vand.u32 2147483647, %v770
        %v3107 = vand.u32 %v3106, 8388607
        %v3108 = vor.u32 %v3107, 8388608
        %v3109 = vsub.s32 0, %v3108
        %v3110 = vadd.s32 %v3105, 1
        %vm3111 = vcmp.gt.s32.totalorder %v3110, 0
        %v3112 = vsel %vm3111, %v3110, 0
        %v3113 = vshrl.u32 %v3112, 5
        %v3114 = vand.u32 %v3112, 31
        %v3115 = vsub.s32 32, %v3114
        %v3116 = vshrl.u32 683565275, %v3115
        %v3117 = vshll.u32 683565275, %v3114
        %v3118 = vshrl.u32 2475754826, %v3115
        %v3119 = vor.u32 %v3117, %v3118
        %v3120 = vshll.u32 2475754826, %v3114
        %v3121 = vshrl.u32 2131351028, %v3115
        %v3122 = vor.u32 %v3120, %v3121
        %v3123 = vshll.u32 2131351028, %v3114
        %v3124 = vshrl.u32 2102212464, %v3115
        %v3125 = vor.u32 %v3123, %v3124
        %v3126 = vshll.u32 2102212464, %v3114
        %v3127 = vshrl.u32 920167782, %v3115
        %v3128 = vor.u32 %v3126, %v3127
        %v3129 = vshll.u32 920167782, %v3114
        %v3130 = vshrl.u32 1326507024, %v3115
        %v3131 = vor.u32 %v3129, %v3130
        %vm3132 = vcmp.lt.s32.totalorder %v3113, 1
        %vm3133 = vcmp.lt.s32.totalorder %v3113, 2
        %vm3134 = vcmp.lt.s32.totalorder %v3113, 3
        %vm3135 = vcmp.lt.s32.totalorder %v3113, 4
        %v3136 = vsel %vm3132, %v3116, %v3119
        %v3137 = vsel %vm3135, %v3125, 2102212464
        %v3138 = vsel %vm3134, %v3122, %v3137
        %v3139 = vsel %vm3133, %v3136, %v3138
        %v3140 = vsel %vm3132, %v3119, %v3122
        %v3141 = vsel %vm3135, %v3128, 920167782
        %v3142 = vsel %vm3134, %v3125, %v3141
        %v3143 = vsel %vm3133, %v3140, %v3142
        %v3144 = vsel %vm3132, %v3122, %v3125
        %v3145 = vsel %vm3135, %v3131, 1326507024
        %v3146 = vsel %vm3134, %v3128, %v3145
        %v3147 = vsel %vm3133, %v3144, %v3146
        %v3148 = vshll.u32 %v3108, 8
        %v3149 = vmul.u32.u64.compose %v3148, %v3147
        %v3150 = vextract.low.u32 %v3149
        %v3151 = vextract.high.u32 %v3149
        %v3152 = vmul.u32.u64.compose %v3148, %v3143
        %v3153 = vextract.low.u32 %v3152
        %v3154 = vextract.high.u32 %v3152
        %v3155 = vmul.u32 %v3148, %v3139
        %v3156 = vadd.s32 %v3151, %v3153
        %vm3157 = vc.u32 %v3151, %v3153
        %v3158 = vadd.s32 %v3154, 1
        %v3159 = vsel %vm3157, %v3158, %v3154
        %v3160 = vadd.s32 %v3155, %v3159
        %v3161 = vadd.s32 %v3160, 536870912
        %v3162 = vshrl.u32 %v3161, 30
        %v3163 = vshll.u32 %v3162, 30
        %v3164 = vsub.s32 %v3160, %v3163
        %vm3165 = vcmp.lt.s32.totalorder %v3164, 0
        %v3166 = vsub.s32 0, %v3164
        %v3167 = vsel %vm3165, %v3166, %v3164
        %v3168 = vclz %v3167
        %v3169 = vsub.s32 %v3168, 2
        %vm3170 = vcmp.gt.s32.totalorder 0, %v3169
        %v3171 = vsel %vm3170, 0, %v3169
        %v3172 = vsub.s32 32, %v3171
        %v3173 = vshll.u32 %v3164, %v3171
        %v3174 = vshrl.u32 %v3156, %v3172
        %v3175 = vor.u32 %v3173, %v3174
        %v3176 = vsub.s32 4294967266, %v3171
        %v3177 = vadd.s32 %v3176, 127
        %v3178 = vshll.u32 %v3177, 23
        %v3179 = vor.u32 4788187, %v3178
        %v3180 = vand.u32 2147483647, %v3179
        %v3182 = vcvt.s32.f32 %v3175
        %v3183 = vmul.f32 %v3182, %v3180
        %v3184 = vxor.u32 %v3183, 2147483648
        %v3185 = vsel %vm3102, %v3184, %v3183
        %v3186 = vsub.s32 4, %v3162
        %v3187 = vsel %vm3102, %v3186, %v3162
        %v3188 = vsel %vm3101, %v770, %v3185
        %v3189 = vsel %vm3101, 0, %v3187
        %v3190 = vcosq.f32.pop %v3188
        %v3191 = vsinq.f32.pop %v3188
        %vm3192 = vweird.f32 %v770
        %v3193 = vadd.s32 %v3189, 3
        %v3194 = vand.u32 %v3193, 3
        %vm3195 = vcmp.lt.s32.totalorder %v3194, 2
        %vm3196 = vcmp.eq.s32.totalorder %v3194, 0
        %v3197 = vxor.u32 %v3191, 2147483648
        %v3198 = vsel %vm3196, %v3190, %v3197
        %vm3199 = vcmp.eq.s32.totalorder %v3194, 2
        %v3200 = vxor.u32 %v3190, 2147483648
        %v3201 = vsel %vm3199, %v3200, %v3191
        %v3202 = vsel %vm3195, %v3198, %v3201
        %v3203 = vsel %vm3192, nan, %v3202
        %v3204 = vand.u32 2147483647, %v771
        %vm3205 = vcmp.le.f32.partialorder %v3204, 0.7853982
        %vm3206 = vcmp.lt.s32.totalorder %v771, 0
        %v3207 = vand.u32 %v771, 2139095040
        %v3208 = vshrl.u32 %v3207, 23
        %v3209 = vsub.s32 %v3208, 127
        %v3210 = vand.u32 2147483647, %v771
        %v3211 = vand.u32 %v3210, 8388607
        %v3212 = vor.u32 %v3211, 8388608
        %v3213 = vsub.s32 0, %v3212
        %v3214 = vadd.s32 %v3209, 1
        %vm3215 = vcmp.gt.s32.totalorder %v3214, 0
        %v3216 = vsel %vm3215, %v3214, 0
        %v3217 = vshrl.u32 %v3216, 5
        %v3218 = vand.u32 %v3216, 31
        %v3219 = vsub.s32 32, %v3218
        %v3220 = vshrl.u32 683565275, %v3219
        %v3221 = vshll.u32 683565275, %v3218
        %v3222 = vshrl.u32 2475754826, %v3219
        %v3223 = vor.u32 %v3221, %v3222
        %v3224 = vshll.u32 2475754826, %v3218
        %v3225 = vshrl.u32 2131351028, %v3219
        %v3226 = vor.u32 %v3224, %v3225
        %v3227 = vshll.u32 2131351028, %v3218
        %v3228 = vshrl.u32 2102212464, %v3219
        %v3229 = vor.u32 %v3227, %v3228
        %v3230 = vshll.u32 2102212464, %v3218
        %v3231 = vshrl.u32 920167782, %v3219
        %v3232 = vor.u32 %v3230, %v3231
        %v3233 = vshll.u32 920167782, %v3218
        %v3234 = vshrl.u32 1326507024, %v3219
        %v3235 = vor.u32 %v3233, %v3234
        %vm3236 = vcmp.lt.s32.totalorder %v3217, 1
        %vm3237 = vcmp.lt.s32.totalorder %v3217, 2
        %vm3238 = vcmp.lt.s32.totalorder %v3217, 3
        %vm3239 = vcmp.lt.s32.totalorder %v3217, 4
        %v3240 = vsel %vm3236, %v3220, %v3223
        %v3241 = vsel %vm3239, %v3229, 2102212464
        %v3242 = vsel %vm3238, %v3226, %v3241
        %v3243 = vsel %vm3237, %v3240, %v3242
        %v3244 = vsel %vm3236, %v3223, %v3226
        %v3245 = vsel %vm3239, %v3232, 920167782
        %v3246 = vsel %vm3238, %v3229, %v3245
        %v3247 = vsel %vm3237, %v3244, %v3246
        %v3248 = vsel %vm3236, %v3226, %v3229
        %v3249 = vsel %vm3239, %v3235, 1326507024
        %v3250 = vsel %vm3238, %v3232, %v3249
        %v3251 = vsel %vm3237, %v3248, %v3250
        %v3252 = vshll.u32 %v3212, 8
        %v3253 = vmul.u32.u64.compose %v3252, %v3251
        %v3254 = vextract.low.u32 %v3253
        %v3255 = vextract.high.u32 %v3253
        %v3256 = vmul.u32.u64.compose %v3252, %v3247
        %v3257 = vextract.low.u32 %v3256
        %v3258 = vextract.high.u32 %v3256
        %v3259 = vmul.u32 %v3252, %v3243
        %v3260 = vadd.s32 %v3255, %v3257
        %vm3261 = vc.u32 %v3255, %v3257
        %v3262 = vadd.s32 %v3258, 1
        %v3263 = vsel %vm3261, %v3262, %v3258
        %v3264 = vadd.s32 %v3259, %v3263
        %v3265 = vadd.s32 %v3264, 536870912
        %v3266 = vshrl.u32 %v3265, 30
        %v3267 = vshll.u32 %v3266, 30
        %v3268 = vsub.s32 %v3264, %v3267
        %vm3269 = vcmp.lt.s32.totalorder %v3268, 0
        %v3270 = vsub.s32 0, %v3268
        %v3271 = vsel %vm3269, %v3270, %v3268
        %v3272 = vclz %v3271
        %v3273 = vsub.s32 %v3272, 2
        %vm3274 = vcmp.gt.s32.totalorder 0, %v3273
        %v3275 = vsel %vm3274, 0, %v3273
        %v3276 = vsub.s32 32, %v3275
        %v3277 = vshll.u32 %v3268, %v3275
        %v3278 = vshrl.u32 %v3260, %v3276
        %v3279 = vor.u32 %v3277, %v3278
        %v3280 = vsub.s32 4294967266, %v3275
        %v3281 = vadd.s32 %v3280, 127
        %v3282 = vshll.u32 %v3281, 23
        %v3283 = vor.u32 4788187, %v3282
        %v3284 = vand.u32 2147483647, %v3283
        %v3286 = vcvt.s32.f32 %v3279
        %v3287 = vmul.f32 %v3286, %v3284
        %v3288 = vxor.u32 %v3287, 2147483648
        %v3289 = vsel %vm3206, %v3288, %v3287
        %v3290 = vsub.s32 4, %v3266
        %v3291 = vsel %vm3206, %v3290, %v3266
        %v3292 = vsel %vm3205, %v771, %v3289
        %v3293 = vsel %vm3205, 0, %v3291
        %v3294 = vcosq.f32.pop %v3292
        %v3295 = vsinq.f32.pop %v3292
        %vm3296 = vweird.f32 %v771
        %v3297 = vadd.s32 %v3293, 3
        %v3298 = vand.u32 %v3297, 3
        %vm3299 = vcmp.lt.s32.totalorder %v3298, 2
        %vm3300 = vcmp.eq.s32.totalorder %v3298, 0
        %v3301 = vxor.u32 %v3295, 2147483648
        %v3302 = vsel %vm3300, %v3294, %v3301
        %vm3303 = vcmp.eq.s32.totalorder %v3298, 2
        %v3304 = vxor.u32 %v3294, 2147483648
        %v3305 = vsel %vm3303, %v3304, %v3295
        %v3306 = vsel %vm3299, %v3302, %v3305
        %v3307 = vsel %vm3296, nan, %v3306
        %v3308 = vand.u32 2147483647, %v772
        %vm3309 = vcmp.le.f32.partialorder %v3308, 0.7853982
        %vm3310 = vcmp.lt.s32.totalorder %v772, 0
        %v3311 = vand.u32 %v772, 2139095040
        %v3312 = vshrl.u32 %v3311, 23
        %v3313 = vsub.s32 %v3312, 127
        %v3314 = vand.u32 2147483647, %v772
        %v3315 = vand.u32 %v3314, 8388607
        %v3316 = vor.u32 %v3315, 8388608
        %v3317 = vsub.s32 0, %v3316
        %v3318 = vadd.s32 %v3313, 1
        %vm3319 = vcmp.gt.s32.totalorder %v3318, 0
        %v3320 = vsel %vm3319, %v3318, 0
        %v3321 = vshrl.u32 %v3320, 5
        %v3322 = vand.u32 %v3320, 31
        %v3323 = vsub.s32 32, %v3322
        %v3324 = vshrl.u32 683565275, %v3323
        %v3325 = vshll.u32 683565275, %v3322
        %v3326 = vshrl.u32 2475754826, %v3323
        %v3327 = vor.u32 %v3325, %v3326
        %v3328 = vshll.u32 2475754826, %v3322
        %v3329 = vshrl.u32 2131351028, %v3323
        %v3330 = vor.u32 %v3328, %v3329
        %v3331 = vshll.u32 2131351028, %v3322
        %v3332 = vshrl.u32 2102212464, %v3323
        %v3333 = vor.u32 %v3331, %v3332
        %v3334 = vshll.u32 2102212464, %v3322
        %v3335 = vshrl.u32 920167782, %v3323
        %v3336 = vor.u32 %v3334, %v3335
        %v3337 = vshll.u32 920167782, %v3322
        %v3338 = vshrl.u32 1326507024, %v3323
        %v3339 = vor.u32 %v3337, %v3338
        %vm3340 = vcmp.lt.s32.totalorder %v3321, 1
        %vm3341 = vcmp.lt.s32.totalorder %v3321, 2
        %vm3342 = vcmp.lt.s32.totalorder %v3321, 3
        %vm3343 = vcmp.lt.s32.totalorder %v3321, 4
        %v3344 = vsel %vm3340, %v3324, %v3327
        %v3345 = vsel %vm3343, %v3333, 2102212464
        %v3346 = vsel %vm3342, %v3330, %v3345
        %v3347 = vsel %vm3341, %v3344, %v3346
        %v3348 = vsel %vm3340, %v3327, %v3330
        %v3349 = vsel %vm3343, %v3336, 920167782
        %v3350 = vsel %vm3342, %v3333, %v3349
        %v3351 = vsel %vm3341, %v3348, %v3350
        %v3352 = vsel %vm3340, %v3330, %v3333
        %v3353 = vsel %vm3343, %v3339, 1326507024
        %v3354 = vsel %vm3342, %v3336, %v3353
        %v3355 = vsel %vm3341, %v3352, %v3354
        %v3356 = vshll.u32 %v3316, 8
        %v3357 = vmul.u32.u64.compose %v3356, %v3355
        %v3358 = vextract.low.u32 %v3357
        %v3359 = vextract.high.u32 %v3357
        %v3360 = vmul.u32.u64.compose %v3356, %v3351
        %v3361 = vextract.low.u32 %v3360
        %v3362 = vextract.high.u32 %v3360
        %v3363 = vmul.u32 %v3356, %v3347
        %v3364 = vadd.s32 %v3359, %v3361
        %vm3365 = vc.u32 %v3359, %v3361
        %v3366 = vadd.s32 %v3362, 1
        %v3367 = vsel %vm3365, %v3366, %v3362
        %v3368 = vadd.s32 %v3363, %v3367
        %v3369 = vadd.s32 %v3368, 536870912
        %v3370 = vshrl.u32 %v3369, 30
        %v3371 = vshll.u32 %v3370, 30
        %v3372 = vsub.s32 %v3368, %v3371
        %vm3373 = vcmp.lt.s32.totalorder %v3372, 0
        %v3374 = vsub.s32 0, %v3372
        %v3375 = vsel %vm3373, %v3374, %v3372
        %v3376 = vclz %v3375
        %v3377 = vsub.s32 %v3376, 2
        %vm3378 = vcmp.gt.s32.totalorder 0, %v3377
        %v3379 = vsel %vm3378, 0, %v3377
        %v3380 = vsub.s32 32, %v3379
        %v3381 = vshll.u32 %v3372, %v3379
        %v3382 = vshrl.u32 %v3364, %v3380
        %v3383 = vor.u32 %v3381, %v3382
        %v3384 = vsub.s32 4294967266, %v3379
        %v3385 = vadd.s32 %v3384, 127
        %v3386 = vshll.u32 %v3385, 23
        %v3387 = vor.u32 4788187, %v3386
        %v3388 = vand.u32 2147483647, %v3387
        %v3390 = vcvt.s32.f32 %v3383
        %v3391 = vmul.f32 %v3390, %v3388
        %v3392 = vxor.u32 %v3391, 2147483648
        %v3393 = vsel %vm3310, %v3392, %v3391
        %v3394 = vsub.s32 4, %v3370
        %v3395 = vsel %vm3310, %v3394, %v3370
        %v3396 = vsel %vm3309, %v772, %v3393
        %v3397 = vsel %vm3309, 0, %v3395
        %v3398 = vcosq.f32.pop %v3396
        %v3399 = vsinq.f32.pop %v3396
        %vm3400 = vweird.f32 %v772
        %v3401 = vadd.s32 %v3397, 3
        %v3402 = vand.u32 %v3401, 3
        %vm3403 = vcmp.lt.s32.totalorder %v3402, 2
        %vm3404 = vcmp.eq.s32.totalorder %v3402, 0
        %v3405 = vxor.u32 %v3399, 2147483648
        %v3406 = vsel %vm3404, %v3398, %v3405
        %vm3407 = vcmp.eq.s32.totalorder %v3402, 2
        %v3408 = vxor.u32 %v3398, 2147483648
        %v3409 = vsel %vm3407, %v3408, %v3399
        %v3410 = vsel %vm3403, %v3406, %v3409
        %v3411 = vsel %vm3400, nan, %v3410
        %v3412 = vand.u32 2147483647, %v773
        %vm3413 = vcmp.le.f32.partialorder %v3412, 0.7853982
        %vm3414 = vcmp.lt.s32.totalorder %v773, 0
        %v3415 = vand.u32 %v773, 2139095040
        %v3416 = vshrl.u32 %v3415, 23
        %v3417 = vsub.s32 %v3416, 127
        %v3418 = vand.u32 2147483647, %v773
        %v3419 = vand.u32 %v3418, 8388607
        %v3420 = vor.u32 %v3419, 8388608
        %v3421 = vsub.s32 0, %v3420
        %v3422 = vadd.s32 %v3417, 1
        %vm3423 = vcmp.gt.s32.totalorder %v3422, 0
        %v3424 = vsel %vm3423, %v3422, 0
        %v3425 = vshrl.u32 %v3424, 5
        %v3426 = vand.u32 %v3424, 31
        %v3427 = vsub.s32 32, %v3426
        %v3428 = vshrl.u32 683565275, %v3427
        %v3429 = vshll.u32 683565275, %v3426
        %v3430 = vshrl.u32 2475754826, %v3427
        %v3431 = vor.u32 %v3429, %v3430
        %v3432 = vshll.u32 2475754826, %v3426
        %v3433 = vshrl.u32 2131351028, %v3427
        %v3434 = vor.u32 %v3432, %v3433
        %v3435 = vshll.u32 2131351028, %v3426
        %v3436 = vshrl.u32 2102212464, %v3427
        %v3437 = vor.u32 %v3435, %v3436
        %v3438 = vshll.u32 2102212464, %v3426
        %v3439 = vshrl.u32 920167782, %v3427
        %v3440 = vor.u32 %v3438, %v3439
        %v3441 = vshll.u32 920167782, %v3426
        %v3442 = vshrl.u32 1326507024, %v3427
        %v3443 = vor.u32 %v3441, %v3442
        %vm3444 = vcmp.lt.s32.totalorder %v3425, 1
        %vm3445 = vcmp.lt.s32.totalorder %v3425, 2
        %vm3446 = vcmp.lt.s32.totalorder %v3425, 3
        %vm3447 = vcmp.lt.s32.totalorder %v3425, 4
        %v3448 = vsel %vm3444, %v3428, %v3431
        %v3449 = vsel %vm3447, %v3437, 2102212464
        %v3450 = vsel %vm3446, %v3434, %v3449
        %v3451 = vsel %vm3445, %v3448, %v3450
        %v3452 = vsel %vm3444, %v3431, %v3434
        %v3453 = vsel %vm3447, %v3440, 920167782
        %v3454 = vsel %vm3446, %v3437, %v3453
        %v3455 = vsel %vm3445, %v3452, %v3454
        %v3456 = vsel %vm3444, %v3434, %v3437
        %v3457 = vsel %vm3447, %v3443, 1326507024
        %v3458 = vsel %vm3446, %v3440, %v3457
        %v3459 = vsel %vm3445, %v3456, %v3458
        %v3460 = vshll.u32 %v3420, 8
        %v3461 = vmul.u32.u64.compose %v3460, %v3459
        %v3462 = vextract.low.u32 %v3461
        %v3463 = vextract.high.u32 %v3461
        %v3464 = vmul.u32.u64.compose %v3460, %v3455
        %v3465 = vextract.low.u32 %v3464
        %v3466 = vextract.high.u32 %v3464
        %v3467 = vmul.u32 %v3460, %v3451
        %v3468 = vadd.s32 %v3463, %v3465
        %vm3469 = vc.u32 %v3463, %v3465
        %v3470 = vadd.s32 %v3466, 1
        %v3471 = vsel %vm3469, %v3470, %v3466
        %v3472 = vadd.s32 %v3467, %v3471
        %v3473 = vadd.s32 %v3472, 536870912
        %v3474 = vshrl.u32 %v3473, 30
        %v3475 = vshll.u32 %v3474, 30
        %v3476 = vsub.s32 %v3472, %v3475
        %vm3477 = vcmp.lt.s32.totalorder %v3476, 0
        %v3478 = vsub.s32 0, %v3476
        %v3479 = vsel %vm3477, %v3478, %v3476
        %v3480 = vclz %v3479
        %v3481 = vsub.s32 %v3480, 2
        %vm3482 = vcmp.gt.s32.totalorder 0, %v3481
        %v3483 = vsel %vm3482, 0, %v3481
        %v3484 = vsub.s32 32, %v3483
        %v3485 = vshll.u32 %v3476, %v3483
        %v3486 = vshrl.u32 %v3468, %v3484
        %v3487 = vor.u32 %v3485, %v3486
        %v3488 = vsub.s32 4294967266, %v3483
        %v3489 = vadd.s32 %v3488, 127
        %v3490 = vshll.u32 %v3489, 23
        %v3491 = vor.u32 4788187, %v3490
        %v3492 = vand.u32 2147483647, %v3491
        %v3494 = vcvt.s32.f32 %v3487
        %v3495 = vmul.f32 %v3494, %v3492
        %v3496 = vxor.u32 %v3495, 2147483648
        %v3497 = vsel %vm3414, %v3496, %v3495
        %v3498 = vsub.s32 4, %v3474
        %v3499 = vsel %vm3414, %v3498, %v3474
        %v3500 = vsel %vm3413, %v773, %v3497
        %v3501 = vsel %vm3413, 0, %v3499
        %v3502 = vcosq.f32.pop %v3500
        %v3503 = vsinq.f32.pop %v3500
        %vm3504 = vweird.f32 %v773
        %v3505 = vadd.s32 %v3501, 3
        %v3506 = vand.u32 %v3505, 3
        %vm3507 = vcmp.lt.s32.totalorder %v3506, 2
        %vm3508 = vcmp.eq.s32.totalorder %v3506, 0
        %v3509 = vxor.u32 %v3503, 2147483648
        %v3510 = vsel %vm3508, %v3502, %v3509
        %vm3511 = vcmp.eq.s32.totalorder %v3506, 2
        %v3512 = vxor.u32 %v3502, 2147483648
        %v3513 = vsel %vm3511, %v3512, %v3503
        %v3514 = vsel %vm3507, %v3510, %v3513
        %v3515 = vsel %vm3504, nan, %v3514
        %v3516 = vand.u32 2147483647, %v774
        %vm3517 = vcmp.le.f32.partialorder %v3516, 0.7853982
        %vm3518 = vcmp.lt.s32.totalorder %v774, 0
        %v3519 = vand.u32 %v774, 2139095040
        %v3520 = vshrl.u32 %v3519, 23
        %v3521 = vsub.s32 %v3520, 127
        %v3522 = vand.u32 2147483647, %v774
        %v3523 = vand.u32 %v3522, 8388607
        %v3524 = vor.u32 %v3523, 8388608
        %v3525 = vsub.s32 0, %v3524
        %v3526 = vadd.s32 %v3521, 1
        %vm3527 = vcmp.gt.s32.totalorder %v3526, 0
        %v3528 = vsel %vm3527, %v3526, 0
        %v3529 = vshrl.u32 %v3528, 5
        %v3530 = vand.u32 %v3528, 31
        %v3531 = vsub.s32 32, %v3530
        %v3532 = vshrl.u32 683565275, %v3531
        %v3533 = vshll.u32 683565275, %v3530
        %v3534 = vshrl.u32 2475754826, %v3531
        %v3535 = vor.u32 %v3533, %v3534
        %v3536 = vshll.u32 2475754826, %v3530
        %v3537 = vshrl.u32 2131351028, %v3531
        %v3538 = vor.u32 %v3536, %v3537
        %v3539 = vshll.u32 2131351028, %v3530
        %v3540 = vshrl.u32 2102212464, %v3531
        %v3541 = vor.u32 %v3539, %v3540
        %v3542 = vshll.u32 2102212464, %v3530
        %v3543 = vshrl.u32 920167782, %v3531
        %v3544 = vor.u32 %v3542, %v3543
        %v3545 = vshll.u32 920167782, %v3530
        %v3546 = vshrl.u32 1326507024, %v3531
        %v3547 = vor.u32 %v3545, %v3546
        %vm3548 = vcmp.lt.s32.totalorder %v3529, 1
        %vm3549 = vcmp.lt.s32.totalorder %v3529, 2
        %vm3550 = vcmp.lt.s32.totalorder %v3529, 3
        %vm3551 = vcmp.lt.s32.totalorder %v3529, 4
        %v3552 = vsel %vm3548, %v3532, %v3535
        %v3553 = vsel %vm3551, %v3541, 2102212464
        %v3554 = vsel %vm3550, %v3538, %v3553
        %v3555 = vsel %vm3549, %v3552, %v3554
        %v3556 = vsel %vm3548, %v3535, %v3538
        %v3557 = vsel %vm3551, %v3544, 920167782
        %v3558 = vsel %vm3550, %v3541, %v3557
        %v3559 = vsel %vm3549, %v3556, %v3558
        %v3560 = vsel %vm3548, %v3538, %v3541
        %v3561 = vsel %vm3551, %v3547, 1326507024
        %v3562 = vsel %vm3550, %v3544, %v3561
        %v3563 = vsel %vm3549, %v3560, %v3562
        %v3564 = vshll.u32 %v3524, 8
        %v3565 = vmul.u32.u64.compose %v3564, %v3563
        %v3566 = vextract.low.u32 %v3565
        %v3567 = vextract.high.u32 %v3565
        %v3568 = vmul.u32.u64.compose %v3564, %v3559
        %v3569 = vextract.low.u32 %v3568
        %v3570 = vextract.high.u32 %v3568
        %v3571 = vmul.u32 %v3564, %v3555
        %v3572 = vadd.s32 %v3567, %v3569
        %vm3573 = vc.u32 %v3567, %v3569
        %v3574 = vadd.s32 %v3570, 1
        %v3575 = vsel %vm3573, %v3574, %v3570
        %v3576 = vadd.s32 %v3571, %v3575
        %v3577 = vadd.s32 %v3576, 536870912
        %v3578 = vshrl.u32 %v3577, 30
        %v3579 = vshll.u32 %v3578, 30
        %v3580 = vsub.s32 %v3576, %v3579
        %vm3581 = vcmp.lt.s32.totalorder %v3580, 0
        %v3582 = vsub.s32 0, %v3580
        %v3583 = vsel %vm3581, %v3582, %v3580
        %v3584 = vclz %v3583
        %v3585 = vsub.s32 %v3584, 2
        %vm3586 = vcmp.gt.s32.totalorder 0, %v3585
        %v3587 = vsel %vm3586, 0, %v3585
        %v3588 = vsub.s32 32, %v3587
        %v3589 = vshll.u32 %v3580, %v3587
        %v3590 = vshrl.u32 %v3572, %v3588
        %v3591 = vor.u32 %v3589, %v3590
        %v3592 = vsub.s32 4294967266, %v3587
        %v3593 = vadd.s32 %v3592, 127
        %v3594 = vshll.u32 %v3593, 23
        %v3595 = vor.u32 4788187, %v3594
        %v3596 = vand.u32 2147483647, %v3595
        %v3598 = vcvt.s32.f32 %v3591
        %v3599 = vmul.f32 %v3598, %v3596
        %v3600 = vxor.u32 %v3599, 2147483648
        %v3601 = vsel %vm3518, %v3600, %v3599
        %v3602 = vsub.s32 4, %v3578
        %v3603 = vsel %vm3518, %v3602, %v3578
        %v3604 = vsel %vm3517, %v774, %v3601
        %v3605 = vsel %vm3517, 0, %v3603
        %v3606 = vcosq.f32.pop %v3604
        %v3607 = vsinq.f32.pop %v3604
        %vm3608 = vweird.f32 %v774
        %v3609 = vadd.s32 %v3605, 3
        %v3610 = vand.u32 %v3609, 3
        %vm3611 = vcmp.lt.s32.totalorder %v3610, 2
        %vm3612 = vcmp.eq.s32.totalorder %v3610, 0
        %v3613 = vxor.u32 %v3607, 2147483648
        %v3614 = vsel %vm3612, %v3606, %v3613
        %vm3615 = vcmp.eq.s32.totalorder %v3610, 2
        %v3616 = vxor.u32 %v3606, 2147483648
        %v3617 = vsel %vm3615, %v3616, %v3607
        %v3618 = vsel %vm3611, %v3614, %v3617
        %v3619 = vsel %vm3608, nan, %v3618
        %v3620 = vand.u32 2147483647, %v775
        %vm3621 = vcmp.le.f32.partialorder %v3620, 0.7853982
        %vm3622 = vcmp.lt.s32.totalorder %v775, 0
        %v3623 = vand.u32 %v775, 2139095040
        %v3624 = vshrl.u32 %v3623, 23
        %v3625 = vsub.s32 %v3624, 127
        %v3626 = vand.u32 2147483647, %v775
        %v3627 = vand.u32 %v3626, 8388607
        %v3628 = vor.u32 %v3627, 8388608
        %v3629 = vsub.s32 0, %v3628
        %v3630 = vadd.s32 %v3625, 1
        %vm3631 = vcmp.gt.s32.totalorder %v3630, 0
        %v3632 = vsel %vm3631, %v3630, 0
        %v3633 = vshrl.u32 %v3632, 5
        %v3634 = vand.u32 %v3632, 31
        %v3635 = vsub.s32 32, %v3634
        %v3636 = vshrl.u32 683565275, %v3635
        %v3637 = vshll.u32 683565275, %v3634
        %v3638 = vshrl.u32 2475754826, %v3635
        %v3639 = vor.u32 %v3637, %v3638
        %v3640 = vshll.u32 2475754826, %v3634
        %v3641 = vshrl.u32 2131351028, %v3635
        %v3642 = vor.u32 %v3640, %v3641
        %v3643 = vshll.u32 2131351028, %v3634
        %v3644 = vshrl.u32 2102212464, %v3635
        %v3645 = vor.u32 %v3643, %v3644
        %v3646 = vshll.u32 2102212464, %v3634
        %v3647 = vshrl.u32 920167782, %v3635
        %v3648 = vor.u32 %v3646, %v3647
        %v3649 = vshll.u32 920167782, %v3634
        %v3650 = vshrl.u32 1326507024, %v3635
        %v3651 = vor.u32 %v3649, %v3650
        %vm3652 = vcmp.lt.s32.totalorder %v3633, 1
        %vm3653 = vcmp.lt.s32.totalorder %v3633, 2
        %vm3654 = vcmp.lt.s32.totalorder %v3633, 3
        %vm3655 = vcmp.lt.s32.totalorder %v3633, 4
        %v3656 = vsel %vm3652, %v3636, %v3639
        %v3657 = vsel %vm3655, %v3645, 2102212464
        %v3658 = vsel %vm3654, %v3642, %v3657
        %v3659 = vsel %vm3653, %v3656, %v3658
        %v3660 = vsel %vm3652, %v3639, %v3642
        %v3661 = vsel %vm3655, %v3648, 920167782
        %v3662 = vsel %vm3654, %v3645, %v3661
        %v3663 = vsel %vm3653, %v3660, %v3662
        %v3664 = vsel %vm3652, %v3642, %v3645
        %v3665 = vsel %vm3655, %v3651, 1326507024
        %v3666 = vsel %vm3654, %v3648, %v3665
        %v3667 = vsel %vm3653, %v3664, %v3666
        %v3668 = vshll.u32 %v3628, 8
        %v3669 = vmul.u32.u64.compose %v3668, %v3667
        %v3670 = vextract.low.u32 %v3669
        %v3671 = vextract.high.u32 %v3669
        %v3672 = vmul.u32.u64.compose %v3668, %v3663
        %v3673 = vextract.low.u32 %v3672
        %v3674 = vextract.high.u32 %v3672
        %v3675 = vmul.u32 %v3668, %v3659
        %v3676 = vadd.s32 %v3671, %v3673
        %vm3677 = vc.u32 %v3671, %v3673
        %v3678 = vadd.s32 %v3674, 1
        %v3679 = vsel %vm3677, %v3678, %v3674
        %v3680 = vadd.s32 %v3675, %v3679
        %v3681 = vadd.s32 %v3680, 536870912
        %v3682 = vshrl.u32 %v3681, 30
        %v3683 = vshll.u32 %v3682, 30
        %v3684 = vsub.s32 %v3680, %v3683
        %vm3685 = vcmp.lt.s32.totalorder %v3684, 0
        %v3686 = vsub.s32 0, %v3684
        %v3687 = vsel %vm3685, %v3686, %v3684
        %v3688 = vclz %v3687
        %v3689 = vsub.s32 %v3688, 2
        %vm3690 = vcmp.gt.s32.totalorder 0, %v3689
        %v3691 = vsel %vm3690, 0, %v3689
        %v3692 = vsub.s32 32, %v3691
        %v3693 = vshll.u32 %v3684, %v3691
        %v3694 = vshrl.u32 %v3676, %v3692
        %v3695 = vor.u32 %v3693, %v3694
        %v3696 = vsub.s32 4294967266, %v3691
        %v3697 = vadd.s32 %v3696, 127
        %v3698 = vshll.u32 %v3697, 23
        %v3699 = vor.u32 4788187, %v3698
        %v3700 = vand.u32 2147483647, %v3699
        %v3702 = vcvt.s32.f32 %v3695
        %v3703 = vmul.f32 %v3702, %v3700
        %v3704 = vxor.u32 %v3703, 2147483648
        %v3705 = vsel %vm3622, %v3704, %v3703
        %v3706 = vsub.s32 4, %v3682
        %v3707 = vsel %vm3622, %v3706, %v3682
        %v3708 = vsel %vm3621, %v775, %v3705
        %v3709 = vsel %vm3621, 0, %v3707
        %v3710 = vcosq.f32.pop %v3708
        %v3711 = vsinq.f32.pop %v3708
        %vm3712 = vweird.f32 %v775
        %v3713 = vadd.s32 %v3709, 3
        %v3714 = vand.u32 %v3713, 3
        %vm3715 = vcmp.lt.s32.totalorder %v3714, 2
        %vm3716 = vcmp.eq.s32.totalorder %v3714, 0
        %v3717 = vxor.u32 %v3711, 2147483648
        %v3718 = vsel %vm3716, %v3710, %v3717
        %vm3719 = vcmp.eq.s32.totalorder %v3714, 2
        %v3720 = vxor.u32 %v3710, 2147483648
        %v3721 = vsel %vm3719, %v3720, %v3711
        %v3722 = vsel %vm3715, %v3718, %v3721
        %v3723 = vsel %vm3712, nan, %v3722
        %v3724 = vand.u32 2147483647, %v776
        %vm3725 = vcmp.le.f32.partialorder %v3724, 0.7853982
        %vm3726 = vcmp.lt.s32.totalorder %v776, 0
        %v3727 = vand.u32 %v776, 2139095040
        %v3728 = vshrl.u32 %v3727, 23
        %v3729 = vsub.s32 %v3728, 127
        %v3730 = vand.u32 2147483647, %v776
        %v3731 = vand.u32 %v3730, 8388607
        %v3732 = vor.u32 %v3731, 8388608
        %v3733 = vsub.s32 0, %v3732
        %v3734 = vadd.s32 %v3729, 1
        %vm3735 = vcmp.gt.s32.totalorder %v3734, 0
        %v3736 = vsel %vm3735, %v3734, 0
        %v3737 = vshrl.u32 %v3736, 5
        %v3738 = vand.u32 %v3736, 31
        %v3739 = vsub.s32 32, %v3738
        %v3740 = vshrl.u32 683565275, %v3739
        %v3741 = vshll.u32 683565275, %v3738
        %v3742 = vshrl.u32 2475754826, %v3739
        %v3743 = vor.u32 %v3741, %v3742
        %v3744 = vshll.u32 2475754826, %v3738
        %v3745 = vshrl.u32 2131351028, %v3739
        %v3746 = vor.u32 %v3744, %v3745
        %v3747 = vshll.u32 2131351028, %v3738
        %v3748 = vshrl.u32 2102212464, %v3739
        %v3749 = vor.u32 %v3747, %v3748
        %v3750 = vshll.u32 2102212464, %v3738
        %v3751 = vshrl.u32 920167782, %v3739
        %v3752 = vor.u32 %v3750, %v3751
        %v3753 = vshll.u32 920167782, %v3738
        %v3754 = vshrl.u32 1326507024, %v3739
        %v3755 = vor.u32 %v3753, %v3754
        %vm3756 = vcmp.lt.s32.totalorder %v3737, 1
        %vm3757 = vcmp.lt.s32.totalorder %v3737, 2
        %vm3758 = vcmp.lt.s32.totalorder %v3737, 3
        %vm3759 = vcmp.lt.s32.totalorder %v3737, 4
        %v3760 = vsel %vm3756, %v3740, %v3743
        %v3761 = vsel %vm3759, %v3749, 2102212464
        %v3762 = vsel %vm3758, %v3746, %v3761
        %v3763 = vsel %vm3757, %v3760, %v3762
        %v3764 = vsel %vm3756, %v3743, %v3746
        %v3765 = vsel %vm3759, %v3752, 920167782
        %v3766 = vsel %vm3758, %v3749, %v3765
        %v3767 = vsel %vm3757, %v3764, %v3766
        %v3768 = vsel %vm3756, %v3746, %v3749
        %v3769 = vsel %vm3759, %v3755, 1326507024
        %v3770 = vsel %vm3758, %v3752, %v3769
        %v3771 = vsel %vm3757, %v3768, %v3770
        %v3772 = vshll.u32 %v3732, 8
        %v3773 = vmul.u32.u64.compose %v3772, %v3771
        %v3774 = vextract.low.u32 %v3773
        %v3775 = vextract.high.u32 %v3773
        %v3776 = vmul.u32.u64.compose %v3772, %v3767
        %v3777 = vextract.low.u32 %v3776
        %v3778 = vextract.high.u32 %v3776
        %v3779 = vmul.u32 %v3772, %v3763
        %v3780 = vadd.s32 %v3775, %v3777
        %vm3781 = vc.u32 %v3775, %v3777
        %v3782 = vadd.s32 %v3778, 1
        %v3783 = vsel %vm3781, %v3782, %v3778
        %v3784 = vadd.s32 %v3779, %v3783
        %v3785 = vadd.s32 %v3784, 536870912
        %v3786 = vshrl.u32 %v3785, 30
        %v3787 = vshll.u32 %v3786, 30
        %v3788 = vsub.s32 %v3784, %v3787
        %vm3789 = vcmp.lt.s32.totalorder %v3788, 0
        %v3790 = vsub.s32 0, %v3788
        %v3791 = vsel %vm3789, %v3790, %v3788
        %v3792 = vclz %v3791
        %v3793 = vsub.s32 %v3792, 2
        %vm3794 = vcmp.gt.s32.totalorder 0, %v3793
        %v3795 = vsel %vm3794, 0, %v3793
        %v3796 = vsub.s32 32, %v3795
        %v3797 = vshll.u32 %v3788, %v3795
        %v3798 = vshrl.u32 %v3780, %v3796
        %v3799 = vor.u32 %v3797, %v3798
        %v3800 = vsub.s32 4294967266, %v3795
        %v3801 = vadd.s32 %v3800, 127
        %v3802 = vshll.u32 %v3801, 23
        %v3803 = vor.u32 4788187, %v3802
        %v3804 = vand.u32 2147483647, %v3803
        %v3806 = vcvt.s32.f32 %v3799
        %v3807 = vmul.f32 %v3806, %v3804
        %v3808 = vxor.u32 %v3807, 2147483648
        %v3809 = vsel %vm3726, %v3808, %v3807
        %v3810 = vsub.s32 4, %v3786
        %v3811 = vsel %vm3726, %v3810, %v3786
        %v3812 = vsel %vm3725, %v776, %v3809
        %v3813 = vsel %vm3725, 0, %v3811
        %v3814 = vcosq.f32.pop %v3812
        %v3815 = vsinq.f32.pop %v3812
        %vm3816 = vweird.f32 %v776
        %v3817 = vadd.s32 %v3813, 3
        %v3818 = vand.u32 %v3817, 3
        %vm3819 = vcmp.lt.s32.totalorder %v3818, 2
        %vm3820 = vcmp.eq.s32.totalorder %v3818, 0
        %v3821 = vxor.u32 %v3815, 2147483648
        %v3822 = vsel %vm3820, %v3814, %v3821
        %vm3823 = vcmp.eq.s32.totalorder %v3818, 2
        %v3824 = vxor.u32 %v3814, 2147483648
        %v3825 = vsel %vm3823, %v3824, %v3815
        %v3826 = vsel %vm3819, %v3822, %v3825
        %v3827 = vsel %vm3816, nan, %v3826
        %v3828 = vand.u32 2147483647, %v777
        %vm3829 = vcmp.le.f32.partialorder %v3828, 0.7853982
        %vm3830 = vcmp.lt.s32.totalorder %v777, 0
        %v3831 = vand.u32 %v777, 2139095040
        %v3832 = vshrl.u32 %v3831, 23
        %v3833 = vsub.s32 %v3832, 127
        %v3834 = vand.u32 2147483647, %v777
        %v3835 = vand.u32 %v3834, 8388607
        %v3836 = vor.u32 %v3835, 8388608
        %v3837 = vsub.s32 0, %v3836
        %v3838 = vadd.s32 %v3833, 1
        %vm3839 = vcmp.gt.s32.totalorder %v3838, 0
        %v3840 = vsel %vm3839, %v3838, 0
        %v3841 = vshrl.u32 %v3840, 5
        %v3842 = vand.u32 %v3840, 31
        %v3843 = vsub.s32 32, %v3842
        %v3844 = vshrl.u32 683565275, %v3843
        %v3845 = vshll.u32 683565275, %v3842
        %v3846 = vshrl.u32 2475754826, %v3843
        %v3847 = vor.u32 %v3845, %v3846
        %v3848 = vshll.u32 2475754826, %v3842
        %v3849 = vshrl.u32 2131351028, %v3843
        %v3850 = vor.u32 %v3848, %v3849
        %v3851 = vshll.u32 2131351028, %v3842
        %v3852 = vshrl.u32 2102212464, %v3843
        %v3853 = vor.u32 %v3851, %v3852
        %v3854 = vshll.u32 2102212464, %v3842
        %v3855 = vshrl.u32 920167782, %v3843
        %v3856 = vor.u32 %v3854, %v3855
        %v3857 = vshll.u32 920167782, %v3842
        %v3858 = vshrl.u32 1326507024, %v3843
        %v3859 = vor.u32 %v3857, %v3858
        %vm3860 = vcmp.lt.s32.totalorder %v3841, 1
        %vm3861 = vcmp.lt.s32.totalorder %v3841, 2
        %vm3862 = vcmp.lt.s32.totalorder %v3841, 3
        %vm3863 = vcmp.lt.s32.totalorder %v3841, 4
        %v3864 = vsel %vm3860, %v3844, %v3847
        %v3865 = vsel %vm3863, %v3853, 2102212464
        %v3866 = vsel %vm3862, %v3850, %v3865
        %v3867 = vsel %vm3861, %v3864, %v3866
        %v3868 = vsel %vm3860, %v3847, %v3850
        %v3869 = vsel %vm3863, %v3856, 920167782
        %v3870 = vsel %vm3862, %v3853, %v3869
        %v3871 = vsel %vm3861, %v3868, %v3870
        %v3872 = vsel %vm3860, %v3850, %v3853
        %v3873 = vsel %vm3863, %v3859, 1326507024
        %v3874 = vsel %vm3862, %v3856, %v3873
        %v3875 = vsel %vm3861, %v3872, %v3874
        %v3876 = vshll.u32 %v3836, 8
        %v3877 = vmul.u32.u64.compose %v3876, %v3875
        %v3878 = vextract.low.u32 %v3877
        %v3879 = vextract.high.u32 %v3877
        %v3880 = vmul.u32.u64.compose %v3876, %v3871
        %v3881 = vextract.low.u32 %v3880
        %v3882 = vextract.high.u32 %v3880
        %v3883 = vmul.u32 %v3876, %v3867
        %v3884 = vadd.s32 %v3879, %v3881
        %vm3885 = vc.u32 %v3879, %v3881
        %v3886 = vadd.s32 %v3882, 1
        %v3887 = vsel %vm3885, %v3886, %v3882
        %v3888 = vadd.s32 %v3883, %v3887
        %v3889 = vadd.s32 %v3888, 536870912
        %v3890 = vshrl.u32 %v3889, 30
        %v3891 = vshll.u32 %v3890, 30
        %v3892 = vsub.s32 %v3888, %v3891
        %vm3893 = vcmp.lt.s32.totalorder %v3892, 0
        %v3894 = vsub.s32 0, %v3892
        %v3895 = vsel %vm3893, %v3894, %v3892
        %v3896 = vclz %v3895
        %v3897 = vsub.s32 %v3896, 2
        %vm3898 = vcmp.gt.s32.totalorder 0, %v3897
        %v3899 = vsel %vm3898, 0, %v3897
        %v3900 = vsub.s32 32, %v3899
        %v3901 = vshll.u32 %v3892, %v3899
        %v3902 = vshrl.u32 %v3884, %v3900
        %v3903 = vor.u32 %v3901, %v3902
        %v3904 = vsub.s32 4294967266, %v3899
        %v3905 = vadd.s32 %v3904, 127
        %v3906 = vshll.u32 %v3905, 23
        %v3907 = vor.u32 4788187, %v3906
        %v3908 = vand.u32 2147483647, %v3907
        %v3910 = vcvt.s32.f32 %v3903
        %v3911 = vmul.f32 %v3910, %v3908
        %v3912 = vxor.u32 %v3911, 2147483648
        %v3913 = vsel %vm3830, %v3912, %v3911
        %v3914 = vsub.s32 4, %v3890
        %v3915 = vsel %vm3830, %v3914, %v3890
        %v3916 = vsel %vm3829, %v777, %v3913
        %v3917 = vsel %vm3829, 0, %v3915
        %v3918 = vcosq.f32.pop %v3916
        %v3919 = vsinq.f32.pop %v3916
        %vm3920 = vweird.f32 %v777
        %v3921 = vadd.s32 %v3917, 3
        %v3922 = vand.u32 %v3921, 3
        %vm3923 = vcmp.lt.s32.totalorder %v3922, 2
        %vm3924 = vcmp.eq.s32.totalorder %v3922, 0
        %v3925 = vxor.u32 %v3919, 2147483648
        %v3926 = vsel %vm3924, %v3918, %v3925
        %vm3927 = vcmp.eq.s32.totalorder %v3922, 2
        %v3928 = vxor.u32 %v3918, 2147483648
        %v3929 = vsel %vm3927, %v3928, %v3919
        %v3930 = vsel %vm3923, %v3926, %v3929
        %v3931 = vsel %vm3920, nan, %v3930
        %v3932 = vand.u32 2147483647, %v778
        %vm3933 = vcmp.le.f32.partialorder %v3932, 0.7853982
        %vm3934 = vcmp.lt.s32.totalorder %v778, 0
        %v3935 = vand.u32 %v778, 2139095040
        %v3936 = vshrl.u32 %v3935, 23
        %v3937 = vsub.s32 %v3936, 127
        %v3938 = vand.u32 2147483647, %v778
        %v3939 = vand.u32 %v3938, 8388607
        %v3940 = vor.u32 %v3939, 8388608
        %v3941 = vsub.s32 0, %v3940
        %v3942 = vadd.s32 %v3937, 1
        %vm3943 = vcmp.gt.s32.totalorder %v3942, 0
        %v3944 = vsel %vm3943, %v3942, 0
        %v3945 = vshrl.u32 %v3944, 5
        %v3946 = vand.u32 %v3944, 31
        %v3947 = vsub.s32 32, %v3946
        %v3948 = vshrl.u32 683565275, %v3947
        %v3949 = vshll.u32 683565275, %v3946
        %v3950 = vshrl.u32 2475754826, %v3947
        %v3951 = vor.u32 %v3949, %v3950
        %v3952 = vshll.u32 2475754826, %v3946
        %v3953 = vshrl.u32 2131351028, %v3947
        %v3954 = vor.u32 %v3952, %v3953
        %v3955 = vshll.u32 2131351028, %v3946
        %v3956 = vshrl.u32 2102212464, %v3947
        %v3957 = vor.u32 %v3955, %v3956
        %v3958 = vshll.u32 2102212464, %v3946
        %v3959 = vshrl.u32 920167782, %v3947
        %v3960 = vor.u32 %v3958, %v3959
        %v3961 = vshll.u32 920167782, %v3946
        %v3962 = vshrl.u32 1326507024, %v3947
        %v3963 = vor.u32 %v3961, %v3962
        %vm3964 = vcmp.lt.s32.totalorder %v3945, 1
        %vm3965 = vcmp.lt.s32.totalorder %v3945, 2
        %vm3966 = vcmp.lt.s32.totalorder %v3945, 3
        %vm3967 = vcmp.lt.s32.totalorder %v3945, 4
        %v3968 = vsel %vm3964, %v3948, %v3951
        %v3969 = vsel %vm3967, %v3957, 2102212464
        %v3970 = vsel %vm3966, %v3954, %v3969
        %v3971 = vsel %vm3965, %v3968, %v3970
        %v3972 = vsel %vm3964, %v3951, %v3954
        %v3973 = vsel %vm3967, %v3960, 920167782
        %v3974 = vsel %vm3966, %v3957, %v3973
        %v3975 = vsel %vm3965, %v3972, %v3974
        %v3976 = vsel %vm3964, %v3954, %v3957
        %v3977 = vsel %vm3967, %v3963, 1326507024
        %v3978 = vsel %vm3966, %v3960, %v3977
        %v3979 = vsel %vm3965, %v3976, %v3978
        %v3980 = vshll.u32 %v3940, 8
        %v3981 = vmul.u32.u64.compose %v3980, %v3979
        %v3982 = vextract.low.u32 %v3981
        %v3983 = vextract.high.u32 %v3981
        %v3984 = vmul.u32.u64.compose %v3980, %v3975
        %v3985 = vextract.low.u32 %v3984
        %v3986 = vextract.high.u32 %v3984
        %v3987 = vmul.u32 %v3980, %v3971
        %v3988 = vadd.s32 %v3983, %v3985
        %vm3989 = vc.u32 %v3983, %v3985
        %v3990 = vadd.s32 %v3986, 1
        %v3991 = vsel %vm3989, %v3990, %v3986
        %v3992 = vadd.s32 %v3987, %v3991
        %v3993 = vadd.s32 %v3992, 536870912
        %v3994 = vshrl.u32 %v3993, 30
        %v3995 = vshll.u32 %v3994, 30
        %v3996 = vsub.s32 %v3992, %v3995
        %vm3997 = vcmp.lt.s32.totalorder %v3996, 0
        %v3998 = vsub.s32 0, %v3996
        %v3999 = vsel %vm3997, %v3998, %v3996
        %v4000 = vclz %v3999
        %v4001 = vsub.s32 %v4000, 2
        %vm4002 = vcmp.gt.s32.totalorder 0, %v4001
        %v4003 = vsel %vm4002, 0, %v4001
        %v4004 = vsub.s32 32, %v4003
        %v4005 = vshll.u32 %v3996, %v4003
        %v4006 = vshrl.u32 %v3988, %v4004
        %v4007 = vor.u32 %v4005, %v4006
        %v4008 = vsub.s32 4294967266, %v4003
        %v4009 = vadd.s32 %v4008, 127
        %v4010 = vshll.u32 %v4009, 23
        %v4011 = vor.u32 4788187, %v4010
        %v4012 = vand.u32 2147483647, %v4011
        %v4014 = vcvt.s32.f32 %v4007
        %v4015 = vmul.f32 %v4014, %v4012
        %v4016 = vxor.u32 %v4015, 2147483648
        %v4017 = vsel %vm3934, %v4016, %v4015
        %v4018 = vsub.s32 4, %v3994
        %v4019 = vsel %vm3934, %v4018, %v3994
        %v4020 = vsel %vm3933, %v778, %v4017
        %v4021 = vsel %vm3933, 0, %v4019
        %v4022 = vcosq.f32.pop %v4020
        %v4023 = vsinq.f32.pop %v4020
        %vm4024 = vweird.f32 %v778
        %v4025 = vadd.s32 %v4021, 3
        %v4026 = vand.u32 %v4025, 3
        %vm4027 = vcmp.lt.s32.totalorder %v4026, 2
        %vm4028 = vcmp.eq.s32.totalorder %v4026, 0
        %v4029 = vxor.u32 %v4023, 2147483648
        %v4030 = vsel %vm4028, %v4022, %v4029
        %vm4031 = vcmp.eq.s32.totalorder %v4026, 2
        %v4032 = vxor.u32 %v4022, 2147483648
        %v4033 = vsel %vm4031, %v4032, %v4023
        %v4034 = vsel %vm4027, %v4030, %v4033
        %v4035 = vsel %vm4024, nan, %v4034
        %v4036 = vand.u32 2147483647, %v779
        %vm4037 = vcmp.le.f32.partialorder %v4036, 0.7853982
        %vm4038 = vcmp.lt.s32.totalorder %v779, 0
        %v4039 = vand.u32 %v779, 2139095040
        %v4040 = vshrl.u32 %v4039, 23
        %v4041 = vsub.s32 %v4040, 127
        %v4042 = vand.u32 2147483647, %v779
        %v4043 = vand.u32 %v4042, 8388607
        %v4044 = vor.u32 %v4043, 8388608
        %v4045 = vsub.s32 0, %v4044
        %v4046 = vadd.s32 %v4041, 1
        %vm4047 = vcmp.gt.s32.totalorder %v4046, 0
        %v4048 = vsel %vm4047, %v4046, 0
        %v4049 = vshrl.u32 %v4048, 5
        %v4050 = vand.u32 %v4048, 31
        %v4051 = vsub.s32 32, %v4050
        %v4052 = vshrl.u32 683565275, %v4051
        %v4053 = vshll.u32 683565275, %v4050
        %v4054 = vshrl.u32 2475754826, %v4051
        %v4055 = vor.u32 %v4053, %v4054
        %v4056 = vshll.u32 2475754826, %v4050
        %v4057 = vshrl.u32 2131351028, %v4051
        %v4058 = vor.u32 %v4056, %v4057
        %v4059 = vshll.u32 2131351028, %v4050
        %v4060 = vshrl.u32 2102212464, %v4051
        %v4061 = vor.u32 %v4059, %v4060
        %v4062 = vshll.u32 2102212464, %v4050
        %v4063 = vshrl.u32 920167782, %v4051
        %v4064 = vor.u32 %v4062, %v4063
        %v4065 = vshll.u32 920167782, %v4050
        %v4066 = vshrl.u32 1326507024, %v4051
        %v4067 = vor.u32 %v4065, %v4066
        %vm4068 = vcmp.lt.s32.totalorder %v4049, 1
        %vm4069 = vcmp.lt.s32.totalorder %v4049, 2
        %vm4070 = vcmp.lt.s32.totalorder %v4049, 3
        %vm4071 = vcmp.lt.s32.totalorder %v4049, 4
        %v4072 = vsel %vm4068, %v4052, %v4055
        %v4073 = vsel %vm4071, %v4061, 2102212464
        %v4074 = vsel %vm4070, %v4058, %v4073
        %v4075 = vsel %vm4069, %v4072, %v4074
        %v4076 = vsel %vm4068, %v4055, %v4058
        %v4077 = vsel %vm4071, %v4064, 920167782
        %v4078 = vsel %vm4070, %v4061, %v4077
        %v4079 = vsel %vm4069, %v4076, %v4078
        %v4080 = vsel %vm4068, %v4058, %v4061
        %v4081 = vsel %vm4071, %v4067, 1326507024
        %v4082 = vsel %vm4070, %v4064, %v4081
        %v4083 = vsel %vm4069, %v4080, %v4082
        %v4084 = vshll.u32 %v4044, 8
        %v4085 = vmul.u32.u64.compose %v4084, %v4083
        %v4086 = vextract.low.u32 %v4085
        %v4087 = vextract.high.u32 %v4085
        %v4088 = vmul.u32.u64.compose %v4084, %v4079
        %v4089 = vextract.low.u32 %v4088
        %v4090 = vextract.high.u32 %v4088
        %v4091 = vmul.u32 %v4084, %v4075
        %v4092 = vadd.s32 %v4087, %v4089
        %vm4093 = vc.u32 %v4087, %v4089
        %v4094 = vadd.s32 %v4090, 1
        %v4095 = vsel %vm4093, %v4094, %v4090
        %v4096 = vadd.s32 %v4091, %v4095
        %v4097 = vadd.s32 %v4096, 536870912
        %v4098 = vshrl.u32 %v4097, 30
        %v4099 = vshll.u32 %v4098, 30
        %v4100 = vsub.s32 %v4096, %v4099
        %vm4101 = vcmp.lt.s32.totalorder %v4100, 0
        %v4102 = vsub.s32 0, %v4100
        %v4103 = vsel %vm4101, %v4102, %v4100
        %v4104 = vclz %v4103
        %v4105 = vsub.s32 %v4104, 2
        %vm4106 = vcmp.gt.s32.totalorder 0, %v4105
        %v4107 = vsel %vm4106, 0, %v4105
        %v4108 = vsub.s32 32, %v4107
        %v4109 = vshll.u32 %v4100, %v4107
        %v4110 = vshrl.u32 %v4092, %v4108
        %v4111 = vor.u32 %v4109, %v4110
        %v4112 = vsub.s32 4294967266, %v4107
        %v4113 = vadd.s32 %v4112, 127
        %v4114 = vshll.u32 %v4113, 23
        %v4115 = vor.u32 4788187, %v4114
        %v4116 = vand.u32 2147483647, %v4115
        %v4118 = vcvt.s32.f32 %v4111
        %v4119 = vmul.f32 %v4118, %v4116
        %v4120 = vxor.u32 %v4119, 2147483648
        %v4121 = vsel %vm4038, %v4120, %v4119
        %v4122 = vsub.s32 4, %v4098
        %v4123 = vsel %vm4038, %v4122, %v4098
        %v4124 = vsel %vm4037, %v779, %v4121
        %v4125 = vsel %vm4037, 0, %v4123
        %v4126 = vcosq.f32.pop %v4124
        %v4127 = vsinq.f32.pop %v4124
        %vm4128 = vweird.f32 %v779
        %v4129 = vadd.s32 %v4125, 3
        %v4130 = vand.u32 %v4129, 3
        %vm4131 = vcmp.lt.s32.totalorder %v4130, 2
        %vm4132 = vcmp.eq.s32.totalorder %v4130, 0
        %v4133 = vxor.u32 %v4127, 2147483648
        %v4134 = vsel %vm4132, %v4126, %v4133
        %vm4135 = vcmp.eq.s32.totalorder %v4130, 2
        %v4136 = vxor.u32 %v4126, 2147483648
        %v4137 = vsel %vm4135, %v4136, %v4127
        %v4138 = vsel %vm4131, %v4134, %v4137
        %v4139 = vsel %vm4128, nan, %v4138
        %v4140 = vand.u32 2147483647, %v780
        %vm4141 = vcmp.le.f32.partialorder %v4140, 0.7853982
        %vm4142 = vcmp.lt.s32.totalorder %v780, 0
        %v4143 = vand.u32 %v780, 2139095040
        %v4144 = vshrl.u32 %v4143, 23
        %v4145 = vsub.s32 %v4144, 127
        %v4146 = vand.u32 2147483647, %v780
        %v4147 = vand.u32 %v4146, 8388607
        %v4148 = vor.u32 %v4147, 8388608
        %v4149 = vsub.s32 0, %v4148
        %v4150 = vadd.s32 %v4145, 1
        %vm4151 = vcmp.gt.s32.totalorder %v4150, 0
        %v4152 = vsel %vm4151, %v4150, 0
        %v4153 = vshrl.u32 %v4152, 5
        %v4154 = vand.u32 %v4152, 31
        %v4155 = vsub.s32 32, %v4154
        %v4156 = vshrl.u32 683565275, %v4155
        %v4157 = vshll.u32 683565275, %v4154
        %v4158 = vshrl.u32 2475754826, %v4155
        %v4159 = vor.u32 %v4157, %v4158
        %v4160 = vshll.u32 2475754826, %v4154
        %v4161 = vshrl.u32 2131351028, %v4155
        %v4162 = vor.u32 %v4160, %v4161
        %v4163 = vshll.u32 2131351028, %v4154
        %v4164 = vshrl.u32 2102212464, %v4155
        %v4165 = vor.u32 %v4163, %v4164
        %v4166 = vshll.u32 2102212464, %v4154
        %v4167 = vshrl.u32 920167782, %v4155
        %v4168 = vor.u32 %v4166, %v4167
        %v4169 = vshll.u32 920167782, %v4154
        %v4170 = vshrl.u32 1326507024, %v4155
        %v4171 = vor.u32 %v4169, %v4170
        %vm4172 = vcmp.lt.s32.totalorder %v4153, 1
        %vm4173 = vcmp.lt.s32.totalorder %v4153, 2
        %vm4174 = vcmp.lt.s32.totalorder %v4153, 3
        %vm4175 = vcmp.lt.s32.totalorder %v4153, 4
        %v4176 = vsel %vm4172, %v4156, %v4159
        %v4177 = vsel %vm4175, %v4165, 2102212464
        %v4178 = vsel %vm4174, %v4162, %v4177
        %v4179 = vsel %vm4173, %v4176, %v4178
        %v4180 = vsel %vm4172, %v4159, %v4162
        %v4181 = vsel %vm4175, %v4168, 920167782
        %v4182 = vsel %vm4174, %v4165, %v4181
        %v4183 = vsel %vm4173, %v4180, %v4182
        %v4184 = vsel %vm4172, %v4162, %v4165
        %v4185 = vsel %vm4175, %v4171, 1326507024
        %v4186 = vsel %vm4174, %v4168, %v4185
        %v4187 = vsel %vm4173, %v4184, %v4186
        %v4188 = vshll.u32 %v4148, 8
        %v4189 = vmul.u32.u64.compose %v4188, %v4187
        %v4190 = vextract.low.u32 %v4189
        %v4191 = vextract.high.u32 %v4189
        %v4192 = vmul.u32.u64.compose %v4188, %v4183
        %v4193 = vextract.low.u32 %v4192
        %v4194 = vextract.high.u32 %v4192
        %v4195 = vmul.u32 %v4188, %v4179
        %v4196 = vadd.s32 %v4191, %v4193
        %vm4197 = vc.u32 %v4191, %v4193
        %v4198 = vadd.s32 %v4194, 1
        %v4199 = vsel %vm4197, %v4198, %v4194
        %v4200 = vadd.s32 %v4195, %v4199
        %v4201 = vadd.s32 %v4200, 536870912
        %v4202 = vshrl.u32 %v4201, 30
        %v4203 = vshll.u32 %v4202, 30
        %v4204 = vsub.s32 %v4200, %v4203
        %vm4205 = vcmp.lt.s32.totalorder %v4204, 0
        %v4206 = vsub.s32 0, %v4204
        %v4207 = vsel %vm4205, %v4206, %v4204
        %v4208 = vclz %v4207
        %v4209 = vsub.s32 %v4208, 2
        %vm4210 = vcmp.gt.s32.totalorder 0, %v4209
        %v4211 = vsel %vm4210, 0, %v4209
        %v4212 = vsub.s32 32, %v4211
        %v4213 = vshll.u32 %v4204, %v4211
        %v4214 = vshrl.u32 %v4196, %v4212
        %v4215 = vor.u32 %v4213, %v4214
        %v4216 = vsub.s32 4294967266, %v4211
        %v4217 = vadd.s32 %v4216, 127
        %v4218 = vshll.u32 %v4217, 23
        %v4219 = vor.u32 4788187, %v4218
        %v4220 = vand.u32 2147483647, %v4219
        %v4222 = vcvt.s32.f32 %v4215
        %v4223 = vmul.f32 %v4222, %v4220
        %v4224 = vxor.u32 %v4223, 2147483648
        %v4225 = vsel %vm4142, %v4224, %v4223
        %v4226 = vsub.s32 4, %v4202
        %v4227 = vsel %vm4142, %v4226, %v4202
        %v4228 = vsel %vm4141, %v780, %v4225
        %v4229 = vsel %vm4141, 0, %v4227
        %v4230 = vcosq.f32.pop %v4228
        %v4231 = vsinq.f32.pop %v4228
        %vm4232 = vweird.f32 %v780
        %v4233 = vadd.s32 %v4229, 3
        %v4234 = vand.u32 %v4233, 3
        %vm4235 = vcmp.lt.s32.totalorder %v4234, 2
        %vm4236 = vcmp.eq.s32.totalorder %v4234, 0
        %v4237 = vxor.u32 %v4231, 2147483648
        %v4238 = vsel %vm4236, %v4230, %v4237
        %vm4239 = vcmp.eq.s32.totalorder %v4234, 2
        %v4240 = vxor.u32 %v4230, 2147483648
        %v4241 = vsel %vm4239, %v4240, %v4231
        %v4242 = vsel %vm4235, %v4238, %v4241
        %v4243 = vsel %vm4232, nan, %v4242
        %v4244 = vand.u32 2147483647, %v781
        %vm4245 = vcmp.le.f32.partialorder %v4244, 0.7853982
        %vm4246 = vcmp.lt.s32.totalorder %v781, 0
        %v4247 = vand.u32 %v781, 2139095040
        %v4248 = vshrl.u32 %v4247, 23
        %v4249 = vsub.s32 %v4248, 127
        %v4250 = vand.u32 2147483647, %v781
        %v4251 = vand.u32 %v4250, 8388607
        %v4252 = vor.u32 %v4251, 8388608
        %v4253 = vsub.s32 0, %v4252
        %v4254 = vadd.s32 %v4249, 1
        %vm4255 = vcmp.gt.s32.totalorder %v4254, 0
        %v4256 = vsel %vm4255, %v4254, 0
        %v4257 = vshrl.u32 %v4256, 5
        %v4258 = vand.u32 %v4256, 31
        %v4259 = vsub.s32 32, %v4258
        %v4260 = vshrl.u32 683565275, %v4259
        %v4261 = vshll.u32 683565275, %v4258
        %v4262 = vshrl.u32 2475754826, %v4259
        %v4263 = vor.u32 %v4261, %v4262
        %v4264 = vshll.u32 2475754826, %v4258
        %v4265 = vshrl.u32 2131351028, %v4259
        %v4266 = vor.u32 %v4264, %v4265
        %v4267 = vshll.u32 2131351028, %v4258
        %v4268 = vshrl.u32 2102212464, %v4259
        %v4269 = vor.u32 %v4267, %v4268
        %v4270 = vshll.u32 2102212464, %v4258
        %v4271 = vshrl.u32 920167782, %v4259
        %v4272 = vor.u32 %v4270, %v4271
        %v4273 = vshll.u32 920167782, %v4258
        %v4274 = vshrl.u32 1326507024, %v4259
        %v4275 = vor.u32 %v4273, %v4274
        %vm4276 = vcmp.lt.s32.totalorder %v4257, 1
        %vm4277 = vcmp.lt.s32.totalorder %v4257, 2
        %vm4278 = vcmp.lt.s32.totalorder %v4257, 3
        %vm4279 = vcmp.lt.s32.totalorder %v4257, 4
        %v4280 = vsel %vm4276, %v4260, %v4263
        %v4281 = vsel %vm4279, %v4269, 2102212464
        %v4282 = vsel %vm4278, %v4266, %v4281
        %v4283 = vsel %vm4277, %v4280, %v4282
        %v4284 = vsel %vm4276, %v4263, %v4266
        %v4285 = vsel %vm4279, %v4272, 920167782
        %v4286 = vsel %vm4278, %v4269, %v4285
        %v4287 = vsel %vm4277, %v4284, %v4286
        %v4288 = vsel %vm4276, %v4266, %v4269
        %v4289 = vsel %vm4279, %v4275, 1326507024
        %v4290 = vsel %vm4278, %v4272, %v4289
        %v4291 = vsel %vm4277, %v4288, %v4290
        %v4292 = vshll.u32 %v4252, 8
        %v4293 = vmul.u32.u64.compose %v4292, %v4291
        %v4294 = vextract.low.u32 %v4293
        %v4295 = vextract.high.u32 %v4293
        %v4296 = vmul.u32.u64.compose %v4292, %v4287
        %v4297 = vextract.low.u32 %v4296
        %v4298 = vextract.high.u32 %v4296
        %v4299 = vmul.u32 %v4292, %v4283
        %v4300 = vadd.s32 %v4295, %v4297
        %vm4301 = vc.u32 %v4295, %v4297
        %v4302 = vadd.s32 %v4298, 1
        %v4303 = vsel %vm4301, %v4302, %v4298
        %v4304 = vadd.s32 %v4299, %v4303
        %v4305 = vadd.s32 %v4304, 536870912
        %v4306 = vshrl.u32 %v4305, 30
        %v4307 = vshll.u32 %v4306, 30
        %v4308 = vsub.s32 %v4304, %v4307
        %vm4309 = vcmp.lt.s32.totalorder %v4308, 0
        %v4310 = vsub.s32 0, %v4308
        %v4311 = vsel %vm4309, %v4310, %v4308
        %v4312 = vclz %v4311
        %v4313 = vsub.s32 %v4312, 2
        %vm4314 = vcmp.gt.s32.totalorder 0, %v4313
        %v4315 = vsel %vm4314, 0, %v4313
        %v4316 = vsub.s32 32, %v4315
        %v4317 = vshll.u32 %v4308, %v4315
        %v4318 = vshrl.u32 %v4300, %v4316
        %v4319 = vor.u32 %v4317, %v4318
        %v4320 = vsub.s32 4294967266, %v4315
        %v4321 = vadd.s32 %v4320, 127
        %v4322 = vshll.u32 %v4321, 23
        %v4323 = vor.u32 4788187, %v4322
        %v4324 = vand.u32 2147483647, %v4323
        %v4326 = vcvt.s32.f32 %v4319
        %v4327 = vmul.f32 %v4326, %v4324
        %v4328 = vxor.u32 %v4327, 2147483648
        %v4329 = vsel %vm4246, %v4328, %v4327
        %v4330 = vsub.s32 4, %v4306
        %v4331 = vsel %vm4246, %v4330, %v4306
        %v4332 = vsel %vm4245, %v781, %v4329
        %v4333 = vsel %vm4245, 0, %v4331
        %v4334 = vcosq.f32.pop %v4332
        %v4335 = vsinq.f32.pop %v4332
        %vm4336 = vweird.f32 %v781
        %v4337 = vadd.s32 %v4333, 3
        %v4338 = vand.u32 %v4337, 3
        %vm4339 = vcmp.lt.s32.totalorder %v4338, 2
        %vm4340 = vcmp.eq.s32.totalorder %v4338, 0
        %v4341 = vxor.u32 %v4335, 2147483648
        %v4342 = vsel %vm4340, %v4334, %v4341
        %vm4343 = vcmp.eq.s32.totalorder %v4338, 2
        %v4344 = vxor.u32 %v4334, 2147483648
        %v4345 = vsel %vm4343, %v4344, %v4335
        %v4346 = vsel %vm4339, %v4342, %v4345
        %v4347 = vsel %vm4336, nan, %v4346
        %v4348 = vand.u32 2147483647, %v782
        %vm4349 = vcmp.le.f32.partialorder %v4348, 0.7853982
        %vm4350 = vcmp.lt.s32.totalorder %v782, 0
        %v4351 = vand.u32 %v782, 2139095040
        %v4352 = vshrl.u32 %v4351, 23
        %v4353 = vsub.s32 %v4352, 127
        %v4354 = vand.u32 2147483647, %v782
        %v4355 = vand.u32 %v4354, 8388607
        %v4356 = vor.u32 %v4355, 8388608
        %v4357 = vsub.s32 0, %v4356
        %v4358 = vadd.s32 %v4353, 1
        %vm4359 = vcmp.gt.s32.totalorder %v4358, 0
        %v4360 = vsel %vm4359, %v4358, 0
        %v4361 = vshrl.u32 %v4360, 5
        %v4362 = vand.u32 %v4360, 31
        %v4363 = vsub.s32 32, %v4362
        %v4364 = vshrl.u32 683565275, %v4363
        %v4365 = vshll.u32 683565275, %v4362
        %v4366 = vshrl.u32 2475754826, %v4363
        %v4367 = vor.u32 %v4365, %v4366
        %v4368 = vshll.u32 2475754826, %v4362
        %v4369 = vshrl.u32 2131351028, %v4363
        %v4370 = vor.u32 %v4368, %v4369
        %v4371 = vshll.u32 2131351028, %v4362
        %v4372 = vshrl.u32 2102212464, %v4363
        %v4373 = vor.u32 %v4371, %v4372
        %v4374 = vshll.u32 2102212464, %v4362
        %v4375 = vshrl.u32 920167782, %v4363
        %v4376 = vor.u32 %v4374, %v4375
        %v4377 = vshll.u32 920167782, %v4362
        %v4378 = vshrl.u32 1326507024, %v4363
        %v4379 = vor.u32 %v4377, %v4378
        %vm4380 = vcmp.lt.s32.totalorder %v4361, 1
        %vm4381 = vcmp.lt.s32.totalorder %v4361, 2
        %vm4382 = vcmp.lt.s32.totalorder %v4361, 3
        %vm4383 = vcmp.lt.s32.totalorder %v4361, 4
        %v4384 = vsel %vm4380, %v4364, %v4367
        %v4385 = vsel %vm4383, %v4373, 2102212464
        %v4386 = vsel %vm4382, %v4370, %v4385
        %v4387 = vsel %vm4381, %v4384, %v4386
        %v4388 = vsel %vm4380, %v4367, %v4370
        %v4389 = vsel %vm4383, %v4376, 920167782
        %v4390 = vsel %vm4382, %v4373, %v4389
        %v4391 = vsel %vm4381, %v4388, %v4390
        %v4392 = vsel %vm4380, %v4370, %v4373
        %v4393 = vsel %vm4383, %v4379, 1326507024
        %v4394 = vsel %vm4382, %v4376, %v4393
        %v4395 = vsel %vm4381, %v4392, %v4394
        %v4396 = vshll.u32 %v4356, 8
        %v4397 = vmul.u32.u64.compose %v4396, %v4395
        %v4398 = vextract.low.u32 %v4397
        %v4399 = vextract.high.u32 %v4397
        %v4400 = vmul.u32.u64.compose %v4396, %v4391
        %v4401 = vextract.low.u32 %v4400
        %v4402 = vextract.high.u32 %v4400
        %v4403 = vmul.u32 %v4396, %v4387
        %v4404 = vadd.s32 %v4399, %v4401
        %vm4405 = vc.u32 %v4399, %v4401
        %v4406 = vadd.s32 %v4402, 1
        %v4407 = vsel %vm4405, %v4406, %v4402
        %v4408 = vadd.s32 %v4403, %v4407
        %v4409 = vadd.s32 %v4408, 536870912
        %v4410 = vshrl.u32 %v4409, 30
        %v4411 = vshll.u32 %v4410, 30
        %v4412 = vsub.s32 %v4408, %v4411
        %vm4413 = vcmp.lt.s32.totalorder %v4412, 0
        %v4414 = vsub.s32 0, %v4412
        %v4415 = vsel %vm4413, %v4414, %v4412
        %v4416 = vclz %v4415
        %v4417 = vsub.s32 %v4416, 2
        %vm4418 = vcmp.gt.s32.totalorder 0, %v4417
        %v4419 = vsel %vm4418, 0, %v4417
        %v4420 = vsub.s32 32, %v4419
        %v4421 = vshll.u32 %v4412, %v4419
        %v4422 = vshrl.u32 %v4404, %v4420
        %v4423 = vor.u32 %v4421, %v4422
        %v4424 = vsub.s32 4294967266, %v4419
        %v4425 = vadd.s32 %v4424, 127
        %v4426 = vshll.u32 %v4425, 23
        %v4427 = vor.u32 4788187, %v4426
        %v4428 = vand.u32 2147483647, %v4427
        %v4430 = vcvt.s32.f32 %v4423
        %v4431 = vmul.f32 %v4430, %v4428
        %v4432 = vxor.u32 %v4431, 2147483648
        %v4433 = vsel %vm4350, %v4432, %v4431
        %v4434 = vsub.s32 4, %v4410
        %v4435 = vsel %vm4350, %v4434, %v4410
        %v4436 = vsel %vm4349, %v782, %v4433
        %v4437 = vsel %vm4349, 0, %v4435
        %v4438 = vcosq.f32.pop %v4436
        %v4439 = vsinq.f32.pop %v4436
        %vm4440 = vweird.f32 %v782
        %v4441 = vadd.s32 %v4437, 3
        %v4442 = vand.u32 %v4441, 3
        %vm4443 = vcmp.lt.s32.totalorder %v4442, 2
        %vm4444 = vcmp.eq.s32.totalorder %v4442, 0
        %v4445 = vxor.u32 %v4439, 2147483648
        %v4446 = vsel %vm4444, %v4438, %v4445
        %vm4447 = vcmp.eq.s32.totalorder %v4442, 2
        %v4448 = vxor.u32 %v4438, 2147483648
        %v4449 = vsel %vm4447, %v4448, %v4439
        %v4450 = vsel %vm4443, %v4446, %v4449
        %v4451 = vsel %vm4440, nan, %v4450
        %v4452 = vand.u32 2147483647, %v783
        %vm4453 = vcmp.le.f32.partialorder %v4452, 0.7853982
        %vm4454 = vcmp.lt.s32.totalorder %v783, 0
        %v4455 = vand.u32 %v783, 2139095040
        %v4456 = vshrl.u32 %v4455, 23
        %v4457 = vsub.s32 %v4456, 127
        %v4458 = vand.u32 2147483647, %v783
        %v4459 = vand.u32 %v4458, 8388607
        %v4460 = vor.u32 %v4459, 8388608
        %v4461 = vsub.s32 0, %v4460
        %v4462 = vadd.s32 %v4457, 1
        %vm4463 = vcmp.gt.s32.totalorder %v4462, 0
        %v4464 = vsel %vm4463, %v4462, 0
        %v4465 = vshrl.u32 %v4464, 5
        %v4466 = vand.u32 %v4464, 31
        %v4467 = vsub.s32 32, %v4466
        %v4468 = vshrl.u32 683565275, %v4467
        %v4469 = vshll.u32 683565275, %v4466
        %v4470 = vshrl.u32 2475754826, %v4467
        %v4471 = vor.u32 %v4469, %v4470
        %v4472 = vshll.u32 2475754826, %v4466
        %v4473 = vshrl.u32 2131351028, %v4467
        %v4474 = vor.u32 %v4472, %v4473
        %v4475 = vshll.u32 2131351028, %v4466
        %v4476 = vshrl.u32 2102212464, %v4467
        %v4477 = vor.u32 %v4475, %v4476
        %v4478 = vshll.u32 2102212464, %v4466
        %v4479 = vshrl.u32 920167782, %v4467
        %v4480 = vor.u32 %v4478, %v4479
        %v4481 = vshll.u32 920167782, %v4466
        %v4482 = vshrl.u32 1326507024, %v4467
        %v4483 = vor.u32 %v4481, %v4482
        %vm4484 = vcmp.lt.s32.totalorder %v4465, 1
        %vm4485 = vcmp.lt.s32.totalorder %v4465, 2
        %vm4486 = vcmp.lt.s32.totalorder %v4465, 3
        %vm4487 = vcmp.lt.s32.totalorder %v4465, 4
        %v4488 = vsel %vm4484, %v4468, %v4471
        %v4489 = vsel %vm4487, %v4477, 2102212464
        %v4490 = vsel %vm4486, %v4474, %v4489
        %v4491 = vsel %vm4485, %v4488, %v4490
        %v4492 = vsel %vm4484, %v4471, %v4474
        %v4493 = vsel %vm4487, %v4480, 920167782
        %v4494 = vsel %vm4486, %v4477, %v4493
        %v4495 = vsel %vm4485, %v4492, %v4494
        %v4496 = vsel %vm4484, %v4474, %v4477
        %v4497 = vsel %vm4487, %v4483, 1326507024
        %v4498 = vsel %vm4486, %v4480, %v4497
        %v4499 = vsel %vm4485, %v4496, %v4498
        %v4500 = vshll.u32 %v4460, 8
        %v4501 = vmul.u32.u64.compose %v4500, %v4499
        %v4502 = vextract.low.u32 %v4501
        %v4503 = vextract.high.u32 %v4501
        %v4504 = vmul.u32.u64.compose %v4500, %v4495
        %v4505 = vextract.low.u32 %v4504
        %v4506 = vextract.high.u32 %v4504
        %v4507 = vmul.u32 %v4500, %v4491
        %v4508 = vadd.s32 %v4503, %v4505
        %vm4509 = vc.u32 %v4503, %v4505
        %v4510 = vadd.s32 %v4506, 1
        %v4511 = vsel %vm4509, %v4510, %v4506
        %v4512 = vadd.s32 %v4507, %v4511
        %v4513 = vadd.s32 %v4512, 536870912
        %v4514 = vshrl.u32 %v4513, 30
        %v4515 = vshll.u32 %v4514, 30
        %v4516 = vsub.s32 %v4512, %v4515
        %vm4517 = vcmp.lt.s32.totalorder %v4516, 0
        %v4518 = vsub.s32 0, %v4516
        %v4519 = vsel %vm4517, %v4518, %v4516
        %v4520 = vclz %v4519
        %v4521 = vsub.s32 %v4520, 2
        %vm4522 = vcmp.gt.s32.totalorder 0, %v4521
        %v4523 = vsel %vm4522, 0, %v4521
        %v4524 = vsub.s32 32, %v4523
        %v4525 = vshll.u32 %v4516, %v4523
        %v4526 = vshrl.u32 %v4508, %v4524
        %v4527 = vor.u32 %v4525, %v4526
        %v4528 = vsub.s32 4294967266, %v4523
        %v4529 = vadd.s32 %v4528, 127
        %v4530 = vshll.u32 %v4529, 23
        %v4531 = vor.u32 4788187, %v4530
        %v4532 = vand.u32 2147483647, %v4531
        %v4534 = vcvt.s32.f32 %v4527
        %v4535 = vmul.f32 %v4534, %v4532
        %v4536 = vxor.u32 %v4535, 2147483648
        %v4537 = vsel %vm4454, %v4536, %v4535
        %v4538 = vsub.s32 4, %v4514
        %v4539 = vsel %vm4454, %v4538, %v4514
        %v4540 = vsel %vm4453, %v783, %v4537
        %v4541 = vsel %vm4453, 0, %v4539
        %v4542 = vcosq.f32.pop %v4540
        %v4543 = vsinq.f32.pop %v4540
        %vm4544 = vweird.f32 %v783
        %v4545 = vadd.s32 %v4541, 3
        %v4546 = vand.u32 %v4545, 3
        %vm4547 = vcmp.lt.s32.totalorder %v4546, 2
        %vm4548 = vcmp.eq.s32.totalorder %v4546, 0
        %v4549 = vxor.u32 %v4543, 2147483648
        %v4550 = vsel %vm4548, %v4542, %v4549
        %vm4551 = vcmp.eq.s32.totalorder %v4546, 2
        %v4552 = vxor.u32 %v4542, 2147483648
        %v4553 = vsel %vm4551, %v4552, %v4543
        %v4554 = vsel %vm4547, %v4550, %v4553
        %v4555 = vsel %vm4544, nan, %v4554
        %v4556 = vand.u32 2147483647, %v784
        %vm4557 = vcmp.le.f32.partialorder %v4556, 0.7853982
        %vm4558 = vcmp.lt.s32.totalorder %v784, 0
        %v4559 = vand.u32 %v784, 2139095040
        %v4560 = vshrl.u32 %v4559, 23
        %v4561 = vsub.s32 %v4560, 127
        %v4562 = vand.u32 2147483647, %v784
        %v4563 = vand.u32 %v4562, 8388607
        %v4564 = vor.u32 %v4563, 8388608
        %v4565 = vsub.s32 0, %v4564
        %v4566 = vadd.s32 %v4561, 1
        %vm4567 = vcmp.gt.s32.totalorder %v4566, 0
        %v4568 = vsel %vm4567, %v4566, 0
        %v4569 = vshrl.u32 %v4568, 5
        %v4570 = vand.u32 %v4568, 31
        %v4571 = vsub.s32 32, %v4570
        %v4572 = vshrl.u32 683565275, %v4571
        %v4573 = vshll.u32 683565275, %v4570
        %v4574 = vshrl.u32 2475754826, %v4571
        %v4575 = vor.u32 %v4573, %v4574
        %v4576 = vshll.u32 2475754826, %v4570
        %v4577 = vshrl.u32 2131351028, %v4571
        %v4578 = vor.u32 %v4576, %v4577
        %v4579 = vshll.u32 2131351028, %v4570
        %v4580 = vshrl.u32 2102212464, %v4571
        %v4581 = vor.u32 %v4579, %v4580
        %v4582 = vshll.u32 2102212464, %v4570
        %v4583 = vshrl.u32 920167782, %v4571
        %v4584 = vor.u32 %v4582, %v4583
        %v4585 = vshll.u32 920167782, %v4570
        %v4586 = vshrl.u32 1326507024, %v4571
        %v4587 = vor.u32 %v4585, %v4586
        %vm4588 = vcmp.lt.s32.totalorder %v4569, 1
        %vm4589 = vcmp.lt.s32.totalorder %v4569, 2
        %vm4590 = vcmp.lt.s32.totalorder %v4569, 3
        %vm4591 = vcmp.lt.s32.totalorder %v4569, 4
        %v4592 = vsel %vm4588, %v4572, %v4575
        %v4593 = vsel %vm4591, %v4581, 2102212464
        %v4594 = vsel %vm4590, %v4578, %v4593
        %v4595 = vsel %vm4589, %v4592, %v4594
        %v4596 = vsel %vm4588, %v4575, %v4578
        %v4597 = vsel %vm4591, %v4584, 920167782
        %v4598 = vsel %vm4590, %v4581, %v4597
        %v4599 = vsel %vm4589, %v4596, %v4598
        %v4600 = vsel %vm4588, %v4578, %v4581
        %v4601 = vsel %vm4591, %v4587, 1326507024
        %v4602 = vsel %vm4590, %v4584, %v4601
        %v4603 = vsel %vm4589, %v4600, %v4602
        %v4604 = vshll.u32 %v4564, 8
        %v4605 = vmul.u32.u64.compose %v4604, %v4603
        %v4606 = vextract.low.u32 %v4605
        %v4607 = vextract.high.u32 %v4605
        %v4608 = vmul.u32.u64.compose %v4604, %v4599
        %v4609 = vextract.low.u32 %v4608
        %v4610 = vextract.high.u32 %v4608
        %v4611 = vmul.u32 %v4604, %v4595
        %v4612 = vadd.s32 %v4607, %v4609
        %vm4613 = vc.u32 %v4607, %v4609
        %v4614 = vadd.s32 %v4610, 1
        %v4615 = vsel %vm4613, %v4614, %v4610
        %v4616 = vadd.s32 %v4611, %v4615
        %v4617 = vadd.s32 %v4616, 536870912
        %v4618 = vshrl.u32 %v4617, 30
        %v4619 = vshll.u32 %v4618, 30
        %v4620 = vsub.s32 %v4616, %v4619
        %vm4621 = vcmp.lt.s32.totalorder %v4620, 0
        %v4622 = vsub.s32 0, %v4620
        %v4623 = vsel %vm4621, %v4622, %v4620
        %v4624 = vclz %v4623
        %v4625 = vsub.s32 %v4624, 2
        %vm4626 = vcmp.gt.s32.totalorder 0, %v4625
        %v4627 = vsel %vm4626, 0, %v4625
        %v4628 = vsub.s32 32, %v4627
        %v4629 = vshll.u32 %v4620, %v4627
        %v4630 = vshrl.u32 %v4612, %v4628
        %v4631 = vor.u32 %v4629, %v4630
        %v4632 = vsub.s32 4294967266, %v4627
        %v4633 = vadd.s32 %v4632, 127
        %v4634 = vshll.u32 %v4633, 23
        %v4635 = vor.u32 4788187, %v4634
        %v4636 = vand.u32 2147483647, %v4635
        %v4638 = vcvt.s32.f32 %v4631
        %v4639 = vmul.f32 %v4638, %v4636
        %v4640 = vxor.u32 %v4639, 2147483648
        %v4641 = vsel %vm4558, %v4640, %v4639
        %v4642 = vsub.s32 4, %v4618
        %v4643 = vsel %vm4558, %v4642, %v4618
        %v4644 = vsel %vm4557, %v784, %v4641
        %v4645 = vsel %vm4557, 0, %v4643
        %v4646 = vcosq.f32.pop %v4644
        %v4647 = vsinq.f32.pop %v4644
        %vm4648 = vweird.f32 %v784
        %v4649 = vadd.s32 %v4645, 3
        %v4650 = vand.u32 %v4649, 3
        %vm4651 = vcmp.lt.s32.totalorder %v4650, 2
        %vm4652 = vcmp.eq.s32.totalorder %v4650, 0
        %v4653 = vxor.u32 %v4647, 2147483648
        %v4654 = vsel %vm4652, %v4646, %v4653
        %vm4655 = vcmp.eq.s32.totalorder %v4650, 2
        %v4656 = vxor.u32 %v4646, 2147483648
        %v4657 = vsel %vm4655, %v4656, %v4647
        %v4658 = vsel %vm4651, %v4654, %v4657
        %v4659 = vsel %vm4648, nan, %v4658
        %v4660 = vand.u32 2147483647, %v785
        %vm4661 = vcmp.le.f32.partialorder %v4660, 0.7853982
        %vm4662 = vcmp.lt.s32.totalorder %v785, 0
        %v4663 = vand.u32 %v785, 2139095040
        %v4664 = vshrl.u32 %v4663, 23
        %v4665 = vsub.s32 %v4664, 127
        %v4666 = vand.u32 2147483647, %v785
        %v4667 = vand.u32 %v4666, 8388607
        %v4668 = vor.u32 %v4667, 8388608
        %v4669 = vsub.s32 0, %v4668
        %v4670 = vadd.s32 %v4665, 1
        %vm4671 = vcmp.gt.s32.totalorder %v4670, 0
        %v4672 = vsel %vm4671, %v4670, 0
        %v4673 = vshrl.u32 %v4672, 5
        %v4674 = vand.u32 %v4672, 31
        %v4675 = vsub.s32 32, %v4674
        %v4676 = vshrl.u32 683565275, %v4675
        %v4677 = vshll.u32 683565275, %v4674
        %v4678 = vshrl.u32 2475754826, %v4675
        %v4679 = vor.u32 %v4677, %v4678
        %v4680 = vshll.u32 2475754826, %v4674
        %v4681 = vshrl.u32 2131351028, %v4675
        %v4682 = vor.u32 %v4680, %v4681
        %v4683 = vshll.u32 2131351028, %v4674
        %v4684 = vshrl.u32 2102212464, %v4675
        %v4685 = vor.u32 %v4683, %v4684
        %v4686 = vshll.u32 2102212464, %v4674
        %v4687 = vshrl.u32 920167782, %v4675
        %v4688 = vor.u32 %v4686, %v4687
        %v4689 = vshll.u32 920167782, %v4674
        %v4690 = vshrl.u32 1326507024, %v4675
        %v4691 = vor.u32 %v4689, %v4690
        %vm4692 = vcmp.lt.s32.totalorder %v4673, 1
        %vm4693 = vcmp.lt.s32.totalorder %v4673, 2
        %vm4694 = vcmp.lt.s32.totalorder %v4673, 3
        %vm4695 = vcmp.lt.s32.totalorder %v4673, 4
        %v4696 = vsel %vm4692, %v4676, %v4679
        %v4697 = vsel %vm4695, %v4685, 2102212464
        %v4698 = vsel %vm4694, %v4682, %v4697
        %v4699 = vsel %vm4693, %v4696, %v4698
        %v4700 = vsel %vm4692, %v4679, %v4682
        %v4701 = vsel %vm4695, %v4688, 920167782
        %v4702 = vsel %vm4694, %v4685, %v4701
        %v4703 = vsel %vm4693, %v4700, %v4702
        %v4704 = vsel %vm4692, %v4682, %v4685
        %v4705 = vsel %vm4695, %v4691, 1326507024
        %v4706 = vsel %vm4694, %v4688, %v4705
        %v4707 = vsel %vm4693, %v4704, %v4706
        %v4708 = vshll.u32 %v4668, 8
        %v4709 = vmul.u32.u64.compose %v4708, %v4707
        %v4710 = vextract.low.u32 %v4709
        %v4711 = vextract.high.u32 %v4709
        %v4712 = vmul.u32.u64.compose %v4708, %v4703
        %v4713 = vextract.low.u32 %v4712
        %v4714 = vextract.high.u32 %v4712
        %v4715 = vmul.u32 %v4708, %v4699
        %v4716 = vadd.s32 %v4711, %v4713
        %vm4717 = vc.u32 %v4711, %v4713
        %v4718 = vadd.s32 %v4714, 1
        %v4719 = vsel %vm4717, %v4718, %v4714
        %v4720 = vadd.s32 %v4715, %v4719
        %v4721 = vadd.s32 %v4720, 536870912
        %v4722 = vshrl.u32 %v4721, 30
        %v4723 = vshll.u32 %v4722, 30
        %v4724 = vsub.s32 %v4720, %v4723
        %vm4725 = vcmp.lt.s32.totalorder %v4724, 0
        %v4726 = vsub.s32 0, %v4724
        %v4727 = vsel %vm4725, %v4726, %v4724
        %v4728 = vclz %v4727
        %v4729 = vsub.s32 %v4728, 2
        %vm4730 = vcmp.gt.s32.totalorder 0, %v4729
        %v4731 = vsel %vm4730, 0, %v4729
        %v4732 = vsub.s32 32, %v4731
        %v4733 = vshll.u32 %v4724, %v4731
        %v4734 = vshrl.u32 %v4716, %v4732
        %v4735 = vor.u32 %v4733, %v4734
        %v4736 = vsub.s32 4294967266, %v4731
        %v4737 = vadd.s32 %v4736, 127
        %v4738 = vshll.u32 %v4737, 23
        %v4739 = vor.u32 4788187, %v4738
        %v4740 = vand.u32 2147483647, %v4739
        %v4742 = vcvt.s32.f32 %v4735
        %v4743 = vmul.f32 %v4742, %v4740
        %v4744 = vxor.u32 %v4743, 2147483648
        %v4745 = vsel %vm4662, %v4744, %v4743
        %v4746 = vsub.s32 4, %v4722
        %v4747 = vsel %vm4662, %v4746, %v4722
        %v4748 = vsel %vm4661, %v785, %v4745
        %v4749 = vsel %vm4661, 0, %v4747
        %v4750 = vcosq.f32.pop %v4748
        %v4751 = vsinq.f32.pop %v4748
        %vm4752 = vweird.f32 %v785
        %v4753 = vadd.s32 %v4749, 3
        %v4754 = vand.u32 %v4753, 3
        %vm4755 = vcmp.lt.s32.totalorder %v4754, 2
        %vm4756 = vcmp.eq.s32.totalorder %v4754, 0
        %v4757 = vxor.u32 %v4751, 2147483648
        %v4758 = vsel %vm4756, %v4750, %v4757
        %vm4759 = vcmp.eq.s32.totalorder %v4754, 2
        %v4760 = vxor.u32 %v4750, 2147483648
        %v4761 = vsel %vm4759, %v4760, %v4751
        %v4762 = vsel %vm4755, %v4758, %v4761
        %v4763 = vsel %vm4752, nan, %v4762
        %v4764 = vand.u32 2147483647, %v786
        %vm4765 = vcmp.le.f32.partialorder %v4764, 0.7853982
        %vm4766 = vcmp.lt.s32.totalorder %v786, 0
        %v4767 = vand.u32 %v786, 2139095040
        %v4768 = vshrl.u32 %v4767, 23
        %v4769 = vsub.s32 %v4768, 127
        %v4770 = vand.u32 2147483647, %v786
        %v4771 = vand.u32 %v4770, 8388607
        %v4772 = vor.u32 %v4771, 8388608
        %v4773 = vsub.s32 0, %v4772
        %v4774 = vadd.s32 %v4769, 1
        %vm4775 = vcmp.gt.s32.totalorder %v4774, 0
        %v4776 = vsel %vm4775, %v4774, 0
        %v4777 = vshrl.u32 %v4776, 5
        %v4778 = vand.u32 %v4776, 31
        %v4779 = vsub.s32 32, %v4778
        %v4780 = vshrl.u32 683565275, %v4779
        %v4781 = vshll.u32 683565275, %v4778
        %v4782 = vshrl.u32 2475754826, %v4779
        %v4783 = vor.u32 %v4781, %v4782
        %v4784 = vshll.u32 2475754826, %v4778
        %v4785 = vshrl.u32 2131351028, %v4779
        %v4786 = vor.u32 %v4784, %v4785
        %v4787 = vshll.u32 2131351028, %v4778
        %v4788 = vshrl.u32 2102212464, %v4779
        %v4789 = vor.u32 %v4787, %v4788
        %v4790 = vshll.u32 2102212464, %v4778
        %v4791 = vshrl.u32 920167782, %v4779
        %v4792 = vor.u32 %v4790, %v4791
        %v4793 = vshll.u32 920167782, %v4778
        %v4794 = vshrl.u32 1326507024, %v4779
        %v4795 = vor.u32 %v4793, %v4794
        %vm4796 = vcmp.lt.s32.totalorder %v4777, 1
        %vm4797 = vcmp.lt.s32.totalorder %v4777, 2
        %vm4798 = vcmp.lt.s32.totalorder %v4777, 3
        %vm4799 = vcmp.lt.s32.totalorder %v4777, 4
        %v4800 = vsel %vm4796, %v4780, %v4783
        %v4801 = vsel %vm4799, %v4789, 2102212464
        %v4802 = vsel %vm4798, %v4786, %v4801
        %v4803 = vsel %vm4797, %v4800, %v4802
        %v4804 = vsel %vm4796, %v4783, %v4786
        %v4805 = vsel %vm4799, %v4792, 920167782
        %v4806 = vsel %vm4798, %v4789, %v4805
        %v4807 = vsel %vm4797, %v4804, %v4806
        %v4808 = vsel %vm4796, %v4786, %v4789
        %v4809 = vsel %vm4799, %v4795, 1326507024
        %v4810 = vsel %vm4798, %v4792, %v4809
        %v4811 = vsel %vm4797, %v4808, %v4810
        %v4812 = vshll.u32 %v4772, 8
        %v4813 = vmul.u32.u64.compose %v4812, %v4811
        %v4814 = vextract.low.u32 %v4813
        %v4815 = vextract.high.u32 %v4813
        %v4816 = vmul.u32.u64.compose %v4812, %v4807
        %v4817 = vextract.low.u32 %v4816
        %v4818 = vextract.high.u32 %v4816
        %v4819 = vmul.u32 %v4812, %v4803
        %v4820 = vadd.s32 %v4815, %v4817
        %vm4821 = vc.u32 %v4815, %v4817
        %v4822 = vadd.s32 %v4818, 1
        %v4823 = vsel %vm4821, %v4822, %v4818
        %v4824 = vadd.s32 %v4819, %v4823
        %v4825 = vadd.s32 %v4824, 536870912
        %v4826 = vshrl.u32 %v4825, 30
        %v4827 = vshll.u32 %v4826, 30
        %v4828 = vsub.s32 %v4824, %v4827
        %vm4829 = vcmp.lt.s32.totalorder %v4828, 0
        %v4830 = vsub.s32 0, %v4828
        %v4831 = vsel %vm4829, %v4830, %v4828
        %v4832 = vclz %v4831
        %v4833 = vsub.s32 %v4832, 2
        %vm4834 = vcmp.gt.s32.totalorder 0, %v4833
        %v4835 = vsel %vm4834, 0, %v4833
        %v4836 = vsub.s32 32, %v4835
        %v4837 = vshll.u32 %v4828, %v4835
        %v4838 = vshrl.u32 %v4820, %v4836
        %v4839 = vor.u32 %v4837, %v4838
        %v4840 = vsub.s32 4294967266, %v4835
        %v4841 = vadd.s32 %v4840, 127
        %v4842 = vshll.u32 %v4841, 23
        %v4843 = vor.u32 4788187, %v4842
        %v4844 = vand.u32 2147483647, %v4843
        %v4846 = vcvt.s32.f32 %v4839
        %v4847 = vmul.f32 %v4846, %v4844
        %v4848 = vxor.u32 %v4847, 2147483648
        %v4849 = vsel %vm4766, %v4848, %v4847
        %v4850 = vsub.s32 4, %v4826
        %v4851 = vsel %vm4766, %v4850, %v4826
        %v4852 = vsel %vm4765, %v786, %v4849
        %v4853 = vsel %vm4765, 0, %v4851
        %v4854 = vcosq.f32.pop %v4852
        %v4855 = vsinq.f32.pop %v4852
        %vm4856 = vweird.f32 %v786
        %v4857 = vadd.s32 %v4853, 3
        %v4858 = vand.u32 %v4857, 3
        %vm4859 = vcmp.lt.s32.totalorder %v4858, 2
        %vm4860 = vcmp.eq.s32.totalorder %v4858, 0
        %v4861 = vxor.u32 %v4855, 2147483648
        %v4862 = vsel %vm4860, %v4854, %v4861
        %vm4863 = vcmp.eq.s32.totalorder %v4858, 2
        %v4864 = vxor.u32 %v4854, 2147483648
        %v4865 = vsel %vm4863, %v4864, %v4855
        %v4866 = vsel %vm4859, %v4862, %v4865
        %v4867 = vsel %vm4856, nan, %v4866
        %v4868 = vand.u32 2147483647, %v787
        %vm4869 = vcmp.le.f32.partialorder %v4868, 0.7853982
        %vm4870 = vcmp.lt.s32.totalorder %v787, 0
        %v4871 = vand.u32 %v787, 2139095040
        %v4872 = vshrl.u32 %v4871, 23
        %v4873 = vsub.s32 %v4872, 127
        %v4874 = vand.u32 2147483647, %v787
        %v4875 = vand.u32 %v4874, 8388607
        %v4876 = vor.u32 %v4875, 8388608
        %v4877 = vsub.s32 0, %v4876
        %v4878 = vadd.s32 %v4873, 1
        %vm4879 = vcmp.gt.s32.totalorder %v4878, 0
        %v4880 = vsel %vm4879, %v4878, 0
        %v4881 = vshrl.u32 %v4880, 5
        %v4882 = vand.u32 %v4880, 31
        %v4883 = vsub.s32 32, %v4882
        %v4884 = vshrl.u32 683565275, %v4883
        %v4885 = vshll.u32 683565275, %v4882
        %v4886 = vshrl.u32 2475754826, %v4883
        %v4887 = vor.u32 %v4885, %v4886
        %v4888 = vshll.u32 2475754826, %v4882
        %v4889 = vshrl.u32 2131351028, %v4883
        %v4890 = vor.u32 %v4888, %v4889
        %v4891 = vshll.u32 2131351028, %v4882
        %v4892 = vshrl.u32 2102212464, %v4883
        %v4893 = vor.u32 %v4891, %v4892
        %v4894 = vshll.u32 2102212464, %v4882
        %v4895 = vshrl.u32 920167782, %v4883
        %v4896 = vor.u32 %v4894, %v4895
        %v4897 = vshll.u32 920167782, %v4882
        %v4898 = vshrl.u32 1326507024, %v4883
        %v4899 = vor.u32 %v4897, %v4898
        %vm4900 = vcmp.lt.s32.totalorder %v4881, 1
        %vm4901 = vcmp.lt.s32.totalorder %v4881, 2
        %vm4902 = vcmp.lt.s32.totalorder %v4881, 3
        %vm4903 = vcmp.lt.s32.totalorder %v4881, 4
        %v4904 = vsel %vm4900, %v4884, %v4887
        %v4905 = vsel %vm4903, %v4893, 2102212464
        %v4906 = vsel %vm4902, %v4890, %v4905
        %v4907 = vsel %vm4901, %v4904, %v4906
        %v4908 = vsel %vm4900, %v4887, %v4890
        %v4909 = vsel %vm4903, %v4896, 920167782
        %v4910 = vsel %vm4902, %v4893, %v4909
        %v4911 = vsel %vm4901, %v4908, %v4910
        %v4912 = vsel %vm4900, %v4890, %v4893
        %v4913 = vsel %vm4903, %v4899, 1326507024
        %v4914 = vsel %vm4902, %v4896, %v4913
        %v4915 = vsel %vm4901, %v4912, %v4914
        %v4916 = vshll.u32 %v4876, 8
        %v4917 = vmul.u32.u64.compose %v4916, %v4915
        %v4918 = vextract.low.u32 %v4917
        %v4919 = vextract.high.u32 %v4917
        %v4920 = vmul.u32.u64.compose %v4916, %v4911
        %v4921 = vextract.low.u32 %v4920
        %v4922 = vextract.high.u32 %v4920
        %v4923 = vmul.u32 %v4916, %v4907
        %v4924 = vadd.s32 %v4919, %v4921
        %vm4925 = vc.u32 %v4919, %v4921
        %v4926 = vadd.s32 %v4922, 1
        %v4927 = vsel %vm4925, %v4926, %v4922
        %v4928 = vadd.s32 %v4923, %v4927
        %v4929 = vadd.s32 %v4928, 536870912
        %v4930 = vshrl.u32 %v4929, 30
        %v4931 = vshll.u32 %v4930, 30
        %v4932 = vsub.s32 %v4928, %v4931
        %vm4933 = vcmp.lt.s32.totalorder %v4932, 0
        %v4934 = vsub.s32 0, %v4932
        %v4935 = vsel %vm4933, %v4934, %v4932
        %v4936 = vclz %v4935
        %v4937 = vsub.s32 %v4936, 2
        %vm4938 = vcmp.gt.s32.totalorder 0, %v4937
        %v4939 = vsel %vm4938, 0, %v4937
        %v4940 = vsub.s32 32, %v4939
        %v4941 = vshll.u32 %v4932, %v4939
        %v4942 = vshrl.u32 %v4924, %v4940
        %v4943 = vor.u32 %v4941, %v4942
        %v4944 = vsub.s32 4294967266, %v4939
        %v4945 = vadd.s32 %v4944, 127
        %v4946 = vshll.u32 %v4945, 23
        %v4947 = vor.u32 4788187, %v4946
        %v4948 = vand.u32 2147483647, %v4947
        %v4950 = vcvt.s32.f32 %v4943
        %v4951 = vmul.f32 %v4950, %v4948
        %v4952 = vxor.u32 %v4951, 2147483648
        %v4953 = vsel %vm4870, %v4952, %v4951
        %v4954 = vsub.s32 4, %v4930
        %v4955 = vsel %vm4870, %v4954, %v4930
        %v4956 = vsel %vm4869, %v787, %v4953
        %v4957 = vsel %vm4869, 0, %v4955
        %v4958 = vcosq.f32.pop %v4956
        %v4959 = vsinq.f32.pop %v4956
        %vm4960 = vweird.f32 %v787
        %v4961 = vadd.s32 %v4957, 3
        %v4962 = vand.u32 %v4961, 3
        %vm4963 = vcmp.lt.s32.totalorder %v4962, 2
        %vm4964 = vcmp.eq.s32.totalorder %v4962, 0
        %v4965 = vxor.u32 %v4959, 2147483648
        %v4966 = vsel %vm4964, %v4958, %v4965
        %vm4967 = vcmp.eq.s32.totalorder %v4962, 2
        %v4968 = vxor.u32 %v4958, 2147483648
        %v4969 = vsel %vm4967, %v4968, %v4959
        %v4970 = vsel %vm4963, %v4966, %v4969
        %v4971 = vsel %vm4960, nan, %v4970
        %v4972 = vand.u32 2147483647, %v788
        %vm4973 = vcmp.le.f32.partialorder %v4972, 0.7853982
        %vm4974 = vcmp.lt.s32.totalorder %v788, 0
        %v4975 = vand.u32 %v788, 2139095040
        %v4976 = vshrl.u32 %v4975, 23
        %v4977 = vsub.s32 %v4976, 127
        %v4978 = vand.u32 2147483647, %v788
        %v4979 = vand.u32 %v4978, 8388607
        %v4980 = vor.u32 %v4979, 8388608
        %v4981 = vsub.s32 0, %v4980
        %v4982 = vadd.s32 %v4977, 1
        %vm4983 = vcmp.gt.s32.totalorder %v4982, 0
        %v4984 = vsel %vm4983, %v4982, 0
        %v4985 = vshrl.u32 %v4984, 5
        %v4986 = vand.u32 %v4984, 31
        %v4987 = vsub.s32 32, %v4986
        %v4988 = vshrl.u32 683565275, %v4987
        %v4989 = vshll.u32 683565275, %v4986
        %v4990 = vshrl.u32 2475754826, %v4987
        %v4991 = vor.u32 %v4989, %v4990
        %v4992 = vshll.u32 2475754826, %v4986
        %v4993 = vshrl.u32 2131351028, %v4987
        %v4994 = vor.u32 %v4992, %v4993
        %v4995 = vshll.u32 2131351028, %v4986
        %v4996 = vshrl.u32 2102212464, %v4987
        %v4997 = vor.u32 %v4995, %v4996
        %v4998 = vshll.u32 2102212464, %v4986
        %v4999 = vshrl.u32 920167782, %v4987
        %v5000 = vor.u32 %v4998, %v4999
        %v5001 = vshll.u32 920167782, %v4986
        %v5002 = vshrl.u32 1326507024, %v4987
        %v5003 = vor.u32 %v5001, %v5002
        %vm5004 = vcmp.lt.s32.totalorder %v4985, 1
        %vm5005 = vcmp.lt.s32.totalorder %v4985, 2
        %vm5006 = vcmp.lt.s32.totalorder %v4985, 3
        %vm5007 = vcmp.lt.s32.totalorder %v4985, 4
        %v5008 = vsel %vm5004, %v4988, %v4991
        %v5009 = vsel %vm5007, %v4997, 2102212464
        %v5010 = vsel %vm5006, %v4994, %v5009
        %v5011 = vsel %vm5005, %v5008, %v5010
        %v5012 = vsel %vm5004, %v4991, %v4994
        %v5013 = vsel %vm5007, %v5000, 920167782
        %v5014 = vsel %vm5006, %v4997, %v5013
        %v5015 = vsel %vm5005, %v5012, %v5014
        %v5016 = vsel %vm5004, %v4994, %v4997
        %v5017 = vsel %vm5007, %v5003, 1326507024
        %v5018 = vsel %vm5006, %v5000, %v5017
        %v5019 = vsel %vm5005, %v5016, %v5018
        %v5020 = vshll.u32 %v4980, 8
        %v5021 = vmul.u32.u64.compose %v5020, %v5019
        %v5022 = vextract.low.u32 %v5021
        %v5023 = vextract.high.u32 %v5021
        %v5024 = vmul.u32.u64.compose %v5020, %v5015
        %v5025 = vextract.low.u32 %v5024
        %v5026 = vextract.high.u32 %v5024
        %v5027 = vmul.u32 %v5020, %v5011
        %v5028 = vadd.s32 %v5023, %v5025
        %vm5029 = vc.u32 %v5023, %v5025
        %v5030 = vadd.s32 %v5026, 1
        %v5031 = vsel %vm5029, %v5030, %v5026
        %v5032 = vadd.s32 %v5027, %v5031
        %v5033 = vadd.s32 %v5032, 536870912
        %v5034 = vshrl.u32 %v5033, 30
        %v5035 = vshll.u32 %v5034, 30
        %v5036 = vsub.s32 %v5032, %v5035
        %vm5037 = vcmp.lt.s32.totalorder %v5036, 0
        %v5038 = vsub.s32 0, %v5036
        %v5039 = vsel %vm5037, %v5038, %v5036
        %v5040 = vclz %v5039
        %v5041 = vsub.s32 %v5040, 2
        %vm5042 = vcmp.gt.s32.totalorder 0, %v5041
        %v5043 = vsel %vm5042, 0, %v5041
        %v5044 = vsub.s32 32, %v5043
        %v5045 = vshll.u32 %v5036, %v5043
        %v5046 = vshrl.u32 %v5028, %v5044
        %v5047 = vor.u32 %v5045, %v5046
        %v5048 = vsub.s32 4294967266, %v5043
        %v5049 = vadd.s32 %v5048, 127
        %v5050 = vshll.u32 %v5049, 23
        %v5051 = vor.u32 4788187, %v5050
        %v5052 = vand.u32 2147483647, %v5051
        %v5054 = vcvt.s32.f32 %v5047
        %v5055 = vmul.f32 %v5054, %v5052
        %v5056 = vxor.u32 %v5055, 2147483648
        %v5057 = vsel %vm4974, %v5056, %v5055
        %v5058 = vsub.s32 4, %v5034
        %v5059 = vsel %vm4974, %v5058, %v5034
        %v5060 = vsel %vm4973, %v788, %v5057
        %v5061 = vsel %vm4973, 0, %v5059
        %v5062 = vcosq.f32.pop %v5060
        %v5063 = vsinq.f32.pop %v5060
        %vm5064 = vweird.f32 %v788
        %v5065 = vadd.s32 %v5061, 3
        %v5066 = vand.u32 %v5065, 3
        %vm5067 = vcmp.lt.s32.totalorder %v5066, 2
        %vm5068 = vcmp.eq.s32.totalorder %v5066, 0
        %v5069 = vxor.u32 %v5063, 2147483648
        %v5070 = vsel %vm5068, %v5062, %v5069
        %vm5071 = vcmp.eq.s32.totalorder %v5066, 2
        %v5072 = vxor.u32 %v5062, 2147483648
        %v5073 = vsel %vm5071, %v5072, %v5063
        %v5074 = vsel %vm5067, %v5070, %v5073
        %v5075 = vsel %vm5064, nan, %v5074
        %v5076 = vand.u32 2147483647, %v789
        %vm5077 = vcmp.le.f32.partialorder %v5076, 0.7853982
        %vm5078 = vcmp.lt.s32.totalorder %v789, 0
        %v5079 = vand.u32 %v789, 2139095040
        %v5080 = vshrl.u32 %v5079, 23
        %v5081 = vsub.s32 %v5080, 127
        %v5082 = vand.u32 2147483647, %v789
        %v5083 = vand.u32 %v5082, 8388607
        %v5084 = vor.u32 %v5083, 8388608
        %v5085 = vsub.s32 0, %v5084
        %v5086 = vadd.s32 %v5081, 1
        %vm5087 = vcmp.gt.s32.totalorder %v5086, 0
        %v5088 = vsel %vm5087, %v5086, 0
        %v5089 = vshrl.u32 %v5088, 5
        %v5090 = vand.u32 %v5088, 31
        %v5091 = vsub.s32 32, %v5090
        %v5092 = vshrl.u32 683565275, %v5091
        %v5093 = vshll.u32 683565275, %v5090
        %v5094 = vshrl.u32 2475754826, %v5091
        %v5095 = vor.u32 %v5093, %v5094
        %v5096 = vshll.u32 2475754826, %v5090
        %v5097 = vshrl.u32 2131351028, %v5091
        %v5098 = vor.u32 %v5096, %v5097
        %v5099 = vshll.u32 2131351028, %v5090
        %v5100 = vshrl.u32 2102212464, %v5091
        %v5101 = vor.u32 %v5099, %v5100
        %v5102 = vshll.u32 2102212464, %v5090
        %v5103 = vshrl.u32 920167782, %v5091
        %v5104 = vor.u32 %v5102, %v5103
        %v5105 = vshll.u32 920167782, %v5090
        %v5106 = vshrl.u32 1326507024, %v5091
        %v5107 = vor.u32 %v5105, %v5106
        %vm5108 = vcmp.lt.s32.totalorder %v5089, 1
        %vm5109 = vcmp.lt.s32.totalorder %v5089, 2
        %vm5110 = vcmp.lt.s32.totalorder %v5089, 3
        %vm5111 = vcmp.lt.s32.totalorder %v5089, 4
        %v5112 = vsel %vm5108, %v5092, %v5095
        %v5113 = vsel %vm5111, %v5101, 2102212464
        %v5114 = vsel %vm5110, %v5098, %v5113
        %v5115 = vsel %vm5109, %v5112, %v5114
        %v5116 = vsel %vm5108, %v5095, %v5098
        %v5117 = vsel %vm5111, %v5104, 920167782
        %v5118 = vsel %vm5110, %v5101, %v5117
        %v5119 = vsel %vm5109, %v5116, %v5118
        %v5120 = vsel %vm5108, %v5098, %v5101
        %v5121 = vsel %vm5111, %v5107, 1326507024
        %v5122 = vsel %vm5110, %v5104, %v5121
        %v5123 = vsel %vm5109, %v5120, %v5122
        %v5124 = vshll.u32 %v5084, 8
        %v5125 = vmul.u32.u64.compose %v5124, %v5123
        %v5126 = vextract.low.u32 %v5125
        %v5127 = vextract.high.u32 %v5125
        %v5128 = vmul.u32.u64.compose %v5124, %v5119
        %v5129 = vextract.low.u32 %v5128
        %v5130 = vextract.high.u32 %v5128
        %v5131 = vmul.u32 %v5124, %v5115
        %v5132 = vadd.s32 %v5127, %v5129
        %vm5133 = vc.u32 %v5127, %v5129
        %v5134 = vadd.s32 %v5130, 1
        %v5135 = vsel %vm5133, %v5134, %v5130
        %v5136 = vadd.s32 %v5131, %v5135
        %v5137 = vadd.s32 %v5136, 536870912
        %v5138 = vshrl.u32 %v5137, 30
        %v5139 = vshll.u32 %v5138, 30
        %v5140 = vsub.s32 %v5136, %v5139
        %vm5141 = vcmp.lt.s32.totalorder %v5140, 0
        %v5142 = vsub.s32 0, %v5140
        %v5143 = vsel %vm5141, %v5142, %v5140
        %v5144 = vclz %v5143
        %v5145 = vsub.s32 %v5144, 2
        %vm5146 = vcmp.gt.s32.totalorder 0, %v5145
        %v5147 = vsel %vm5146, 0, %v5145
        %v5148 = vsub.s32 32, %v5147
        %v5149 = vshll.u32 %v5140, %v5147
        %v5150 = vshrl.u32 %v5132, %v5148
        %v5151 = vor.u32 %v5149, %v5150
        %v5152 = vsub.s32 4294967266, %v5147
        %v5153 = vadd.s32 %v5152, 127
        %v5154 = vshll.u32 %v5153, 23
        %v5155 = vor.u32 4788187, %v5154
        %v5156 = vand.u32 2147483647, %v5155
        %v5158 = vcvt.s32.f32 %v5151
        %v5159 = vmul.f32 %v5158, %v5156
        %v5160 = vxor.u32 %v5159, 2147483648
        %v5161 = vsel %vm5078, %v5160, %v5159
        %v5162 = vsub.s32 4, %v5138
        %v5163 = vsel %vm5078, %v5162, %v5138
        %v5164 = vsel %vm5077, %v789, %v5161
        %v5165 = vsel %vm5077, 0, %v5163
        %v5166 = vcosq.f32.pop %v5164
        %v5167 = vsinq.f32.pop %v5164
        %vm5168 = vweird.f32 %v789
        %v5169 = vadd.s32 %v5165, 3
        %v5170 = vand.u32 %v5169, 3
        %vm5171 = vcmp.lt.s32.totalorder %v5170, 2
        %vm5172 = vcmp.eq.s32.totalorder %v5170, 0
        %v5173 = vxor.u32 %v5167, 2147483648
        %v5174 = vsel %vm5172, %v5166, %v5173
        %vm5175 = vcmp.eq.s32.totalorder %v5170, 2
        %v5176 = vxor.u32 %v5166, 2147483648
        %v5177 = vsel %vm5175, %v5176, %v5167
        %v5178 = vsel %vm5171, %v5174, %v5177
        %v5179 = vsel %vm5168, nan, %v5178
        %v5180 = vand.u32 2147483647, %v790
        %vm5181 = vcmp.le.f32.partialorder %v5180, 0.7853982
        %vm5182 = vcmp.lt.s32.totalorder %v790, 0
        %v5183 = vand.u32 %v790, 2139095040
        %v5184 = vshrl.u32 %v5183, 23
        %v5185 = vsub.s32 %v5184, 127
        %v5186 = vand.u32 2147483647, %v790
        %v5187 = vand.u32 %v5186, 8388607
        %v5188 = vor.u32 %v5187, 8388608
        %v5189 = vsub.s32 0, %v5188
        %v5190 = vadd.s32 %v5185, 1
        %vm5191 = vcmp.gt.s32.totalorder %v5190, 0
        %v5192 = vsel %vm5191, %v5190, 0
        %v5193 = vshrl.u32 %v5192, 5
        %v5194 = vand.u32 %v5192, 31
        %v5195 = vsub.s32 32, %v5194
        %v5196 = vshrl.u32 683565275, %v5195
        %v5197 = vshll.u32 683565275, %v5194
        %v5198 = vshrl.u32 2475754826, %v5195
        %v5199 = vor.u32 %v5197, %v5198
        %v5200 = vshll.u32 2475754826, %v5194
        %v5201 = vshrl.u32 2131351028, %v5195
        %v5202 = vor.u32 %v5200, %v5201
        %v5203 = vshll.u32 2131351028, %v5194
        %v5204 = vshrl.u32 2102212464, %v5195
        %v5205 = vor.u32 %v5203, %v5204
        %v5206 = vshll.u32 2102212464, %v5194
        %v5207 = vshrl.u32 920167782, %v5195
        %v5208 = vor.u32 %v5206, %v5207
        %v5209 = vshll.u32 920167782, %v5194
        %v5210 = vshrl.u32 1326507024, %v5195
        %v5211 = vor.u32 %v5209, %v5210
        %vm5212 = vcmp.lt.s32.totalorder %v5193, 1
        %vm5213 = vcmp.lt.s32.totalorder %v5193, 2
        %vm5214 = vcmp.lt.s32.totalorder %v5193, 3
        %vm5215 = vcmp.lt.s32.totalorder %v5193, 4
        %v5216 = vsel %vm5212, %v5196, %v5199
        %v5217 = vsel %vm5215, %v5205, 2102212464
        %v5218 = vsel %vm5214, %v5202, %v5217
        %v5219 = vsel %vm5213, %v5216, %v5218
        %v5220 = vsel %vm5212, %v5199, %v5202
        %v5221 = vsel %vm5215, %v5208, 920167782
        %v5222 = vsel %vm5214, %v5205, %v5221
        %v5223 = vsel %vm5213, %v5220, %v5222
        %v5224 = vsel %vm5212, %v5202, %v5205
        %v5225 = vsel %vm5215, %v5211, 1326507024
        %v5226 = vsel %vm5214, %v5208, %v5225
        %v5227 = vsel %vm5213, %v5224, %v5226
        %v5228 = vshll.u32 %v5188, 8
        %v5229 = vmul.u32.u64.compose %v5228, %v5227
        %v5230 = vextract.low.u32 %v5229
        %v5231 = vextract.high.u32 %v5229
        %v5232 = vmul.u32.u64.compose %v5228, %v5223
        %v5233 = vextract.low.u32 %v5232
        %v5234 = vextract.high.u32 %v5232
        %v5235 = vmul.u32 %v5228, %v5219
        %v5236 = vadd.s32 %v5231, %v5233
        %vm5237 = vc.u32 %v5231, %v5233
        %v5238 = vadd.s32 %v5234, 1
        %v5239 = vsel %vm5237, %v5238, %v5234
        %v5240 = vadd.s32 %v5235, %v5239
        %v5241 = vadd.s32 %v5240, 536870912
        %v5242 = vshrl.u32 %v5241, 30
        %v5243 = vshll.u32 %v5242, 30
        %v5244 = vsub.s32 %v5240, %v5243
        %vm5245 = vcmp.lt.s32.totalorder %v5244, 0
        %v5246 = vsub.s32 0, %v5244
        %v5247 = vsel %vm5245, %v5246, %v5244
        %v5248 = vclz %v5247
        %v5249 = vsub.s32 %v5248, 2
        %vm5250 = vcmp.gt.s32.totalorder 0, %v5249
        %v5251 = vsel %vm5250, 0, %v5249
        %v5252 = vsub.s32 32, %v5251
        %v5253 = vshll.u32 %v5244, %v5251
        %v5254 = vshrl.u32 %v5236, %v5252
        %v5255 = vor.u32 %v5253, %v5254
        %v5256 = vsub.s32 4294967266, %v5251
        %v5257 = vadd.s32 %v5256, 127
        %v5258 = vshll.u32 %v5257, 23
        %v5259 = vor.u32 4788187, %v5258
        %v5260 = vand.u32 2147483647, %v5259
        %v5262 = vcvt.s32.f32 %v5255
        %v5263 = vmul.f32 %v5262, %v5260
        %v5264 = vxor.u32 %v5263, 2147483648
        %v5265 = vsel %vm5182, %v5264, %v5263
        %v5266 = vsub.s32 4, %v5242
        %v5267 = vsel %vm5182, %v5266, %v5242
        %v5268 = vsel %vm5181, %v790, %v5265
        %v5269 = vsel %vm5181, 0, %v5267
        %v5270 = vcosq.f32.pop %v5268
        %v5271 = vsinq.f32.pop %v5268
        %vm5272 = vweird.f32 %v790
        %v5273 = vadd.s32 %v5269, 3
        %v5274 = vand.u32 %v5273, 3
        %vm5275 = vcmp.lt.s32.totalorder %v5274, 2
        %vm5276 = vcmp.eq.s32.totalorder %v5274, 0
        %v5277 = vxor.u32 %v5271, 2147483648
        %v5278 = vsel %vm5276, %v5270, %v5277
        %vm5279 = vcmp.eq.s32.totalorder %v5274, 2
        %v5280 = vxor.u32 %v5270, 2147483648
        %v5281 = vsel %vm5279, %v5280, %v5271
        %v5282 = vsel %vm5275, %v5278, %v5281
        %v5283 = vsel %vm5272, nan, %v5282
        %v5284 = vand.u32 2147483647, %v791
        %vm5285 = vcmp.le.f32.partialorder %v5284, 0.7853982
        %vm5286 = vcmp.lt.s32.totalorder %v791, 0
        %v5287 = vand.u32 %v791, 2139095040
        %v5288 = vshrl.u32 %v5287, 23
        %v5289 = vsub.s32 %v5288, 127
        %v5290 = vand.u32 2147483647, %v791
        %v5291 = vand.u32 %v5290, 8388607
        %v5292 = vor.u32 %v5291, 8388608
        %v5293 = vsub.s32 0, %v5292
        %v5294 = vadd.s32 %v5289, 1
        %vm5295 = vcmp.gt.s32.totalorder %v5294, 0
        %v5296 = vsel %vm5295, %v5294, 0
        %v5297 = vshrl.u32 %v5296, 5
        %v5298 = vand.u32 %v5296, 31
        %v5299 = vsub.s32 32, %v5298
        %v5300 = vshrl.u32 683565275, %v5299
        %v5301 = vshll.u32 683565275, %v5298
        %v5302 = vshrl.u32 2475754826, %v5299
        %v5303 = vor.u32 %v5301, %v5302
        %v5304 = vshll.u32 2475754826, %v5298
        %v5305 = vshrl.u32 2131351028, %v5299
        %v5306 = vor.u32 %v5304, %v5305
        %v5307 = vshll.u32 2131351028, %v5298
        %v5308 = vshrl.u32 2102212464, %v5299
        %v5309 = vor.u32 %v5307, %v5308
        %v5310 = vshll.u32 2102212464, %v5298
        %v5311 = vshrl.u32 920167782, %v5299
        %v5312 = vor.u32 %v5310, %v5311
        %v5313 = vshll.u32 920167782, %v5298
        %v5314 = vshrl.u32 1326507024, %v5299
        %v5315 = vor.u32 %v5313, %v5314
        %vm5316 = vcmp.lt.s32.totalorder %v5297, 1
        %vm5317 = vcmp.lt.s32.totalorder %v5297, 2
        %vm5318 = vcmp.lt.s32.totalorder %v5297, 3
        %vm5319 = vcmp.lt.s32.totalorder %v5297, 4
        %v5320 = vsel %vm5316, %v5300, %v5303
        %v5321 = vsel %vm5319, %v5309, 2102212464
        %v5322 = vsel %vm5318, %v5306, %v5321
        %v5323 = vsel %vm5317, %v5320, %v5322
        %v5324 = vsel %vm5316, %v5303, %v5306
        %v5325 = vsel %vm5319, %v5312, 920167782
        %v5326 = vsel %vm5318, %v5309, %v5325
        %v5327 = vsel %vm5317, %v5324, %v5326
        %v5328 = vsel %vm5316, %v5306, %v5309
        %v5329 = vsel %vm5319, %v5315, 1326507024
        %v5330 = vsel %vm5318, %v5312, %v5329
        %v5331 = vsel %vm5317, %v5328, %v5330
        %v5332 = vshll.u32 %v5292, 8
        %v5333 = vmul.u32.u64.compose %v5332, %v5331
        %v5334 = vextract.low.u32 %v5333
        %v5335 = vextract.high.u32 %v5333
        %v5336 = vmul.u32.u64.compose %v5332, %v5327
        %v5337 = vextract.low.u32 %v5336
        %v5338 = vextract.high.u32 %v5336
        %v5339 = vmul.u32 %v5332, %v5323
        %v5340 = vadd.s32 %v5335, %v5337
        %vm5341 = vc.u32 %v5335, %v5337
        %v5342 = vadd.s32 %v5338, 1
        %v5343 = vsel %vm5341, %v5342, %v5338
        %v5344 = vadd.s32 %v5339, %v5343
        %v5345 = vadd.s32 %v5344, 536870912
        %v5346 = vshrl.u32 %v5345, 30
        %v5347 = vshll.u32 %v5346, 30
        %v5348 = vsub.s32 %v5344, %v5347
        %vm5349 = vcmp.lt.s32.totalorder %v5348, 0
        %v5350 = vsub.s32 0, %v5348
        %v5351 = vsel %vm5349, %v5350, %v5348
        %v5352 = vclz %v5351
        %v5353 = vsub.s32 %v5352, 2
        %vm5354 = vcmp.gt.s32.totalorder 0, %v5353
        %v5355 = vsel %vm5354, 0, %v5353
        %v5356 = vsub.s32 32, %v5355
        %v5357 = vshll.u32 %v5348, %v5355
        %v5358 = vshrl.u32 %v5340, %v5356
        %v5359 = vor.u32 %v5357, %v5358
        %v5360 = vsub.s32 4294967266, %v5355
        %v5361 = vadd.s32 %v5360, 127
        %v5362 = vshll.u32 %v5361, 23
        %v5363 = vor.u32 4788187, %v5362
        %v5364 = vand.u32 2147483647, %v5363
        %v5366 = vcvt.s32.f32 %v5359
        %v5367 = vmul.f32 %v5366, %v5364
        %v5368 = vxor.u32 %v5367, 2147483648
        %v5369 = vsel %vm5286, %v5368, %v5367
        %v5370 = vsub.s32 4, %v5346
        %v5371 = vsel %vm5286, %v5370, %v5346
        %v5372 = vsel %vm5285, %v791, %v5369
        %v5373 = vsel %vm5285, 0, %v5371
        %v5374 = vcosq.f32.pop %v5372
        %v5375 = vsinq.f32.pop %v5372
        %vm5376 = vweird.f32 %v791
        %v5377 = vadd.s32 %v5373, 3
        %v5378 = vand.u32 %v5377, 3
        %vm5379 = vcmp.lt.s32.totalorder %v5378, 2
        %vm5380 = vcmp.eq.s32.totalorder %v5378, 0
        %v5381 = vxor.u32 %v5375, 2147483648
        %v5382 = vsel %vm5380, %v5374, %v5381
        %vm5383 = vcmp.eq.s32.totalorder %v5378, 2
        %v5384 = vxor.u32 %v5374, 2147483648
        %v5385 = vsel %vm5383, %v5384, %v5375
        %v5386 = vsel %vm5379, %v5382, %v5385
        %v5387 = vsel %vm5376, nan, %v5386
        %v5388 = vand.u32 2147483647, %v792
        %vm5389 = vcmp.le.f32.partialorder %v5388, 0.7853982
        %vm5390 = vcmp.lt.s32.totalorder %v792, 0
        %v5391 = vand.u32 %v792, 2139095040
        %v5392 = vshrl.u32 %v5391, 23
        %v5393 = vsub.s32 %v5392, 127
        %v5394 = vand.u32 2147483647, %v792
        %v5395 = vand.u32 %v5394, 8388607
        %v5396 = vor.u32 %v5395, 8388608
        %v5397 = vsub.s32 0, %v5396
        %v5398 = vadd.s32 %v5393, 1
        %vm5399 = vcmp.gt.s32.totalorder %v5398, 0
        %v5400 = vsel %vm5399, %v5398, 0
        %v5401 = vshrl.u32 %v5400, 5
        %v5402 = vand.u32 %v5400, 31
        %v5403 = vsub.s32 32, %v5402
        %v5404 = vshrl.u32 683565275, %v5403
        %v5405 = vshll.u32 683565275, %v5402
        %v5406 = vshrl.u32 2475754826, %v5403
        %v5407 = vor.u32 %v5405, %v5406
        %v5408 = vshll.u32 2475754826, %v5402
        %v5409 = vshrl.u32 2131351028, %v5403
        %v5410 = vor.u32 %v5408, %v5409
        %v5411 = vshll.u32 2131351028, %v5402
        %v5412 = vshrl.u32 2102212464, %v5403
        %v5413 = vor.u32 %v5411, %v5412
        %v5414 = vshll.u32 2102212464, %v5402
        %v5415 = vshrl.u32 920167782, %v5403
        %v5416 = vor.u32 %v5414, %v5415
        %v5417 = vshll.u32 920167782, %v5402
        %v5418 = vshrl.u32 1326507024, %v5403
        %v5419 = vor.u32 %v5417, %v5418
        %vm5420 = vcmp.lt.s32.totalorder %v5401, 1
        %vm5421 = vcmp.lt.s32.totalorder %v5401, 2
        %vm5422 = vcmp.lt.s32.totalorder %v5401, 3
        %vm5423 = vcmp.lt.s32.totalorder %v5401, 4
        %v5424 = vsel %vm5420, %v5404, %v5407
        %v5425 = vsel %vm5423, %v5413, 2102212464
        %v5426 = vsel %vm5422, %v5410, %v5425
        %v5427 = vsel %vm5421, %v5424, %v5426
        %v5428 = vsel %vm5420, %v5407, %v5410
        %v5429 = vsel %vm5423, %v5416, 920167782
        %v5430 = vsel %vm5422, %v5413, %v5429
        %v5431 = vsel %vm5421, %v5428, %v5430
        %v5432 = vsel %vm5420, %v5410, %v5413
        %v5433 = vsel %vm5423, %v5419, 1326507024
        %v5434 = vsel %vm5422, %v5416, %v5433
        %v5435 = vsel %vm5421, %v5432, %v5434
        %v5436 = vshll.u32 %v5396, 8
        %v5437 = vmul.u32.u64.compose %v5436, %v5435
        %v5438 = vextract.low.u32 %v5437
        %v5439 = vextract.high.u32 %v5437
        %v5440 = vmul.u32.u64.compose %v5436, %v5431
        %v5441 = vextract.low.u32 %v5440
        %v5442 = vextract.high.u32 %v5440
        %v5443 = vmul.u32 %v5436, %v5427
        %v5444 = vadd.s32 %v5439, %v5441
        %vm5445 = vc.u32 %v5439, %v5441
        %v5446 = vadd.s32 %v5442, 1
        %v5447 = vsel %vm5445, %v5446, %v5442
        %v5448 = vadd.s32 %v5443, %v5447
        %v5449 = vadd.s32 %v5448, 536870912
        %v5450 = vshrl.u32 %v5449, 30
        %v5451 = vshll.u32 %v5450, 30
        %v5452 = vsub.s32 %v5448, %v5451
        %vm5453 = vcmp.lt.s32.totalorder %v5452, 0
        %v5454 = vsub.s32 0, %v5452
        %v5455 = vsel %vm5453, %v5454, %v5452
        %v5456 = vclz %v5455
        %v5457 = vsub.s32 %v5456, 2
        %vm5458 = vcmp.gt.s32.totalorder 0, %v5457
        %v5459 = vsel %vm5458, 0, %v5457
        %v5460 = vsub.s32 32, %v5459
        %v5461 = vshll.u32 %v5452, %v5459
        %v5462 = vshrl.u32 %v5444, %v5460
        %v5463 = vor.u32 %v5461, %v5462
        %v5464 = vsub.s32 4294967266, %v5459
        %v5465 = vadd.s32 %v5464, 127
        %v5466 = vshll.u32 %v5465, 23
        %v5467 = vor.u32 4788187, %v5466
        %v5468 = vand.u32 2147483647, %v5467
        %v5470 = vcvt.s32.f32 %v5463
        %v5471 = vmul.f32 %v5470, %v5468
        %v5472 = vxor.u32 %v5471, 2147483648
        %v5473 = vsel %vm5390, %v5472, %v5471
        %v5474 = vsub.s32 4, %v5450
        %v5475 = vsel %vm5390, %v5474, %v5450
        %v5476 = vsel %vm5389, %v792, %v5473
        %v5477 = vsel %vm5389, 0, %v5475
        %v5478 = vcosq.f32.pop %v5476
        %v5479 = vsinq.f32.pop %v5476
        %vm5480 = vweird.f32 %v792
        %v5481 = vadd.s32 %v5477, 3
        %v5482 = vand.u32 %v5481, 3
        %vm5483 = vcmp.lt.s32.totalorder %v5482, 2
        %vm5484 = vcmp.eq.s32.totalorder %v5482, 0
        %v5485 = vxor.u32 %v5479, 2147483648
        %v5486 = vsel %vm5484, %v5478, %v5485
        %vm5487 = vcmp.eq.s32.totalorder %v5482, 2
        %v5488 = vxor.u32 %v5478, 2147483648
        %v5489 = vsel %vm5487, %v5488, %v5479
        %v5490 = vsel %vm5483, %v5486, %v5489
        %v5491 = vsel %vm5480, nan, %v5490
        %v5492 = vand.u32 2147483647, %v793
        %vm5493 = vcmp.le.f32.partialorder %v5492, 0.7853982
        %vm5494 = vcmp.lt.s32.totalorder %v793, 0
        %v5495 = vand.u32 %v793, 2139095040
        %v5496 = vshrl.u32 %v5495, 23
        %v5497 = vsub.s32 %v5496, 127
        %v5498 = vand.u32 2147483647, %v793
        %v5499 = vand.u32 %v5498, 8388607
        %v5500 = vor.u32 %v5499, 8388608
        %v5501 = vsub.s32 0, %v5500
        %v5502 = vadd.s32 %v5497, 1
        %vm5503 = vcmp.gt.s32.totalorder %v5502, 0
        %v5504 = vsel %vm5503, %v5502, 0
        %v5505 = vshrl.u32 %v5504, 5
        %v5506 = vand.u32 %v5504, 31
        %v5507 = vsub.s32 32, %v5506
        %v5508 = vshrl.u32 683565275, %v5507
        %v5509 = vshll.u32 683565275, %v5506
        %v5510 = vshrl.u32 2475754826, %v5507
        %v5511 = vor.u32 %v5509, %v5510
        %v5512 = vshll.u32 2475754826, %v5506
        %v5513 = vshrl.u32 2131351028, %v5507
        %v5514 = vor.u32 %v5512, %v5513
        %v5515 = vshll.u32 2131351028, %v5506
        %v5516 = vshrl.u32 2102212464, %v5507
        %v5517 = vor.u32 %v5515, %v5516
        %v5518 = vshll.u32 2102212464, %v5506
        %v5519 = vshrl.u32 920167782, %v5507
        %v5520 = vor.u32 %v5518, %v5519
        %v5521 = vshll.u32 920167782, %v5506
        %v5522 = vshrl.u32 1326507024, %v5507
        %v5523 = vor.u32 %v5521, %v5522
        %vm5524 = vcmp.lt.s32.totalorder %v5505, 1
        %vm5525 = vcmp.lt.s32.totalorder %v5505, 2
        %vm5526 = vcmp.lt.s32.totalorder %v5505, 3
        %vm5527 = vcmp.lt.s32.totalorder %v5505, 4
        %v5528 = vsel %vm5524, %v5508, %v5511
        %v5529 = vsel %vm5527, %v5517, 2102212464
        %v5530 = vsel %vm5526, %v5514, %v5529
        %v5531 = vsel %vm5525, %v5528, %v5530
        %v5532 = vsel %vm5524, %v5511, %v5514
        %v5533 = vsel %vm5527, %v5520, 920167782
        %v5534 = vsel %vm5526, %v5517, %v5533
        %v5535 = vsel %vm5525, %v5532, %v5534
        %v5536 = vsel %vm5524, %v5514, %v5517
        %v5537 = vsel %vm5527, %v5523, 1326507024
        %v5538 = vsel %vm5526, %v5520, %v5537
        %v5539 = vsel %vm5525, %v5536, %v5538
        %v5540 = vshll.u32 %v5500, 8
        %v5541 = vmul.u32.u64.compose %v5540, %v5539
        %v5542 = vextract.low.u32 %v5541
        %v5543 = vextract.high.u32 %v5541
        %v5544 = vmul.u32.u64.compose %v5540, %v5535
        %v5545 = vextract.low.u32 %v5544
        %v5546 = vextract.high.u32 %v5544
        %v5547 = vmul.u32 %v5540, %v5531
        %v5548 = vadd.s32 %v5543, %v5545
        %vm5549 = vc.u32 %v5543, %v5545
        %v5550 = vadd.s32 %v5546, 1
        %v5551 = vsel %vm5549, %v5550, %v5546
        %v5552 = vadd.s32 %v5547, %v5551
        %v5553 = vadd.s32 %v5552, 536870912
        %v5554 = vshrl.u32 %v5553, 30
        %v5555 = vshll.u32 %v5554, 30
        %v5556 = vsub.s32 %v5552, %v5555
        %vm5557 = vcmp.lt.s32.totalorder %v5556, 0
        %v5558 = vsub.s32 0, %v5556
        %v5559 = vsel %vm5557, %v5558, %v5556
        %v5560 = vclz %v5559
        %v5561 = vsub.s32 %v5560, 2
        %vm5562 = vcmp.gt.s32.totalorder 0, %v5561
        %v5563 = vsel %vm5562, 0, %v5561
        %v5564 = vsub.s32 32, %v5563
        %v5565 = vshll.u32 %v5556, %v5563
        %v5566 = vshrl.u32 %v5548, %v5564
        %v5567 = vor.u32 %v5565, %v5566
        %v5568 = vsub.s32 4294967266, %v5563
        %v5569 = vadd.s32 %v5568, 127
        %v5570 = vshll.u32 %v5569, 23
        %v5571 = vor.u32 4788187, %v5570
        %v5572 = vand.u32 2147483647, %v5571
        %v5574 = vcvt.s32.f32 %v5567
        %v5575 = vmul.f32 %v5574, %v5572
        %v5576 = vxor.u32 %v5575, 2147483648
        %v5577 = vsel %vm5494, %v5576, %v5575
        %v5578 = vsub.s32 4, %v5554
        %v5579 = vsel %vm5494, %v5578, %v5554
        %v5580 = vsel %vm5493, %v793, %v5577
        %v5581 = vsel %vm5493, 0, %v5579
        %v5582 = vcosq.f32.pop %v5580
        %v5583 = vsinq.f32.pop %v5580
        %vm5584 = vweird.f32 %v793
        %v5585 = vadd.s32 %v5581, 3
        %v5586 = vand.u32 %v5585, 3
        %vm5587 = vcmp.lt.s32.totalorder %v5586, 2
        %vm5588 = vcmp.eq.s32.totalorder %v5586, 0
        %v5589 = vxor.u32 %v5583, 2147483648
        %v5590 = vsel %vm5588, %v5582, %v5589
        %vm5591 = vcmp.eq.s32.totalorder %v5586, 2
        %v5592 = vxor.u32 %v5582, 2147483648
        %v5593 = vsel %vm5591, %v5592, %v5583
        %v5594 = vsel %vm5587, %v5590, %v5593
        %v5595 = vsel %vm5584, nan, %v5594
        %v5596 = vand.u32 2147483647, %v794
        %vm5597 = vcmp.le.f32.partialorder %v5596, 0.7853982
        %vm5598 = vcmp.lt.s32.totalorder %v794, 0
        %v5599 = vand.u32 %v794, 2139095040
        %v5600 = vshrl.u32 %v5599, 23
        %v5601 = vsub.s32 %v5600, 127
        %v5602 = vand.u32 2147483647, %v794
        %v5603 = vand.u32 %v5602, 8388607
        %v5604 = vor.u32 %v5603, 8388608
        %v5605 = vsub.s32 0, %v5604
        %v5606 = vadd.s32 %v5601, 1
        %vm5607 = vcmp.gt.s32.totalorder %v5606, 0
        %v5608 = vsel %vm5607, %v5606, 0
        %v5609 = vshrl.u32 %v5608, 5
        %v5610 = vand.u32 %v5608, 31
        %v5611 = vsub.s32 32, %v5610
        %v5612 = vshrl.u32 683565275, %v5611
        %v5613 = vshll.u32 683565275, %v5610
        %v5614 = vshrl.u32 2475754826, %v5611
        %v5615 = vor.u32 %v5613, %v5614
        %v5616 = vshll.u32 2475754826, %v5610
        %v5617 = vshrl.u32 2131351028, %v5611
        %v5618 = vor.u32 %v5616, %v5617
        %v5619 = vshll.u32 2131351028, %v5610
        %v5620 = vshrl.u32 2102212464, %v5611
        %v5621 = vor.u32 %v5619, %v5620
        %v5622 = vshll.u32 2102212464, %v5610
        %v5623 = vshrl.u32 920167782, %v5611
        %v5624 = vor.u32 %v5622, %v5623
        %v5625 = vshll.u32 920167782, %v5610
        %v5626 = vshrl.u32 1326507024, %v5611
        %v5627 = vor.u32 %v5625, %v5626
        %vm5628 = vcmp.lt.s32.totalorder %v5609, 1
        %vm5629 = vcmp.lt.s32.totalorder %v5609, 2
        %vm5630 = vcmp.lt.s32.totalorder %v5609, 3
        %vm5631 = vcmp.lt.s32.totalorder %v5609, 4
        %v5632 = vsel %vm5628, %v5612, %v5615
        %v5633 = vsel %vm5631, %v5621, 2102212464
        %v5634 = vsel %vm5630, %v5618, %v5633
        %v5635 = vsel %vm5629, %v5632, %v5634
        %v5636 = vsel %vm5628, %v5615, %v5618
        %v5637 = vsel %vm5631, %v5624, 920167782
        %v5638 = vsel %vm5630, %v5621, %v5637
        %v5639 = vsel %vm5629, %v5636, %v5638
        %v5640 = vsel %vm5628, %v5618, %v5621
        %v5641 = vsel %vm5631, %v5627, 1326507024
        %v5642 = vsel %vm5630, %v5624, %v5641
        %v5643 = vsel %vm5629, %v5640, %v5642
        %v5644 = vshll.u32 %v5604, 8
        %v5645 = vmul.u32.u64.compose %v5644, %v5643
        %v5646 = vextract.low.u32 %v5645
        %v5647 = vextract.high.u32 %v5645
        %v5648 = vmul.u32.u64.compose %v5644, %v5639
        %v5649 = vextract.low.u32 %v5648
        %v5650 = vextract.high.u32 %v5648
        %v5651 = vmul.u32 %v5644, %v5635
        %v5652 = vadd.s32 %v5647, %v5649
        %vm5653 = vc.u32 %v5647, %v5649
        %v5654 = vadd.s32 %v5650, 1
        %v5655 = vsel %vm5653, %v5654, %v5650
        %v5656 = vadd.s32 %v5651, %v5655
        %v5657 = vadd.s32 %v5656, 536870912
        %v5658 = vshrl.u32 %v5657, 30
        %v5659 = vshll.u32 %v5658, 30
        %v5660 = vsub.s32 %v5656, %v5659
        %vm5661 = vcmp.lt.s32.totalorder %v5660, 0
        %v5662 = vsub.s32 0, %v5660
        %v5663 = vsel %vm5661, %v5662, %v5660
        %v5664 = vclz %v5663
        %v5665 = vsub.s32 %v5664, 2
        %vm5666 = vcmp.gt.s32.totalorder 0, %v5665
        %v5667 = vsel %vm5666, 0, %v5665
        %v5668 = vsub.s32 32, %v5667
        %v5669 = vshll.u32 %v5660, %v5667
        %v5670 = vshrl.u32 %v5652, %v5668
        %v5671 = vor.u32 %v5669, %v5670
        %v5672 = vsub.s32 4294967266, %v5667
        %v5673 = vadd.s32 %v5672, 127
        %v5674 = vshll.u32 %v5673, 23
        %v5675 = vor.u32 4788187, %v5674
        %v5676 = vand.u32 2147483647, %v5675
        %v5678 = vcvt.s32.f32 %v5671
        %v5679 = vmul.f32 %v5678, %v5676
        %v5680 = vxor.u32 %v5679, 2147483648
        %v5681 = vsel %vm5598, %v5680, %v5679
        %v5682 = vsub.s32 4, %v5658
        %v5683 = vsel %vm5598, %v5682, %v5658
        %v5684 = vsel %vm5597, %v794, %v5681
        %v5685 = vsel %vm5597, 0, %v5683
        %v5686 = vcosq.f32.pop %v5684
        %v5687 = vsinq.f32.pop %v5684
        %vm5688 = vweird.f32 %v794
        %v5689 = vadd.s32 %v5685, 3
        %v5690 = vand.u32 %v5689, 3
        %vm5691 = vcmp.lt.s32.totalorder %v5690, 2
        %vm5692 = vcmp.eq.s32.totalorder %v5690, 0
        %v5693 = vxor.u32 %v5687, 2147483648
        %v5694 = vsel %vm5692, %v5686, %v5693
        %vm5695 = vcmp.eq.s32.totalorder %v5690, 2
        %v5696 = vxor.u32 %v5686, 2147483648
        %v5697 = vsel %vm5695, %v5696, %v5687
        %v5698 = vsel %vm5691, %v5694, %v5697
        %v5699 = vsel %vm5688, nan, %v5698
        %v5700 = vand.u32 2147483647, %v795
        %vm5701 = vcmp.le.f32.partialorder %v5700, 0.7853982
        %vm5702 = vcmp.lt.s32.totalorder %v795, 0
        %v5703 = vand.u32 %v795, 2139095040
        %v5704 = vshrl.u32 %v5703, 23
        %v5705 = vsub.s32 %v5704, 127
        %v5706 = vand.u32 2147483647, %v795
        %v5707 = vand.u32 %v5706, 8388607
        %v5708 = vor.u32 %v5707, 8388608
        %v5709 = vsub.s32 0, %v5708
        %v5710 = vadd.s32 %v5705, 1
        %vm5711 = vcmp.gt.s32.totalorder %v5710, 0
        %v5712 = vsel %vm5711, %v5710, 0
        %v5713 = vshrl.u32 %v5712, 5
        %v5714 = vand.u32 %v5712, 31
        %v5715 = vsub.s32 32, %v5714
        %v5716 = vshrl.u32 683565275, %v5715
        %v5717 = vshll.u32 683565275, %v5714
        %v5718 = vshrl.u32 2475754826, %v5715
        %v5719 = vor.u32 %v5717, %v5718
        %v5720 = vshll.u32 2475754826, %v5714
        %v5721 = vshrl.u32 2131351028, %v5715
        %v5722 = vor.u32 %v5720, %v5721
        %v5723 = vshll.u32 2131351028, %v5714
        %v5724 = vshrl.u32 2102212464, %v5715
        %v5725 = vor.u32 %v5723, %v5724
        %v5726 = vshll.u32 2102212464, %v5714
        %v5727 = vshrl.u32 920167782, %v5715
        %v5728 = vor.u32 %v5726, %v5727
        %v5729 = vshll.u32 920167782, %v5714
        %v5730 = vshrl.u32 1326507024, %v5715
        %v5731 = vor.u32 %v5729, %v5730
        %vm5732 = vcmp.lt.s32.totalorder %v5713, 1
        %vm5733 = vcmp.lt.s32.totalorder %v5713, 2
        %vm5734 = vcmp.lt.s32.totalorder %v5713, 3
        %vm5735 = vcmp.lt.s32.totalorder %v5713, 4
        %v5736 = vsel %vm5732, %v5716, %v5719
        %v5737 = vsel %vm5735, %v5725, 2102212464
        %v5738 = vsel %vm5734, %v5722, %v5737
        %v5739 = vsel %vm5733, %v5736, %v5738
        %v5740 = vsel %vm5732, %v5719, %v5722
        %v5741 = vsel %vm5735, %v5728, 920167782
        %v5742 = vsel %vm5734, %v5725, %v5741
        %v5743 = vsel %vm5733, %v5740, %v5742
        %v5744 = vsel %vm5732, %v5722, %v5725
        %v5745 = vsel %vm5735, %v5731, 1326507024
        %v5746 = vsel %vm5734, %v5728, %v5745
        %v5747 = vsel %vm5733, %v5744, %v5746
        %v5748 = vshll.u32 %v5708, 8
        %v5749 = vmul.u32.u64.compose %v5748, %v5747
        %v5750 = vextract.low.u32 %v5749
        %v5751 = vextract.high.u32 %v5749
        %v5752 = vmul.u32.u64.compose %v5748, %v5743
        %v5753 = vextract.low.u32 %v5752
        %v5754 = vextract.high.u32 %v5752
        %v5755 = vmul.u32 %v5748, %v5739
        %v5756 = vadd.s32 %v5751, %v5753
        %vm5757 = vc.u32 %v5751, %v5753
        %v5758 = vadd.s32 %v5754, 1
        %v5759 = vsel %vm5757, %v5758, %v5754
        %v5760 = vadd.s32 %v5755, %v5759
        %v5761 = vadd.s32 %v5760, 536870912
        %v5762 = vshrl.u32 %v5761, 30
        %v5763 = vshll.u32 %v5762, 30
        %v5764 = vsub.s32 %v5760, %v5763
        %vm5765 = vcmp.lt.s32.totalorder %v5764, 0
        %v5766 = vsub.s32 0, %v5764
        %v5767 = vsel %vm5765, %v5766, %v5764
        %v5768 = vclz %v5767
        %v5769 = vsub.s32 %v5768, 2
        %vm5770 = vcmp.gt.s32.totalorder 0, %v5769
        %v5771 = vsel %vm5770, 0, %v5769
        %v5772 = vsub.s32 32, %v5771
        %v5773 = vshll.u32 %v5764, %v5771
        %v5774 = vshrl.u32 %v5756, %v5772
        %v5775 = vor.u32 %v5773, %v5774
        %v5776 = vsub.s32 4294967266, %v5771
        %v5777 = vadd.s32 %v5776, 127
        %v5778 = vshll.u32 %v5777, 23
        %v5779 = vor.u32 4788187, %v5778
        %v5780 = vand.u32 2147483647, %v5779
        %v5782 = vcvt.s32.f32 %v5775
        %v5783 = vmul.f32 %v5782, %v5780
        %v5784 = vxor.u32 %v5783, 2147483648
        %v5785 = vsel %vm5702, %v5784, %v5783
        %v5786 = vsub.s32 4, %v5762
        %v5787 = vsel %vm5702, %v5786, %v5762
        %v5788 = vsel %vm5701, %v795, %v5785
        %v5789 = vsel %vm5701, 0, %v5787
        %v5790 = vcosq.f32.pop %v5788
        %v5791 = vsinq.f32.pop %v5788
        %vm5792 = vweird.f32 %v795
        %v5793 = vadd.s32 %v5789, 3
        %v5794 = vand.u32 %v5793, 3
        %vm5795 = vcmp.lt.s32.totalorder %v5794, 2
        %vm5796 = vcmp.eq.s32.totalorder %v5794, 0
        %v5797 = vxor.u32 %v5791, 2147483648
        %v5798 = vsel %vm5796, %v5790, %v5797
        %vm5799 = vcmp.eq.s32.totalorder %v5794, 2
        %v5800 = vxor.u32 %v5790, 2147483648
        %v5801 = vsel %vm5799, %v5800, %v5791
        %v5802 = vsel %vm5795, %v5798, %v5801
        %v5803 = vsel %vm5792, nan, %v5802
        %v5804 = vand.u32 2147483647, %v796
        %vm5805 = vcmp.le.f32.partialorder %v5804, 0.7853982
        %vm5806 = vcmp.lt.s32.totalorder %v796, 0
        %v5807 = vand.u32 %v796, 2139095040
        %v5808 = vshrl.u32 %v5807, 23
        %v5809 = vsub.s32 %v5808, 127
        %v5810 = vand.u32 2147483647, %v796
        %v5811 = vand.u32 %v5810, 8388607
        %v5812 = vor.u32 %v5811, 8388608
        %v5813 = vsub.s32 0, %v5812
        %v5814 = vadd.s32 %v5809, 1
        %vm5815 = vcmp.gt.s32.totalorder %v5814, 0
        %v5816 = vsel %vm5815, %v5814, 0
        %v5817 = vshrl.u32 %v5816, 5
        %v5818 = vand.u32 %v5816, 31
        %v5819 = vsub.s32 32, %v5818
        %v5820 = vshrl.u32 683565275, %v5819
        %v5821 = vshll.u32 683565275, %v5818
        %v5822 = vshrl.u32 2475754826, %v5819
        %v5823 = vor.u32 %v5821, %v5822
        %v5824 = vshll.u32 2475754826, %v5818
        %v5825 = vshrl.u32 2131351028, %v5819
        %v5826 = vor.u32 %v5824, %v5825
        %v5827 = vshll.u32 2131351028, %v5818
        %v5828 = vshrl.u32 2102212464, %v5819
        %v5829 = vor.u32 %v5827, %v5828
        %v5830 = vshll.u32 2102212464, %v5818
        %v5831 = vshrl.u32 920167782, %v5819
        %v5832 = vor.u32 %v5830, %v5831
        %v5833 = vshll.u32 920167782, %v5818
        %v5834 = vshrl.u32 1326507024, %v5819
        %v5835 = vor.u32 %v5833, %v5834
        %vm5836 = vcmp.lt.s32.totalorder %v5817, 1
        %vm5837 = vcmp.lt.s32.totalorder %v5817, 2
        %vm5838 = vcmp.lt.s32.totalorder %v5817, 3
        %vm5839 = vcmp.lt.s32.totalorder %v5817, 4
        %v5840 = vsel %vm5836, %v5820, %v5823
        %v5841 = vsel %vm5839, %v5829, 2102212464
        %v5842 = vsel %vm5838, %v5826, %v5841
        %v5843 = vsel %vm5837, %v5840, %v5842
        %v5844 = vsel %vm5836, %v5823, %v5826
        %v5845 = vsel %vm5839, %v5832, 920167782
        %v5846 = vsel %vm5838, %v5829, %v5845
        %v5847 = vsel %vm5837, %v5844, %v5846
        %v5848 = vsel %vm5836, %v5826, %v5829
        %v5849 = vsel %vm5839, %v5835, 1326507024
        %v5850 = vsel %vm5838, %v5832, %v5849
        %v5851 = vsel %vm5837, %v5848, %v5850
        %v5852 = vshll.u32 %v5812, 8
        %v5853 = vmul.u32.u64.compose %v5852, %v5851
        %v5854 = vextract.low.u32 %v5853
        %v5855 = vextract.high.u32 %v5853
        %v5856 = vmul.u32.u64.compose %v5852, %v5847
        %v5857 = vextract.low.u32 %v5856
        %v5858 = vextract.high.u32 %v5856
        %v5859 = vmul.u32 %v5852, %v5843
        %v5860 = vadd.s32 %v5855, %v5857
        %vm5861 = vc.u32 %v5855, %v5857
        %v5862 = vadd.s32 %v5858, 1
        %v5863 = vsel %vm5861, %v5862, %v5858
        %v5864 = vadd.s32 %v5859, %v5863
        %v5865 = vadd.s32 %v5864, 536870912
        %v5866 = vshrl.u32 %v5865, 30
        %v5867 = vshll.u32 %v5866, 30
        %v5868 = vsub.s32 %v5864, %v5867
        %vm5869 = vcmp.lt.s32.totalorder %v5868, 0
        %v5870 = vsub.s32 0, %v5868
        %v5871 = vsel %vm5869, %v5870, %v5868
        %v5872 = vclz %v5871
        %v5873 = vsub.s32 %v5872, 2
        %vm5874 = vcmp.gt.s32.totalorder 0, %v5873
        %v5875 = vsel %vm5874, 0, %v5873
        %v5876 = vsub.s32 32, %v5875
        %v5877 = vshll.u32 %v5868, %v5875
        %v5878 = vshrl.u32 %v5860, %v5876
        %v5879 = vor.u32 %v5877, %v5878
        %v5880 = vsub.s32 4294967266, %v5875
        %v5881 = vadd.s32 %v5880, 127
        %v5882 = vshll.u32 %v5881, 23
        %v5883 = vor.u32 4788187, %v5882
        %v5884 = vand.u32 2147483647, %v5883
        %v5886 = vcvt.s32.f32 %v5879
        %v5887 = vmul.f32 %v5886, %v5884
        %v5888 = vxor.u32 %v5887, 2147483648
        %v5889 = vsel %vm5806, %v5888, %v5887
        %v5890 = vsub.s32 4, %v5866
        %v5891 = vsel %vm5806, %v5890, %v5866
        %v5892 = vsel %vm5805, %v796, %v5889
        %v5893 = vsel %vm5805, 0, %v5891
        %v5894 = vcosq.f32.pop %v5892
        %v5895 = vsinq.f32.pop %v5892
        %vm5896 = vweird.f32 %v796
        %v5897 = vadd.s32 %v5893, 3
        %v5898 = vand.u32 %v5897, 3
        %vm5899 = vcmp.lt.s32.totalorder %v5898, 2
        %vm5900 = vcmp.eq.s32.totalorder %v5898, 0
        %v5901 = vxor.u32 %v5895, 2147483648
        %v5902 = vsel %vm5900, %v5894, %v5901
        %vm5903 = vcmp.eq.s32.totalorder %v5898, 2
        %v5904 = vxor.u32 %v5894, 2147483648
        %v5905 = vsel %vm5903, %v5904, %v5895
        %v5906 = vsel %vm5899, %v5902, %v5905
        %v5907 = vsel %vm5896, nan, %v5906
        %v5908 = vand.u32 2147483647, %v797
        %vm5909 = vcmp.le.f32.partialorder %v5908, 0.7853982
        %vm5910 = vcmp.lt.s32.totalorder %v797, 0
        %v5911 = vand.u32 %v797, 2139095040
        %v5912 = vshrl.u32 %v5911, 23
        %v5913 = vsub.s32 %v5912, 127
        %v5914 = vand.u32 2147483647, %v797
        %v5915 = vand.u32 %v5914, 8388607
        %v5916 = vor.u32 %v5915, 8388608
        %v5917 = vsub.s32 0, %v5916
        %v5918 = vadd.s32 %v5913, 1
        %vm5919 = vcmp.gt.s32.totalorder %v5918, 0
        %v5920 = vsel %vm5919, %v5918, 0
        %v5921 = vshrl.u32 %v5920, 5
        %v5922 = vand.u32 %v5920, 31
        %v5923 = vsub.s32 32, %v5922
        %v5924 = vshrl.u32 683565275, %v5923
        %v5925 = vshll.u32 683565275, %v5922
        %v5926 = vshrl.u32 2475754826, %v5923
        %v5927 = vor.u32 %v5925, %v5926
        %v5928 = vshll.u32 2475754826, %v5922
        %v5929 = vshrl.u32 2131351028, %v5923
        %v5930 = vor.u32 %v5928, %v5929
        %v5931 = vshll.u32 2131351028, %v5922
        %v5932 = vshrl.u32 2102212464, %v5923
        %v5933 = vor.u32 %v5931, %v5932
        %v5934 = vshll.u32 2102212464, %v5922
        %v5935 = vshrl.u32 920167782, %v5923
        %v5936 = vor.u32 %v5934, %v5935
        %v5937 = vshll.u32 920167782, %v5922
        %v5938 = vshrl.u32 1326507024, %v5923
        %v5939 = vor.u32 %v5937, %v5938
        %vm5940 = vcmp.lt.s32.totalorder %v5921, 1
        %vm5941 = vcmp.lt.s32.totalorder %v5921, 2
        %vm5942 = vcmp.lt.s32.totalorder %v5921, 3
        %vm5943 = vcmp.lt.s32.totalorder %v5921, 4
        %v5944 = vsel %vm5940, %v5924, %v5927
        %v5945 = vsel %vm5943, %v5933, 2102212464
        %v5946 = vsel %vm5942, %v5930, %v5945
        %v5947 = vsel %vm5941, %v5944, %v5946
        %v5948 = vsel %vm5940, %v5927, %v5930
        %v5949 = vsel %vm5943, %v5936, 920167782
        %v5950 = vsel %vm5942, %v5933, %v5949
        %v5951 = vsel %vm5941, %v5948, %v5950
        %v5952 = vsel %vm5940, %v5930, %v5933
        %v5953 = vsel %vm5943, %v5939, 1326507024
        %v5954 = vsel %vm5942, %v5936, %v5953
        %v5955 = vsel %vm5941, %v5952, %v5954
        %v5956 = vshll.u32 %v5916, 8
        %v5957 = vmul.u32.u64.compose %v5956, %v5955
        %v5958 = vextract.low.u32 %v5957
        %v5959 = vextract.high.u32 %v5957
        %v5960 = vmul.u32.u64.compose %v5956, %v5951
        %v5961 = vextract.low.u32 %v5960
        %v5962 = vextract.high.u32 %v5960
        %v5963 = vmul.u32 %v5956, %v5947
        %v5964 = vadd.s32 %v5959, %v5961
        %vm5965 = vc.u32 %v5959, %v5961
        %v5966 = vadd.s32 %v5962, 1
        %v5967 = vsel %vm5965, %v5966, %v5962
        %v5968 = vadd.s32 %v5963, %v5967
        %v5969 = vadd.s32 %v5968, 536870912
        %v5970 = vshrl.u32 %v5969, 30
        %v5971 = vshll.u32 %v5970, 30
        %v5972 = vsub.s32 %v5968, %v5971
        %vm5973 = vcmp.lt.s32.totalorder %v5972, 0
        %v5974 = vsub.s32 0, %v5972
        %v5975 = vsel %vm5973, %v5974, %v5972
        %v5976 = vclz %v5975
        %v5977 = vsub.s32 %v5976, 2
        %vm5978 = vcmp.gt.s32.totalorder 0, %v5977
        %v5979 = vsel %vm5978, 0, %v5977
        %v5980 = vsub.s32 32, %v5979
        %v5981 = vshll.u32 %v5972, %v5979
        %v5982 = vshrl.u32 %v5964, %v5980
        %v5983 = vor.u32 %v5981, %v5982
        %v5984 = vsub.s32 4294967266, %v5979
        %v5985 = vadd.s32 %v5984, 127
        %v5986 = vshll.u32 %v5985, 23
        %v5987 = vor.u32 4788187, %v5986
        %v5988 = vand.u32 2147483647, %v5987
        %v5990 = vcvt.s32.f32 %v5983
        %v5991 = vmul.f32 %v5990, %v5988
        %v5992 = vxor.u32 %v5991, 2147483648
        %v5993 = vsel %vm5910, %v5992, %v5991
        %v5994 = vsub.s32 4, %v5970
        %v5995 = vsel %vm5910, %v5994, %v5970
        %v5996 = vsel %vm5909, %v797, %v5993
        %v5997 = vsel %vm5909, 0, %v5995
        %v5998 = vcosq.f32.pop %v5996
        %v5999 = vsinq.f32.pop %v5996
        %vm6000 = vweird.f32 %v797
        %v6001 = vadd.s32 %v5997, 3
        %v6002 = vand.u32 %v6001, 3
        %vm6003 = vcmp.lt.s32.totalorder %v6002, 2
        %vm6004 = vcmp.eq.s32.totalorder %v6002, 0
        %v6005 = vxor.u32 %v5999, 2147483648
        %v6006 = vsel %vm6004, %v5998, %v6005
        %vm6007 = vcmp.eq.s32.totalorder %v6002, 2
        %v6008 = vxor.u32 %v5998, 2147483648
        %v6009 = vsel %vm6007, %v6008, %v5999
        %v6010 = vsel %vm6003, %v6006, %v6009
        %v6011 = vsel %vm6000, nan, %v6010
        %v6012 = vand.u32 2147483647, %v798
        %vm6013 = vcmp.le.f32.partialorder %v6012, 0.7853982
        %vm6014 = vcmp.lt.s32.totalorder %v798, 0
        %v6015 = vand.u32 %v798, 2139095040
        %v6016 = vshrl.u32 %v6015, 23
        %v6017 = vsub.s32 %v6016, 127
        %v6018 = vand.u32 2147483647, %v798
        %v6019 = vand.u32 %v6018, 8388607
        %v6020 = vor.u32 %v6019, 8388608
        %v6021 = vsub.s32 0, %v6020
        %v6022 = vadd.s32 %v6017, 1
        %vm6023 = vcmp.gt.s32.totalorder %v6022, 0
        %v6024 = vsel %vm6023, %v6022, 0
        %v6025 = vshrl.u32 %v6024, 5
        %v6026 = vand.u32 %v6024, 31
        %v6027 = vsub.s32 32, %v6026
        %v6028 = vshrl.u32 683565275, %v6027
        %v6029 = vshll.u32 683565275, %v6026
        %v6030 = vshrl.u32 2475754826, %v6027
        %v6031 = vor.u32 %v6029, %v6030
        %v6032 = vshll.u32 2475754826, %v6026
        %v6033 = vshrl.u32 2131351028, %v6027
        %v6034 = vor.u32 %v6032, %v6033
        %v6035 = vshll.u32 2131351028, %v6026
        %v6036 = vshrl.u32 2102212464, %v6027
        %v6037 = vor.u32 %v6035, %v6036
        %v6038 = vshll.u32 2102212464, %v6026
        %v6039 = vshrl.u32 920167782, %v6027
        %v6040 = vor.u32 %v6038, %v6039
        %v6041 = vshll.u32 920167782, %v6026
        %v6042 = vshrl.u32 1326507024, %v6027
        %v6043 = vor.u32 %v6041, %v6042
        %vm6044 = vcmp.lt.s32.totalorder %v6025, 1
        %vm6045 = vcmp.lt.s32.totalorder %v6025, 2
        %vm6046 = vcmp.lt.s32.totalorder %v6025, 3
        %vm6047 = vcmp.lt.s32.totalorder %v6025, 4
        %v6048 = vsel %vm6044, %v6028, %v6031
        %v6049 = vsel %vm6047, %v6037, 2102212464
        %v6050 = vsel %vm6046, %v6034, %v6049
        %v6051 = vsel %vm6045, %v6048, %v6050
        %v6052 = vsel %vm6044, %v6031, %v6034
        %v6053 = vsel %vm6047, %v6040, 920167782
        %v6054 = vsel %vm6046, %v6037, %v6053
        %v6055 = vsel %vm6045, %v6052, %v6054
        %v6056 = vsel %vm6044, %v6034, %v6037
        %v6057 = vsel %vm6047, %v6043, 1326507024
        %v6058 = vsel %vm6046, %v6040, %v6057
        %v6059 = vsel %vm6045, %v6056, %v6058
        %v6060 = vshll.u32 %v6020, 8
        %v6061 = vmul.u32.u64.compose %v6060, %v6059
        %v6062 = vextract.low.u32 %v6061
        %v6063 = vextract.high.u32 %v6061
        %v6064 = vmul.u32.u64.compose %v6060, %v6055
        %v6065 = vextract.low.u32 %v6064
        %v6066 = vextract.high.u32 %v6064
        %v6067 = vmul.u32 %v6060, %v6051
        %v6068 = vadd.s32 %v6063, %v6065
        %vm6069 = vc.u32 %v6063, %v6065
        %v6070 = vadd.s32 %v6066, 1
        %v6071 = vsel %vm6069, %v6070, %v6066
        %v6072 = vadd.s32 %v6067, %v6071
        %v6073 = vadd.s32 %v6072, 536870912
        %v6074 = vshrl.u32 %v6073, 30
        %v6075 = vshll.u32 %v6074, 30
        %v6076 = vsub.s32 %v6072, %v6075
        %vm6077 = vcmp.lt.s32.totalorder %v6076, 0
        %v6078 = vsub.s32 0, %v6076
        %v6079 = vsel %vm6077, %v6078, %v6076
        %v6080 = vclz %v6079
        %v6081 = vsub.s32 %v6080, 2
        %vm6082 = vcmp.gt.s32.totalorder 0, %v6081
        %v6083 = vsel %vm6082, 0, %v6081
        %v6084 = vsub.s32 32, %v6083
        %v6085 = vshll.u32 %v6076, %v6083
        %v6086 = vshrl.u32 %v6068, %v6084
        %v6087 = vor.u32 %v6085, %v6086
        %v6088 = vsub.s32 4294967266, %v6083
        %v6089 = vadd.s32 %v6088, 127
        %v6090 = vshll.u32 %v6089, 23
        %v6091 = vor.u32 4788187, %v6090
        %v6092 = vand.u32 2147483647, %v6091
        %v6094 = vcvt.s32.f32 %v6087
        %v6095 = vmul.f32 %v6094, %v6092
        %v6096 = vxor.u32 %v6095, 2147483648
        %v6097 = vsel %vm6014, %v6096, %v6095
        %v6098 = vsub.s32 4, %v6074
        %v6099 = vsel %vm6014, %v6098, %v6074
        %v6100 = vsel %vm6013, %v798, %v6097
        %v6101 = vsel %vm6013, 0, %v6099
        %v6102 = vcosq.f32.pop %v6100
        %v6103 = vsinq.f32.pop %v6100
        %vm6104 = vweird.f32 %v798
        %v6105 = vadd.s32 %v6101, 3
        %v6106 = vand.u32 %v6105, 3
        %vm6107 = vcmp.lt.s32.totalorder %v6106, 2
        %vm6108 = vcmp.eq.s32.totalorder %v6106, 0
        %v6109 = vxor.u32 %v6103, 2147483648
        %v6110 = vsel %vm6108, %v6102, %v6109
        %vm6111 = vcmp.eq.s32.totalorder %v6106, 2
        %v6112 = vxor.u32 %v6102, 2147483648
        %v6113 = vsel %vm6111, %v6112, %v6103
        %v6114 = vsel %vm6107, %v6110, %v6113
        %v6115 = vsel %vm6104, nan, %v6114
        %v6116 = vand.u32 2147483647, %v799
        %vm6117 = vcmp.le.f32.partialorder %v6116, 0.7853982
        %vm6118 = vcmp.lt.s32.totalorder %v799, 0
        %v6119 = vand.u32 %v799, 2139095040
        %v6120 = vshrl.u32 %v6119, 23
        %v6121 = vsub.s32 %v6120, 127
        %v6122 = vand.u32 2147483647, %v799
        %v6123 = vand.u32 %v6122, 8388607
        %v6124 = vor.u32 %v6123, 8388608
        %v6125 = vsub.s32 0, %v6124
        %v6126 = vadd.s32 %v6121, 1
        %vm6127 = vcmp.gt.s32.totalorder %v6126, 0
        %v6128 = vsel %vm6127, %v6126, 0
        %v6129 = vshrl.u32 %v6128, 5
        %v6130 = vand.u32 %v6128, 31
        %v6131 = vsub.s32 32, %v6130
        %v6132 = vshrl.u32 683565275, %v6131
        %v6133 = vshll.u32 683565275, %v6130
        %v6134 = vshrl.u32 2475754826, %v6131
        %v6135 = vor.u32 %v6133, %v6134
        %v6136 = vshll.u32 2475754826, %v6130
        %v6137 = vshrl.u32 2131351028, %v6131
        %v6138 = vor.u32 %v6136, %v6137
        %v6139 = vshll.u32 2131351028, %v6130
        %v6140 = vshrl.u32 2102212464, %v6131
        %v6141 = vor.u32 %v6139, %v6140
        %v6142 = vshll.u32 2102212464, %v6130
        %v6143 = vshrl.u32 920167782, %v6131
        %v6144 = vor.u32 %v6142, %v6143
        %v6145 = vshll.u32 920167782, %v6130
        %v6146 = vshrl.u32 1326507024, %v6131
        %v6147 = vor.u32 %v6145, %v6146
        %vm6148 = vcmp.lt.s32.totalorder %v6129, 1
        %vm6149 = vcmp.lt.s32.totalorder %v6129, 2
        %vm6150 = vcmp.lt.s32.totalorder %v6129, 3
        %vm6151 = vcmp.lt.s32.totalorder %v6129, 4
        %v6152 = vsel %vm6148, %v6132, %v6135
        %v6153 = vsel %vm6151, %v6141, 2102212464
        %v6154 = vsel %vm6150, %v6138, %v6153
        %v6155 = vsel %vm6149, %v6152, %v6154
        %v6156 = vsel %vm6148, %v6135, %v6138
        %v6157 = vsel %vm6151, %v6144, 920167782
        %v6158 = vsel %vm6150, %v6141, %v6157
        %v6159 = vsel %vm6149, %v6156, %v6158
        %v6160 = vsel %vm6148, %v6138, %v6141
        %v6161 = vsel %vm6151, %v6147, 1326507024
        %v6162 = vsel %vm6150, %v6144, %v6161
        %v6163 = vsel %vm6149, %v6160, %v6162
        %v6164 = vshll.u32 %v6124, 8
        %v6165 = vmul.u32.u64.compose %v6164, %v6163
        %v6166 = vextract.low.u32 %v6165
        %v6167 = vextract.high.u32 %v6165
        %v6168 = vmul.u32.u64.compose %v6164, %v6159
        %v6169 = vextract.low.u32 %v6168
        %v6170 = vextract.high.u32 %v6168
        %v6171 = vmul.u32 %v6164, %v6155
        %v6172 = vadd.s32 %v6167, %v6169
        %vm6173 = vc.u32 %v6167, %v6169
        %v6174 = vadd.s32 %v6170, 1
        %v6175 = vsel %vm6173, %v6174, %v6170
        %v6176 = vadd.s32 %v6171, %v6175
        %v6177 = vadd.s32 %v6176, 536870912
        %v6178 = vshrl.u32 %v6177, 30
        %v6179 = vshll.u32 %v6178, 30
        %v6180 = vsub.s32 %v6176, %v6179
        %vm6181 = vcmp.lt.s32.totalorder %v6180, 0
        %v6182 = vsub.s32 0, %v6180
        %v6183 = vsel %vm6181, %v6182, %v6180
        %v6184 = vclz %v6183
        %v6185 = vsub.s32 %v6184, 2
        %vm6186 = vcmp.gt.s32.totalorder 0, %v6185
        %v6187 = vsel %vm6186, 0, %v6185
        %v6188 = vsub.s32 32, %v6187
        %v6189 = vshll.u32 %v6180, %v6187
        %v6190 = vshrl.u32 %v6172, %v6188
        %v6191 = vor.u32 %v6189, %v6190
        %v6192 = vsub.s32 4294967266, %v6187
        %v6193 = vadd.s32 %v6192, 127
        %v6194 = vshll.u32 %v6193, 23
        %v6195 = vor.u32 4788187, %v6194
        %v6196 = vand.u32 2147483647, %v6195
        %v6198 = vcvt.s32.f32 %v6191
        %v6199 = vmul.f32 %v6198, %v6196
        %v6200 = vxor.u32 %v6199, 2147483648
        %v6201 = vsel %vm6118, %v6200, %v6199
        %v6202 = vsub.s32 4, %v6178
        %v6203 = vsel %vm6118, %v6202, %v6178
        %v6204 = vsel %vm6117, %v799, %v6201
        %v6205 = vsel %vm6117, 0, %v6203
        %v6206 = vcosq.f32.pop %v6204
        %v6207 = vsinq.f32.pop %v6204
        %vm6208 = vweird.f32 %v799
        %v6209 = vadd.s32 %v6205, 3
        %v6210 = vand.u32 %v6209, 3
        %vm6211 = vcmp.lt.s32.totalorder %v6210, 2
        %vm6212 = vcmp.eq.s32.totalorder %v6210, 0
        %v6213 = vxor.u32 %v6207, 2147483648
        %v6214 = vsel %vm6212, %v6206, %v6213
        %vm6215 = vcmp.eq.s32.totalorder %v6210, 2
        %v6216 = vxor.u32 %v6206, 2147483648
        %v6217 = vsel %vm6215, %v6216, %v6207
        %v6218 = vsel %vm6211, %v6214, %v6217
        %v6219 = vsel %vm6208, nan, %v6218
        %v6220 = vand.u32 2147483647, %v800
        %vm6221 = vcmp.le.f32.partialorder %v6220, 0.7853982
        %vm6222 = vcmp.lt.s32.totalorder %v800, 0
        %v6223 = vand.u32 %v800, 2139095040
        %v6224 = vshrl.u32 %v6223, 23
        %v6225 = vsub.s32 %v6224, 127
        %v6226 = vand.u32 2147483647, %v800
        %v6227 = vand.u32 %v6226, 8388607
        %v6228 = vor.u32 %v6227, 8388608
        %v6229 = vsub.s32 0, %v6228
        %v6230 = vadd.s32 %v6225, 1
        %vm6231 = vcmp.gt.s32.totalorder %v6230, 0
        %v6232 = vsel %vm6231, %v6230, 0
        %v6233 = vshrl.u32 %v6232, 5
        %v6234 = vand.u32 %v6232, 31
        %v6235 = vsub.s32 32, %v6234
        %v6236 = vshrl.u32 683565275, %v6235
        %v6237 = vshll.u32 683565275, %v6234
        %v6238 = vshrl.u32 2475754826, %v6235
        %v6239 = vor.u32 %v6237, %v6238
        %v6240 = vshll.u32 2475754826, %v6234
        %v6241 = vshrl.u32 2131351028, %v6235
        %v6242 = vor.u32 %v6240, %v6241
        %v6243 = vshll.u32 2131351028, %v6234
        %v6244 = vshrl.u32 2102212464, %v6235
        %v6245 = vor.u32 %v6243, %v6244
        %v6246 = vshll.u32 2102212464, %v6234
        %v6247 = vshrl.u32 920167782, %v6235
        %v6248 = vor.u32 %v6246, %v6247
        %v6249 = vshll.u32 920167782, %v6234
        %v6250 = vshrl.u32 1326507024, %v6235
        %v6251 = vor.u32 %v6249, %v6250
        %vm6252 = vcmp.lt.s32.totalorder %v6233, 1
        %vm6253 = vcmp.lt.s32.totalorder %v6233, 2
        %vm6254 = vcmp.lt.s32.totalorder %v6233, 3
        %vm6255 = vcmp.lt.s32.totalorder %v6233, 4
        %v6256 = vsel %vm6252, %v6236, %v6239
        %v6257 = vsel %vm6255, %v6245, 2102212464
        %v6258 = vsel %vm6254, %v6242, %v6257
        %v6259 = vsel %vm6253, %v6256, %v6258
        %v6260 = vsel %vm6252, %v6239, %v6242
        %v6261 = vsel %vm6255, %v6248, 920167782
        %v6262 = vsel %vm6254, %v6245, %v6261
        %v6263 = vsel %vm6253, %v6260, %v6262
        %v6264 = vsel %vm6252, %v6242, %v6245
        %v6265 = vsel %vm6255, %v6251, 1326507024
        %v6266 = vsel %vm6254, %v6248, %v6265
        %v6267 = vsel %vm6253, %v6264, %v6266
        %v6268 = vshll.u32 %v6228, 8
        %v6269 = vmul.u32.u64.compose %v6268, %v6267
        %v6270 = vextract.low.u32 %v6269
        %v6271 = vextract.high.u32 %v6269
        %v6272 = vmul.u32.u64.compose %v6268, %v6263
        %v6273 = vextract.low.u32 %v6272
        %v6274 = vextract.high.u32 %v6272
        %v6275 = vmul.u32 %v6268, %v6259
        %v6276 = vadd.s32 %v6271, %v6273
        %vm6277 = vc.u32 %v6271, %v6273
        %v6278 = vadd.s32 %v6274, 1
        %v6279 = vsel %vm6277, %v6278, %v6274
        %v6280 = vadd.s32 %v6275, %v6279
        %v6281 = vadd.s32 %v6280, 536870912
        %v6282 = vshrl.u32 %v6281, 30
        %v6283 = vshll.u32 %v6282, 30
        %v6284 = vsub.s32 %v6280, %v6283
        %vm6285 = vcmp.lt.s32.totalorder %v6284, 0
        %v6286 = vsub.s32 0, %v6284
        %v6287 = vsel %vm6285, %v6286, %v6284
        %v6288 = vclz %v6287
        %v6289 = vsub.s32 %v6288, 2
        %vm6290 = vcmp.gt.s32.totalorder 0, %v6289
        %v6291 = vsel %vm6290, 0, %v6289
        %v6292 = vsub.s32 32, %v6291
        %v6293 = vshll.u32 %v6284, %v6291
        %v6294 = vshrl.u32 %v6276, %v6292
        %v6295 = vor.u32 %v6293, %v6294
        %v6296 = vsub.s32 4294967266, %v6291
        %v6297 = vadd.s32 %v6296, 127
        %v6298 = vshll.u32 %v6297, 23
        %v6299 = vor.u32 4788187, %v6298
        %v6300 = vand.u32 2147483647, %v6299
        %v6302 = vcvt.s32.f32 %v6295
        %v6303 = vmul.f32 %v6302, %v6300
        %v6304 = vxor.u32 %v6303, 2147483648
        %v6305 = vsel %vm6222, %v6304, %v6303
        %v6306 = vsub.s32 4, %v6282
        %v6307 = vsel %vm6222, %v6306, %v6282
        %v6308 = vsel %vm6221, %v800, %v6305
        %v6309 = vsel %vm6221, 0, %v6307
        %v6310 = vcosq.f32.pop %v6308
        %v6311 = vsinq.f32.pop %v6308
        %vm6312 = vweird.f32 %v800
        %v6313 = vadd.s32 %v6309, 3
        %v6314 = vand.u32 %v6313, 3
        %vm6315 = vcmp.lt.s32.totalorder %v6314, 2
        %vm6316 = vcmp.eq.s32.totalorder %v6314, 0
        %v6317 = vxor.u32 %v6311, 2147483648
        %v6318 = vsel %vm6316, %v6310, %v6317
        %vm6319 = vcmp.eq.s32.totalorder %v6314, 2
        %v6320 = vxor.u32 %v6310, 2147483648
        %v6321 = vsel %vm6319, %v6320, %v6311
        %v6322 = vsel %vm6315, %v6318, %v6321
        %v6323 = vsel %vm6312, nan, %v6322
        %v6324 = vand.u32 2147483647, %v801
        %vm6325 = vcmp.le.f32.partialorder %v6324, 0.7853982
        %vm6326 = vcmp.lt.s32.totalorder %v801, 0
        %v6327 = vand.u32 %v801, 2139095040
        %v6328 = vshrl.u32 %v6327, 23
        %v6329 = vsub.s32 %v6328, 127
        %v6330 = vand.u32 2147483647, %v801
        %v6331 = vand.u32 %v6330, 8388607
        %v6332 = vor.u32 %v6331, 8388608
        %v6333 = vsub.s32 0, %v6332
        %v6334 = vadd.s32 %v6329, 1
        %vm6335 = vcmp.gt.s32.totalorder %v6334, 0
        %v6336 = vsel %vm6335, %v6334, 0
        %v6337 = vshrl.u32 %v6336, 5
        %v6338 = vand.u32 %v6336, 31
        %v6339 = vsub.s32 32, %v6338
        %v6340 = vshrl.u32 683565275, %v6339
        %v6341 = vshll.u32 683565275, %v6338
        %v6342 = vshrl.u32 2475754826, %v6339
        %v6343 = vor.u32 %v6341, %v6342
        %v6344 = vshll.u32 2475754826, %v6338
        %v6345 = vshrl.u32 2131351028, %v6339
        %v6346 = vor.u32 %v6344, %v6345
        %v6347 = vshll.u32 2131351028, %v6338
        %v6348 = vshrl.u32 2102212464, %v6339
        %v6349 = vor.u32 %v6347, %v6348
        %v6350 = vshll.u32 2102212464, %v6338
        %v6351 = vshrl.u32 920167782, %v6339
        %v6352 = vor.u32 %v6350, %v6351
        %v6353 = vshll.u32 920167782, %v6338
        %v6354 = vshrl.u32 1326507024, %v6339
        %v6355 = vor.u32 %v6353, %v6354
        %vm6356 = vcmp.lt.s32.totalorder %v6337, 1
        %vm6357 = vcmp.lt.s32.totalorder %v6337, 2
        %vm6358 = vcmp.lt.s32.totalorder %v6337, 3
        %vm6359 = vcmp.lt.s32.totalorder %v6337, 4
        %v6360 = vsel %vm6356, %v6340, %v6343
        %v6361 = vsel %vm6359, %v6349, 2102212464
        %v6362 = vsel %vm6358, %v6346, %v6361
        %v6363 = vsel %vm6357, %v6360, %v6362
        %v6364 = vsel %vm6356, %v6343, %v6346
        %v6365 = vsel %vm6359, %v6352, 920167782
        %v6366 = vsel %vm6358, %v6349, %v6365
        %v6367 = vsel %vm6357, %v6364, %v6366
        %v6368 = vsel %vm6356, %v6346, %v6349
        %v6369 = vsel %vm6359, %v6355, 1326507024
        %v6370 = vsel %vm6358, %v6352, %v6369
        %v6371 = vsel %vm6357, %v6368, %v6370
        %v6372 = vshll.u32 %v6332, 8
        %v6373 = vmul.u32.u64.compose %v6372, %v6371
        %v6374 = vextract.low.u32 %v6373
        %v6375 = vextract.high.u32 %v6373
        %v6376 = vmul.u32.u64.compose %v6372, %v6367
        %v6377 = vextract.low.u32 %v6376
        %v6378 = vextract.high.u32 %v6376
        %v6379 = vmul.u32 %v6372, %v6363
        %v6380 = vadd.s32 %v6375, %v6377
        %vm6381 = vc.u32 %v6375, %v6377
        %v6382 = vadd.s32 %v6378, 1
        %v6383 = vsel %vm6381, %v6382, %v6378
        %v6384 = vadd.s32 %v6379, %v6383
        %v6385 = vadd.s32 %v6384, 536870912
        %v6386 = vshrl.u32 %v6385, 30
        %v6387 = vshll.u32 %v6386, 30
        %v6388 = vsub.s32 %v6384, %v6387
        %vm6389 = vcmp.lt.s32.totalorder %v6388, 0
        %v6390 = vsub.s32 0, %v6388
        %v6391 = vsel %vm6389, %v6390, %v6388
        %v6392 = vclz %v6391
        %v6393 = vsub.s32 %v6392, 2
        %vm6394 = vcmp.gt.s32.totalorder 0, %v6393
        %v6395 = vsel %vm6394, 0, %v6393
        %v6396 = vsub.s32 32, %v6395
        %v6397 = vshll.u32 %v6388, %v6395
        %v6398 = vshrl.u32 %v6380, %v6396
        %v6399 = vor.u32 %v6397, %v6398
        %v6400 = vsub.s32 4294967266, %v6395
        %v6401 = vadd.s32 %v6400, 127
        %v6402 = vshll.u32 %v6401, 23
        %v6403 = vor.u32 4788187, %v6402
        %v6404 = vand.u32 2147483647, %v6403
        %v6406 = vcvt.s32.f32 %v6399
        %v6407 = vmul.f32 %v6406, %v6404
        %v6408 = vxor.u32 %v6407, 2147483648
        %v6409 = vsel %vm6326, %v6408, %v6407
        %v6410 = vsub.s32 4, %v6386
        %v6411 = vsel %vm6326, %v6410, %v6386
        %v6412 = vsel %vm6325, %v801, %v6409
        %v6413 = vsel %vm6325, 0, %v6411
        %v6414 = vcosq.f32.pop %v6412
        %v6415 = vsinq.f32.pop %v6412
        %vm6416 = vweird.f32 %v801
        %v6417 = vadd.s32 %v6413, 3
        %v6418 = vand.u32 %v6417, 3
        %vm6419 = vcmp.lt.s32.totalorder %v6418, 2
        %vm6420 = vcmp.eq.s32.totalorder %v6418, 0
        %v6421 = vxor.u32 %v6415, 2147483648
        %v6422 = vsel %vm6420, %v6414, %v6421
        %vm6423 = vcmp.eq.s32.totalorder %v6418, 2
        %v6424 = vxor.u32 %v6414, 2147483648
        %v6425 = vsel %vm6423, %v6424, %v6415
        %v6426 = vsel %vm6419, %v6422, %v6425
        %v6427 = vsel %vm6416, nan, %v6426
        %v6428 = vand.u32 2147483647, %v802
        %vm6429 = vcmp.le.f32.partialorder %v6428, 0.7853982
        %vm6430 = vcmp.lt.s32.totalorder %v802, 0
        %v6431 = vand.u32 %v802, 2139095040
        %v6432 = vshrl.u32 %v6431, 23
        %v6433 = vsub.s32 %v6432, 127
        %v6434 = vand.u32 2147483647, %v802
        %v6435 = vand.u32 %v6434, 8388607
        %v6436 = vor.u32 %v6435, 8388608
        %v6437 = vsub.s32 0, %v6436
        %v6438 = vadd.s32 %v6433, 1
        %vm6439 = vcmp.gt.s32.totalorder %v6438, 0
        %v6440 = vsel %vm6439, %v6438, 0
        %v6441 = vshrl.u32 %v6440, 5
        %v6442 = vand.u32 %v6440, 31
        %v6443 = vsub.s32 32, %v6442
        %v6444 = vshrl.u32 683565275, %v6443
        %v6445 = vshll.u32 683565275, %v6442
        %v6446 = vshrl.u32 2475754826, %v6443
        %v6447 = vor.u32 %v6445, %v6446
        %v6448 = vshll.u32 2475754826, %v6442
        %v6449 = vshrl.u32 2131351028, %v6443
        %v6450 = vor.u32 %v6448, %v6449
        %v6451 = vshll.u32 2131351028, %v6442
        %v6452 = vshrl.u32 2102212464, %v6443
        %v6453 = vor.u32 %v6451, %v6452
        %v6454 = vshll.u32 2102212464, %v6442
        %v6455 = vshrl.u32 920167782, %v6443
        %v6456 = vor.u32 %v6454, %v6455
        %v6457 = vshll.u32 920167782, %v6442
        %v6458 = vshrl.u32 1326507024, %v6443
        %v6459 = vor.u32 %v6457, %v6458
        %vm6460 = vcmp.lt.s32.totalorder %v6441, 1
        %vm6461 = vcmp.lt.s32.totalorder %v6441, 2
        %vm6462 = vcmp.lt.s32.totalorder %v6441, 3
        %vm6463 = vcmp.lt.s32.totalorder %v6441, 4
        %v6464 = vsel %vm6460, %v6444, %v6447
        %v6465 = vsel %vm6463, %v6453, 2102212464
        %v6466 = vsel %vm6462, %v6450, %v6465
        %v6467 = vsel %vm6461, %v6464, %v6466
        %v6468 = vsel %vm6460, %v6447, %v6450
        %v6469 = vsel %vm6463, %v6456, 920167782
        %v6470 = vsel %vm6462, %v6453, %v6469
        %v6471 = vsel %vm6461, %v6468, %v6470
        %v6472 = vsel %vm6460, %v6450, %v6453
        %v6473 = vsel %vm6463, %v6459, 1326507024
        %v6474 = vsel %vm6462, %v6456, %v6473
        %v6475 = vsel %vm6461, %v6472, %v6474
        %v6476 = vshll.u32 %v6436, 8
        %v6477 = vmul.u32.u64.compose %v6476, %v6475
        %v6478 = vextract.low.u32 %v6477
        %v6479 = vextract.high.u32 %v6477
        %v6480 = vmul.u32.u64.compose %v6476, %v6471
        %v6481 = vextract.low.u32 %v6480
        %v6482 = vextract.high.u32 %v6480
        %v6483 = vmul.u32 %v6476, %v6467
        %v6484 = vadd.s32 %v6479, %v6481
        %vm6485 = vc.u32 %v6479, %v6481
        %v6486 = vadd.s32 %v6482, 1
        %v6487 = vsel %vm6485, %v6486, %v6482
        %v6488 = vadd.s32 %v6483, %v6487
        %v6489 = vadd.s32 %v6488, 536870912
        %v6490 = vshrl.u32 %v6489, 30
        %v6491 = vshll.u32 %v6490, 30
        %v6492 = vsub.s32 %v6488, %v6491
        %vm6493 = vcmp.lt.s32.totalorder %v6492, 0
        %v6494 = vsub.s32 0, %v6492
        %v6495 = vsel %vm6493, %v6494, %v6492
        %v6496 = vclz %v6495
        %v6497 = vsub.s32 %v6496, 2
        %vm6498 = vcmp.gt.s32.totalorder 0, %v6497
        %v6499 = vsel %vm6498, 0, %v6497
        %v6500 = vsub.s32 32, %v6499
        %v6501 = vshll.u32 %v6492, %v6499
        %v6502 = vshrl.u32 %v6484, %v6500
        %v6503 = vor.u32 %v6501, %v6502
        %v6504 = vsub.s32 4294967266, %v6499
        %v6505 = vadd.s32 %v6504, 127
        %v6506 = vshll.u32 %v6505, 23
        %v6507 = vor.u32 4788187, %v6506
        %v6508 = vand.u32 2147483647, %v6507
        %v6510 = vcvt.s32.f32 %v6503
        %v6511 = vmul.f32 %v6510, %v6508
        %v6512 = vxor.u32 %v6511, 2147483648
        %v6513 = vsel %vm6430, %v6512, %v6511
        %v6514 = vsub.s32 4, %v6490
        %v6515 = vsel %vm6430, %v6514, %v6490
        %v6516 = vsel %vm6429, %v802, %v6513
        %v6517 = vsel %vm6429, 0, %v6515
        %v6518 = vcosq.f32.pop %v6516
        %v6519 = vsinq.f32.pop %v6516
        %vm6520 = vweird.f32 %v802
        %v6521 = vadd.s32 %v6517, 3
        %v6522 = vand.u32 %v6521, 3
        %vm6523 = vcmp.lt.s32.totalorder %v6522, 2
        %vm6524 = vcmp.eq.s32.totalorder %v6522, 0
        %v6525 = vxor.u32 %v6519, 2147483648
        %v6526 = vsel %vm6524, %v6518, %v6525
        %vm6527 = vcmp.eq.s32.totalorder %v6522, 2
        %v6528 = vxor.u32 %v6518, 2147483648
        %v6529 = vsel %vm6527, %v6528, %v6519
        %v6530 = vsel %vm6523, %v6526, %v6529
        %v6531 = vsel %vm6520, nan, %v6530
        %v6532 = vand.u32 2147483647, %v803
        %vm6533 = vcmp.le.f32.partialorder %v6532, 0.7853982
        %vm6534 = vcmp.lt.s32.totalorder %v803, 0
        %v6535 = vand.u32 %v803, 2139095040
        %v6536 = vshrl.u32 %v6535, 23
        %v6537 = vsub.s32 %v6536, 127
        %v6538 = vand.u32 2147483647, %v803
        %v6539 = vand.u32 %v6538, 8388607
        %v6540 = vor.u32 %v6539, 8388608
        %v6541 = vsub.s32 0, %v6540
        %v6542 = vadd.s32 %v6537, 1
        %vm6543 = vcmp.gt.s32.totalorder %v6542, 0
        %v6544 = vsel %vm6543, %v6542, 0
        %v6545 = vshrl.u32 %v6544, 5
        %v6546 = vand.u32 %v6544, 31
        %v6547 = vsub.s32 32, %v6546
        %v6548 = vshrl.u32 683565275, %v6547
        %v6549 = vshll.u32 683565275, %v6546
        %v6550 = vshrl.u32 2475754826, %v6547
        %v6551 = vor.u32 %v6549, %v6550
        %v6552 = vshll.u32 2475754826, %v6546
        %v6553 = vshrl.u32 2131351028, %v6547
        %v6554 = vor.u32 %v6552, %v6553
        %v6555 = vshll.u32 2131351028, %v6546
        %v6556 = vshrl.u32 2102212464, %v6547
        %v6557 = vor.u32 %v6555, %v6556
        %v6558 = vshll.u32 2102212464, %v6546
        %v6559 = vshrl.u32 920167782, %v6547
        %v6560 = vor.u32 %v6558, %v6559
        %v6561 = vshll.u32 920167782, %v6546
        %v6562 = vshrl.u32 1326507024, %v6547
        %v6563 = vor.u32 %v6561, %v6562
        %vm6564 = vcmp.lt.s32.totalorder %v6545, 1
        %vm6565 = vcmp.lt.s32.totalorder %v6545, 2
        %vm6566 = vcmp.lt.s32.totalorder %v6545, 3
        %vm6567 = vcmp.lt.s32.totalorder %v6545, 4
        %v6568 = vsel %vm6564, %v6548, %v6551
        %v6569 = vsel %vm6567, %v6557, 2102212464
        %v6570 = vsel %vm6566, %v6554, %v6569
        %v6571 = vsel %vm6565, %v6568, %v6570
        %v6572 = vsel %vm6564, %v6551, %v6554
        %v6573 = vsel %vm6567, %v6560, 920167782
        %v6574 = vsel %vm6566, %v6557, %v6573
        %v6575 = vsel %vm6565, %v6572, %v6574
        %v6576 = vsel %vm6564, %v6554, %v6557
        %v6577 = vsel %vm6567, %v6563, 1326507024
        %v6578 = vsel %vm6566, %v6560, %v6577
        %v6579 = vsel %vm6565, %v6576, %v6578
        %v6580 = vshll.u32 %v6540, 8
        %v6581 = vmul.u32.u64.compose %v6580, %v6579
        %v6582 = vextract.low.u32 %v6581
        %v6583 = vextract.high.u32 %v6581
        %v6584 = vmul.u32.u64.compose %v6580, %v6575
        %v6585 = vextract.low.u32 %v6584
        %v6586 = vextract.high.u32 %v6584
        %v6587 = vmul.u32 %v6580, %v6571
        %v6588 = vadd.s32 %v6583, %v6585
        %vm6589 = vc.u32 %v6583, %v6585
        %v6590 = vadd.s32 %v6586, 1
        %v6591 = vsel %vm6589, %v6590, %v6586
        %v6592 = vadd.s32 %v6587, %v6591
        %v6593 = vadd.s32 %v6592, 536870912
        %v6594 = vshrl.u32 %v6593, 30
        %v6595 = vshll.u32 %v6594, 30
        %v6596 = vsub.s32 %v6592, %v6595
        %vm6597 = vcmp.lt.s32.totalorder %v6596, 0
        %v6598 = vsub.s32 0, %v6596
        %v6599 = vsel %vm6597, %v6598, %v6596
        %v6600 = vclz %v6599
        %v6601 = vsub.s32 %v6600, 2
        %vm6602 = vcmp.gt.s32.totalorder 0, %v6601
        %v6603 = vsel %vm6602, 0, %v6601
        %v6604 = vsub.s32 32, %v6603
        %v6605 = vshll.u32 %v6596, %v6603
        %v6606 = vshrl.u32 %v6588, %v6604
        %v6607 = vor.u32 %v6605, %v6606
        %v6608 = vsub.s32 4294967266, %v6603
        %v6609 = vadd.s32 %v6608, 127
        %v6610 = vshll.u32 %v6609, 23
        %v6611 = vor.u32 4788187, %v6610
        %v6612 = vand.u32 2147483647, %v6611
        %v6614 = vcvt.s32.f32 %v6607
        %v6615 = vmul.f32 %v6614, %v6612
        %v6616 = vxor.u32 %v6615, 2147483648
        %v6617 = vsel %vm6534, %v6616, %v6615
        %v6618 = vsub.s32 4, %v6594
        %v6619 = vsel %vm6534, %v6618, %v6594
        %v6620 = vsel %vm6533, %v803, %v6617
        %v6621 = vsel %vm6533, 0, %v6619
        %v6622 = vcosq.f32.pop %v6620
        %v6623 = vsinq.f32.pop %v6620
        %vm6624 = vweird.f32 %v803
        %v6625 = vadd.s32 %v6621, 3
        %v6626 = vand.u32 %v6625, 3
        %vm6627 = vcmp.lt.s32.totalorder %v6626, 2
        %vm6628 = vcmp.eq.s32.totalorder %v6626, 0
        %v6629 = vxor.u32 %v6623, 2147483648
        %v6630 = vsel %vm6628, %v6622, %v6629
        %vm6631 = vcmp.eq.s32.totalorder %v6626, 2
        %v6632 = vxor.u32 %v6622, 2147483648
        %v6633 = vsel %vm6631, %v6632, %v6623
        %v6634 = vsel %vm6627, %v6630, %v6633
        %v6635 = vsel %vm6624, nan, %v6634
        %v6636 = vand.u32 2147483647, %v804
        %vm6637 = vcmp.le.f32.partialorder %v6636, 0.7853982
        %vm6638 = vcmp.lt.s32.totalorder %v804, 0
        %v6639 = vand.u32 %v804, 2139095040
        %v6640 = vshrl.u32 %v6639, 23
        %v6641 = vsub.s32 %v6640, 127
        %v6642 = vand.u32 2147483647, %v804
        %v6643 = vand.u32 %v6642, 8388607
        %v6644 = vor.u32 %v6643, 8388608
        %v6645 = vsub.s32 0, %v6644
        %v6646 = vadd.s32 %v6641, 1
        %vm6647 = vcmp.gt.s32.totalorder %v6646, 0
        %v6648 = vsel %vm6647, %v6646, 0
        %v6649 = vshrl.u32 %v6648, 5
        %v6650 = vand.u32 %v6648, 31
        %v6651 = vsub.s32 32, %v6650
        %v6652 = vshrl.u32 683565275, %v6651
        %v6653 = vshll.u32 683565275, %v6650
        %v6654 = vshrl.u32 2475754826, %v6651
        %v6655 = vor.u32 %v6653, %v6654
        %v6656 = vshll.u32 2475754826, %v6650
        %v6657 = vshrl.u32 2131351028, %v6651
        %v6658 = vor.u32 %v6656, %v6657
        %v6659 = vshll.u32 2131351028, %v6650
        %v6660 = vshrl.u32 2102212464, %v6651
        %v6661 = vor.u32 %v6659, %v6660
        %v6662 = vshll.u32 2102212464, %v6650
        %v6663 = vshrl.u32 920167782, %v6651
        %v6664 = vor.u32 %v6662, %v6663
        %v6665 = vshll.u32 920167782, %v6650
        %v6666 = vshrl.u32 1326507024, %v6651
        %v6667 = vor.u32 %v6665, %v6666
        %vm6668 = vcmp.lt.s32.totalorder %v6649, 1
        %vm6669 = vcmp.lt.s32.totalorder %v6649, 2
        %vm6670 = vcmp.lt.s32.totalorder %v6649, 3
        %vm6671 = vcmp.lt.s32.totalorder %v6649, 4
        %v6672 = vsel %vm6668, %v6652, %v6655
        %v6673 = vsel %vm6671, %v6661, 2102212464
        %v6674 = vsel %vm6670, %v6658, %v6673
        %v6675 = vsel %vm6669, %v6672, %v6674
        %v6676 = vsel %vm6668, %v6655, %v6658
        %v6677 = vsel %vm6671, %v6664, 920167782
        %v6678 = vsel %vm6670, %v6661, %v6677
        %v6679 = vsel %vm6669, %v6676, %v6678
        %v6680 = vsel %vm6668, %v6658, %v6661
        %v6681 = vsel %vm6671, %v6667, 1326507024
        %v6682 = vsel %vm6670, %v6664, %v6681
        %v6683 = vsel %vm6669, %v6680, %v6682
        %v6684 = vshll.u32 %v6644, 8
        %v6685 = vmul.u32.u64.compose %v6684, %v6683
        %v6686 = vextract.low.u32 %v6685
        %v6687 = vextract.high.u32 %v6685
        %v6688 = vmul.u32.u64.compose %v6684, %v6679
        %v6689 = vextract.low.u32 %v6688
        %v6690 = vextract.high.u32 %v6688
        %v6691 = vmul.u32 %v6684, %v6675
        %v6692 = vadd.s32 %v6687, %v6689
        %vm6693 = vc.u32 %v6687, %v6689
        %v6694 = vadd.s32 %v6690, 1
        %v6695 = vsel %vm6693, %v6694, %v6690
        %v6696 = vadd.s32 %v6691, %v6695
        %v6697 = vadd.s32 %v6696, 536870912
        %v6698 = vshrl.u32 %v6697, 30
        %v6699 = vshll.u32 %v6698, 30
        %v6700 = vsub.s32 %v6696, %v6699
        %vm6701 = vcmp.lt.s32.totalorder %v6700, 0
        %v6702 = vsub.s32 0, %v6700
        %v6703 = vsel %vm6701, %v6702, %v6700
        %v6704 = vclz %v6703
        %v6705 = vsub.s32 %v6704, 2
        %vm6706 = vcmp.gt.s32.totalorder 0, %v6705
        %v6707 = vsel %vm6706, 0, %v6705
        %v6708 = vsub.s32 32, %v6707
        %v6709 = vshll.u32 %v6700, %v6707
        %v6710 = vshrl.u32 %v6692, %v6708
        %v6711 = vor.u32 %v6709, %v6710
        %v6712 = vsub.s32 4294967266, %v6707
        %v6713 = vadd.s32 %v6712, 127
        %v6714 = vshll.u32 %v6713, 23
        %v6715 = vor.u32 4788187, %v6714
        %v6716 = vand.u32 2147483647, %v6715
        %v6718 = vcvt.s32.f32 %v6711
        %v6719 = vmul.f32 %v6718, %v6716
        %v6720 = vxor.u32 %v6719, 2147483648
        %v6721 = vsel %vm6638, %v6720, %v6719
        %v6722 = vsub.s32 4, %v6698
        %v6723 = vsel %vm6638, %v6722, %v6698
        %v6724 = vsel %vm6637, %v804, %v6721
        %v6725 = vsel %vm6637, 0, %v6723
        %v6726 = vcosq.f32.pop %v6724
        %v6727 = vsinq.f32.pop %v6724
        %vm6728 = vweird.f32 %v804
        %v6729 = vadd.s32 %v6725, 3
        %v6730 = vand.u32 %v6729, 3
        %vm6731 = vcmp.lt.s32.totalorder %v6730, 2
        %vm6732 = vcmp.eq.s32.totalorder %v6730, 0
        %v6733 = vxor.u32 %v6727, 2147483648
        %v6734 = vsel %vm6732, %v6726, %v6733
        %vm6735 = vcmp.eq.s32.totalorder %v6730, 2
        %v6736 = vxor.u32 %v6726, 2147483648
        %v6737 = vsel %vm6735, %v6736, %v6727
        %v6738 = vsel %vm6731, %v6734, %v6737
        %v6739 = vsel %vm6728, nan, %v6738
        %v6740 = vand.u32 2147483647, %v805
        %vm6741 = vcmp.le.f32.partialorder %v6740, 0.7853982
        %vm6742 = vcmp.lt.s32.totalorder %v805, 0
        %v6743 = vand.u32 %v805, 2139095040
        %v6744 = vshrl.u32 %v6743, 23
        %v6745 = vsub.s32 %v6744, 127
        %v6746 = vand.u32 2147483647, %v805
        %v6747 = vand.u32 %v6746, 8388607
        %v6748 = vor.u32 %v6747, 8388608
        %v6749 = vsub.s32 0, %v6748
        %v6750 = vadd.s32 %v6745, 1
        %vm6751 = vcmp.gt.s32.totalorder %v6750, 0
        %v6752 = vsel %vm6751, %v6750, 0
        %v6753 = vshrl.u32 %v6752, 5
        %v6754 = vand.u32 %v6752, 31
        %v6755 = vsub.s32 32, %v6754
        %v6756 = vshrl.u32 683565275, %v6755
        %v6757 = vshll.u32 683565275, %v6754
        %v6758 = vshrl.u32 2475754826, %v6755
        %v6759 = vor.u32 %v6757, %v6758
        %v6760 = vshll.u32 2475754826, %v6754
        %v6761 = vshrl.u32 2131351028, %v6755
        %v6762 = vor.u32 %v6760, %v6761
        %v6763 = vshll.u32 2131351028, %v6754
        %v6764 = vshrl.u32 2102212464, %v6755
        %v6765 = vor.u32 %v6763, %v6764
        %v6766 = vshll.u32 2102212464, %v6754
        %v6767 = vshrl.u32 920167782, %v6755
        %v6768 = vor.u32 %v6766, %v6767
        %v6769 = vshll.u32 920167782, %v6754
        %v6770 = vshrl.u32 1326507024, %v6755
        %v6771 = vor.u32 %v6769, %v6770
        %vm6772 = vcmp.lt.s32.totalorder %v6753, 1
        %vm6773 = vcmp.lt.s32.totalorder %v6753, 2
        %vm6774 = vcmp.lt.s32.totalorder %v6753, 3
        %vm6775 = vcmp.lt.s32.totalorder %v6753, 4
        %v6776 = vsel %vm6772, %v6756, %v6759
        %v6777 = vsel %vm6775, %v6765, 2102212464
        %v6778 = vsel %vm6774, %v6762, %v6777
        %v6779 = vsel %vm6773, %v6776, %v6778
        %v6780 = vsel %vm6772, %v6759, %v6762
        %v6781 = vsel %vm6775, %v6768, 920167782
        %v6782 = vsel %vm6774, %v6765, %v6781
        %v6783 = vsel %vm6773, %v6780, %v6782
        %v6784 = vsel %vm6772, %v6762, %v6765
        %v6785 = vsel %vm6775, %v6771, 1326507024
        %v6786 = vsel %vm6774, %v6768, %v6785
        %v6787 = vsel %vm6773, %v6784, %v6786
        %v6788 = vshll.u32 %v6748, 8
        %v6789 = vmul.u32.u64.compose %v6788, %v6787
        %v6790 = vextract.low.u32 %v6789
        %v6791 = vextract.high.u32 %v6789
        %v6792 = vmul.u32.u64.compose %v6788, %v6783
        %v6793 = vextract.low.u32 %v6792
        %v6794 = vextract.high.u32 %v6792
        %v6795 = vmul.u32 %v6788, %v6779
        %v6796 = vadd.s32 %v6791, %v6793
        %vm6797 = vc.u32 %v6791, %v6793
        %v6798 = vadd.s32 %v6794, 1
        %v6799 = vsel %vm6797, %v6798, %v6794
        %v6800 = vadd.s32 %v6795, %v6799
        %v6801 = vadd.s32 %v6800, 536870912
        %v6802 = vshrl.u32 %v6801, 30
        %v6803 = vshll.u32 %v6802, 30
        %v6804 = vsub.s32 %v6800, %v6803
        %vm6805 = vcmp.lt.s32.totalorder %v6804, 0
        %v6806 = vsub.s32 0, %v6804
        %v6807 = vsel %vm6805, %v6806, %v6804
        %v6808 = vclz %v6807
        %v6809 = vsub.s32 %v6808, 2
        %vm6810 = vcmp.gt.s32.totalorder 0, %v6809
        %v6811 = vsel %vm6810, 0, %v6809
        %v6812 = vsub.s32 32, %v6811
        %v6813 = vshll.u32 %v6804, %v6811
        %v6814 = vshrl.u32 %v6796, %v6812
        %v6815 = vor.u32 %v6813, %v6814
        %v6816 = vsub.s32 4294967266, %v6811
        %v6817 = vadd.s32 %v6816, 127
        %v6818 = vshll.u32 %v6817, 23
        %v6819 = vor.u32 4788187, %v6818
        %v6820 = vand.u32 2147483647, %v6819
        %v6822 = vcvt.s32.f32 %v6815
        %v6823 = vmul.f32 %v6822, %v6820
        %v6824 = vxor.u32 %v6823, 2147483648
        %v6825 = vsel %vm6742, %v6824, %v6823
        %v6826 = vsub.s32 4, %v6802
        %v6827 = vsel %vm6742, %v6826, %v6802
        %v6828 = vsel %vm6741, %v805, %v6825
        %v6829 = vsel %vm6741, 0, %v6827
        %v6830 = vcosq.f32.pop %v6828
        %v6831 = vsinq.f32.pop %v6828
        %vm6832 = vweird.f32 %v805
        %v6833 = vadd.s32 %v6829, 3
        %v6834 = vand.u32 %v6833, 3
        %vm6835 = vcmp.lt.s32.totalorder %v6834, 2
        %vm6836 = vcmp.eq.s32.totalorder %v6834, 0
        %v6837 = vxor.u32 %v6831, 2147483648
        %v6838 = vsel %vm6836, %v6830, %v6837
        %vm6839 = vcmp.eq.s32.totalorder %v6834, 2
        %v6840 = vxor.u32 %v6830, 2147483648
        %v6841 = vsel %vm6839, %v6840, %v6831
        %v6842 = vsel %vm6835, %v6838, %v6841
        %v6843 = vsel %vm6832, nan, %v6842
        %v6844 = vand.u32 2147483647, %v806
        %vm6845 = vcmp.le.f32.partialorder %v6844, 0.7853982
        %vm6846 = vcmp.lt.s32.totalorder %v806, 0
        %v6847 = vand.u32 %v806, 2139095040
        %v6848 = vshrl.u32 %v6847, 23
        %v6849 = vsub.s32 %v6848, 127
        %v6850 = vand.u32 2147483647, %v806
        %v6851 = vand.u32 %v6850, 8388607
        %v6852 = vor.u32 %v6851, 8388608
        %v6853 = vsub.s32 0, %v6852
        %v6854 = vadd.s32 %v6849, 1
        %vm6855 = vcmp.gt.s32.totalorder %v6854, 0
        %v6856 = vsel %vm6855, %v6854, 0
        %v6857 = vshrl.u32 %v6856, 5
        %v6858 = vand.u32 %v6856, 31
        %v6859 = vsub.s32 32, %v6858
        %v6860 = vshrl.u32 683565275, %v6859
        %v6861 = vshll.u32 683565275, %v6858
        %v6862 = vshrl.u32 2475754826, %v6859
        %v6863 = vor.u32 %v6861, %v6862
        %v6864 = vshll.u32 2475754826, %v6858
        %v6865 = vshrl.u32 2131351028, %v6859
        %v6866 = vor.u32 %v6864, %v6865
        %v6867 = vshll.u32 2131351028, %v6858
        %v6868 = vshrl.u32 2102212464, %v6859
        %v6869 = vor.u32 %v6867, %v6868
        %v6870 = vshll.u32 2102212464, %v6858
        %v6871 = vshrl.u32 920167782, %v6859
        %v6872 = vor.u32 %v6870, %v6871
        %v6873 = vshll.u32 920167782, %v6858
        %v6874 = vshrl.u32 1326507024, %v6859
        %v6875 = vor.u32 %v6873, %v6874
        %vm6876 = vcmp.lt.s32.totalorder %v6857, 1
        %vm6877 = vcmp.lt.s32.totalorder %v6857, 2
        %vm6878 = vcmp.lt.s32.totalorder %v6857, 3
        %vm6879 = vcmp.lt.s32.totalorder %v6857, 4
        %v6880 = vsel %vm6876, %v6860, %v6863
        %v6881 = vsel %vm6879, %v6869, 2102212464
        %v6882 = vsel %vm6878, %v6866, %v6881
        %v6883 = vsel %vm6877, %v6880, %v6882
        %v6884 = vsel %vm6876, %v6863, %v6866
        %v6885 = vsel %vm6879, %v6872, 920167782
        %v6886 = vsel %vm6878, %v6869, %v6885
        %v6887 = vsel %vm6877, %v6884, %v6886
        %v6888 = vsel %vm6876, %v6866, %v6869
        %v6889 = vsel %vm6879, %v6875, 1326507024
        %v6890 = vsel %vm6878, %v6872, %v6889
        %v6891 = vsel %vm6877, %v6888, %v6890
        %v6892 = vshll.u32 %v6852, 8
        %v6893 = vmul.u32.u64.compose %v6892, %v6891
        %v6894 = vextract.low.u32 %v6893
        %v6895 = vextract.high.u32 %v6893
        %v6896 = vmul.u32.u64.compose %v6892, %v6887
        %v6897 = vextract.low.u32 %v6896
        %v6898 = vextract.high.u32 %v6896
        %v6899 = vmul.u32 %v6892, %v6883
        %v6900 = vadd.s32 %v6895, %v6897
        %vm6901 = vc.u32 %v6895, %v6897
        %v6902 = vadd.s32 %v6898, 1
        %v6903 = vsel %vm6901, %v6902, %v6898
        %v6904 = vadd.s32 %v6899, %v6903
        %v6905 = vadd.s32 %v6904, 536870912
        %v6906 = vshrl.u32 %v6905, 30
        %v6907 = vshll.u32 %v6906, 30
        %v6908 = vsub.s32 %v6904, %v6907
        %vm6909 = vcmp.lt.s32.totalorder %v6908, 0
        %v6910 = vsub.s32 0, %v6908
        %v6911 = vsel %vm6909, %v6910, %v6908
        %v6912 = vclz %v6911
        %v6913 = vsub.s32 %v6912, 2
        %vm6914 = vcmp.gt.s32.totalorder 0, %v6913
        %v6915 = vsel %vm6914, 0, %v6913
        %v6916 = vsub.s32 32, %v6915
        %v6917 = vshll.u32 %v6908, %v6915
        %v6918 = vshrl.u32 %v6900, %v6916
        %v6919 = vor.u32 %v6917, %v6918
        %v6920 = vsub.s32 4294967266, %v6915
        %v6921 = vadd.s32 %v6920, 127
        %v6922 = vshll.u32 %v6921, 23
        %v6923 = vor.u32 4788187, %v6922
        %v6924 = vand.u32 2147483647, %v6923
        %v6926 = vcvt.s32.f32 %v6919
        %v6927 = vmul.f32 %v6926, %v6924
        %v6928 = vxor.u32 %v6927, 2147483648
        %v6929 = vsel %vm6846, %v6928, %v6927
        %v6930 = vsub.s32 4, %v6906
        %v6931 = vsel %vm6846, %v6930, %v6906
        %v6932 = vsel %vm6845, %v806, %v6929
        %v6933 = vsel %vm6845, 0, %v6931
        %v6934 = vcosq.f32.pop %v6932
        %v6935 = vsinq.f32.pop %v6932
        %vm6936 = vweird.f32 %v806
        %v6937 = vadd.s32 %v6933, 3
        %v6938 = vand.u32 %v6937, 3
        %vm6939 = vcmp.lt.s32.totalorder %v6938, 2
        %vm6940 = vcmp.eq.s32.totalorder %v6938, 0
        %v6941 = vxor.u32 %v6935, 2147483648
        %v6942 = vsel %vm6940, %v6934, %v6941
        %vm6943 = vcmp.eq.s32.totalorder %v6938, 2
        %v6944 = vxor.u32 %v6934, 2147483648
        %v6945 = vsel %vm6943, %v6944, %v6935
        %v6946 = vsel %vm6939, %v6942, %v6945
        %v6947 = vsel %vm6936, nan, %v6946
        %v6948 = vand.u32 2147483647, %v807
        %vm6949 = vcmp.le.f32.partialorder %v6948, 0.7853982
        %vm6950 = vcmp.lt.s32.totalorder %v807, 0
        %v6951 = vand.u32 %v807, 2139095040
        %v6952 = vshrl.u32 %v6951, 23
        %v6953 = vsub.s32 %v6952, 127
        %v6954 = vand.u32 2147483647, %v807
        %v6955 = vand.u32 %v6954, 8388607
        %v6956 = vor.u32 %v6955, 8388608
        %v6957 = vsub.s32 0, %v6956
        %v6958 = vadd.s32 %v6953, 1
        %vm6959 = vcmp.gt.s32.totalorder %v6958, 0
        %v6960 = vsel %vm6959, %v6958, 0
        %v6961 = vshrl.u32 %v6960, 5
        %v6962 = vand.u32 %v6960, 31
        %v6963 = vsub.s32 32, %v6962
        %v6964 = vshrl.u32 683565275, %v6963
        %v6965 = vshll.u32 683565275, %v6962
        %v6966 = vshrl.u32 2475754826, %v6963
        %v6967 = vor.u32 %v6965, %v6966
        %v6968 = vshll.u32 2475754826, %v6962
        %v6969 = vshrl.u32 2131351028, %v6963
        %v6970 = vor.u32 %v6968, %v6969
        %v6971 = vshll.u32 2131351028, %v6962
        %v6972 = vshrl.u32 2102212464, %v6963
        %v6973 = vor.u32 %v6971, %v6972
        %v6974 = vshll.u32 2102212464, %v6962
        %v6975 = vshrl.u32 920167782, %v6963
        %v6976 = vor.u32 %v6974, %v6975
        %v6977 = vshll.u32 920167782, %v6962
        %v6978 = vshrl.u32 1326507024, %v6963
        %v6979 = vor.u32 %v6977, %v6978
        %vm6980 = vcmp.lt.s32.totalorder %v6961, 1
        %vm6981 = vcmp.lt.s32.totalorder %v6961, 2
        %vm6982 = vcmp.lt.s32.totalorder %v6961, 3
        %vm6983 = vcmp.lt.s32.totalorder %v6961, 4
        %v6984 = vsel %vm6980, %v6964, %v6967
        %v6985 = vsel %vm6983, %v6973, 2102212464
        %v6986 = vsel %vm6982, %v6970, %v6985
        %v6987 = vsel %vm6981, %v6984, %v6986
        %v6988 = vsel %vm6980, %v6967, %v6970
        %v6989 = vsel %vm6983, %v6976, 920167782
        %v6990 = vsel %vm6982, %v6973, %v6989
        %v6991 = vsel %vm6981, %v6988, %v6990
        %v6992 = vsel %vm6980, %v6970, %v6973
        %v6993 = vsel %vm6983, %v6979, 1326507024
        %v6994 = vsel %vm6982, %v6976, %v6993
        %v6995 = vsel %vm6981, %v6992, %v6994
        %v6996 = vshll.u32 %v6956, 8
        %v6997 = vmul.u32.u64.compose %v6996, %v6995
        %v6998 = vextract.low.u32 %v6997
        %v6999 = vextract.high.u32 %v6997
        %v7000 = vmul.u32.u64.compose %v6996, %v6991
        %v7001 = vextract.low.u32 %v7000
        %v7002 = vextract.high.u32 %v7000
        %v7003 = vmul.u32 %v6996, %v6987
        %v7004 = vadd.s32 %v6999, %v7001
        %vm7005 = vc.u32 %v6999, %v7001
        %v7006 = vadd.s32 %v7002, 1
        %v7007 = vsel %vm7005, %v7006, %v7002
        %v7008 = vadd.s32 %v7003, %v7007
        %v7009 = vadd.s32 %v7008, 536870912
        %v7010 = vshrl.u32 %v7009, 30
        %v7011 = vshll.u32 %v7010, 30
        %v7012 = vsub.s32 %v7008, %v7011
        %vm7013 = vcmp.lt.s32.totalorder %v7012, 0
        %v7014 = vsub.s32 0, %v7012
        %v7015 = vsel %vm7013, %v7014, %v7012
        %v7016 = vclz %v7015
        %v7017 = vsub.s32 %v7016, 2
        %vm7018 = vcmp.gt.s32.totalorder 0, %v7017
        %v7019 = vsel %vm7018, 0, %v7017
        %v7020 = vsub.s32 32, %v7019
        %v7021 = vshll.u32 %v7012, %v7019
        %v7022 = vshrl.u32 %v7004, %v7020
        %v7023 = vor.u32 %v7021, %v7022
        %v7024 = vsub.s32 4294967266, %v7019
        %v7025 = vadd.s32 %v7024, 127
        %v7026 = vshll.u32 %v7025, 23
        %v7027 = vor.u32 4788187, %v7026
        %v7028 = vand.u32 2147483647, %v7027
        %v7030 = vcvt.s32.f32 %v7023
        %v7031 = vmul.f32 %v7030, %v7028
        %v7032 = vxor.u32 %v7031, 2147483648
        %v7033 = vsel %vm6950, %v7032, %v7031
        %v7034 = vsub.s32 4, %v7010
        %v7035 = vsel %vm6950, %v7034, %v7010
        %v7036 = vsel %vm6949, %v807, %v7033
        %v7037 = vsel %vm6949, 0, %v7035
        %v7038 = vcosq.f32.pop %v7036
        %v7039 = vsinq.f32.pop %v7036
        %vm7040 = vweird.f32 %v807
        %v7041 = vadd.s32 %v7037, 3
        %v7042 = vand.u32 %v7041, 3
        %vm7043 = vcmp.lt.s32.totalorder %v7042, 2
        %vm7044 = vcmp.eq.s32.totalorder %v7042, 0
        %v7045 = vxor.u32 %v7039, 2147483648
        %v7046 = vsel %vm7044, %v7038, %v7045
        %vm7047 = vcmp.eq.s32.totalorder %v7042, 2
        %v7048 = vxor.u32 %v7038, 2147483648
        %v7049 = vsel %vm7047, %v7048, %v7039
        %v7050 = vsel %vm7043, %v7046, %v7049
        %v7051 = vsel %vm7040, nan, %v7050
        %v7052 = vand.u32 2147483647, %v808
        %vm7053 = vcmp.le.f32.partialorder %v7052, 0.7853982
        %vm7054 = vcmp.lt.s32.totalorder %v808, 0
        %v7055 = vand.u32 %v808, 2139095040
        %v7056 = vshrl.u32 %v7055, 23
        %v7057 = vsub.s32 %v7056, 127
        %v7058 = vand.u32 2147483647, %v808
        %v7059 = vand.u32 %v7058, 8388607
        %v7060 = vor.u32 %v7059, 8388608
        %v7061 = vsub.s32 0, %v7060
        %v7062 = vadd.s32 %v7057, 1
        %vm7063 = vcmp.gt.s32.totalorder %v7062, 0
        %v7064 = vsel %vm7063, %v7062, 0
        %v7065 = vshrl.u32 %v7064, 5
        %v7066 = vand.u32 %v7064, 31
        %v7067 = vsub.s32 32, %v7066
        %v7068 = vshrl.u32 683565275, %v7067
        %v7069 = vshll.u32 683565275, %v7066
        %v7070 = vshrl.u32 2475754826, %v7067
        %v7071 = vor.u32 %v7069, %v7070
        %v7072 = vshll.u32 2475754826, %v7066
        %v7073 = vshrl.u32 2131351028, %v7067
        %v7074 = vor.u32 %v7072, %v7073
        %v7075 = vshll.u32 2131351028, %v7066
        %v7076 = vshrl.u32 2102212464, %v7067
        %v7077 = vor.u32 %v7075, %v7076
        %v7078 = vshll.u32 2102212464, %v7066
        %v7079 = vshrl.u32 920167782, %v7067
        %v7080 = vor.u32 %v7078, %v7079
        %v7081 = vshll.u32 920167782, %v7066
        %v7082 = vshrl.u32 1326507024, %v7067
        %v7083 = vor.u32 %v7081, %v7082
        %vm7084 = vcmp.lt.s32.totalorder %v7065, 1
        %vm7085 = vcmp.lt.s32.totalorder %v7065, 2
        %vm7086 = vcmp.lt.s32.totalorder %v7065, 3
        %vm7087 = vcmp.lt.s32.totalorder %v7065, 4
        %v7088 = vsel %vm7084, %v7068, %v7071
        %v7089 = vsel %vm7087, %v7077, 2102212464
        %v7090 = vsel %vm7086, %v7074, %v7089
        %v7091 = vsel %vm7085, %v7088, %v7090
        %v7092 = vsel %vm7084, %v7071, %v7074
        %v7093 = vsel %vm7087, %v7080, 920167782
        %v7094 = vsel %vm7086, %v7077, %v7093
        %v7095 = vsel %vm7085, %v7092, %v7094
        %v7096 = vsel %vm7084, %v7074, %v7077
        %v7097 = vsel %vm7087, %v7083, 1326507024
        %v7098 = vsel %vm7086, %v7080, %v7097
        %v7099 = vsel %vm7085, %v7096, %v7098
        %v7100 = vshll.u32 %v7060, 8
        %v7101 = vmul.u32.u64.compose %v7100, %v7099
        %v7102 = vextract.low.u32 %v7101
        %v7103 = vextract.high.u32 %v7101
        %v7104 = vmul.u32.u64.compose %v7100, %v7095
        %v7105 = vextract.low.u32 %v7104
        %v7106 = vextract.high.u32 %v7104
        %v7107 = vmul.u32 %v7100, %v7091
        %v7108 = vadd.s32 %v7103, %v7105
        %vm7109 = vc.u32 %v7103, %v7105
        %v7110 = vadd.s32 %v7106, 1
        %v7111 = vsel %vm7109, %v7110, %v7106
        %v7112 = vadd.s32 %v7107, %v7111
        %v7113 = vadd.s32 %v7112, 536870912
        %v7114 = vshrl.u32 %v7113, 30
        %v7115 = vshll.u32 %v7114, 30
        %v7116 = vsub.s32 %v7112, %v7115
        %vm7117 = vcmp.lt.s32.totalorder %v7116, 0
        %v7118 = vsub.s32 0, %v7116
        %v7119 = vsel %vm7117, %v7118, %v7116
        %v7120 = vclz %v7119
        %v7121 = vsub.s32 %v7120, 2
        %vm7122 = vcmp.gt.s32.totalorder 0, %v7121
        %v7123 = vsel %vm7122, 0, %v7121
        %v7124 = vsub.s32 32, %v7123
        %v7125 = vshll.u32 %v7116, %v7123
        %v7126 = vshrl.u32 %v7108, %v7124
        %v7127 = vor.u32 %v7125, %v7126
        %v7128 = vsub.s32 4294967266, %v7123
        %v7129 = vadd.s32 %v7128, 127
        %v7130 = vshll.u32 %v7129, 23
        %v7131 = vor.u32 4788187, %v7130
        %v7132 = vand.u32 2147483647, %v7131
        %v7134 = vcvt.s32.f32 %v7127
        %v7135 = vmul.f32 %v7134, %v7132
        %v7136 = vxor.u32 %v7135, 2147483648
        %v7137 = vsel %vm7054, %v7136, %v7135
        %v7138 = vsub.s32 4, %v7114
        %v7139 = vsel %vm7054, %v7138, %v7114
        %v7140 = vsel %vm7053, %v808, %v7137
        %v7141 = vsel %vm7053, 0, %v7139
        %v7142 = vcosq.f32.pop %v7140
        %v7143 = vsinq.f32.pop %v7140
        %vm7144 = vweird.f32 %v808
        %v7145 = vadd.s32 %v7141, 3
        %v7146 = vand.u32 %v7145, 3
        %vm7147 = vcmp.lt.s32.totalorder %v7146, 2
        %vm7148 = vcmp.eq.s32.totalorder %v7146, 0
        %v7149 = vxor.u32 %v7143, 2147483648
        %v7150 = vsel %vm7148, %v7142, %v7149
        %vm7151 = vcmp.eq.s32.totalorder %v7146, 2
        %v7152 = vxor.u32 %v7142, 2147483648
        %v7153 = vsel %vm7151, %v7152, %v7143
        %v7154 = vsel %vm7147, %v7150, %v7153
        %v7155 = vsel %vm7144, nan, %v7154
        %v7156 = vand.u32 2147483647, %v809
        %vm7157 = vcmp.le.f32.partialorder %v7156, 0.7853982
        %vm7158 = vcmp.lt.s32.totalorder %v809, 0
        %v7159 = vand.u32 %v809, 2139095040
        %v7160 = vshrl.u32 %v7159, 23
        %v7161 = vsub.s32 %v7160, 127
        %v7162 = vand.u32 2147483647, %v809
        %v7163 = vand.u32 %v7162, 8388607
        %v7164 = vor.u32 %v7163, 8388608
        %v7165 = vsub.s32 0, %v7164
        %v7166 = vadd.s32 %v7161, 1
        %vm7167 = vcmp.gt.s32.totalorder %v7166, 0
        %v7168 = vsel %vm7167, %v7166, 0
        %v7169 = vshrl.u32 %v7168, 5
        %v7170 = vand.u32 %v7168, 31
        %v7171 = vsub.s32 32, %v7170
        %v7172 = vshrl.u32 683565275, %v7171
        %v7173 = vshll.u32 683565275, %v7170
        %v7174 = vshrl.u32 2475754826, %v7171
        %v7175 = vor.u32 %v7173, %v7174
        %v7176 = vshll.u32 2475754826, %v7170
        %v7177 = vshrl.u32 2131351028, %v7171
        %v7178 = vor.u32 %v7176, %v7177
        %v7179 = vshll.u32 2131351028, %v7170
        %v7180 = vshrl.u32 2102212464, %v7171
        %v7181 = vor.u32 %v7179, %v7180
        %v7182 = vshll.u32 2102212464, %v7170
        %v7183 = vshrl.u32 920167782, %v7171
        %v7184 = vor.u32 %v7182, %v7183
        %v7185 = vshll.u32 920167782, %v7170
        %v7186 = vshrl.u32 1326507024, %v7171
        %v7187 = vor.u32 %v7185, %v7186
        %vm7188 = vcmp.lt.s32.totalorder %v7169, 1
        %vm7189 = vcmp.lt.s32.totalorder %v7169, 2
        %vm7190 = vcmp.lt.s32.totalorder %v7169, 3
        %vm7191 = vcmp.lt.s32.totalorder %v7169, 4
        %v7192 = vsel %vm7188, %v7172, %v7175
        %v7193 = vsel %vm7191, %v7181, 2102212464
        %v7194 = vsel %vm7190, %v7178, %v7193
        %v7195 = vsel %vm7189, %v7192, %v7194
        %v7196 = vsel %vm7188, %v7175, %v7178
        %v7197 = vsel %vm7191, %v7184, 920167782
        %v7198 = vsel %vm7190, %v7181, %v7197
        %v7199 = vsel %vm7189, %v7196, %v7198
        %v7200 = vsel %vm7188, %v7178, %v7181
        %v7201 = vsel %vm7191, %v7187, 1326507024
        %v7202 = vsel %vm7190, %v7184, %v7201
        %v7203 = vsel %vm7189, %v7200, %v7202
        %v7204 = vshll.u32 %v7164, 8
        %v7205 = vmul.u32.u64.compose %v7204, %v7203
        %v7206 = vextract.low.u32 %v7205
        %v7207 = vextract.high.u32 %v7205
        %v7208 = vmul.u32.u64.compose %v7204, %v7199
        %v7209 = vextract.low.u32 %v7208
        %v7210 = vextract.high.u32 %v7208
        %v7211 = vmul.u32 %v7204, %v7195
        %v7212 = vadd.s32 %v7207, %v7209
        %vm7213 = vc.u32 %v7207, %v7209
        %v7214 = vadd.s32 %v7210, 1
        %v7215 = vsel %vm7213, %v7214, %v7210
        %v7216 = vadd.s32 %v7211, %v7215
        %v7217 = vadd.s32 %v7216, 536870912
        %v7218 = vshrl.u32 %v7217, 30
        %v7219 = vshll.u32 %v7218, 30
        %v7220 = vsub.s32 %v7216, %v7219
        %vm7221 = vcmp.lt.s32.totalorder %v7220, 0
        %v7222 = vsub.s32 0, %v7220
        %v7223 = vsel %vm7221, %v7222, %v7220
        %v7224 = vclz %v7223
        %v7225 = vsub.s32 %v7224, 2
        %vm7226 = vcmp.gt.s32.totalorder 0, %v7225
        %v7227 = vsel %vm7226, 0, %v7225
        %v7228 = vsub.s32 32, %v7227
        %v7229 = vshll.u32 %v7220, %v7227
        %v7230 = vshrl.u32 %v7212, %v7228
        %v7231 = vor.u32 %v7229, %v7230
        %v7232 = vsub.s32 4294967266, %v7227
        %v7233 = vadd.s32 %v7232, 127
        %v7234 = vshll.u32 %v7233, 23
        %v7235 = vor.u32 4788187, %v7234
        %v7236 = vand.u32 2147483647, %v7235
        %v7238 = vcvt.s32.f32 %v7231
        %v7239 = vmul.f32 %v7238, %v7236
        %v7240 = vxor.u32 %v7239, 2147483648
        %v7241 = vsel %vm7158, %v7240, %v7239
        %v7242 = vsub.s32 4, %v7218
        %v7243 = vsel %vm7158, %v7242, %v7218
        %v7244 = vsel %vm7157, %v809, %v7241
        %v7245 = vsel %vm7157, 0, %v7243
        %v7246 = vcosq.f32.pop %v7244
        %v7247 = vsinq.f32.pop %v7244
        %vm7248 = vweird.f32 %v809
        %v7249 = vadd.s32 %v7245, 3
        %v7250 = vand.u32 %v7249, 3
        %vm7251 = vcmp.lt.s32.totalorder %v7250, 2
        %vm7252 = vcmp.eq.s32.totalorder %v7250, 0
        %v7253 = vxor.u32 %v7247, 2147483648
        %v7254 = vsel %vm7252, %v7246, %v7253
        %vm7255 = vcmp.eq.s32.totalorder %v7250, 2
        %v7256 = vxor.u32 %v7246, 2147483648
        %v7257 = vsel %vm7255, %v7256, %v7247
        %v7258 = vsel %vm7251, %v7254, %v7257
        %v7259 = vsel %vm7248, nan, %v7258
        %v7260 = vand.u32 2147483647, %v810
        %vm7261 = vcmp.le.f32.partialorder %v7260, 0.7853982
        %vm7262 = vcmp.lt.s32.totalorder %v810, 0
        %v7263 = vand.u32 %v810, 2139095040
        %v7264 = vshrl.u32 %v7263, 23
        %v7265 = vsub.s32 %v7264, 127
        %v7266 = vand.u32 2147483647, %v810
        %v7267 = vand.u32 %v7266, 8388607
        %v7268 = vor.u32 %v7267, 8388608
        %v7269 = vsub.s32 0, %v7268
        %v7270 = vadd.s32 %v7265, 1
        %vm7271 = vcmp.gt.s32.totalorder %v7270, 0
        %v7272 = vsel %vm7271, %v7270, 0
        %v7273 = vshrl.u32 %v7272, 5
        %v7274 = vand.u32 %v7272, 31
        %v7275 = vsub.s32 32, %v7274
        %v7276 = vshrl.u32 683565275, %v7275
        %v7277 = vshll.u32 683565275, %v7274
        %v7278 = vshrl.u32 2475754826, %v7275
        %v7279 = vor.u32 %v7277, %v7278
        %v7280 = vshll.u32 2475754826, %v7274
        %v7281 = vshrl.u32 2131351028, %v7275
        %v7282 = vor.u32 %v7280, %v7281
        %v7283 = vshll.u32 2131351028, %v7274
        %v7284 = vshrl.u32 2102212464, %v7275
        %v7285 = vor.u32 %v7283, %v7284
        %v7286 = vshll.u32 2102212464, %v7274
        %v7287 = vshrl.u32 920167782, %v7275
        %v7288 = vor.u32 %v7286, %v7287
        %v7289 = vshll.u32 920167782, %v7274
        %v7290 = vshrl.u32 1326507024, %v7275
        %v7291 = vor.u32 %v7289, %v7290
        %vm7292 = vcmp.lt.s32.totalorder %v7273, 1
        %vm7293 = vcmp.lt.s32.totalorder %v7273, 2
        %vm7294 = vcmp.lt.s32.totalorder %v7273, 3
        %vm7295 = vcmp.lt.s32.totalorder %v7273, 4
        %v7296 = vsel %vm7292, %v7276, %v7279
        %v7297 = vsel %vm7295, %v7285, 2102212464
        %v7298 = vsel %vm7294, %v7282, %v7297
        %v7299 = vsel %vm7293, %v7296, %v7298
        %v7300 = vsel %vm7292, %v7279, %v7282
        %v7301 = vsel %vm7295, %v7288, 920167782
        %v7302 = vsel %vm7294, %v7285, %v7301
        %v7303 = vsel %vm7293, %v7300, %v7302
        %v7304 = vsel %vm7292, %v7282, %v7285
        %v7305 = vsel %vm7295, %v7291, 1326507024
        %v7306 = vsel %vm7294, %v7288, %v7305
        %v7307 = vsel %vm7293, %v7304, %v7306
        %v7308 = vshll.u32 %v7268, 8
        %v7309 = vmul.u32.u64.compose %v7308, %v7307
        %v7310 = vextract.low.u32 %v7309
        %v7311 = vextract.high.u32 %v7309
        %v7312 = vmul.u32.u64.compose %v7308, %v7303
        %v7313 = vextract.low.u32 %v7312
        %v7314 = vextract.high.u32 %v7312
        %v7315 = vmul.u32 %v7308, %v7299
        %v7316 = vadd.s32 %v7311, %v7313
        %vm7317 = vc.u32 %v7311, %v7313
        %v7318 = vadd.s32 %v7314, 1
        %v7319 = vsel %vm7317, %v7318, %v7314
        %v7320 = vadd.s32 %v7315, %v7319
        %v7321 = vadd.s32 %v7320, 536870912
        %v7322 = vshrl.u32 %v7321, 30
        %v7323 = vshll.u32 %v7322, 30
        %v7324 = vsub.s32 %v7320, %v7323
        %vm7325 = vcmp.lt.s32.totalorder %v7324, 0
        %v7326 = vsub.s32 0, %v7324
        %v7327 = vsel %vm7325, %v7326, %v7324
        %v7328 = vclz %v7327
        %v7329 = vsub.s32 %v7328, 2
        %vm7330 = vcmp.gt.s32.totalorder 0, %v7329
        %v7331 = vsel %vm7330, 0, %v7329
        %v7332 = vsub.s32 32, %v7331
        %v7333 = vshll.u32 %v7324, %v7331
        %v7334 = vshrl.u32 %v7316, %v7332
        %v7335 = vor.u32 %v7333, %v7334
        %v7336 = vsub.s32 4294967266, %v7331
        %v7337 = vadd.s32 %v7336, 127
        %v7338 = vshll.u32 %v7337, 23
        %v7339 = vor.u32 4788187, %v7338
        %v7340 = vand.u32 2147483647, %v7339
        %v7342 = vcvt.s32.f32 %v7335
        %v7343 = vmul.f32 %v7342, %v7340
        %v7344 = vxor.u32 %v7343, 2147483648
        %v7345 = vsel %vm7262, %v7344, %v7343
        %v7346 = vsub.s32 4, %v7322
        %v7347 = vsel %vm7262, %v7346, %v7322
        %v7348 = vsel %vm7261, %v810, %v7345
        %v7349 = vsel %vm7261, 0, %v7347
        %v7350 = vcosq.f32.pop %v7348
        %v7351 = vsinq.f32.pop %v7348
        %vm7352 = vweird.f32 %v810
        %v7353 = vadd.s32 %v7349, 3
        %v7354 = vand.u32 %v7353, 3
        %vm7355 = vcmp.lt.s32.totalorder %v7354, 2
        %vm7356 = vcmp.eq.s32.totalorder %v7354, 0
        %v7357 = vxor.u32 %v7351, 2147483648
        %v7358 = vsel %vm7356, %v7350, %v7357
        %vm7359 = vcmp.eq.s32.totalorder %v7354, 2
        %v7360 = vxor.u32 %v7350, 2147483648
        %v7361 = vsel %vm7359, %v7360, %v7351
        %v7362 = vsel %vm7355, %v7358, %v7361
        %v7363 = vsel %vm7352, nan, %v7362
        %v7364 = vand.u32 2147483647, %v811
        %vm7365 = vcmp.le.f32.partialorder %v7364, 0.7853982
        %vm7366 = vcmp.lt.s32.totalorder %v811, 0
        %v7367 = vand.u32 %v811, 2139095040
        %v7368 = vshrl.u32 %v7367, 23
        %v7369 = vsub.s32 %v7368, 127
        %v7370 = vand.u32 2147483647, %v811
        %v7371 = vand.u32 %v7370, 8388607
        %v7372 = vor.u32 %v7371, 8388608
        %v7373 = vsub.s32 0, %v7372
        %v7374 = vadd.s32 %v7369, 1
        %vm7375 = vcmp.gt.s32.totalorder %v7374, 0
        %v7376 = vsel %vm7375, %v7374, 0
        %v7377 = vshrl.u32 %v7376, 5
        %v7378 = vand.u32 %v7376, 31
        %v7379 = vsub.s32 32, %v7378
        %v7380 = vshrl.u32 683565275, %v7379
        %v7381 = vshll.u32 683565275, %v7378
        %v7382 = vshrl.u32 2475754826, %v7379
        %v7383 = vor.u32 %v7381, %v7382
        %v7384 = vshll.u32 2475754826, %v7378
        %v7385 = vshrl.u32 2131351028, %v7379
        %v7386 = vor.u32 %v7384, %v7385
        %v7387 = vshll.u32 2131351028, %v7378
        %v7388 = vshrl.u32 2102212464, %v7379
        %v7389 = vor.u32 %v7387, %v7388
        %v7390 = vshll.u32 2102212464, %v7378
        %v7391 = vshrl.u32 920167782, %v7379
        %v7392 = vor.u32 %v7390, %v7391
        %v7393 = vshll.u32 920167782, %v7378
        %v7394 = vshrl.u32 1326507024, %v7379
        %v7395 = vor.u32 %v7393, %v7394
        %vm7396 = vcmp.lt.s32.totalorder %v7377, 1
        %vm7397 = vcmp.lt.s32.totalorder %v7377, 2
        %vm7398 = vcmp.lt.s32.totalorder %v7377, 3
        %vm7399 = vcmp.lt.s32.totalorder %v7377, 4
        %v7400 = vsel %vm7396, %v7380, %v7383
        %v7401 = vsel %vm7399, %v7389, 2102212464
        %v7402 = vsel %vm7398, %v7386, %v7401
        %v7403 = vsel %vm7397, %v7400, %v7402
        %v7404 = vsel %vm7396, %v7383, %v7386
        %v7405 = vsel %vm7399, %v7392, 920167782
        %v7406 = vsel %vm7398, %v7389, %v7405
        %v7407 = vsel %vm7397, %v7404, %v7406
        %v7408 = vsel %vm7396, %v7386, %v7389
        %v7409 = vsel %vm7399, %v7395, 1326507024
        %v7410 = vsel %vm7398, %v7392, %v7409
        %v7411 = vsel %vm7397, %v7408, %v7410
        %v7412 = vshll.u32 %v7372, 8
        %v7413 = vmul.u32.u64.compose %v7412, %v7411
        %v7414 = vextract.low.u32 %v7413
        %v7415 = vextract.high.u32 %v7413
        %v7416 = vmul.u32.u64.compose %v7412, %v7407
        %v7417 = vextract.low.u32 %v7416
        %v7418 = vextract.high.u32 %v7416
        %v7419 = vmul.u32 %v7412, %v7403
        %v7420 = vadd.s32 %v7415, %v7417
        %vm7421 = vc.u32 %v7415, %v7417
        %v7422 = vadd.s32 %v7418, 1
        %v7423 = vsel %vm7421, %v7422, %v7418
        %v7424 = vadd.s32 %v7419, %v7423
        %v7425 = vadd.s32 %v7424, 536870912
        %v7426 = vshrl.u32 %v7425, 30
        %v7427 = vshll.u32 %v7426, 30
        %v7428 = vsub.s32 %v7424, %v7427
        %vm7429 = vcmp.lt.s32.totalorder %v7428, 0
        %v7430 = vsub.s32 0, %v7428
        %v7431 = vsel %vm7429, %v7430, %v7428
        %v7432 = vclz %v7431
        %v7433 = vsub.s32 %v7432, 2
        %vm7434 = vcmp.gt.s32.totalorder 0, %v7433
        %v7435 = vsel %vm7434, 0, %v7433
        %v7436 = vsub.s32 32, %v7435
        %v7437 = vshll.u32 %v7428, %v7435
        %v7438 = vshrl.u32 %v7420, %v7436
        %v7439 = vor.u32 %v7437, %v7438
        %v7440 = vsub.s32 4294967266, %v7435
        %v7441 = vadd.s32 %v7440, 127
        %v7442 = vshll.u32 %v7441, 23
        %v7443 = vor.u32 4788187, %v7442
        %v7444 = vand.u32 2147483647, %v7443
        %v7446 = vcvt.s32.f32 %v7439
        %v7447 = vmul.f32 %v7446, %v7444
        %v7448 = vxor.u32 %v7447, 2147483648
        %v7449 = vsel %vm7366, %v7448, %v7447
        %v7450 = vsub.s32 4, %v7426
        %v7451 = vsel %vm7366, %v7450, %v7426
        %v7452 = vsel %vm7365, %v811, %v7449
        %v7453 = vsel %vm7365, 0, %v7451
        %v7454 = vcosq.f32.pop %v7452
        %v7455 = vsinq.f32.pop %v7452
        %vm7456 = vweird.f32 %v811
        %v7457 = vadd.s32 %v7453, 3
        %v7458 = vand.u32 %v7457, 3
        %vm7459 = vcmp.lt.s32.totalorder %v7458, 2
        %vm7460 = vcmp.eq.s32.totalorder %v7458, 0
        %v7461 = vxor.u32 %v7455, 2147483648
        %v7462 = vsel %vm7460, %v7454, %v7461
        %vm7463 = vcmp.eq.s32.totalorder %v7458, 2
        %v7464 = vxor.u32 %v7454, 2147483648
        %v7465 = vsel %vm7463, %v7464, %v7455
        %v7466 = vsel %vm7459, %v7462, %v7465
        %v7467 = vsel %vm7456, nan, %v7466
        %v7468 = vld [vmem:[%s4] sm:$0xff]
        %v7469 = vld [vmem:[%s4 + $0x8] sm:$0xff]
        %v7470 = vld [vmem:[%s4 + $0x10] sm:$0xff]
        %v7471 = vld [vmem:[%s4 + $0x18] sm:$0xff]
        %v7472 = vld [vmem:[%s4 + $0x20] sm:$0xff]
        %v7473 = vld [vmem:[%s4 + $0x28] sm:$0xff]
        %v7474 = vld [vmem:[%s4 + $0x30] sm:$0xff]
        %v7475 = vld [vmem:[%s4 + $0x38] sm:$0xff]
        %v7476 = vld [vmem:[#allocation5] sm:$0xff]
        %v7477 = vld [vmem:[#allocation5 + $0x8] sm:$0xff]
        %v7478 = vld [vmem:[#allocation5 + $0x10] sm:$0xff]
        %v7479 = vld [vmem:[#allocation5 + $0x18] sm:$0xff]
        %v7480 = vld [vmem:[#allocation5 + $0x20] sm:$0xff]
        %v7481 = vld [vmem:[#allocation5 + $0x28] sm:$0xff]
        %v7482 = vld [vmem:[#allocation5 + $0x30] sm:$0xff]
        %v7483 = vld [vmem:[#allocation5 + $0x38] sm:$0xff]
        %7485 = vset.pattern.permute.xlu0 0
        %7486 = vperm.xlu0 %7485, %v7468
        %v7487 = vpop.permute.xlu0 %7486
        %7490 = vset.pattern.permute.xlu0 0
        %7491 = vperm.xlu0 %7490, %v7469
        %v7492 = vpop.permute.xlu0 %7491
        %7495 = vset.pattern.permute.xlu0 0
        %7496 = vperm.xlu0 %7495, %v7470
        %v7497 = vpop.permute.xlu0 %7496
        %7500 = vset.pattern.permute.xlu0 0
        %7501 = vperm.xlu0 %7500, %v7471
        %v7502 = vpop.permute.xlu0 %7501
        %7505 = vset.pattern.permute.xlu0 0
        %7506 = vperm.xlu0 %7505, %v7472
        %v7507 = vpop.permute.xlu0 %7506
        %7510 = vset.pattern.permute.xlu0 0
        %7511 = vperm.xlu0 %7510, %v7473
        %v7512 = vpop.permute.xlu0 %7511
        %7515 = vset.pattern.permute.xlu0 0
        %7516 = vperm.xlu0 %7515, %v7474
        %v7517 = vpop.permute.xlu0 %7516
        %7520 = vset.pattern.permute.xlu0 0
        %7521 = vperm.xlu0 %7520, %v7475
        %v7522 = vpop.permute.xlu0 %7521
        %7524 = vmatprep.subr.mxu0 %v1019
        %7525 = vmatpush1.msra.mxu0 %v915
        %7526 = vmatprep.subr.mxu0 %v1435
        %7527 = vmatpush1.msra.mxu0 %v1331
        %7528 = vmatprep.subr.mxu0 %v1851
        %7529 = vmatpush1.msra.mxu0 %v1747
        %7530 = vmatprep.subr.mxu0 %v2267
        %7531 = vmatpush1.msra.mxu0 %v2163
        %7532 = vmatprep.subr.mxu0 %v2683
        %7533 = vmatpush1.msra.mxu0 %v2579
        %7534 = vmatprep.subr.mxu0 %v3099
        %7535 = vmatpush1.msra.mxu0 %v2995
        %7536 = vmatprep.subr.mxu0 %v3515
        %7537 = vmatpush1.msra.mxu0 %v3411
        %7538 = vmatprep.subr.mxu0 %v3931
        %7539 = vmatpush1.msra.mxu0 %v3827
        %7540 = vmatprep.subr.mxu0 %v4347
        %7541 = vmatpush1.msra.mxu0 %v4243
        %7542 = vmatprep.subr.mxu0 %v4763
        %7543 = vmatpush1.msra.mxu0 %v4659
        %7544 = vmatprep.subr.mxu0 %v5179
        %7545 = vmatpush1.msra.mxu0 %v5075
        %7546 = vmatprep.subr.mxu0 %v5595
        %7547 = vmatpush1.msra.mxu0 %v5491
        %7548 = vmatprep.subr.mxu0 %v6011
        %7549 = vmatpush1.msra.mxu0 %v5907
        %7550 = vmatprep.subr.mxu0 %v6427
        %7551 = vmatpush1.msra.mxu0 %v6323
        %7552 = vmatprep.subr.mxu0 %v6843
        %7553 = vmatpush1.msra.mxu0 %v6739
        %7554 = vmatprep.subr.mxu0 %v7259
        %7555 = vmatpush1.msra.mxu0 %v7155
        %7556 = vmatprep.subr.mxu0 0.0
        %7557 = vmatpush1.msra.mxu0 0.0
        %7558 = vmatprep.subr.mxu0 0.0
        %7559 = vmatpush1.msra.mxu0 0.0
        %7560 = vmatprep.subr.mxu0 0.0
        %7561 = vmatpush1.msra.mxu0 0.0
        %7562 = vmatprep.subr.mxu0 0.0
        %7563 = vmatpush1.msra.mxu0 0.0
        %7564 = vmatprep.subr.mxu0 0.0
        %7565 = vmatpush1.msra.mxu0 0.0
        %7566 = vmatprep.subr.mxu0 0.0
        %7567 = vmatpush1.msra.mxu0 0.0
        %7568 = vmatprep.subr.mxu0 0.0
        %7569 = vmatpush1.msra.mxu0 0.0
        %7570 = vmatprep.subr.mxu0 0.0
        %7571 = vmatpush1.msra.mxu0 0.0
        %7572 = vmatprep.subr.mxu0 0.0
        %7573 = vmatpush1.msra.mxu0 0.0
        %7574 = vmatprep.subr.mxu0 0.0
        %7575 = vmatpush1.msra.mxu0 0.0
        %7576 = vmatprep.subr.mxu0 0.0
        %7577 = vmatpush1.msra.mxu0 0.0
        %7578 = vmatprep.subr.mxu0 0.0
        %7579 = vmatpush1.msra.mxu0 0.0
        %7580 = vmatprep.subr.mxu0 0.0
        %7581 = vmatpush1.msra.mxu0 0.0
        %7582 = vmatprep.subr.mxu0 0.0
        %7583 = vmatpush1.msra.mxu0 0.0
        %7584 = vmatprep.subr.mxu0 0.0
        %7585 = vmatpush1.msra.mxu0 0.0
        %7586 = vmatprep.subr.mxu0 0.0
        %7587 = vmatpush1.msra.mxu0 0.0
        %7588 = vmatprep.mubr.f32.mxu0 0.0
        %7589 = vmatmul.mubr.f32.gmra.mrb[0].mxu0 %v7476
        %v7590 = vpop.f32.mrb[0].mxu0
        %v7591 = vadd.f32 %v7487, %v7590
        %v7592 = vpop.f32.mrb[0].mxu0
        %v7593 = vadd.f32 %v7487, %v7592
        %7594 = vmatprep.mubr.f32.mxu0 0.0
        %7595 = vmatmul.mubr.f32.gmra.mrb[0].mxu0 %v7477
        %v7596 = vpop.f32.mrb[0].mxu0
        %v7597 = vadd.f32 %v7492, %v7596
        %v7598 = vpop.f32.mrb[0].mxu0
        %v7599 = vadd.f32 %v7492, %v7598
        %7600 = vmatprep.mubr.f32.mxu0 0.0
        %7601 = vmatmul.mubr.f32.gmra.mrb[0].mxu0 %v7478
        %v7602 = vpop.f32.mrb[0].mxu0
        %v7603 = vadd.f32 %v7497, %v7602
        %v7604 = vpop.f32.mrb[0].mxu0
        %v7605 = vadd.f32 %v7497, %v7604
        %7606 = vmatprep.mubr.f32.mxu0 0.0
        %7607 = vmatmul.mubr.f32.gmra.mrb[0].mxu0 %v7479
        %v7608 = vpop.f32.mrb[0].mxu0
        %v7609 = vadd.f32 %v7502, %v7608
        %v7610 = vpop.f32.mrb[0].mxu0
        %v7611 = vadd.f32 %v7502, %v7610
        %7612 = vmatprep.mubr.f32.mxu0 0.0
        %7613 = vmatmul.mubr.f32.gmra.mrb[0].mxu0 %v7480
        %v7614 = vpop.f32.mrb[0].mxu0
        %v7615 = vadd.f32 %v7507, %v7614
        %v7616 = vpop.f32.mrb[0].mxu0
        %v7617 = vadd.f32 %v7507, %v7616
        %7618 = vmatprep.mubr.f32.mxu0 0.0
        %7619 = vmatmul.mubr.f32.gmra.mrb[0].mxu0 %v7481
        %v7620 = vpop.f32.mrb[0].mxu0
        %v7621 = vadd.f32 %v7512, %v7620
        %v7622 = vpop.f32.mrb[0].mxu0
        %v7623 = vadd.f32 %v7512, %v7622
        %7624 = vmatprep.mubr.f32.mxu0 0.0
        %7625 = vmatmul.mubr.f32.gmra.mrb[0].mxu0 %v7482
        %v7626 = vpop.f32.mrb[0].mxu0
        %v7627 = vadd.f32 %v7517, %v7626
        %v7628 = vpop.f32.mrb[0].mxu0
        %v7629 = vadd.f32 %v7517, %v7628
        %7630 = vmatprep.mubr.f32.mxu0 0.0
        %7631 = vmatmul.mubr.f32.gmra.mrb[0].mxu0 %v7483
        %v7632 = vpop.f32.mrb[0].mxu0
        %v7633 = vadd.f32 %v7522, %v7632
        %v7634 = vpop.f32.mrb[0].mxu0
        %v7635 = vadd.f32 %v7522, %v7634
        %7636 = vdwg.mxu0
        %7637 = vmatprep.subr.mxu0 %v1227
        %7638 = vmatpush1.msra.mxu0 %v1123
        %7639 = vmatprep.subr.mxu0 %v1643
        %7640 = vmatpush1.msra.mxu0 %v1539
        %7641 = vmatprep.subr.mxu0 %v2059
        %7642 = vmatpush1.msra.mxu0 %v1955
        %7643 = vmatprep.subr.mxu0 %v2475
        %7644 = vmatpush1.msra.mxu0 %v2371
        %7645 = vmatprep.subr.mxu0 %v2891
        %7646 = vmatpush1.msra.mxu0 %v2787
        %7647 = vmatprep.subr.mxu0 %v3307
        %7648 = vmatpush1.msra.mxu0 %v3203
        %7649 = vmatprep.subr.mxu0 %v3723
        %7650 = vmatpush1.msra.mxu0 %v3619
        %7651 = vmatprep.subr.mxu0 %v4139
        %7652 = vmatpush1.msra.mxu0 %v4035
        %7653 = vmatprep.subr.mxu0 %v4555
        %7654 = vmatpush1.msra.mxu0 %v4451
        %7655 = vmatprep.subr.mxu0 %v4971
        %7656 = vmatpush1.msra.mxu0 %v4867
        %7657 = vmatprep.subr.mxu0 %v5387
        %7658 = vmatpush1.msra.mxu0 %v5283
        %7659 = vmatprep.subr.mxu0 %v5803
        %7660 = vmatpush1.msra.mxu0 %v5699
        %7661 = vmatprep.subr.mxu0 %v6219
        %7662 = vmatpush1.msra.mxu0 %v6115
        %7663 = vmatprep.subr.mxu0 %v6635
        %7664 = vmatpush1.msra.mxu0 %v6531
        %7665 = vmatprep.subr.mxu0 %v7051
        %7666 = vmatpush1.msra.mxu0 %v6947
        %7667 = vmatprep.subr.mxu0 %v7467
        %7668 = vmatpush1.msra.mxu0 %v7363
        %7669 = vmatprep.subr.mxu0 0.0
        %7670 = vmatpush1.msra.mxu0 0.0
        %7671 = vmatprep.subr.mxu0 0.0
        %7672 = vmatpush1.msra.mxu0 0.0
        %7673 = vmatprep.subr.mxu0 0.0
        %7674 = vmatpush1.msra.mxu0 0.0
        %7675 = vmatprep.subr.mxu0 0.0
        %7676 = vmatpush1.msra.mxu0 0.0
        %7677 = vmatprep.subr.mxu0 0.0
        %7678 = vmatpush1.msra.mxu0 0.0
        %7679 = vmatprep.subr.mxu0 0.0
        %7680 = vmatpush1.msra.mxu0 0.0
        %7681 = vmatprep.subr.mxu0 0.0
        %7682 = vmatpush1.msra.mxu0 0.0
        %7683 = vmatprep.subr.mxu0 0.0
        %7684 = vmatpush1.msra.mxu0 0.0
        %7685 = vmatprep.subr.mxu0 0.0
        %7686 = vmatpush1.msra.mxu0 0.0
        %7687 = vmatprep.subr.mxu0 0.0
        %7688 = vmatpush1.msra.mxu0 0.0
        %7689 = vmatprep.subr.mxu0 0.0
        %7690 = vmatpush1.msra.mxu0 0.0
        %7691 = vmatprep.subr.mxu0 0.0
        %7692 = vmatpush1.msra.mxu0 0.0
        %7693 = vmatprep.subr.mxu0 0.0
        %7694 = vmatpush1.msra.mxu0 0.0
        %7695 = vmatprep.subr.mxu0 0.0
        %7696 = vmatpush1.msra.mxu0 0.0
        %7697 = vmatprep.subr.mxu0 0.0
        %7698 = vmatpush1.msra.mxu0 0.0
        %7699 = vmatprep.subr.mxu0 0.0
        %7700 = vmatpush1.msra.mxu0 0.0
        %7701 = vmatprep.mubr.f32.mxu0 0.0
        %7702 = vmatmul.mubr.f32.gmra.mrb[0].mxu0 %v7476
        %v7703 = vpop.f32.mrb[0].mxu0
        %v7704 = vadd.f32 %v7487, %v7703
        %v7705 = vpop.f32.mrb[0].mxu0
        %v7706 = vadd.f32 %v7487, %v7705
        %7707 = vmatprep.mubr.f32.mxu0 0.0
        %7708 = vmatmul.mubr.f32.gmra.mrb[0].mxu0 %v7477
        %v7709 = vpop.f32.mrb[0].mxu0
        %v7710 = vadd.f32 %v7492, %v7709
        %v7711 = vpop.f32.mrb[0].mxu0
        %v7712 = vadd.f32 %v7492, %v7711
        %7713 = vmatprep.mubr.f32.mxu0 0.0
        %7714 = vmatmul.mubr.f32.gmra.mrb[0].mxu0 %v7478
        %v7715 = vpop.f32.mrb[0].mxu0
        %v7716 = vadd.f32 %v7497, %v7715
        %v7717 = vpop.f32.mrb[0].mxu0
        %v7718 = vadd.f32 %v7497, %v7717
        %7719 = vmatprep.mubr.f32.mxu0 0.0
        %7720 = vmatmul.mubr.f32.gmra.mrb[0].mxu0 %v7479
        %v7721 = vpop.f32.mrb[0].mxu0
        %v7722 = vadd.f32 %v7502, %v7721
        %v7723 = vpop.f32.mrb[0].mxu0
        %v7724 = vadd.f32 %v7502, %v7723
        %7725 = vmatprep.mubr.f32.mxu0 0.0
        %7726 = vmatmul.mubr.f32.gmra.mrb[0].mxu0 %v7480
        %v7727 = vpop.f32.mrb[0].mxu0
        %v7728 = vadd.f32 %v7507, %v7727
        %v7729 = vpop.f32.mrb[0].mxu0
        %v7730 = vadd.f32 %v7507, %v7729
        %7731 = vmatprep.mubr.f32.mxu0 0.0
        %7732 = vmatmul.mubr.f32.gmra.mrb[0].mxu0 %v7481
        %v7733 = vpop.f32.mrb[0].mxu0
        %v7734 = vadd.f32 %v7512, %v7733
        %v7735 = vpop.f32.mrb[0].mxu0
        %v7736 = vadd.f32 %v7512, %v7735
        %7737 = vmatprep.mubr.f32.mxu0 0.0
        %7738 = vmatmul.mubr.f32.gmra.mrb[0].mxu0 %v7482
        %v7739 = vpop.f32.mrb[0].mxu0
        %v7740 = vadd.f32 %v7517, %v7739
        %v7741 = vpop.f32.mrb[0].mxu0
        %v7742 = vadd.f32 %v7517, %v7741
        %7743 = vmatprep.mubr.f32.mxu0 0.0
        %7744 = vmatmul.mubr.f32.gmra.mrb[0].mxu0 %v7483
        %v7745 = vpop.f32.mrb[0].mxu0
        %v7746 = vadd.f32 %v7522, %v7745
        %v7747 = vpop.f32.mrb[0].mxu0
        %v7748 = vadd.f32 %v7522, %v7747
        %7749 = vdwg.mxu0
        %v7750 = vmax.f32 %v7591, 0.0
        %v7751 = vmax.f32 %v7593, 0.0
        %v7752 = vmax.f32 %v7704, 0.0
        %v7753 = vmax.f32 %v7706, 0.0
        %v7754 = vmax.f32 %v7597, 0.0
        %v7755 = vmax.f32 %v7599, 0.0
        %v7756 = vmax.f32 %v7710, 0.0
        %v7757 = vmax.f32 %v7712, 0.0
        %v7758 = vmax.f32 %v7603, 0.0
        %v7759 = vmax.f32 %v7605, 0.0
        %v7760 = vmax.f32 %v7716, 0.0
        %v7761 = vmax.f32 %v7718, 0.0
        %v7762 = vmax.f32 %v7609, 0.0
        %v7763 = vmax.f32 %v7611, 0.0
        %v7764 = vmax.f32 %v7722, 0.0
        %v7765 = vmax.f32 %v7724, 0.0
        %v7766 = vmax.f32 %v7615, 0.0
        %v7767 = vmax.f32 %v7617, 0.0
        %v7768 = vmax.f32 %v7728, 0.0
        %v7769 = vmax.f32 %v7730, 0.0
        %v7770 = vmax.f32 %v7621, 0.0
        %v7771 = vmax.f32 %v7623, 0.0
        %v7772 = vmax.f32 %v7734, 0.0
        %v7773 = vmax.f32 %v7736, 0.0
        %v7774 = vmax.f32 %v7627, 0.0
        %v7775 = vmax.f32 %v7629, 0.0
        %v7776 = vmax.f32 %v7740, 0.0
        %v7777 = vmax.f32 %v7742, 0.0
        %v7778 = vmax.f32 %v7633, 0.0
        %v7779 = vmax.f32 %v7635, 0.0
        %v7780 = vmax.f32 %v7746, 0.0
        %v7781 = vmax.f32 %v7748, 0.0
        %v7782 = vld [vmem:[%s2] sm:$0xff]
        %v7783 = vld [vmem:[%s2 + $0x8] sm:$0xff]
        %v7784 = vld [vmem:[%s2 + $0x10] sm:$0xff]
        %v7785 = vld [vmem:[%s2 + $0x18] sm:$0xff]
        %v7786 = vld [vmem:[%s2 + $0x20] sm:$0xff]
        %v7787 = vld [vmem:[%s2 + $0x28] sm:$0xff]
        %v7788 = vld [vmem:[%s2 + $0x30] sm:$0xff]
        %v7789 = vld [vmem:[%s2 + $0x38] sm:$0xff]
        %7790 = vset.pattern.permute.xlu0 1
        %7791 = vperm.xlu0 %7790, %v7468
        %v7792 = vpop.permute.xlu0 %7791
        %7794 = vset.pattern.permute.xlu0 1
        %7795 = vperm.xlu0 %7794, %v7469
        %v7796 = vpop.permute.xlu0 %7795
        %7798 = vset.pattern.permute.xlu0 1
        %7799 = vperm.xlu0 %7798, %v7470
        %v7800 = vpop.permute.xlu0 %7799
        %7802 = vset.pattern.permute.xlu0 1
        %7803 = vperm.xlu0 %7802, %v7471
        %v7804 = vpop.permute.xlu0 %7803
        %7806 = vset.pattern.permute.xlu0 1
        %7807 = vperm.xlu0 %7806, %v7472
        %v7808 = vpop.permute.xlu0 %7807
        %7810 = vset.pattern.permute.xlu0 1
        %7811 = vperm.xlu0 %7810, %v7473
        %v7812 = vpop.permute.xlu0 %7811
        %7814 = vset.pattern.permute.xlu0 1
        %7815 = vperm.xlu0 %7814, %v7474
        %v7816 = vpop.permute.xlu0 %7815
        %7818 = vset.pattern.permute.xlu0 1
        %7819 = vperm.xlu0 %7818, %v7475
        %v7820 = vpop.permute.xlu0 %7819
        %vm7822 = vcmask 523264
        %v7824 = vsel %vm7822, %v7782, 0
        %v7827 = vsel %vm7822, %v7783, 0
        %v7830 = vsel %vm7822, %v7784, 0
        %v7833 = vsel %vm7822, %v7785, 0
        %v7836 = vsel %vm7822, %v7786, 0
        %v7839 = vsel %vm7822, %v7787, 0
        %v7842 = vsel %vm7822, %v7788, 0
        %v7845 = vsel %vm7822, %v7789, 0
        %7847 = vmatprep.subr.mxu0 %v7751
        %7848 = vmatpush1.msra.mxu0 %v7750
        %7849 = vmatprep.subr.mxu0 %v7755
        %7850 = vmatpush1.msra.mxu0 %v7754
        %7851 = vmatprep.subr.mxu0 %v7759
        %7852 = vmatpush1.msra.mxu0 %v7758
        %7853 = vmatprep.subr.mxu0 %v7763
        %7854 = vmatpush1.msra.mxu0 %v7762
        %7855 = vmatprep.subr.mxu0 %v7767
        %7856 = vmatpush1.msra.mxu0 %v7766
        %7857 = vmatprep.subr.mxu0 %v7771
        %7858 = vmatpush1.msra.mxu0 %v7770
        %7859 = vmatprep.subr.mxu0 %v7775
        %7860 = vmatpush1.msra.mxu0 %v7774
        %7861 = vmatprep.subr.mxu0 %v7779
        %7862 = vmatpush1.msra.mxu0 %v7778
        %7863 = vmatprep.subr.mxu0 0.0
        %7864 = vmatpush1.msra.mxu0 0.0
        %7865 = vmatprep.subr.mxu0 0.0
        %7866 = vmatpush1.msra.mxu0 0.0
        %7867 = vmatprep.subr.mxu0 0.0
        %7868 = vmatpush1.msra.mxu0 0.0
        %7869 = vmatprep.subr.mxu0 0.0
        %7870 = vmatpush1.msra.mxu0 0.0
        %7871 = vmatprep.subr.mxu0 0.0
        %7872 = vmatpush1.msra.mxu0 0.0
        %7873 = vmatprep.subr.mxu0 0.0
        %7874 = vmatpush1.msra.mxu0 0.0
        %7875 = vmatprep.subr.mxu0 0.0
        %7876 = vmatpush1.msra.mxu0 0.0
        %7877 = vmatprep.subr.mxu0 0.0
        %7878 = vmatpush1.msra.mxu0 0.0
        %7879 = vmatprep.subr.mxu0 0.0
        %7880 = vmatpush1.msra.mxu0 0.0
        %7881 = vmatprep.subr.mxu0 0.0
        %7882 = vmatpush1.msra.mxu0 0.0
        %7883 = vmatprep.subr.mxu0 0.0
        %7884 = vmatpush1.msra.mxu0 0.0
        %7885 = vmatprep.subr.mxu0 0.0
        %7886 = vmatpush1.msra.mxu0 0.0
        %7887 = vmatprep.subr.mxu0 0.0
        %7888 = vmatpush1.msra.mxu0 0.0
        %7889 = vmatprep.subr.mxu0 0.0
        %7890 = vmatpush1.msra.mxu0 0.0
        %7891 = vmatprep.subr.mxu0 0.0
        %7892 = vmatpush1.msra.mxu0 0.0
        %7893 = vmatprep.subr.mxu0 0.0
        %7894 = vmatpush1.msra.mxu0 0.0
        %7895 = vmatprep.subr.mxu0 0.0
        %7896 = vmatpush1.msra.mxu0 0.0
        %7897 = vmatprep.subr.mxu0 0.0
        %7898 = vmatpush1.msra.mxu0 0.0
        %7899 = vmatprep.subr.mxu0 0.0
        %7900 = vmatpush1.msra.mxu0 0.0
        %7901 = vmatprep.subr.mxu0 0.0
        %7902 = vmatpush1.msra.mxu0 0.0
        %7903 = vmatprep.subr.mxu0 0.0
        %7904 = vmatpush1.msra.mxu0 0.0
        %7905 = vmatprep.subr.mxu0 0.0
        %7906 = vmatpush1.msra.mxu0 0.0
        %7907 = vmatprep.subr.mxu0 0.0
        %7908 = vmatpush1.msra.mxu0 0.0
        %7909 = vmatprep.subr.mxu0 0.0
        %7910 = vmatpush1.msra.mxu0 0.0
        %7911 = vmatprep.mubr.f32.mxu0 0.0
        %7912 = vmatmul.mubr.f32.gmra.mrb[0].mxu0 %v7824
        %v7913 = vpop.f32.mrb[0].mxu0
        %v7914 = vadd.f32 %v7792, %v7913
        %v7915 = vpop.f32.mrb[0].mxu0
        %v7916 = vadd.f32 %v7792, %v7915
        %7917 = vmatprep.mubr.f32.mxu0 0.0
        %7918 = vmatmul.mubr.f32.gmra.mrb[0].mxu0 %v7827
        %v7919 = vpop.f32.mrb[0].mxu0
        %v7920 = vadd.f32 %v7796, %v7919
        %v7921 = vpop.f32.mrb[0].mxu0
        %v7922 = vadd.f32 %v7796, %v7921
        %7923 = vmatprep.mubr.f32.mxu0 0.0
        %7924 = vmatmul.mubr.f32.gmra.mrb[0].mxu0 %v7830
        %v7925 = vpop.f32.mrb[0].mxu0
        %v7926 = vadd.f32 %v7800, %v7925
        %v7927 = vpop.f32.mrb[0].mxu0
        %v7928 = vadd.f32 %v7800, %v7927
        %7929 = vmatprep.mubr.f32.mxu0 0.0
        %7930 = vmatmul.mubr.f32.gmra.mrb[0].mxu0 %v7833
        %v7931 = vpop.f32.mrb[0].mxu0
        %v7932 = vadd.f32 %v7804, %v7931
        %v7933 = vpop.f32.mrb[0].mxu0
        %v7934 = vadd.f32 %v7804, %v7933
        %7935 = vmatprep.mubr.f32.mxu0 0.0
        %7936 = vmatmul.mubr.f32.gmra.mrb[0].mxu0 %v7836
        %v7937 = vpop.f32.mrb[0].mxu0
        %v7938 = vadd.f32 %v7808, %v7937
        %v7939 = vpop.f32.mrb[0].mxu0
        %v7940 = vadd.f32 %v7808, %v7939
        %7941 = vmatprep.mubr.f32.mxu0 0.0
        %7942 = vmatmul.mubr.f32.gmra.mrb[0].mxu0 %v7839
        %v7943 = vpop.f32.mrb[0].mxu0
        %v7944 = vadd.f32 %v7812, %v7943
        %v7945 = vpop.f32.mrb[0].mxu0
        %v7946 = vadd.f32 %v7812, %v7945
        %7947 = vmatprep.mubr.f32.mxu0 0.0
        %7948 = vmatmul.mubr.f32.gmra.mrb[0].mxu0 %v7842
        %v7949 = vpop.f32.mrb[0].mxu0
        %v7950 = vadd.f32 %v7816, %v7949
        %v7951 = vpop.f32.mrb[0].mxu0
        %v7952 = vadd.f32 %v7816, %v7951
        %7953 = vmatprep.mubr.f32.mxu0 0.0
        %7954 = vmatmul.mubr.f32.gmra.mrb[0].mxu0 %v7845
        %v7955 = vpop.f32.mrb[0].mxu0
        %v7956 = vadd.f32 %v7820, %v7955
        %v7957 = vpop.f32.mrb[0].mxu0
        %v7958 = vadd.f32 %v7820, %v7957
        %7959 = vdwg.mxu0
        %7960 = vmatprep.subr.mxu0 %v7753
        %7961 = vmatpush1.msra.mxu0 %v7752
        %7962 = vmatprep.subr.mxu0 %v7757
        %7963 = vmatpush1.msra.mxu0 %v7756
        %7964 = vmatprep.subr.mxu0 %v7761
        %7965 = vmatpush1.msra.mxu0 %v7760
        %7966 = vmatprep.subr.mxu0 %v7765
        %7967 = vmatpush1.msra.mxu0 %v7764
        %7968 = vmatprep.subr.mxu0 %v7769
        %7969 = vmatpush1.msra.mxu0 %v7768
        %7970 = vmatprep.subr.mxu0 %v7773
        %7971 = vmatpush1.msra.mxu0 %v7772
        %7972 = vmatprep.subr.mxu0 %v7777
        %7973 = vmatpush1.msra.mxu0 %v7776
        %7974 = vmatprep.subr.mxu0 %v7781
        %7975 = vmatpush1.msra.mxu0 %v7780
        %7976 = vmatprep.subr.mxu0 0.0
        %7977 = vmatpush1.msra.mxu0 0.0
        %7978 = vmatprep.subr.mxu0 0.0
        %7979 = vmatpush1.msra.mxu0 0.0
        %7980 = vmatprep.subr.mxu0 0.0
        %7981 = vmatpush1.msra.mxu0 0.0
        %7982 = vmatprep.subr.mxu0 0.0
        %7983 = vmatpush1.msra.mxu0 0.0
        %7984 = vmatprep.subr.mxu0 0.0
        %7985 = vmatpush1.msra.mxu0 0.0
        %7986 = vmatprep.subr.mxu0 0.0
        %7987 = vmatpush1.msra.mxu0 0.0
        %7988 = vmatprep.subr.mxu0 0.0
        %7989 = vmatpush1.msra.mxu0 0.0
        %7990 = vmatprep.subr.mxu0 0.0
        %7991 = vmatpush1.msra.mxu0 0.0
        %7992 = vmatprep.subr.mxu0 0.0
        %7993 = vmatpush1.msra.mxu0 0.0
        %7994 = vmatprep.subr.mxu0 0.0
        %7995 = vmatpush1.msra.mxu0 0.0
        %7996 = vmatprep.subr.mxu0 0.0
        %7997 = vmatpush1.msra.mxu0 0.0
        %7998 = vmatprep.subr.mxu0 0.0
        %7999 = vmatpush1.msra.mxu0 0.0
        %8000 = vmatprep.subr.mxu0 0.0
        %8001 = vmatpush1.msra.mxu0 0.0
        %8002 = vmatprep.subr.mxu0 0.0
        %8003 = vmatpush1.msra.mxu0 0.0
        %8004 = vmatprep.subr.mxu0 0.0
        %8005 = vmatpush1.msra.mxu0 0.0
        %8006 = vmatprep.subr.mxu0 0.0
        %8007 = vmatpush1.msra.mxu0 0.0
        %8008 = vmatprep.subr.mxu0 0.0
        %8009 = vmatpush1.msra.mxu0 0.0
        %8010 = vmatprep.subr.mxu0 0.0
        %8011 = vmatpush1.msra.mxu0 0.0
        %8012 = vmatprep.subr.mxu0 0.0
        %8013 = vmatpush1.msra.mxu0 0.0
        %8014 = vmatprep.subr.mxu0 0.0
        %8015 = vmatpush1.msra.mxu0 0.0
        %8016 = vmatprep.subr.mxu0 0.0
        %8017 = vmatpush1.msra.mxu0 0.0
        %8018 = vmatprep.subr.mxu0 0.0
        %8019 = vmatpush1.msra.mxu0 0.0
        %8020 = vmatprep.subr.mxu0 0.0
        %8021 = vmatpush1.msra.mxu0 0.0
        %8022 = vmatprep.subr.mxu0 0.0
        %8023 = vmatpush1.msra.mxu0 0.0
        %8024 = vmatprep.mubr.f32.mxu0 0.0
        %8025 = vmatmul.mubr.f32.gmra.mrb[0].mxu0 %v7824
        %v8026 = vpop.f32.mrb[0].mxu0
        %v8027 = vadd.f32 %v7792, %v8026
        %v8028 = vpop.f32.mrb[0].mxu0
        %v8029 = vadd.f32 %v7792, %v8028
        %8030 = vmatprep.mubr.f32.mxu0 0.0
        %8031 = vmatmul.mubr.f32.gmra.mrb[0].mxu0 %v7827
        %v8032 = vpop.f32.mrb[0].mxu0
        %v8033 = vadd.f32 %v7796, %v8032
        %v8034 = vpop.f32.mrb[0].mxu0
        %v8035 = vadd.f32 %v7796, %v8034
        %8036 = vmatprep.mubr.f32.mxu0 0.0
        %8037 = vmatmul.mubr.f32.gmra.mrb[0].mxu0 %v7830
        %v8038 = vpop.f32.mrb[0].mxu0
        %v8039 = vadd.f32 %v7800, %v8038
        %v8040 = vpop.f32.mrb[0].mxu0
        %v8041 = vadd.f32 %v7800, %v8040
        %8042 = vmatprep.mubr.f32.mxu0 0.0
        %8043 = vmatmul.mubr.f32.gmra.mrb[0].mxu0 %v7833
        %v8044 = vpop.f32.mrb[0].mxu0
        %v8045 = vadd.f32 %v7804, %v8044
        %v8046 = vpop.f32.mrb[0].mxu0
        %v8047 = vadd.f32 %v7804, %v8046
        %8048 = vmatprep.mubr.f32.mxu0 0.0
        %8049 = vmatmul.mubr.f32.gmra.mrb[0].mxu0 %v7836
        %v8050 = vpop.f32.mrb[0].mxu0
        %v8051 = vadd.f32 %v7808, %v8050
        %v8052 = vpop.f32.mrb[0].mxu0
        %v8053 = vadd.f32 %v7808, %v8052
        %8054 = vmatprep.mubr.f32.mxu0 0.0
        %8055 = vmatmul.mubr.f32.gmra.mrb[0].mxu0 %v7839
        %v8056 = vpop.f32.mrb[0].mxu0
        %v8057 = vadd.f32 %v7812, %v8056
        %v8058 = vpop.f32.mrb[0].mxu0
        %v8059 = vadd.f32 %v7812, %v8058
        %8060 = vmatprep.mubr.f32.mxu0 0.0
        %8061 = vmatmul.mubr.f32.gmra.mrb[0].mxu0 %v7842
        %v8062 = vpop.f32.mrb[0].mxu0
        %v8063 = vadd.f32 %v7816, %v8062
        %v8064 = vpop.f32.mrb[0].mxu0
        %v8065 = vadd.f32 %v7816, %v8064
        %8066 = vmatprep.mubr.f32.mxu0 0.0
        %8067 = vmatmul.mubr.f32.gmra.mrb[0].mxu0 %v7845
        %v8068 = vpop.f32.mrb[0].mxu0
        %v8069 = vadd.f32 %v7820, %v8068
        %v8070 = vpop.f32.mrb[0].mxu0
        %v8071 = vadd.f32 %v7820, %v8070
        %8072 = vdwg.mxu0
        %v8073 = vmax.f32 %v7914, 0.0
        %v8074 = vmax.f32 %v7916, 0.0
        %v8075 = vmax.f32 %v8027, 0.0
        %v8076 = vmax.f32 %v8029, 0.0
        %v8077 = vmax.f32 %v7920, 0.0
        %v8078 = vmax.f32 %v7922, 0.0
        %v8079 = vmax.f32 %v8033, 0.0
        %v8080 = vmax.f32 %v8035, 0.0
        %v8081 = vmax.f32 %v7926, 0.0
        %v8082 = vmax.f32 %v7928, 0.0
        %v8083 = vmax.f32 %v8039, 0.0
        %v8084 = vmax.f32 %v8041, 0.0
        %v8085 = vmax.f32 %v7932, 0.0
        %v8086 = vmax.f32 %v7934, 0.0
        %v8087 = vmax.f32 %v8045, 0.0
        %v8088 = vmax.f32 %v8047, 0.0
        %v8089 = vmax.f32 %v7938, 0.0
        %v8090 = vmax.f32 %v7940, 0.0
        %v8091 = vmax.f32 %v8051, 0.0
        %v8092 = vmax.f32 %v8053, 0.0
        %v8093 = vmax.f32 %v7944, 0.0
        %v8094 = vmax.f32 %v7946, 0.0
        %v8095 = vmax.f32 %v8057, 0.0
        %v8096 = vmax.f32 %v8059, 0.0
        %v8097 = vmax.f32 %v7950, 0.0
        %v8098 = vmax.f32 %v7952, 0.0
        %v8099 = vmax.f32 %v8063, 0.0
        %v8100 = vmax.f32 %v8065, 0.0
        %v8101 = vmax.f32 %v7956, 0.0
        %v8102 = vmax.f32 %v7958, 0.0
        %v8103 = vmax.f32 %v8069, 0.0
        %v8104 = vmax.f32 %v8071, 0.0
        %s8105 = scalar_lea.vmem %s2, 64
        %v8106 = vld [vmem:[%s8105] sm:$0xff]
        %v8107 = vld [vmem:[%s8105 + $0x8] sm:$0xff]
        %v8108 = vld [vmem:[%s8105 + $0x10] sm:$0xff]
        %v8109 = vld [vmem:[%s8105 + $0x18] sm:$0xff]
        %v8110 = vld [vmem:[%s8105 + $0x20] sm:$0xff]
        %v8111 = vld [vmem:[%s8105 + $0x28] sm:$0xff]
        %v8112 = vld [vmem:[%s8105 + $0x30] sm:$0xff]
        %v8113 = vld [vmem:[%s8105 + $0x38] sm:$0xff]
        %8114 = vset.pattern.permute.xlu0 2
        %8115 = vperm.xlu0 %8114, %v7468
        %v8116 = vpop.permute.xlu0 %8115
        %8118 = vset.pattern.permute.xlu0 2
        %8119 = vperm.xlu0 %8118, %v7469
        %v8120 = vpop.permute.xlu0 %8119
        %8122 = vset.pattern.permute.xlu0 2
        %8123 = vperm.xlu0 %8122, %v7470
        %v8124 = vpop.permute.xlu0 %8123
        %8126 = vset.pattern.permute.xlu0 2
        %8127 = vperm.xlu0 %8126, %v7471
        %v8128 = vpop.permute.xlu0 %8127
        %8130 = vset.pattern.permute.xlu0 2
        %8131 = vperm.xlu0 %8130, %v7472
        %v8132 = vpop.permute.xlu0 %8131
        %8134 = vset.pattern.permute.xlu0 2
        %8135 = vperm.xlu0 %8134, %v7473
        %v8136 = vpop.permute.xlu0 %8135
        %8138 = vset.pattern.permute.xlu0 2
        %8139 = vperm.xlu0 %8138, %v7474
        %v8140 = vpop.permute.xlu0 %8139
        %8142 = vset.pattern.permute.xlu0 2
        %8143 = vperm.xlu0 %8142, %v7475
        %v8144 = vpop.permute.xlu0 %8143
        %v8147 = vsel %vm7822, %v8106, 0
        %v8150 = vsel %vm7822, %v8107, 0
        %v8153 = vsel %vm7822, %v8108, 0
        %v8156 = vsel %vm7822, %v8109, 0
        %v8159 = vsel %vm7822, %v8110, 0
        %v8162 = vsel %vm7822, %v8111, 0
        %v8165 = vsel %vm7822, %v8112, 0
        %v8168 = vsel %vm7822, %v8113, 0
        %8170 = vmatprep.subr.mxu0 %v8074
        %8171 = vmatpush1.msra.mxu0 %v8073
        %8172 = vmatprep.subr.mxu0 %v8078
        %8173 = vmatpush1.msra.mxu0 %v8077
        %8174 = vmatprep.subr.mxu0 %v8082
        %8175 = vmatpush1.msra.mxu0 %v8081
        %8176 = vmatprep.subr.mxu0 %v8086
        %8177 = vmatpush1.msra.mxu0 %v8085
        %8178 = vmatprep.subr.mxu0 %v8090
        %8179 = vmatpush1.msra.mxu0 %v8089
        %8180 = vmatprep.subr.mxu0 %v8094
        %8181 = vmatpush1.msra.mxu0 %v8093
        %8182 = vmatprep.subr.mxu0 %v8098
        %8183 = vmatpush1.msra.mxu0 %v8097
        %8184 = vmatprep.subr.mxu0 %v8102
        %8185 = vmatpush1.msra.mxu0 %v8101
        %8186 = vmatprep.subr.mxu0 0.0
        %8187 = vmatpush1.msra.mxu0 0.0
        %8188 = vmatprep.subr.mxu0 0.0
        %8189 = vmatpush1.msra.mxu0 0.0
        %8190 = vmatprep.subr.mxu0 0.0
        %8191 = vmatpush1.msra.mxu0 0.0
        %8192 = vmatprep.subr.mxu0 0.0
        %8193 = vmatpush1.msra.mxu0 0.0
        %8194 = vmatprep.subr.mxu0 0.0
        %8195 = vmatpush1.msra.mxu0 0.0
        %8196 = vmatprep.subr.mxu0 0.0
        %8197 = vmatpush1.msra.mxu0 0.0
        %8198 = vmatprep.subr.mxu0 0.0
        %8199 = vmatpush1.msra.mxu0 0.0
        %8200 = vmatprep.subr.mxu0 0.0
        %8201 = vmatpush1.msra.mxu0 0.0
        %8202 = vmatprep.subr.mxu0 0.0
        %8203 = vmatpush1.msra.mxu0 0.0
        %8204 = vmatprep.subr.mxu0 0.0
        %8205 = vmatpush1.msra.mxu0 0.0
        %8206 = vmatprep.subr.mxu0 0.0
        %8207 = vmatpush1.msra.mxu0 0.0
        %8208 = vmatprep.subr.mxu0 0.0
        %8209 = vmatpush1.msra.mxu0 0.0
        %8210 = vmatprep.subr.mxu0 0.0
        %8211 = vmatpush1.msra.mxu0 0.0
        %8212 = vmatprep.subr.mxu0 0.0
        %8213 = vmatpush1.msra.mxu0 0.0
        %8214 = vmatprep.subr.mxu0 0.0
        %8215 = vmatpush1.msra.mxu0 0.0
        %8216 = vmatprep.subr.mxu0 0.0
        %8217 = vmatpush1.msra.mxu0 0.0
        %8218 = vmatprep.subr.mxu0 0.0
        %8219 = vmatpush1.msra.mxu0 0.0
        %8220 = vmatprep.subr.mxu0 0.0
        %8221 = vmatpush1.msra.mxu0 0.0
        %8222 = vmatprep.subr.mxu0 0.0
        %8223 = vmatpush1.msra.mxu0 0.0
        %8224 = vmatprep.subr.mxu0 0.0
        %8225 = vmatpush1.msra.mxu0 0.0
        %8226 = vmatprep.subr.mxu0 0.0
        %8227 = vmatpush1.msra.mxu0 0.0
        %8228 = vmatprep.subr.mxu0 0.0
        %8229 = vmatpush1.msra.mxu0 0.0
        %8230 = vmatprep.subr.mxu0 0.0
        %8231 = vmatpush1.msra.mxu0 0.0
        %8232 = vmatprep.subr.mxu0 0.0
        %8233 = vmatpush1.msra.mxu0 0.0
        %8234 = vmatprep.mubr.f32.mxu0 0.0
        %8235 = vmatmul.mubr.f32.gmra.mrb[0].mxu0 %v8147
        %v8236 = vpop.f32.mrb[0].mxu0
        %v8237 = vadd.f32 %v8116, %v8236
        %v8238 = vpop.f32.mrb[0].mxu0
        %v8239 = vadd.f32 %v8116, %v8238
        %8240 = vmatprep.mubr.f32.mxu0 0.0
        %8241 = vmatmul.mubr.f32.gmra.mrb[0].mxu0 %v8150
        %v8242 = vpop.f32.mrb[0].mxu0
        %v8243 = vadd.f32 %v8120, %v8242
        %v8244 = vpop.f32.mrb[0].mxu0
        %v8245 = vadd.f32 %v8120, %v8244
        %8246 = vmatprep.mubr.f32.mxu0 0.0
        %8247 = vmatmul.mubr.f32.gmra.mrb[0].mxu0 %v8153
        %v8248 = vpop.f32.mrb[0].mxu0
        %v8249 = vadd.f32 %v8124, %v8248
        %v8250 = vpop.f32.mrb[0].mxu0
        %v8251 = vadd.f32 %v8124, %v8250
        %8252 = vmatprep.mubr.f32.mxu0 0.0
        %8253 = vmatmul.mubr.f32.gmra.mrb[0].mxu0 %v8156
        %v8254 = vpop.f32.mrb[0].mxu0
        %v8255 = vadd.f32 %v8128, %v8254
        %v8256 = vpop.f32.mrb[0].mxu0
        %v8257 = vadd.f32 %v8128, %v8256
        %8258 = vmatprep.mubr.f32.mxu0 0.0
        %8259 = vmatmul.mubr.f32.gmra.mrb[0].mxu0 %v8159
        %v8260 = vpop.f32.mrb[0].mxu0
        %v8261 = vadd.f32 %v8132, %v8260
        %v8262 = vpop.f32.mrb[0].mxu0
        %v8263 = vadd.f32 %v8132, %v8262
        %8264 = vmatprep.mubr.f32.mxu0 0.0
        %8265 = vmatmul.mubr.f32.gmra.mrb[0].mxu0 %v8162
        %v8266 = vpop.f32.mrb[0].mxu0
        %v8267 = vadd.f32 %v8136, %v8266
        %v8268 = vpop.f32.mrb[0].mxu0
        %v8269 = vadd.f32 %v8136, %v8268
        %8270 = vmatprep.mubr.f32.mxu0 0.0
        %8271 = vmatmul.mubr.f32.gmra.mrb[0].mxu0 %v8165
        %v8272 = vpop.f32.mrb[0].mxu0
        %v8273 = vadd.f32 %v8140, %v8272
        %v8274 = vpop.f32.mrb[0].mxu0
        %v8275 = vadd.f32 %v8140, %v8274
        %8276 = vmatprep.mubr.f32.mxu0 0.0
        %8277 = vmatmul.mubr.f32.gmra.mrb[0].mxu0 %v8168
        %v8278 = vpop.f32.mrb[0].mxu0
        %v8279 = vadd.f32 %v8144, %v8278
        %v8280 = vpop.f32.mrb[0].mxu0
        %v8281 = vadd.f32 %v8144, %v8280
        %8282 = vdwg.mxu0
        %8283 = vmatprep.subr.mxu0 %v8076
        %8284 = vmatpush1.msra.mxu0 %v8075
        %8285 = vmatprep.subr.mxu0 %v8080
        %8286 = vmatpush1.msra.mxu0 %v8079
        %8287 = vmatprep.subr.mxu0 %v8084
        %8288 = vmatpush1.msra.mxu0 %v8083
        %8289 = vmatprep.subr.mxu0 %v8088
        %8290 = vmatpush1.msra.mxu0 %v8087
        %8291 = vmatprep.subr.mxu0 %v8092
        %8292 = vmatpush1.msra.mxu0 %v8091
        %8293 = vmatprep.subr.mxu0 %v8096
        %8294 = vmatpush1.msra.mxu0 %v8095
        %8295 = vmatprep.subr.mxu0 %v8100
        %8296 = vmatpush1.msra.mxu0 %v8099
        %8297 = vmatprep.subr.mxu0 %v8104
        %8298 = vmatpush1.msra.mxu0 %v8103
        %8299 = vmatprep.subr.mxu0 0.0
        %8300 = vmatpush1.msra.mxu0 0.0
        %8301 = vmatprep.subr.mxu0 0.0
        %8302 = vmatpush1.msra.mxu0 0.0
        %8303 = vmatprep.subr.mxu0 0.0
        %8304 = vmatpush1.msra.mxu0 0.0
        %8305 = vmatprep.subr.mxu0 0.0
        %8306 = vmatpush1.msra.mxu0 0.0
        %8307 = vmatprep.subr.mxu0 0.0
        %8308 = vmatpush1.msra.mxu0 0.0
        %8309 = vmatprep.subr.mxu0 0.0
        %8310 = vmatpush1.msra.mxu0 0.0
        %8311 = vmatprep.subr.mxu0 0.0
        %8312 = vmatpush1.msra.mxu0 0.0
        %8313 = vmatprep.subr.mxu0 0.0
        %8314 = vmatpush1.msra.mxu0 0.0
        %8315 = vmatprep.subr.mxu0 0.0
        %8316 = vmatpush1.msra.mxu0 0.0
        %8317 = vmatprep.subr.mxu0 0.0
        %8318 = vmatpush1.msra.mxu0 0.0
        %8319 = vmatprep.subr.mxu0 0.0
        %8320 = vmatpush1.msra.mxu0 0.0
        %8321 = vmatprep.subr.mxu0 0.0
        %8322 = vmatpush1.msra.mxu0 0.0
        %8323 = vmatprep.subr.mxu0 0.0
        %8324 = vmatpush1.msra.mxu0 0.0
        %8325 = vmatprep.subr.mxu0 0.0
        %8326 = vmatpush1.msra.mxu0 0.0
        %8327 = vmatprep.subr.mxu0 0.0
        %8328 = vmatpush1.msra.mxu0 0.0
        %8329 = vmatprep.subr.mxu0 0.0
        %8330 = vmatpush1.msra.mxu0 0.0
        %8331 = vmatprep.subr.mxu0 0.0
        %8332 = vmatpush1.msra.mxu0 0.0
        %8333 = vmatprep.subr.mxu0 0.0
        %8334 = vmatpush1.msra.mxu0 0.0
        %8335 = vmatprep.subr.mxu0 0.0
        %8336 = vmatpush1.msra.mxu0 0.0
        %8337 = vmatprep.subr.mxu0 0.0
        %8338 = vmatpush1.msra.mxu0 0.0
        %8339 = vmatprep.subr.mxu0 0.0
        %8340 = vmatpush1.msra.mxu0 0.0
        %8341 = vmatprep.subr.mxu0 0.0
        %8342 = vmatpush1.msra.mxu0 0.0
        %8343 = vmatprep.subr.mxu0 0.0
        %8344 = vmatpush1.msra.mxu0 0.0
        %8345 = vmatprep.subr.mxu0 0.0
        %8346 = vmatpush1.msra.mxu0 0.0
        %8347 = vmatprep.mubr.f32.mxu0 0.0
        %8348 = vmatmul.mubr.f32.gmra.mrb[0].mxu0 %v8147
        %v8349 = vpop.f32.mrb[0].mxu0
        %v8350 = vadd.f32 %v8116, %v8349
        %v8351 = vpop.f32.mrb[0].mxu0
        %v8352 = vadd.f32 %v8116, %v8351
        %8353 = vmatprep.mubr.f32.mxu0 0.0
        %8354 = vmatmul.mubr.f32.gmra.mrb[0].mxu0 %v8150
        %v8355 = vpop.f32.mrb[0].mxu0
        %v8356 = vadd.f32 %v8120, %v8355
        %v8357 = vpop.f32.mrb[0].mxu0
        %v8358 = vadd.f32 %v8120, %v8357
        %8359 = vmatprep.mubr.f32.mxu0 0.0
        %8360 = vmatmul.mubr.f32.gmra.mrb[0].mxu0 %v8153
        %v8361 = vpop.f32.mrb[0].mxu0
        %v8362 = vadd.f32 %v8124, %v8361
        %v8363 = vpop.f32.mrb[0].mxu0
        %v8364 = vadd.f32 %v8124, %v8363
        %8365 = vmatprep.mubr.f32.mxu0 0.0
        %8366 = vmatmul.mubr.f32.gmra.mrb[0].mxu0 %v8156
        %v8367 = vpop.f32.mrb[0].mxu0
        %v8368 = vadd.f32 %v8128, %v8367
        %v8369 = vpop.f32.mrb[0].mxu0
        %v8370 = vadd.f32 %v8128, %v8369
        %8371 = vmatprep.mubr.f32.mxu0 0.0
        %8372 = vmatmul.mubr.f32.gmra.mrb[0].mxu0 %v8159
        %v8373 = vpop.f32.mrb[0].mxu0
        %v8374 = vadd.f32 %v8132, %v8373
        %v8375 = vpop.f32.mrb[0].mxu0
        %v8376 = vadd.f32 %v8132, %v8375
        %8377 = vmatprep.mubr.f32.mxu0 0.0
        %8378 = vmatmul.mubr.f32.gmra.mrb[0].mxu0 %v8162
        %v8379 = vpop.f32.mrb[0].mxu0
        %v8380 = vadd.f32 %v8136, %v8379
        %v8381 = vpop.f32.mrb[0].mxu0
        %v8382 = vadd.f32 %v8136, %v8381
        %8383 = vmatprep.mubr.f32.mxu0 0.0
        %8384 = vmatmul.mubr.f32.gmra.mrb[0].mxu0 %v8165
        %v8385 = vpop.f32.mrb[0].mxu0
        %v8386 = vadd.f32 %v8140, %v8385
        %v8387 = vpop.f32.mrb[0].mxu0
        %v8388 = vadd.f32 %v8140, %v8387
        %8389 = vmatprep.mubr.f32.mxu0 0.0
        %8390 = vmatmul.mubr.f32.gmra.mrb[0].mxu0 %v8168
        %v8391 = vpop.f32.mrb[0].mxu0
        %v8392 = vadd.f32 %v8144, %v8391
        %v8393 = vpop.f32.mrb[0].mxu0
        %v8394 = vadd.f32 %v8144, %v8393
        %8395 = vdwg.mxu0
        %v8396 = vmax.f32 %v8237, 0.0
        %v8397 = vmax.f32 %v8239, 0.0
        %v8398 = vmax.f32 %v8350, 0.0
        %v8399 = vmax.f32 %v8352, 0.0
        %v8400 = vmax.f32 %v8243, 0.0
        %v8401 = vmax.f32 %v8245, 0.0
        %v8402 = vmax.f32 %v8356, 0.0
        %v8403 = vmax.f32 %v8358, 0.0
        %v8404 = vmax.f32 %v8249, 0.0
        %v8405 = vmax.f32 %v8251, 0.0
        %v8406 = vmax.f32 %v8362, 0.0
        %v8407 = vmax.f32 %v8364, 0.0
        %v8408 = vmax.f32 %v8255, 0.0
        %v8409 = vmax.f32 %v8257, 0.0
        %v8410 = vmax.f32 %v8368, 0.0
        %v8411 = vmax.f32 %v8370, 0.0
        %v8412 = vmax.f32 %v8261, 0.0
        %v8413 = vmax.f32 %v8263, 0.0
        %v8414 = vmax.f32 %v8374, 0.0
        %v8415 = vmax.f32 %v8376, 0.0
        %v8416 = vmax.f32 %v8267, 0.0
        %v8417 = vmax.f32 %v8269, 0.0
        %v8418 = vmax.f32 %v8380, 0.0
        %v8419 = vmax.f32 %v8382, 0.0
        %v8420 = vmax.f32 %v8273, 0.0
        %v8421 = vmax.f32 %v8275, 0.0
        %v8422 = vmax.f32 %v8386, 0.0
        %v8423 = vmax.f32 %v8388, 0.0
        %v8424 = vmax.f32 %v8279, 0.0
        %v8425 = vmax.f32 %v8281, 0.0
        %v8426 = vmax.f32 %v8392, 0.0
        %v8427 = vmax.f32 %v8394, 0.0
        %v8428 = vld [vmem:[%s4] sm:$0xff]
        %v8429 = vld [vmem:[%s3] sm:$0xff]
        %8431 = vset.pattern.permute.xlu0 3
        %8432 = vperm.xlu0 %8431, %v8428
        %v8433 = vpop.permute.xlu0 %8432
        %v8436 = vsel %vm7822, %v8429, 0
        %8438 = vmatprep.subr.mxu0 %v8397
        %8439 = vmatpush1.msra.mxu0 %v8396
        %8440 = vmatprep.subr.mxu0 %v8401
        %8441 = vmatpush1.msra.mxu0 %v8400
        %8442 = vmatprep.subr.mxu0 %v8405
        %8443 = vmatpush1.msra.mxu0 %v8404
        %8444 = vmatprep.subr.mxu0 %v8409
        %8445 = vmatpush1.msra.mxu0 %v8408
        %8446 = vmatprep.subr.mxu0 %v8413
        %8447 = vmatpush1.msra.mxu0 %v8412
        %8448 = vmatprep.subr.mxu0 %v8417
        %8449 = vmatpush1.msra.mxu0 %v8416
        %8450 = vmatprep.subr.mxu0 %v8421
        %8451 = vmatpush1.msra.mxu0 %v8420
        %8452 = vmatprep.subr.mxu0 %v8425
        %8453 = vmatpush1.msra.mxu0 %v8424
        %8454 = vmatprep.subr.mxu0 0.0
        %8455 = vmatpush1.msra.mxu0 0.0
        %8456 = vmatprep.subr.mxu0 0.0
        %8457 = vmatpush1.msra.mxu0 0.0
        %8458 = vmatprep.subr.mxu0 0.0
        %8459 = vmatpush1.msra.mxu0 0.0
        %8460 = vmatprep.subr.mxu0 0.0
        %8461 = vmatpush1.msra.mxu0 0.0
        %8462 = vmatprep.subr.mxu0 0.0
        %8463 = vmatpush1.msra.mxu0 0.0
        %8464 = vmatprep.subr.mxu0 0.0
        %8465 = vmatpush1.msra.mxu0 0.0
        %8466 = vmatprep.subr.mxu0 0.0
        %8467 = vmatpush1.msra.mxu0 0.0
        %8468 = vmatprep.subr.mxu0 0.0
        %8469 = vmatpush1.msra.mxu0 0.0
        %8470 = vmatprep.subr.mxu0 0.0
        %8471 = vmatpush1.msra.mxu0 0.0
        %8472 = vmatprep.subr.mxu0 0.0
        %8473 = vmatpush1.msra.mxu0 0.0
        %8474 = vmatprep.subr.mxu0 0.0
        %8475 = vmatpush1.msra.mxu0 0.0
        %8476 = vmatprep.subr.mxu0 0.0
        %8477 = vmatpush1.msra.mxu0 0.0
        %8478 = vmatprep.subr.mxu0 0.0
        %8479 = vmatpush1.msra.mxu0 0.0
        %8480 = vmatprep.subr.mxu0 0.0
        %8481 = vmatpush1.msra.mxu0 0.0
        %8482 = vmatprep.subr.mxu0 0.0
        %8483 = vmatpush1.msra.mxu0 0.0
        %8484 = vmatprep.subr.mxu0 0.0
        %8485 = vmatpush1.msra.mxu0 0.0
        %8486 = vmatprep.subr.mxu0 0.0
        %8487 = vmatpush1.msra.mxu0 0.0
        %8488 = vmatprep.subr.mxu0 0.0
        %8489 = vmatpush1.msra.mxu0 0.0
        %8490 = vmatprep.subr.mxu0 0.0
        %8491 = vmatpush1.msra.mxu0 0.0
        %8492 = vmatprep.subr.mxu0 0.0
        %8493 = vmatpush1.msra.mxu0 0.0
        %8494 = vmatprep.subr.mxu0 0.0
        %8495 = vmatpush1.msra.mxu0 0.0
        %8496 = vmatprep.subr.mxu0 0.0
        %8497 = vmatpush1.msra.mxu0 0.0
        %8498 = vmatprep.subr.mxu0 0.0
        %8499 = vmatpush1.msra.mxu0 0.0
        %8500 = vmatprep.subr.mxu0 0.0
        %8501 = vmatpush1.msra.mxu0 0.0
        %8502 = vmatprep.mubr.f32.mxu0 0.0
        %8503 = vmatmul.mubr.f32.gmra.mrb[0].mxu0 %v8436
        %v8504 = vpop.f32.mrb[0].mxu0
        %v8505 = vadd.f32 %v8433, %v8504
        %v8506 = vpop.f32.mrb[0].mxu0
        %v8507 = vadd.f32 %v8433, %v8506
        %8508 = vdwg.mxu0
        %8509 = vmatprep.subr.mxu0 %v8399
        %8510 = vmatpush1.msra.mxu0 %v8398
        %8511 = vmatprep.subr.mxu0 %v8403
        %8512 = vmatpush1.msra.mxu0 %v8402
        %8513 = vmatprep.subr.mxu0 %v8407
        %8514 = vmatpush1.msra.mxu0 %v8406
        %8515 = vmatprep.subr.mxu0 %v8411
        %8516 = vmatpush1.msra.mxu0 %v8410
        %8517 = vmatprep.subr.mxu0 %v8415
        %8518 = vmatpush1.msra.mxu0 %v8414
        %8519 = vmatprep.subr.mxu0 %v8419
        %8520 = vmatpush1.msra.mxu0 %v8418
        %8521 = vmatprep.subr.mxu0 %v8423
        %8522 = vmatpush1.msra.mxu0 %v8422
        %8523 = vmatprep.subr.mxu0 %v8427
        %8524 = vmatpush1.msra.mxu0 %v8426
        %8525 = vmatprep.subr.mxu0 0.0
        %8526 = vmatpush1.msra.mxu0 0.0
        %8527 = vmatprep.subr.mxu0 0.0
        %8528 = vmatpush1.msra.mxu0 0.0
        %8529 = vmatprep.subr.mxu0 0.0
        %8530 = vmatpush1.msra.mxu0 0.0
        %8531 = vmatprep.subr.mxu0 0.0
        %8532 = vmatpush1.msra.mxu0 0.0
        %8533 = vmatprep.subr.mxu0 0.0
        %8534 = vmatpush1.msra.mxu0 0.0
        %8535 = vmatprep.subr.mxu0 0.0
        %8536 = vmatpush1.msra.mxu0 0.0
        %8537 = vmatprep.subr.mxu0 0.0
        %8538 = vmatpush1.msra.mxu0 0.0
        %8539 = vmatprep.subr.mxu0 0.0
        %8540 = vmatpush1.msra.mxu0 0.0
        %8541 = vmatprep.subr.mxu0 0.0
        %8542 = vmatpush1.msra.mxu0 0.0
        %8543 = vmatprep.subr.mxu0 0.0
        %8544 = vmatpush1.msra.mxu0 0.0
        %8545 = vmatprep.subr.mxu0 0.0
        %8546 = vmatpush1.msra.mxu0 0.0
        %8547 = vmatprep.subr.mxu0 0.0
        %8548 = vmatpush1.msra.mxu0 0.0
        %8549 = vmatprep.subr.mxu0 0.0
        %8550 = vmatpush1.msra.mxu0 0.0
        %8551 = vmatprep.subr.mxu0 0.0
        %8552 = vmatpush1.msra.mxu0 0.0
        %8553 = vmatprep.subr.mxu0 0.0
        %8554 = vmatpush1.msra.mxu0 0.0
        %8555 = vmatprep.subr.mxu0 0.0
        %8556 = vmatpush1.msra.mxu0 0.0
        %8557 = vmatprep.subr.mxu0 0.0
        %8558 = vmatpush1.msra.mxu0 0.0
        %8559 = vmatprep.subr.mxu0 0.0
        %8560 = vmatpush1.msra.mxu0 0.0
        %8561 = vmatprep.subr.mxu0 0.0
        %8562 = vmatpush1.msra.mxu0 0.0
        %8563 = vmatprep.subr.mxu0 0.0
        %8564 = vmatpush1.msra.mxu0 0.0
        %8565 = vmatprep.subr.mxu0 0.0
        %8566 = vmatpush1.msra.mxu0 0.0
        %8567 = vmatprep.subr.mxu0 0.0
        %8568 = vmatpush1.msra.mxu0 0.0
        %8569 = vmatprep.subr.mxu0 0.0
        %8570 = vmatpush1.msra.mxu0 0.0
        %8571 = vmatprep.subr.mxu0 0.0
        %8572 = vmatpush1.msra.mxu0 0.0
        %8573 = vmatprep.mubr.f32.mxu0 0.0
        %8574 = vmatmul.mubr.f32.gmra.mrb[0].mxu0 %v8436
        %v8575 = vpop.f32.mrb[0].mxu0
        %v8576 = vadd.f32 %v8433, %v8575
        %v8577 = vpop.f32.mrb[0].mxu0
        %v8578 = vadd.f32 %v8433, %v8577
        %8579 = vdwg.mxu0
        %v8580 = vmul.f32 %v8505, 0.5
        %v8581 = vmul.f32 %v8507, 0.5
        %v8582 = vmul.f32 %v8576, 0.5
        %v8583 = vmul.f32 %v8578, 0.5
        %v8584 = vtanh.pop %v8580
        %v8585 = vtanh.pop %v8581
        %v8586 = vtanh.pop %v8582
        %v8587 = vtanh.pop %v8583
        %v8588 = vadd.f32 %v8584, 1.0
        %v8589 = vadd.f32 %v8585, 1.0
        %v8590 = vadd.f32 %v8586, 1.0
        %v8591 = vadd.f32 %v8587, 1.0
        %v8592 = vmul.f32 %v8588, 0.5
        %v8593 = vmul.f32 %v8589, 0.5
        %v8594 = vmul.f32 %v8590, 0.5
        %v8595 = vmul.f32 %v8591, 0.5
        %v8596 = vlaneseq
        %v8597 = vshrl.u32 %v8596, 7
        %v8598 = vsub.s32 3, %v8597
        %v8599 = vrot.slane %v8592, %v8598
        %v8600 = vlaneseq
        %v8601 = vshrl.u32 %v8600, 7
        %v8602 = vsub.s32 3, %v8601
        %v8603 = vrot.slane %v8593, %v8602
        %v8604 = vlaneseq
        %v8605 = vshrl.u32 %v8604, 7
        %v8606 = vsub.s32 3, %v8605
        %v8607 = vrot.slane %v8594, %v8606
        %v8608 = vlaneseq
        %v8609 = vshrl.u32 %v8608, 7
        %v8610 = vsub.s32 3, %v8609
        %v8611 = vrot.slane %v8595, %v8610
        %v8612 = vmul.f32 %v8592, %v8599
        %v8613 = vmul.f32 %v8593, %v8603
        %v8614 = vmul.f32 %v8594, %v8607
        %v8615 = vmul.f32 %v8595, %v8611
        %v8616 = vlaneseq
        %v8617 = vshrl.u32 %v8616, 7
        %v8618 = vsub.s32 7, %v8617
        %v8619 = vrot.slane %v8592, %v8618
        %v8620 = vlaneseq
        %v8621 = vshrl.u32 %v8620, 7
        %v8622 = vsub.s32 7, %v8621
        %v8623 = vrot.slane %v8593, %v8622
        %v8624 = vlaneseq
        %v8625 = vshrl.u32 %v8624, 7
        %v8626 = vsub.s32 7, %v8625
        %v8627 = vrot.slane %v8594, %v8626
        %v8628 = vlaneseq
        %v8629 = vshrl.u32 %v8628, 7
        %v8630 = vsub.s32 7, %v8629
        %v8631 = vrot.slane %v8595, %v8630
        %v8632 = vmul.f32 %v8592, %v8619
        %v8633 = vmul.f32 %v8593, %v8623
        %v8634 = vmul.f32 %v8594, %v8627
        %v8635 = vmul.f32 %v8595, %v8631
        %v8640 = vrot.slane %v8632, 4
        %v8641 = vrot.slane %v8633, 4
        %v8642 = vrot.slane %v8634, 4
        %v8643 = vrot.slane %v8635, 4
        %v8648 = vadd.f32 %v8612, %v8640
        %v8649 = vadd.f32 %v8613, %v8641
        %v8650 = vadd.f32 %v8614, %v8642
        %v8651 = vadd.f32 %v8615, %v8643
        %v8652 = vmax.f32 %v8648, 0.0
        %v8653 = vmax.f32 %v8649, 0.0
        %v8654 = vmax.f32 %v8650, 0.0
        %v8655 = vmax.f32 %v8651, 0.0
        %v8656 = vmin.f32 %v8652, 1.0
        %v8657 = vmin.f32 %v8653, 1.0
        %v8658 = vmin.f32 %v8654, 1.0
        %v8659 = vmin.f32 %v8655, 1.0
        %v8664 = vrot.slane %v8592, 4
        %v8665 = vrot.slane %v8593, 4
        %v8666 = vrot.slane %v8594, 4
        %v8667 = vrot.slane %v8595, 4
        %v8672 = vmax.f32 %v8592, %v8664
        %v8673 = vmax.f32 %v8593, %v8665
        %v8674 = vmax.f32 %v8594, %v8666
        %v8675 = vmax.f32 %v8595, %v8667
        %v8676 = vrot.slane %v8592, 3
        %v8677 = vrot.slane %v8593, 3
        %v8678 = vrot.slane %v8594, 3
        %v8679 = vrot.slane %v8595, 3
        %v8688 = vrot.slane %v8672, 6
        %v8689 = vrot.slane %v8673, 6
        %v8690 = vrot.slane %v8674, 6
        %v8691 = vrot.slane %v8675, 6
        %vm8696 = vcmask 1042432
        %v8697 = vsel %vm8696, %v8656, %v8592
        %v8698 = vsel %vm8696, %v8657, %v8593
        %v8699 = vsel %vm8696, %v8658, %v8594
        %v8700 = vsel %vm8696, %v8659, %v8595
        %vm8701 = vcmask 1043456
        %v8702 = vsel %vm8701, %v8697, %v8676
        %v8703 = vsel %vm8701, %v8698, %v8677
        %v8704 = vsel %vm8701, %v8699, %v8678
        %v8705 = vsel %vm8701, %v8700, %v8679
        %vm8706 = vcmask 1044480
        %v8707 = vsel %vm8706, %v8702, %v8688
        %v8708 = vsel %vm8706, %v8703, %v8689
        %v8709 = vsel %vm8706, %v8704, %v8690
        %v8710 = vsel %vm8706, %v8705, %v8691
        %vm8711 = vcmask 1045504
        %v8712 = vsel %vm8711, %v8707, 0.0
        %v8713 = vsel %vm8711, %v8708, 0.0
        %v8714 = vsel %vm8711, %v8709, 0.0
        %v8715 = vsel %vm8711, %v8710, 0.0
        %vm8716 = vcmask 1046528
        %v8717 = vsel %vm8716, %v8712, 0.0
        %v8718 = vsel %vm8716, %v8713, 0.0
        %v8719 = vsel %vm8716, %v8714, 0.0
        %v8720 = vsel %vm8716, %v8715, 0.0
        %8721 = vst [vmem:[%s255] sm:$0xff] %v8717
        %8722 = vst [vmem:[%s255 + $0x8] sm:$0xff] %v8718
        %8723 = vst [vmem:[%s255 + $0x10] sm:$0xff] %v8719
        %8724 = vst [vmem:[%s255 + $0x18] sm:$0xff] %v8720
        %s8725 = sand.u32 %s141, 1
        %s8726 = scalar_lea.sflag [#allocation4], %s8725
        %s8727 = sand.u32 %s141, 1
        %s8728 = smul.addr %s8727, 32
        %s8729 = scalar_lea.vmem [#allocation7], %s8728
        // Predicated region
        $region49: #{tpu_custom_call.1} parent=39 // pred_check
          %p8730 = pneg %p151
        $region50: #{tpu_custom_call.1} parent=39 // pred_check_branch
          %8732 = sbr.rel (%p8730) target = $region52
        $region51: #{tpu_custom_call.1} parent=39 // pred_region
          %s8733 = smul.u32 4, %s23
          %s8735 = ssub.s32 512, 512
          %8736 = vsyncadd %s8726, %s8735
          %s8737 = smul.addr %s8733, 128
          %s8738 = scalar_lea.hbm %s5, %s8737
          %s8740 = sshll.u32 %s8729, 4
          %s8741 = int_to_ptr.vmem [resolvable:$true] %s8740
          %8743 = dma.vmem_to_hbm [thread:$0]  %s8741, 512, %s8738, %s8726
        $region52: #{tpu_custom_call.1} parent=39 // pred_fallthru
          _
      $region40: #{tpu_custom_call.1} parent=5 // pred_fallthru
        _
      %p8744 = scmp.le.s32.totalorder 2, %s18
      // Predicated region
      $region53: #{tpu_custom_call.1} parent=5 // pred_check
        %p8745 = pneg %p8744
      $region54: #{tpu_custom_call.1} parent=5 // pred_check_branch
        %8747 = sbr.rel (%p8745) target = $region56
      $region55: #{tpu_custom_call.1} parent=5 // pred_region
        %s8748 = ssub.s32 %s18, 2
        // Predicated region
        $region57: #{tpu_custom_call.1} parent=55 // pred_check
          %p8749 = pneg %p157
        $region58: #{tpu_custom_call.1} parent=55 // pred_check_branch
          %8751 = sbr.rel (%p8749) target = $region60
        $region59: #{tpu_custom_call.1} parent=55 // pred_region
          %s8752 = sand.u32 %s142, 1
          %s8753 = scalar_lea.sflag [#allocation4], %s8752
          %s8754 = sand.u32 %s142, 1
          %s8755 = smul.addr %s8754, 32
          %s8756 = scalar_lea.vmem [#allocation7], %s8755
          %8757 = dma.done %s8753, 512
        $region60: #{tpu_custom_call.1} parent=55 // pred_fallthru
          _
      $region56: #{tpu_custom_call.1} parent=5 // pred_fallthru
        _
    $region6: #{tpu_custom_call.1} parent=1 // loop_footer
      %s22 = sadd.s32 1, %s18
    $region7: #{tpu_custom_call.1} parent=1 // loop_footer_branch
      %17 = sbr.rel target = $region3
    $region8: #{tpu_custom_call.1} parent=1 // loop_exit
      _
    %8758 = vsyncpa [#allocation3], 1
    %s8759 = scalar_lea.sflag [#allocation3], 1
    %8760 = vsyncpa %s8759, 1
    %8761 = vsyncpa [#allocation6], 1
    %8762 = vsyncpa [#allocation4], 1
    %s8763 = scalar_lea.sflag [#allocation4], 1
    %8764 = vsyncpa %s8763, 1

</llo_original>
